<compile_context>
chip_gen: v7x
topology: tpu7x:2x2x1
jax: 0.10.0
libtpu: 0.0.40
codegen_flags: <defaults>
</compile_context>

<pallas_src>
import functools

import jax
import jax.numpy as jnp
from jax import lax
from jax.experimental import pallas as pl
from jax.experimental.pallas import tpu as pltpu


def _round_up(x, m):
    return ((x + m - 1) // m) * m


# ----------------------------------------------------------------------------
# Fused Pallas kernel: embedding projection + stacked LSTM (wavefront) + FC.
# ----------------------------------------------------------------------------
def _make_fused_kernel(num_layers, T, Bp, H, K_pad, n_feat):
    """Ref layout (positional):
      inputs : idx (T*Bp, n_feat) int32,
               proj_tab (K_pad, 4H), b0 (1,4H), w_hh0_t (H,4H),
               [w_ih_t (H,4H), w_hh_t (H,4H), b (1,4H)] * (num_layers-1),
               fc_w_t (H, Cp), fc_b (1, Cp)
      outputs: logits (Bp, Cp)
      scratch: gx (T*Bp, 4H)
    """
    L = num_layers
    TBp = T * Bp
    CH = 8  # row chunk for the multi-hot build (keeps vreg pressure low)
    n_in = 4 + 3 * (L - 1) + 2

    def kernel(*refs):
        idx_ref = refs[0]
        ptab_ref = refs[1]
        b0_ref = refs[2]
        whh0_ref = refs[3]
        layer_refs = refs[4:4 + 3 * (L - 1)]
        fcw_ref = refs[n_in - 2]
        fcb_ref = refs[n_in - 1]
        out_ref = refs[n_in]
        gx_scr = refs[n_in + 1]

        # -------- fused embedding lookup + layer-0 input projection ---------
        # multi-hot rows (one 1 per categorical feature) @ pre-projected table
        lane_k = lax.broadcasted_iota(jnp.int32, (CH, K_pad), 1)
        bias0 = b0_ref[...]
        for r0 in range(0, TBp, CH):                      # static chunk loop
            idx_c = idx_ref[r0:r0 + CH, :]                # (CH, n_feat)
            m = jnp.zeros((CH, K_pad), jnp.float32)
            for f in range(n_feat):
                m = m + (idx_c[:, f:f + 1] == lane_k).astype(jnp.float32)
            gx_scr[r0:r0 + CH, :] = (
                jnp.dot(m, ptab_ref[...], preferred_element_type=jnp.float32)
                + bias0)

        # -------- static per-lane activation constants -----------------------
        # gate order (i,f,g,o): sigmoid on i/f/o, tanh on g, using
        # sigmoid(x) = 0.5*tanh(0.5*x) + 0.5  -> single EUP pass per step
        lane4 = lax.broadcasted_iota(jnp.int32, (Bp, 4 * H), 1)
        is_g = (lane4 >= 2 * H) & (lane4 < 3 * H)
        a_scale = jnp.where(is_g, 1.0, 0.5).astype(jnp.float32)
        a_shift = jnp.where(is_g, 0.0, 0.5).astype(jnp.float32)

        def cell(gates, c_prev):
            a = jnp.tanh(gates * a_scale) * a_scale + a_shift
            i_g = a[:, 0 * H:1 * H]
            f_g = a[:, 1 * H:2 * H]
            g_g = a[:, 2 * H:3 * H]
            o_g = a[:, 3 * H:4 * H]
            c_new = f_g * c_prev + i_g * g_g
            h_new = o_g * jnp.tanh(c_new)
            return h_new, c_new

        # -------- hoist recurrent weight tiles into vregs --------------------
        whh0 = whh0_ref[...]
        extra_w = []
        for l in range(1, L):
            extra_w.append((layer_refs[3 * (l - 1) + 0][...],
                            layer_refs[3 * (l - 1) + 1][...],
                            layer_refs[3 * (l - 1) + 2][...]))

        # -------- skewed wavefront recurrence: layer l runs timestep j-l -----
        zeros = jnp.zeros((Bp, H), jnp.float32)
        init = (zeros,) * (2 * L)
        n_iter = T + L - 1

        def step(j, carry):
            hs = list(carry[0::2])
            cs = list(carry[1::2])
            new = []
            for l in range(L):
                t_l = j - l
                if l == 0:
                    t_c = jnp.minimum(t_l, T - 1) if L > 1 else t_l
                    row = pl.multiple_of(t_c * Bp, Bp)
                    gates = gx_scr[pl.ds(row, Bp), :] + jnp.dot(
                        hs[0], whh0, preferred_element_type=jnp.float32)
                else:
                    wih_t, whh_t, b_l = extra_w[l - 1]
                    gates = (jnp.dot(hs[l - 1], wih_t,
                                     preferred_element_type=jnp.float32)
                             + jnp.dot(hs[l], whh_t,
                                       preferred_element_type=jnp.float32)
                             + b_l)
                h_new, c_new = cell(gates, cs[l])
                # boundary guards of the wavefront (static structure)
                conds = []
                if l > 0:
                    conds.append(t_l >= 0)
                if l < L - 1:
                    conds.append(t_l <= T - 1)
                if conds:
                    active = conds[0]
                    for c in conds[1:]:
                        active = jnp.logical_and(active, c)
                    h_new = jnp.where(active, h_new, hs[l])
                    c_new = jnp.where(active, c_new, cs[l])
                new += [h_new, c_new]
            return tuple(new)

        final = lax.fori_loop(0, n_iter, step, init,
                              unroll=True if n_iter <= 16 else 4)
        h_last = final[2 * (L - 1)]

        # -------- FC head on the final hidden state (lane-dense output) ------
        out_ref[...] = (
            jnp.dot(h_last, fcw_ref[...], preferred_element_type=jnp.float32)
            + fcb_ref[...])

    return kernel


def fused_lstm_fc(idx_flat, proj_tab, b0, whh0_t, extra_layers, fc_w_t, fc_b,
                  *, num_layers, T, Bp, H, K_pad, n_feat):
    kernel = _make_fused_kernel(num_layers, T, Bp, H, K_pad, n_feat)
    Cp = fc_w_t.shape[1]
    args = [idx_flat, proj_tab, b0, whh0_t]
    for (wih_t, whh_t, b) in extra_layers:
        args += [wih_t, whh_t, b]
    args += [fc_w_t, fc_b]
    # TODO(synk): for production-scale T the gx scratch (T*Bp*4H f32) should be
    # time-chunked / double-buffered to fit v7x's 64 MiB VMEM.
    return pl.pallas_call(
        kernel,
        out_shape=jax.ShapeDtypeStruct((Bp, Cp), jnp.float32),
        scratch_shapes=[pltpu.VMEM((T * Bp, 4 * H), jnp.float32)],
    )(*args)


# ----------------------------------------------------------------------------
# Parameter prep: embeddings pre-projected through W_ih^(0); padded weights.
# ----------------------------------------------------------------------------
def prepare_kernel_params(params):
    lstm = params["lstm"]
    H = lstm[0]["w_hh"].shape[1]
    w_ih0_t = jnp.asarray(lstm[0]["w_ih"].T, jnp.float32)        # (Din, 4H)

    emb_imo = jnp.asarray(params["emb_imo"], jnp.float32)
    emb_tgt = jnp.asarray(params["emb_target"], jnp.float32)
    emb_cls = jnp.asarray(params["emb_classification"], jnp.float32)
    emb_mon = jnp.asarray(params["emb_month_str"], jnp.float32)
    emb_til = jnp.asarray(params["emb_tiles"], jnp.float32)

    d_imo, d_tgt = emb_imo.shape[1], emb_tgt.shape[1]
    d_cls, d_mon, d_til = emb_cls.shape[1], emb_mon.shape[1], emb_til.shape[1]
    n_tiles = (w_ih0_t.shape[0] - (d_imo + d_tgt + d_cls + d_mon)) // d_til

    # Column layout of W_ih^(0) == module concat order:
    #   [imo | target | classification | month_str | tile0 .. tile{n-1}]
    feats = [(emb_imo, d_imo), (emb_tgt, d_tgt),
             (emb_cls, d_cls), (emb_mon, d_mon)] + [(emb_til, d_til)] * n_tiles

    blocks, offs = [], []
    cursor, total = 0, 0
    for table, d in feats:
        blocks.append(table @ w_ih0_t[cursor:cursor + d, :])     # (V, 4H)
        offs.append(total)
        cursor += d
        total += table.shape[0]

    proj_tab = jnp.concatenate(blocks, axis=0)                   # (K_total, 4H)
    K_total = proj_tab.shape[0]
    K_pad = _round_up(K_total, 128)
    proj_tab = jnp.pad(proj_tab, ((0, K_pad - K_total), (0, 0)))

    b0 = (lstm[0]["b_ih"] + lstm[0]["b_hh"]).reshape(1, -1).astype(jnp.float32)
    whh0_t = jnp.asarray(lstm[0]["w_hh"].T, jnp.float32)         # (H, 4H)

    extra = []
    for layer in lstm[1:]:
        extra.append((
            jnp.asarray(layer["w_ih"].T, jnp.float32),           # (H, 4H)
            jnp.asarray(layer["w_hh"].T, jnp.float32),           # (H, 4H)
            (layer["b_ih"] + layer["b_hh"]).reshape(1, -1).astype(jnp.float32),
        ))

    C = params["fc_w"].shape[0]
    Cp = _round_up(max(C, 128), 128)
    fc_w_t = jnp.zeros((H, Cp), jnp.float32).at[:, :C].set(
        jnp.asarray(params["fc_w"].T, jnp.float32))
    fc_b = jnp.zeros((1, Cp), jnp.float32).at[0, :C].set(
        jnp.asarray(params["fc_b"], jnp.float32))

    return {
        "proj_tab": proj_tab,                                    # (K_pad, 4H)
        "offsets": jnp.asarray(offs, jnp.int32),                 # (n_feat,)
        "b0": b0,
        "whh0_t": whh0_t,
        "extra_layers": tuple(extra),
        "fc_w_t": fc_w_t,
        "fc_b": fc_b,
    }


# ----------------------------------------------------------------------------
# Forward pass (only tiny int reindexing stays in XLA; everything else fused).
# ----------------------------------------------------------------------------
@functools.partial(jax.jit, static_argnames=("num_tile_features", "num_classes"))
def lstm_with_embeddings_forward(x, kparams, num_tile_features=10,
                                 num_classes=None):
    """Forward pass matching LSTMWithEmbeddings.forward (eval mode).

    x: (B, T, 14) float — integer-valued categorical codes.
    """
    x_int = x.astype(jnp.int32)
    B, T = x_int.shape[0], x_int.shape[1]
    Bp = _round_up(B, 8)                       # sublane-aligned batch padding
    n_feat = 4 + num_tile_features

    # categorical codes reordered to match the projected-table block order
    feats = jnp.concatenate([
        x_int[:, :, 0:1],                      # imo
        x_int[:, :, 3:4],                      # target
        x_int[:, :, 1:2],                      # classification
        x_int[:, :, 2:3],                      # month_str
        x_int[:, :, 4:4 + num_tile_features],  # tiles
    ], axis=2)                                 # (B, T, n_feat)

    K_pad = kparams["proj_tab"].shape[0]
    idx = feats + kparams["offsets"][None, None, :]        # combined table rows
    idx = jnp.transpose(idx, (1, 0, 2))                    # time-major (T,B,f)
    idx = jnp.pad(idx, ((0, 0), (0, Bp - B), (0, 0)),
                  constant_values=K_pad)                   # pad rows match nothing
    idx_flat = idx.reshape(T * Bp, n_feat)

    H = kparams["whh0_t"].shape[0]
    num_layers = 1 + len(kparams["extra_layers"])

    logits_p = fused_lstm_fc(
        idx_flat, kparams["proj_tab"], kparams["b0"], kparams["whh0_t"],
        kparams["extra_layers"], kparams["fc_w_t"], kparams["fc_b"],
        num_layers=num_layers, T=T, Bp=Bp, H=H, K_pad=K_pad, n_feat=n_feat)

    C = num_classes if num_classes is not None else logits_p.shape[1]
    return logits_p[:B, :C]


# ----------------------------------------------------------------------------
# Pure-JAX reference (for correctness check)
# ----------------------------------------------------------------------------
def lstm_ref_layer(x_btd, w_ih, w_hh, b_ih, b_hh):
    B, T, _ = x_btd.shape
    H = w_hh.shape[1]

    def step(carry, x_t):
        h, c = carry
        gates = x_t @ w_ih.T + b_ih + h @ w_hh.T + b_hh
        i = jax.nn.sigmoid(gates[:, 0 * H:1 * H])
        f = jax.nn.sigmoid(gates[:, 1 * H:2 * H])
        g = jnp.tanh(gates[:, 2 * H:3 * H])
        o = jax.nn.sigmoid(gates[:, 3 * H:4 * H])
        c = f * c + i * g
        h = o * jnp.tanh(c)
        return (h, c), h

    h0 = jnp.zeros((B, H), jnp.float32)
    c0 = jnp.zeros((B, H), jnp.float32)
    _, hs = jax.lax.scan(step, (h0, c0), jnp.transpose(x_btd, (1, 0, 2)))
    return jnp.transpose(hs, (1, 0, 2))


def forward_ref(x, params, num_tile_features=10):
    x_int = x.astype(jnp.int32)
    B, T = x_int.shape[0], x_int.shape[1]
    imo_e = jnp.take(params["emb_imo"], x_int[:, :, 0], axis=0)
    tgt_e = jnp.take(params["emb_target"], x_int[:, :, 3], axis=0)
    cls_e = jnp.take(params["emb_classification"], x_int[:, :, 1], axis=0)
    mon_e = jnp.take(params["emb_month_str"], x_int[:, :, 2], axis=0)
    tile_e = jnp.take(params["emb_tiles"], x_int[:, :, 4:4 + num_tile_features],
                      axis=0)
    tile_e = tile_e.reshape(B, T, -1)
    h = jnp.concatenate((imo_e, tgt_e, cls_e, mon_e, tile_e), axis=2)
    h = h.astype(jnp.float32)
    for layer in params["lstm"]:
        h = lstm_ref_layer(h, layer["w_ih"], layer["w_hh"],
                           layer["b_ih"], layer["b_hh"])
    return h[:, -1, :] @ params["fc_w"].T + params["fc_b"]


# ----------------------------------------------------------------------------
# Deterministic parameter construction (PyTorch weight layout)
# ----------------------------------------------------------------------------
def make_params(key, cfg):
    keys = iter(jax.random.split(key, 32))

    def emb(n, d, pad=None):
        w = jax.random.normal(next(keys), (n, d), jnp.float32) * 0.1
        if pad is not None:
            w = w.at[pad].set(0.0)        # padding_idx row is zero (PyTorch init)
        return w

    H = cfg["hidden_size"]
    Din = (cfg["embedding_dim_imo"] + cfg["embedding_dim_target"]
           + cfg["embedding_dim_classification"] + cfg["embedding_dim_month_str"]
           + cfg["num_tile_features"] * cfg["embedding_dim_tile"])

    lstm_layers = []
    in_size = Din
    scale = 1.0 / jnp.sqrt(H)
    for _ in range(cfg["num_stacked_layers"]):
        lstm_layers.append({
            "w_ih": jax.random.uniform(next(keys), (4 * H, in_size),
                                       jnp.float32, -scale, scale),
            "w_hh": jax.random.uniform(next(keys), (4 * H, H),
                                       jnp.float32, -scale, scale),
            "b_ih": jax.random.uniform(next(keys), (4 * H,),
                                       jnp.float32, -scale, scale),
            "b_hh": jax.random.uniform(next(keys), (4 * H,),
                                       jnp.float32, -scale, scale),
        })
        in_size = H

    return {
        "emb_imo": emb(cfg["num_imo_categories"], cfg["embedding_dim_imo"]),
        "emb_target": emb(cfg["num_target_categories"],
                          cfg["embedding_dim_target"], cfg["padding_target"]),
        "emb_classification": emb(cfg["num_classification_categories"],
                                  cfg["embedding_dim_classification"]),
        "emb_month_str": emb(cfg["num_month_str_categories"],
                             cfg["embedding_dim_month_str"],
                             cfg["padding_month_str"]),
        "emb_tiles": emb(cfg["num_tile_categories"], cfg["embedding_dim_tile"],
                         cfg["padding_tile"]),
        "lstm": lstm_layers,
        "fc_w": jax.random.uniform(next(keys), (cfg["num_classes"], H),
                                   jnp.float32, -scale, scale),
        "fc_b": jax.random.uniform(next(keys), (cfg["num_classes"],),
                                   jnp.float32, -scale, scale),
    }


# ----------------------------------------------------------------------------
if __name__ == "__main__":
    cfg = dict(
        num_imo_categories=50,
        num_target_categories=20,
        num_classification_categories=10,
        num_month_str_categories=13,
        num_tile_categories=30,
        embedding_dim_imo=8,
        embedding_dim_target=8,
        embedding_dim_classification=8,
        embedding_dim_month_str=8,
        embedding_dim_tile=4,
        hidden_size=32,
        num_stacked_layers=2,
        num_classes=5,
        padding_target=0,
        padding_month_str=0,
        padding_tile=0,
        num_tile_features=10,
        dropout_rate=0.1,
    )

    key = jax.random.PRNGKey(0)
    k_params, k_x = jax.random.split(key)
    params = make_params(k_params, cfg)
    kparams = prepare_kernel_params(params)

    B, T = 2, 8
    ks = jax.random.split(k_x, 6)
    x = jnp.concatenate([
        jax.random.randint(ks[0], (B, T, 1), 0, cfg["num_imo_categories"]),
        jax.random.randint(ks[1], (B, T, 1), 0,
                           cfg["num_classification_categories"]),
        jax.random.randint(ks[2], (B, T, 1), 0,
                           cfg["num_month_str_categories"]),
        jax.random.randint(ks[3], (B, T, 1), 0, cfg["num_target_categories"]),
        jax.random.randint(ks[4], (B, T, cfg["num_tile_features"]), 0,
                           cfg["num_tile_categories"]),
    ], axis=2).astype(jnp.float32)                    # (B, T, 14)

    out = lstm_with_embeddings_forward(
        x, kparams, num_tile_features=cfg["num_tile_features"],
        num_classes=cfg["num_classes"])
    out = jax.block_until_ready(out)

    ref = forward_ref(x, params, num_tile_features=cfg["num_tile_features"])
    assert out.shape == (B, cfg["num_classes"])
    assert jnp.allclose(out, ref, atol=5e-4, rtol=5e-4), (out, ref)

    print("KERNEL_OK")
</pallas_src>

<mosaic_0001>
module attributes {stable_mosaic.version = 11 : i64} {
  func.func @kernel(%arg0: memref<64x14xi32, #tpu.memory_space<vmem>>, %arg1: memref<512x128xf32, #tpu.memory_space<vmem>>, %arg2: memref<1x128xf32, #tpu.memory_space<vmem>>, %arg3: memref<32x128xf32, #tpu.memory_space<vmem>>, %arg4: memref<32x128xf32, #tpu.memory_space<vmem>>, %arg5: memref<32x128xf32, #tpu.memory_space<vmem>>, %arg6: memref<1x128xf32, #tpu.memory_space<vmem>>, %arg7: memref<32x128xf32, #tpu.memory_space<vmem>>, %arg8: memref<1x128xf32, #tpu.memory_space<vmem>>, %arg9: memref<8x128xf32, #tpu.memory_space<vmem>>, %arg10: memref<64x128xf32, #tpu.memory_space<vmem>>) attributes {dimension_semantics = [], scalar_prefetch = 0 : i64, scratch_operands = 1 : i64, tpu.core_type = #tpu.core_type<tc>} {
    %0 = tpu.iota {dimensions = array<i32: 1>} : vector<8x512xi32>
    %c0 = arith.constant 0 : index
    %c0_0 = arith.constant 0 : index
    %1 = vector.load %arg2[%c0, %c0_0] : memref<1x128xf32, #tpu.memory_space<vmem>>, vector<1x128xf32>
    %c0_1 = arith.constant 0 : index
    %c0_2 = arith.constant 0 : index
    %2 = vector.load %arg0[%c0_1, %c0_2] : memref<64x14xi32, #tpu.memory_space<vmem>>, vector<8x14xi32>
    %cst = arith.constant 0.000000e+00 : f32
    %3 = vector.broadcast %cst : f32 to vector<8x512xf32>
    %4 = vector.extract_strided_slice %2 {offsets = [0, 0], sizes = [8, 1], strides = [1, 1]} : vector<8x14xi32> to vector<8x1xi32>
    %5 = vector.broadcast %4 : vector<8x1xi32> to vector<8x512xi32>
    %6 = arith.cmpi eq, %5, %0 : vector<8x512xi32>
    %7 = arith.extui %6 : vector<8x512xi1> to vector<8x512xi32>
    %8 = arith.sitofp %7 : vector<8x512xi32> to vector<8x512xf32>
    %9 = arith.addf %3, %8 : vector<8x512xf32>
    %10 = vector.extract_strided_slice %2 {offsets = [0, 1], sizes = [8, 1], strides = [1, 1]} : vector<8x14xi32> to vector<8x1xi32>
    %11 = vector.broadcast %10 : vector<8x1xi32> to vector<8x512xi32>
    %12 = arith.cmpi eq, %11, %0 : vector<8x512xi32>
    %13 = arith.extui %12 : vector<8x512xi1> to vector<8x512xi32>
    %14 = arith.sitofp %13 : vector<8x512xi32> to vector<8x512xf32>
    %15 = arith.addf %9, %14 : vector<8x512xf32>
    %16 = vector.extract_strided_slice %2 {offsets = [0, 2], sizes = [8, 1], strides = [1, 1]} : vector<8x14xi32> to vector<8x1xi32>
    %17 = vector.broadcast %16 : vector<8x1xi32> to vector<8x512xi32>
    %18 = arith.cmpi eq, %17, %0 : vector<8x512xi32>
    %19 = arith.extui %18 : vector<8x512xi1> to vector<8x512xi32>
    %20 = arith.sitofp %19 : vector<8x512xi32> to vector<8x512xf32>
    %21 = arith.addf %15, %20 : vector<8x512xf32>
    %22 = vector.extract_strided_slice %2 {offsets = [0, 3], sizes = [8, 1], strides = [1, 1]} : vector<8x14xi32> to vector<8x1xi32>
    %23 = vector.broadcast %22 : vector<8x1xi32> to vector<8x512xi32>
    %24 = arith.cmpi eq, %23, %0 : vector<8x512xi32>
    %25 = arith.extui %24 : vector<8x512xi1> to vector<8x512xi32>
    %26 = arith.sitofp %25 : vector<8x512xi32> to vector<8x512xf32>
    %27 = arith.addf %21, %26 : vector<8x512xf32>
    %28 = vector.extract_strided_slice %2 {offsets = [0, 4], sizes = [8, 1], strides = [1, 1]} : vector<8x14xi32> to vector<8x1xi32>
    %29 = vector.broadcast %28 : vector<8x1xi32> to vector<8x512xi32>
    %30 = arith.cmpi eq, %29, %0 : vector<8x512xi32>
    %31 = arith.extui %30 : vector<8x512xi1> to vector<8x512xi32>
    %32 = arith.sitofp %31 : vector<8x512xi32> to vector<8x512xf32>
    %33 = arith.addf %27, %32 : vector<8x512xf32>
    %34 = vector.extract_strided_slice %2 {offsets = [0, 5], sizes = [8, 1], strides = [1, 1]} : vector<8x14xi32> to vector<8x1xi32>
    %35 = vector.broadcast %34 : vector<8x1xi32> to vector<8x512xi32>
    %36 = arith.cmpi eq, %35, %0 : vector<8x512xi32>
    %37 = arith.extui %36 : vector<8x512xi1> to vector<8x512xi32>
    %38 = arith.sitofp %37 : vector<8x512xi32> to vector<8x512xf32>
    %39 = arith.addf %33, %38 : vector<8x512xf32>
    %40 = vector.extract_strided_slice %2 {offsets = [0, 6], sizes = [8, 1], strides = [1, 1]} : vector<8x14xi32> to vector<8x1xi32>
    %41 = vector.broadcast %40 : vector<8x1xi32> to vector<8x512xi32>
    %42 = arith.cmpi eq, %41, %0 : vector<8x512xi32>
    %43 = arith.extui %42 : vector<8x512xi1> to vector<8x512xi32>
    %44 = arith.sitofp %43 : vector<8x512xi32> to vector<8x512xf32>
    %45 = arith.addf %39, %44 : vector<8x512xf32>
    %46 = vector.extract_strided_slice %2 {offsets = [0, 7], sizes = [8, 1], strides = [1, 1]} : vector<8x14xi32> to vector<8x1xi32>
    %47 = vector.broadcast %46 : vector<8x1xi32> to vector<8x512xi32>
    %48 = arith.cmpi eq, %47, %0 : vector<8x512xi32>
    %49 = arith.extui %48 : vector<8x512xi1> to vector<8x512xi32>
    %50 = arith.sitofp %49 : vector<8x512xi32> to vector<8x512xf32>
    %51 = arith.addf %45, %50 : vector<8x512xf32>
    %52 = vector.extract_strided_slice %2 {offsets = [0, 8], sizes = [8, 1], strides = [1, 1]} : vector<8x14xi32> to vector<8x1xi32>
    %53 = vector.broadcast %52 : vector<8x1xi32> to vector<8x512xi32>
    %54 = arith.cmpi eq, %53, %0 : vector<8x512xi32>
    %55 = arith.extui %54 : vector<8x512xi1> to vector<8x512xi32>
    %56 = arith.sitofp %55 : vector<8x512xi32> to vector<8x512xf32>
    %57 = arith.addf %51, %56 : vector<8x512xf32>
    %58 = vector.extract_strided_slice %2 {offsets = [0, 9], sizes = [8, 1], strides = [1, 1]} : vector<8x14xi32> to vector<8x1xi32>
    %59 = vector.broadcast %58 : vector<8x1xi32> to vector<8x512xi32>
    %60 = arith.cmpi eq, %59, %0 : vector<8x512xi32>
    %61 = arith.extui %60 : vector<8x512xi1> to vector<8x512xi32>
    %62 = arith.sitofp %61 : vector<8x512xi32> to vector<8x512xf32>
    %63 = arith.addf %57, %62 : vector<8x512xf32>
    %64 = vector.extract_strided_slice %2 {offsets = [0, 10], sizes = [8, 1], strides = [1, 1]} : vector<8x14xi32> to vector<8x1xi32>
    %65 = vector.broadcast %64 : vector<8x1xi32> to vector<8x512xi32>
    %66 = arith.cmpi eq, %65, %0 : vector<8x512xi32>
    %67 = arith.extui %66 : vector<8x512xi1> to vector<8x512xi32>
    %68 = arith.sitofp %67 : vector<8x512xi32> to vector<8x512xf32>
    %69 = arith.addf %63, %68 : vector<8x512xf32>
    %70 = vector.extract_strided_slice %2 {offsets = [0, 11], sizes = [8, 1], strides = [1, 1]} : vector<8x14xi32> to vector<8x1xi32>
    %71 = vector.broadcast %70 : vector<8x1xi32> to vector<8x512xi32>
    %72 = arith.cmpi eq, %71, %0 : vector<8x512xi32>
    %73 = arith.extui %72 : vector<8x512xi1> to vector<8x512xi32>
    %74 = arith.sitofp %73 : vector<8x512xi32> to vector<8x512xf32>
    %75 = arith.addf %69, %74 : vector<8x512xf32>
    %76 = vector.extract_strided_slice %2 {offsets = [0, 12], sizes = [8, 1], strides = [1, 1]} : vector<8x14xi32> to vector<8x1xi32>
    %77 = vector.broadcast %76 : vector<8x1xi32> to vector<8x512xi32>
    %78 = arith.cmpi eq, %77, %0 : vector<8x512xi32>
    %79 = arith.extui %78 : vector<8x512xi1> to vector<8x512xi32>
    %80 = arith.sitofp %79 : vector<8x512xi32> to vector<8x512xf32>
    %81 = arith.addf %75, %80 : vector<8x512xf32>
    %82 = vector.extract_strided_slice %2 {offsets = [0, 13], sizes = [8, 1], strides = [1, 1]} : vector<8x14xi32> to vector<8x1xi32>
    %83 = vector.broadcast %82 : vector<8x1xi32> to vector<8x512xi32>
    %84 = arith.cmpi eq, %83, %0 : vector<8x512xi32>
    %85 = arith.extui %84 : vector<8x512xi1> to vector<8x512xi32>
    %86 = arith.sitofp %85 : vector<8x512xi32> to vector<8x512xf32>
    %87 = arith.addf %81, %86 : vector<8x512xf32>
    %c0_3 = arith.constant 0 : index
    %c0_4 = arith.constant 0 : index
    %88 = vector.load %arg1[%c0_3, %c0_4] : memref<512x128xf32, #tpu.memory_space<vmem>>, vector<512x128xf32>
    %cst_5 = arith.constant dense<0.000000e+00> : vector<8x128xf32>
    %89 = tpu.matmul %87, %88, %cst_5 {dimension_numbers = #tpu.dot_dimension_numbers<[1], [0], [0], [1], [0, 0, 1, 1], [], []>} : vector<8x512xf32>, vector<512x128xf32>, vector<8x128xf32> -> vector<8x128xf32>
    %90 = vector.broadcast %1 : vector<1x128xf32> to vector<8x128xf32>
    %91 = arith.addf %89, %90 : vector<8x128xf32>
    %c0_6 = arith.constant 0 : index
    %c0_7 = arith.constant 0 : index
    %92 = vector.load %arg10[%c0_6, %c0_7] : memref<64x128xf32, #tpu.memory_space<vmem>>, vector<8x128xf32>
    tpu.vector_store %arg10[%c0_6, %c0_7], %91 {strides = array<i32>} : memref<64x128xf32, #tpu.memory_space<vmem>>, vector<8x128xf32>,
    %c8 = arith.constant 8 : index
    %c0_8 = arith.constant 0 : index
    %93 = vector.load %arg0[%c8, %c0_8] : memref<64x14xi32, #tpu.memory_space<vmem>>, vector<8x14xi32>
    %cst_9 = arith.constant 0.000000e+00 : f32
    %94 = vector.broadcast %cst_9 : f32 to vector<8x512xf32>
    %95 = vector.extract_strided_slice %93 {offsets = [0, 0], sizes = [8, 1], strides = [1, 1]} : vector<8x14xi32> to vector<8x1xi32>
    %96 = vector.broadcast %95 : vector<8x1xi32> to vector<8x512xi32>
    %97 = arith.cmpi eq, %96, %0 : vector<8x512xi32>
    %98 = arith.extui %97 : vector<8x512xi1> to vector<8x512xi32>
    %99 = arith.sitofp %98 : vector<8x512xi32> to vector<8x512xf32>
    %100 = arith.addf %94, %99 : vector<8x512xf32>
    %101 = vector.extract_strided_slice %93 {offsets = [0, 1], sizes = [8, 1], strides = [1, 1]} : vector<8x14xi32> to vector<8x1xi32>
    %102 = vector.broadcast %101 : vector<8x1xi32> to vector<8x512xi32>
    %103 = arith.cmpi eq, %102, %0 : vector<8x512xi32>
    %104 = arith.extui %103 : vector<8x512xi1> to vector<8x512xi32>
    %105 = arith.sitofp %104 : vector<8x512xi32> to vector<8x512xf32>
    %106 = arith.addf %100, %105 : vector<8x512xf32>
    %107 = vector.extract_strided_slice %93 {offsets = [0, 2], sizes = [8, 1], strides = [1, 1]} : vector<8x14xi32> to vector<8x1xi32>
    %108 = vector.broadcast %107 : vector<8x1xi32> to vector<8x512xi32>
    %109 = arith.cmpi eq, %108, %0 : vector<8x512xi32>
    %110 = arith.extui %109 : vector<8x512xi1> to vector<8x512xi32>
    %111 = arith.sitofp %110 : vector<8x512xi32> to vector<8x512xf32>
    %112 = arith.addf %106, %111 : vector<8x512xf32>
    %113 = vector.extract_strided_slice %93 {offsets = [0, 3], sizes = [8, 1], strides = [1, 1]} : vector<8x14xi32> to vector<8x1xi32>
    %114 = vector.broadcast %113 : vector<8x1xi32> to vector<8x512xi32>
    %115 = arith.cmpi eq, %114, %0 : vector<8x512xi32>
    %116 = arith.extui %115 : vector<8x512xi1> to vector<8x512xi32>
    %117 = arith.sitofp %116 : vector<8x512xi32> to vector<8x512xf32>
    %118 = arith.addf %112, %117 : vector<8x512xf32>
    %119 = vector.extract_strided_slice %93 {offsets = [0, 4], sizes = [8, 1], strides = [1, 1]} : vector<8x14xi32> to vector<8x1xi32>
    %120 = vector.broadcast %119 : vector<8x1xi32> to vector<8x512xi32>
    %121 = arith.cmpi eq, %120, %0 : vector<8x512xi32>
    %122 = arith.extui %121 : vector<8x512xi1> to vector<8x512xi32>
    %123 = arith.sitofp %122 : vector<8x512xi32> to vector<8x512xf32>
    %124 = arith.addf %118, %123 : vector<8x512xf32>
    %125 = vector.extract_strided_slice %93 {offsets = [0, 5], sizes = [8, 1], strides = [1, 1]} : vector<8x14xi32> to vector<8x1xi32>
    %126 = vector.broadcast %125 : vector<8x1xi32> to vector<8x512xi32>
    %127 = arith.cmpi eq, %126, %0 : vector<8x512xi32>
    %128 = arith.extui %127 : vector<8x512xi1> to vector<8x512xi32>
    %129 = arith.sitofp %128 : vector<8x512xi32> to vector<8x512xf32>
    %130 = arith.addf %124, %129 : vector<8x512xf32>
    %131 = vector.extract_strided_slice %93 {offsets = [0, 6], sizes = [8, 1], strides = [1, 1]} : vector<8x14xi32> to vector<8x1xi32>
    %132 = vector.broadcast %131 : vector<8x1xi32> to vector<8x512xi32>
    %133 = arith.cmpi eq, %132, %0 : vector<8x512xi32>
    %134 = arith.extui %133 : vector<8x512xi1> to vector<8x512xi32>
    %135 = arith.sitofp %134 : vector<8x512xi32> to vector<8x512xf32>
    %136 = arith.addf %130, %135 : vector<8x512xf32>
    %137 = vector.extract_strided_slice %93 {offsets = [0, 7], sizes = [8, 1], strides = [1, 1]} : vector<8x14xi32> to vector<8x1xi32>
    %138 = vector.broadcast %137 : vector<8x1xi32> to vector<8x512xi32>
    %139 = arith.cmpi eq, %138, %0 : vector<8x512xi32>
    %140 = arith.extui %139 : vector<8x512xi1> to vector<8x512xi32>
    %141 = arith.sitofp %140 : vector<8x512xi32> to vector<8x512xf32>
    %142 = arith.addf %136, %141 : vector<8x512xf32>
    %143 = vector.extract_strided_slice %93 {offsets = [0, 8], sizes = [8, 1], strides = [1, 1]} : vector<8x14xi32> to vector<8x1xi32>
    %144 = vector.broadcast %143 : vector<8x1xi32> to vector<8x512xi32>
    %145 = arith.cmpi eq, %144, %0 : vector<8x512xi32>
    %146 = arith.extui %145 : vector<8x512xi1> to vector<8x512xi32>
    %147 = arith.sitofp %146 : vector<8x512xi32> to vector<8x512xf32>
    %148 = arith.addf %142, %147 : vector<8x512xf32>
    %149 = vector.extract_strided_slice %93 {offsets = [0, 9], sizes = [8, 1], strides = [1, 1]} : vector<8x14xi32> to vector<8x1xi32>
    %150 = vector.broadcast %149 : vector<8x1xi32> to vector<8x512xi32>
    %151 = arith.cmpi eq, %150, %0 : vector<8x512xi32>
    %152 = arith.extui %151 : vector<8x512xi1> to vector<8x512xi32>
    %153 = arith.sitofp %152 : vector<8x512xi32> to vector<8x512xf32>
    %154 = arith.addf %148, %153 : vector<8x512xf32>
    %155 = vector.extract_strided_slice %93 {offsets = [0, 10], sizes = [8, 1], strides = [1, 1]} : vector<8x14xi32> to vector<8x1xi32>
    %156 = vector.broadcast %155 : vector<8x1xi32> to vector<8x512xi32>
    %157 = arith.cmpi eq, %156, %0 : vector<8x512xi32>
    %158 = arith.extui %157 : vector<8x512xi1> to vector<8x512xi32>
    %159 = arith.sitofp %158 : vector<8x512xi32> to vector<8x512xf32>
    %160 = arith.addf %154, %159 : vector<8x512xf32>
    %161 = vector.extract_strided_slice %93 {offsets = [0, 11], sizes = [8, 1], strides = [1, 1]} : vector<8x14xi32> to vector<8x1xi32>
    %162 = vector.broadcast %161 : vector<8x1xi32> to vector<8x512xi32>
    %163 = arith.cmpi eq, %162, %0 : vector<8x512xi32>
    %164 = arith.extui %163 : vector<8x512xi1> to vector<8x512xi32>
    %165 = arith.sitofp %164 : vector<8x512xi32> to vector<8x512xf32>
    %166 = arith.addf %160, %165 : vector<8x512xf32>
    %167 = vector.extract_strided_slice %93 {offsets = [0, 12], sizes = [8, 1], strides = [1, 1]} : vector<8x14xi32> to vector<8x1xi32>
    %168 = vector.broadcast %167 : vector<8x1xi32> to vector<8x512xi32>
    %169 = arith.cmpi eq, %168, %0 : vector<8x512xi32>
    %170 = arith.extui %169 : vector<8x512xi1> to vector<8x512xi32>
    %171 = arith.sitofp %170 : vector<8x512xi32> to vector<8x512xf32>
    %172 = arith.addf %166, %171 : vector<8x512xf32>
    %173 = vector.extract_strided_slice %93 {offsets = [0, 13], sizes = [8, 1], strides = [1, 1]} : vector<8x14xi32> to vector<8x1xi32>
    %174 = vector.broadcast %173 : vector<8x1xi32> to vector<8x512xi32>
    %175 = arith.cmpi eq, %174, %0 : vector<8x512xi32>
    %176 = arith.extui %175 : vector<8x512xi1> to vector<8x512xi32>
    %177 = arith.sitofp %176 : vector<8x512xi32> to vector<8x512xf32>
    %178 = arith.addf %172, %177 : vector<8x512xf32>
    %c0_10 = arith.constant 0 : index
    %c0_11 = arith.constant 0 : index
    %179 = vector.load %arg1[%c0_10, %c0_11] : memref<512x128xf32, #tpu.memory_space<vmem>>, vector<512x128xf32>
    %cst_12 = arith.constant dense<0.000000e+00> : vector<8x128xf32>
    %180 = tpu.matmul %178, %179, %cst_12 {dimension_numbers = #tpu.dot_dimension_numbers<[1], [0], [0], [1], [0, 0, 1, 1], [], []>} : vector<8x512xf32>, vector<512x128xf32>, vector<8x128xf32> -> vector<8x128xf32>
    %181 = vector.broadcast %1 : vector<1x128xf32> to vector<8x128xf32>
    %182 = arith.addf %180, %181 : vector<8x128xf32>
    %c8_13 = arith.constant 8 : index
    %c0_14 = arith.constant 0 : index
    %183 = vector.load %arg10[%c8_13, %c0_14] : memref<64x128xf32, #tpu.memory_space<vmem>>, vector<8x128xf32>
    tpu.vector_store %arg10[%c8_13, %c0_14], %182 {strides = array<i32>} : memref<64x128xf32, #tpu.memory_space<vmem>>, vector<8x128xf32>,
    %c16 = arith.constant 16 : index
    %c0_15 = arith.constant 0 : index
    %184 = vector.load %arg0[%c16, %c0_15] : memref<64x14xi32, #tpu.memory_space<vmem>>, vector<8x14xi32>
    %cst_16 = arith.constant 0.000000e+00 : f32
    %185 = vector.broadcast %cst_16 : f32 to vector<8x512xf32>
    %186 = vector.extract_strided_slice %184 {offsets = [0, 0], sizes = [8, 1], strides = [1, 1]} : vector<8x14xi32> to vector<8x1xi32>
    %187 = vector.broadcast %186 : vector<8x1xi32> to vector<8x512xi32>
    %188 = arith.cmpi eq, %187, %0 : vector<8x512xi32>
    %189 = arith.extui %188 : vector<8x512xi1> to vector<8x512xi32>
    %190 = arith.sitofp %189 : vector<8x512xi32> to vector<8x512xf32>
    %191 = arith.addf %185, %190 : vector<8x512xf32>
    %192 = vector.extract_strided_slice %184 {offsets = [0, 1], sizes = [8, 1], strides = [1, 1]} : vector<8x14xi32> to vector<8x1xi32>
    %193 = vector.broadcast %192 : vector<8x1xi32> to vector<8x512xi32>
    %194 = arith.cmpi eq, %193, %0 : vector<8x512xi32>
    %195 = arith.extui %194 : vector<8x512xi1> to vector<8x512xi32>
    %196 = arith.sitofp %195 : vector<8x512xi32> to vector<8x512xf32>
    %197 = arith.addf %191, %196 : vector<8x512xf32>
    %198 = vector.extract_strided_slice %184 {offsets = [0, 2], sizes = [8, 1], strides = [1, 1]} : vector<8x14xi32> to vector<8x1xi32>
    %199 = vector.broadcast %198 : vector<8x1xi32> to vector<8x512xi32>
    %200 = arith.cmpi eq, %199, %0 : vector<8x512xi32>
    %201 = arith.extui %200 : vector<8x512xi1> to vector<8x512xi32>
    %202 = arith.sitofp %201 : vector<8x512xi32> to vector<8x512xf32>
    %203 = arith.addf %197, %202 : vector<8x512xf32>
    %204 = vector.extract_strided_slice %184 {offsets = [0, 3], sizes = [8, 1], strides = [1, 1]} : vector<8x14xi32> to vector<8x1xi32>
    %205 = vector.broadcast %204 : vector<8x1xi32> to vector<8x512xi32>
    %206 = arith.cmpi eq, %205, %0 : vector<8x512xi32>
    %207 = arith.extui %206 : vector<8x512xi1> to vector<8x512xi32>
    %208 = arith.sitofp %207 : vector<8x512xi32> to vector<8x512xf32>
    %209 = arith.addf %203, %208 : vector<8x512xf32>
    %210 = vector.extract_strided_slice %184 {offsets = [0, 4], sizes = [8, 1], strides = [1, 1]} : vector<8x14xi32> to vector<8x1xi32>
    %211 = vector.broadcast %210 : vector<8x1xi32> to vector<8x512xi32>
    %212 = arith.cmpi eq, %211, %0 : vector<8x512xi32>
    %213 = arith.extui %212 : vector<8x512xi1> to vector<8x512xi32>
    %214 = arith.sitofp %213 : vector<8x512xi32> to vector<8x512xf32>
    %215 = arith.addf %209, %214 : vector<8x512xf32>
    %216 = vector.extract_strided_slice %184 {offsets = [0, 5], sizes = [8, 1], strides = [1, 1]} : vector<8x14xi32> to vector<8x1xi32>
    %217 = vector.broadcast %216 : vector<8x1xi32> to vector<8x512xi32>
    %218 = arith.cmpi eq, %217, %0 : vector<8x512xi32>
    %219 = arith.extui %218 : vector<8x512xi1> to vector<8x512xi32>
    %220 = arith.sitofp %219 : vector<8x512xi32> to vector<8x512xf32>
    %221 = arith.addf %215, %220 : vector<8x512xf32>
    %222 = vector.extract_strided_slice %184 {offsets = [0, 6], sizes = [8, 1], strides = [1, 1]} : vector<8x14xi32> to vector<8x1xi32>
    %223 = vector.broadcast %222 : vector<8x1xi32> to vector<8x512xi32>
    %224 = arith.cmpi eq, %223, %0 : vector<8x512xi32>
    %225 = arith.extui %224 : vector<8x512xi1> to vector<8x512xi32>
    %226 = arith.sitofp %225 : vector<8x512xi32> to vector<8x512xf32>
    %227 = arith.addf %221, %226 : vector<8x512xf32>
    %228 = vector.extract_strided_slice %184 {offsets = [0, 7], sizes = [8, 1], strides = [1, 1]} : vector<8x14xi32> to vector<8x1xi32>
    %229 = vector.broadcast %228 : vector<8x1xi32> to vector<8x512xi32>
    %230 = arith.cmpi eq, %229, %0 : vector<8x512xi32>
    %231 = arith.extui %230 : vector<8x512xi1> to vector<8x512xi32>
    %232 = arith.sitofp %231 : vector<8x512xi32> to vector<8x512xf32>
    %233 = arith.addf %227, %232 : vector<8x512xf32>
    %234 = vector.extract_strided_slice %184 {offsets = [0, 8], sizes = [8, 1], strides = [1, 1]} : vector<8x14xi32> to vector<8x1xi32>
    %235 = vector.broadcast %234 : vector<8x1xi32> to vector<8x512xi32>
    %236 = arith.cmpi eq, %235, %0 : vector<8x512xi32>
    %237 = arith.extui %236 : vector<8x512xi1> to vector<8x512xi32>
    %238 = arith.sitofp %237 : vector<8x512xi32> to vector<8x512xf32>
    %239 = arith.addf %233, %238 : vector<8x512xf32>
    %240 = vector.extract_strided_slice %184 {offsets = [0, 9], sizes = [8, 1], strides = [1, 1]} : vector<8x14xi32> to vector<8x1xi32>
    %241 = vector.broadcast %240 : vector<8x1xi32> to vector<8x512xi32>
    %242 = arith.cmpi eq, %241, %0 : vector<8x512xi32>
    %243 = arith.extui %242 : vector<8x512xi1> to vector<8x512xi32>
    %244 = arith.sitofp %243 : vector<8x512xi32> to vector<8x512xf32>
    %245 = arith.addf %239, %244 : vector<8x512xf32>
    %246 = vector.extract_strided_slice %184 {offsets = [0, 10], sizes = [8, 1], strides = [1, 1]} : vector<8x14xi32> to vector<8x1xi32>
    %247 = vector.broadcast %246 : vector<8x1xi32> to vector<8x512xi32>
    %248 = arith.cmpi eq, %247, %0 : vector<8x512xi32>
    %249 = arith.extui %248 : vector<8x512xi1> to vector<8x512xi32>
    %250 = arith.sitofp %249 : vector<8x512xi32> to vector<8x512xf32>
    %251 = arith.addf %245, %250 : vector<8x512xf32>
    %252 = vector.extract_strided_slice %184 {offsets = [0, 11], sizes = [8, 1], strides = [1, 1]} : vector<8x14xi32> to vector<8x1xi32>
    %253 = vector.broadcast %252 : vector<8x1xi32> to vector<8x512xi32>
    %254 = arith.cmpi eq, %253, %0 : vector<8x512xi32>
    %255 = arith.extui %254 : vector<8x512xi1> to vector<8x512xi32>
    %256 = arith.sitofp %255 : vector<8x512xi32> to vector<8x512xf32>
    %257 = arith.addf %251, %256 : vector<8x512xf32>
    %258 = vector.extract_strided_slice %184 {offsets = [0, 12], sizes = [8, 1], strides = [1, 1]} : vector<8x14xi32> to vector<8x1xi32>
    %259 = vector.broadcast %258 : vector<8x1xi32> to vector<8x512xi32>
    %260 = arith.cmpi eq, %259, %0 : vector<8x512xi32>
    %261 = arith.extui %260 : vector<8x512xi1> to vector<8x512xi32>
    %262 = arith.sitofp %261 : vector<8x512xi32> to vector<8x512xf32>
    %263 = arith.addf %257, %262 : vector<8x512xf32>
    %264 = vector.extract_strided_slice %184 {offsets = [0, 13], sizes = [8, 1], strides = [1, 1]} : vector<8x14xi32> to vector<8x1xi32>
    %265 = vector.broadcast %264 : vector<8x1xi32> to vector<8x512xi32>
    %266 = arith.cmpi eq, %265, %0 : vector<8x512xi32>
    %267 = arith.extui %266 : vector<8x512xi1> to vector<8x512xi32>
    %268 = arith.sitofp %267 : vector<8x512xi32> to vector<8x512xf32>
    %269 = arith.addf %263, %268 : vector<8x512xf32>
    %c0_17 = arith.constant 0 : index
    %c0_18 = arith.constant 0 : index
    %270 = vector.load %arg1[%c0_17, %c0_18] : memref<512x128xf32, #tpu.memory_space<vmem>>, vector<512x128xf32>
    %cst_19 = arith.constant dense<0.000000e+00> : vector<8x128xf32>
    %271 = tpu.matmul %269, %270, %cst_19 {dimension_numbers = #tpu.dot_dimension_numbers<[1], [0], [0], [1], [0, 0, 1, 1], [], []>} : vector<8x512xf32>, vector<512x128xf32>, vector<8x128xf32> -> vector<8x128xf32>
    %272 = vector.broadcast %1 : vector<1x128xf32> to vector<8x128xf32>
    %273 = arith.addf %271, %272 : vector<8x128xf32>
    %c16_20 = arith.constant 16 : index
    %c0_21 = arith.constant 0 : index
    %274 = vector.load %arg10[%c16_20, %c0_21] : memref<64x128xf32, #tpu.memory_space<vmem>>, vector<8x128xf32>
    tpu.vector_store %arg10[%c16_20, %c0_21], %273 {strides = array<i32>} : memref<64x128xf32, #tpu.memory_space<vmem>>, vector<8x128xf32>,
    %c24 = arith.constant 24 : index
    %c0_22 = arith.constant 0 : index
    %275 = vector.load %arg0[%c24, %c0_22] : memref<64x14xi32, #tpu.memory_space<vmem>>, vector<8x14xi32>
    %cst_23 = arith.constant 0.000000e+00 : f32
    %276 = vector.broadcast %cst_23 : f32 to vector<8x512xf32>
    %277 = vector.extract_strided_slice %275 {offsets = [0, 0], sizes = [8, 1], strides = [1, 1]} : vector<8x14xi32> to vector<8x1xi32>
    %278 = vector.broadcast %277 : vector<8x1xi32> to vector<8x512xi32>
    %279 = arith.cmpi eq, %278, %0 : vector<8x512xi32>
    %280 = arith.extui %279 : vector<8x512xi1> to vector<8x512xi32>
    %281 = arith.sitofp %280 : vector<8x512xi32> to vector<8x512xf32>
    %282 = arith.addf %276, %281 : vector<8x512xf32>
    %283 = vector.extract_strided_slice %275 {offsets = [0, 1], sizes = [8, 1], strides = [1, 1]} : vector<8x14xi32> to vector<8x1xi32>
    %284 = vector.broadcast %283 : vector<8x1xi32> to vector<8x512xi32>
    %285 = arith.cmpi eq, %284, %0 : vector<8x512xi32>
    %286 = arith.extui %285 : vector<8x512xi1> to vector<8x512xi32>
    %287 = arith.sitofp %286 : vector<8x512xi32> to vector<8x512xf32>
    %288 = arith.addf %282, %287 : vector<8x512xf32>
    %289 = vector.extract_strided_slice %275 {offsets = [0, 2], sizes = [8, 1], strides = [1, 1]} : vector<8x14xi32> to vector<8x1xi32>
    %290 = vector.broadcast %289 : vector<8x1xi32> to vector<8x512xi32>
    %291 = arith.cmpi eq, %290, %0 : vector<8x512xi32>
    %292 = arith.extui %291 : vector<8x512xi1> to vector<8x512xi32>
    %293 = arith.sitofp %292 : vector<8x512xi32> to vector<8x512xf32>
    %294 = arith.addf %288, %293 : vector<8x512xf32>
    %295 = vector.extract_strided_slice %275 {offsets = [0, 3], sizes = [8, 1], strides = [1, 1]} : vector<8x14xi32> to vector<8x1xi32>
    %296 = vector.broadcast %295 : vector<8x1xi32> to vector<8x512xi32>
    %297 = arith.cmpi eq, %296, %0 : vector<8x512xi32>
    %298 = arith.extui %297 : vector<8x512xi1> to vector<8x512xi32>
    %299 = arith.sitofp %298 : vector<8x512xi32> to vector<8x512xf32>
    %300 = arith.addf %294, %299 : vector<8x512xf32>
    %301 = vector.extract_strided_slice %275 {offsets = [0, 4], sizes = [8, 1], strides = [1, 1]} : vector<8x14xi32> to vector<8x1xi32>
    %302 = vector.broadcast %301 : vector<8x1xi32> to vector<8x512xi32>
    %303 = arith.cmpi eq, %302, %0 : vector<8x512xi32>
    %304 = arith.extui %303 : vector<8x512xi1> to vector<8x512xi32>
    %305 = arith.sitofp %304 : vector<8x512xi32> to vector<8x512xf32>
    %306 = arith.addf %300, %305 : vector<8x512xf32>
    %307 = vector.extract_strided_slice %275 {offsets = [0, 5], sizes = [8, 1], strides = [1, 1]} : vector<8x14xi32> to vector<8x1xi32>
    %308 = vector.broadcast %307 : vector<8x1xi32> to vector<8x512xi32>
    %309 = arith.cmpi eq, %308, %0 : vector<8x512xi32>
    %310 = arith.extui %309 : vector<8x512xi1> to vector<8x512xi32>
    %311 = arith.sitofp %310 : vector<8x512xi32> to vector<8x512xf32>
    %312 = arith.addf %306, %311 : vector<8x512xf32>
    %313 = vector.extract_strided_slice %275 {offsets = [0, 6], sizes = [8, 1], strides = [1, 1]} : vector<8x14xi32> to vector<8x1xi32>
    %314 = vector.broadcast %313 : vector<8x1xi32> to vector<8x512xi32>
    %315 = arith.cmpi eq, %314, %0 : vector<8x512xi32>
    %316 = arith.extui %315 : vector<8x512xi1> to vector<8x512xi32>
    %317 = arith.sitofp %316 : vector<8x512xi32> to vector<8x512xf32>
    %318 = arith.addf %312, %317 : vector<8x512xf32>
    %319 = vector.extract_strided_slice %275 {offsets = [0, 7], sizes = [8, 1], strides = [1, 1]} : vector<8x14xi32> to vector<8x1xi32>
    %320 = vector.broadcast %319 : vector<8x1xi32> to vector<8x512xi32>
    %321 = arith.cmpi eq, %320, %0 : vector<8x512xi32>
    %322 = arith.extui %321 : vector<8x512xi1> to vector<8x512xi32>
    %323 = arith.sitofp %322 : vector<8x512xi32> to vector<8x512xf32>
    %324 = arith.addf %318, %323 : vector<8x512xf32>
    %325 = vector.extract_strided_slice %275 {offsets = [0, 8], sizes = [8, 1], strides = [1, 1]} : vector<8x14xi32> to vector<8x1xi32>
    %326 = vector.broadcast %325 : vector<8x1xi32> to vector<8x512xi32>
    %327 = arith.cmpi eq, %326, %0 : vector<8x512xi32>
    %328 = arith.extui %327 : vector<8x512xi1> to vector<8x512xi32>
    %329 = arith.sitofp %328 : vector<8x512xi32> to vector<8x512xf32>
    %330 = arith.addf %324, %329 : vector<8x512xf32>
    %331 = vector.extract_strided_slice %275 {offsets = [0, 9], sizes = [8, 1], strides = [1, 1]} : vector<8x14xi32> to vector<8x1xi32>
    %332 = vector.broadcast %331 : vector<8x1xi32> to vector<8x512xi32>
    %333 = arith.cmpi eq, %332, %0 : vector<8x512xi32>
    %334 = arith.extui %333 : vector<8x512xi1> to vector<8x512xi32>
    %335 = arith.sitofp %334 : vector<8x512xi32> to vector<8x512xf32>
    %336 = arith.addf %330, %335 : vector<8x512xf32>
    %337 = vector.extract_strided_slice %275 {offsets = [0, 10], sizes = [8, 1], strides = [1, 1]} : vector<8x14xi32> to vector<8x1xi32>
    %338 = vector.broadcast %337 : vector<8x1xi32> to vector<8x512xi32>
    %339 = arith.cmpi eq, %338, %0 : vector<8x512xi32>
    %340 = arith.extui %339 : vector<8x512xi1> to vector<8x512xi32>
    %341 = arith.sitofp %340 : vector<8x512xi32> to vector<8x512xf32>
    %342 = arith.addf %336, %341 : vector<8x512xf32>
    %343 = vector.extract_strided_slice %275 {offsets = [0, 11], sizes = [8, 1], strides = [1, 1]} : vector<8x14xi32> to vector<8x1xi32>
    %344 = vector.broadcast %343 : vector<8x1xi32> to vector<8x512xi32>
    %345 = arith.cmpi eq, %344, %0 : vector<8x512xi32>
    %346 = arith.extui %345 : vector<8x512xi1> to vector<8x512xi32>
    %347 = arith.sitofp %346 : vector<8x512xi32> to vector<8x512xf32>
    %348 = arith.addf %342, %347 : vector<8x512xf32>
    %349 = vector.extract_strided_slice %275 {offsets = [0, 12], sizes = [8, 1], strides = [1, 1]} : vector<8x14xi32> to vector<8x1xi32>
    %350 = vector.broadcast %349 : vector<8x1xi32> to vector<8x512xi32>
    %351 = arith.cmpi eq, %350, %0 : vector<8x512xi32>
    %352 = arith.extui %351 : vector<8x512xi1> to vector<8x512xi32>
    %353 = arith.sitofp %352 : vector<8x512xi32> to vector<8x512xf32>
    %354 = arith.addf %348, %353 : vector<8x512xf32>
    %355 = vector.extract_strided_slice %275 {offsets = [0, 13], sizes = [8, 1], strides = [1, 1]} : vector<8x14xi32> to vector<8x1xi32>
    %356 = vector.broadcast %355 : vector<8x1xi32> to vector<8x512xi32>
    %357 = arith.cmpi eq, %356, %0 : vector<8x512xi32>
    %358 = arith.extui %357 : vector<8x512xi1> to vector<8x512xi32>
    %359 = arith.sitofp %358 : vector<8x512xi32> to vector<8x512xf32>
    %360 = arith.addf %354, %359 : vector<8x512xf32>
    %c0_24 = arith.constant 0 : index
    %c0_25 = arith.constant 0 : index
    %361 = vector.load %arg1[%c0_24, %c0_25] : memref<512x128xf32, #tpu.memory_space<vmem>>, vector<512x128xf32>
    %cst_26 = arith.constant dense<0.000000e+00> : vector<8x128xf32>
    %362 = tpu.matmul %360, %361, %cst_26 {dimension_numbers = #tpu.dot_dimension_numbers<[1], [0], [0], [1], [0, 0, 1, 1], [], []>} : vector<8x512xf32>, vector<512x128xf32>, vector<8x128xf32> -> vector<8x128xf32>
    %363 = vector.broadcast %1 : vector<1x128xf32> to vector<8x128xf32>
    %364 = arith.addf %362, %363 : vector<8x128xf32>
    %c24_27 = arith.constant 24 : index
    %c0_28 = arith.constant 0 : index
    %365 = vector.load %arg10[%c24_27, %c0_28] : memref<64x128xf32, #tpu.memory_space<vmem>>, vector<8x128xf32>
    tpu.vector_store %arg10[%c24_27, %c0_28], %364 {strides = array<i32>} : memref<64x128xf32, #tpu.memory_space<vmem>>, vector<8x128xf32>,
    %c32 = arith.constant 32 : index
    %c0_29 = arith.constant 0 : index
    %366 = vector.load %arg0[%c32, %c0_29] : memref<64x14xi32, #tpu.memory_space<vmem>>, vector<8x14xi32>
    %cst_30 = arith.constant 0.000000e+00 : f32
    %367 = vector.broadcast %cst_30 : f32 to vector<8x512xf32>
    %368 = vector.extract_strided_slice %366 {offsets = [0, 0], sizes = [8, 1], strides = [1, 1]} : vector<8x14xi32> to vector<8x1xi32>
    %369 = vector.broadcast %368 : vector<8x1xi32> to vector<8x512xi32>
    %370 = arith.cmpi eq, %369, %0 : vector<8x512xi32>
    %371 = arith.extui %370 : vector<8x512xi1> to vector<8x512xi32>
    %372 = arith.sitofp %371 : vector<8x512xi32> to vector<8x512xf32>
    %373 = arith.addf %367, %372 : vector<8x512xf32>
    %374 = vector.extract_strided_slice %366 {offsets = [0, 1], sizes = [8, 1], strides = [1, 1]} : vector<8x14xi32> to vector<8x1xi32>
    %375 = vector.broadcast %374 : vector<8x1xi32> to vector<8x512xi32>
    %376 = arith.cmpi eq, %375, %0 : vector<8x512xi32>
    %377 = arith.extui %376 : vector<8x512xi1> to vector<8x512xi32>
    %378 = arith.sitofp %377 : vector<8x512xi32> to vector<8x512xf32>
    %379 = arith.addf %373, %378 : vector<8x512xf32>
    %380 = vector.extract_strided_slice %366 {offsets = [0, 2], sizes = [8, 1], strides = [1, 1]} : vector<8x14xi32> to vector<8x1xi32>
    %381 = vector.broadcast %380 : vector<8x1xi32> to vector<8x512xi32>
    %382 = arith.cmpi eq, %381, %0 : vector<8x512xi32>
    %383 = arith.extui %382 : vector<8x512xi1> to vector<8x512xi32>
    %384 = arith.sitofp %383 : vector<8x512xi32> to vector<8x512xf32>
    %385 = arith.addf %379, %384 : vector<8x512xf32>
    %386 = vector.extract_strided_slice %366 {offsets = [0, 3], sizes = [8, 1], strides = [1, 1]} : vector<8x14xi32> to vector<8x1xi32>
    %387 = vector.broadcast %386 : vector<8x1xi32> to vector<8x512xi32>
    %388 = arith.cmpi eq, %387, %0 : vector<8x512xi32>
    %389 = arith.extui %388 : vector<8x512xi1> to vector<8x512xi32>
    %390 = arith.sitofp %389 : vector<8x512xi32> to vector<8x512xf32>
    %391 = arith.addf %385, %390 : vector<8x512xf32>
    %392 = vector.extract_strided_slice %366 {offsets = [0, 4], sizes = [8, 1], strides = [1, 1]} : vector<8x14xi32> to vector<8x1xi32>
    %393 = vector.broadcast %392 : vector<8x1xi32> to vector<8x512xi32>
    %394 = arith.cmpi eq, %393, %0 : vector<8x512xi32>
    %395 = arith.extui %394 : vector<8x512xi1> to vector<8x512xi32>
    %396 = arith.sitofp %395 : vector<8x512xi32> to vector<8x512xf32>
    %397 = arith.addf %391, %396 : vector<8x512xf32>
    %398 = vector.extract_strided_slice %366 {offsets = [0, 5], sizes = [8, 1], strides = [1, 1]} : vector<8x14xi32> to vector<8x1xi32>
    %399 = vector.broadcast %398 : vector<8x1xi32> to vector<8x512xi32>
    %400 = arith.cmpi eq, %399, %0 : vector<8x512xi32>
    %401 = arith.extui %400 : vector<8x512xi1> to vector<8x512xi32>
    %402 = arith.sitofp %401 : vector<8x512xi32> to vector<8x512xf32>
    %403 = arith.addf %397, %402 : vector<8x512xf32>
    %404 = vector.extract_strided_slice %366 {offsets = [0, 6], sizes = [8, 1], strides = [1, 1]} : vector<8x14xi32> to vector<8x1xi32>
    %405 = vector.broadcast %404 : vector<8x1xi32> to vector<8x512xi32>
    %406 = arith.cmpi eq, %405, %0 : vector<8x512xi32>
    %407 = arith.extui %406 : vector<8x512xi1> to vector<8x512xi32>
    %408 = arith.sitofp %407 : vector<8x512xi32> to vector<8x512xf32>
    %409 = arith.addf %403, %408 : vector<8x512xf32>
    %410 = vector.extract_strided_slice %366 {offsets = [0, 7], sizes = [8, 1], strides = [1, 1]} : vector<8x14xi32> to vector<8x1xi32>
    %411 = vector.broadcast %410 : vector<8x1xi32> to vector<8x512xi32>
    %412 = arith.cmpi eq, %411, %0 : vector<8x512xi32>
    %413 = arith.extui %412 : vector<8x512xi1> to vector<8x512xi32>
    %414 = arith.sitofp %413 : vector<8x512xi32> to vector<8x512xf32>
    %415 = arith.addf %409, %414 : vector<8x512xf32>
    %416 = vector.extract_strided_slice %366 {offsets = [0, 8], sizes = [8, 1], strides = [1, 1]} : vector<8x14xi32> to vector<8x1xi32>
    %417 = vector.broadcast %416 : vector<8x1xi32> to vector<8x512xi32>
    %418 = arith.cmpi eq, %417, %0 : vector<8x512xi32>
    %419 = arith.extui %418 : vector<8x512xi1> to vector<8x512xi32>
    %420 = arith.sitofp %419 : vector<8x512xi32> to vector<8x512xf32>
    %421 = arith.addf %415, %420 : vector<8x512xf32>
    %422 = vector.extract_strided_slice %366 {offsets = [0, 9], sizes = [8, 1], strides = [1, 1]} : vector<8x14xi32> to vector<8x1xi32>
    %423 = vector.broadcast %422 : vector<8x1xi32> to vector<8x512xi32>
    %424 = arith.cmpi eq, %423, %0 : vector<8x512xi32>
    %425 = arith.extui %424 : vector<8x512xi1> to vector<8x512xi32>
    %426 = arith.sitofp %425 : vector<8x512xi32> to vector<8x512xf32>
    %427 = arith.addf %421, %426 : vector<8x512xf32>
    %428 = vector.extract_strided_slice %366 {offsets = [0, 10], sizes = [8, 1], strides = [1, 1]} : vector<8x14xi32> to vector<8x1xi32>
    %429 = vector.broadcast %428 : vector<8x1xi32> to vector<8x512xi32>
    %430 = arith.cmpi eq, %429, %0 : vector<8x512xi32>
    %431 = arith.extui %430 : vector<8x512xi1> to vector<8x512xi32>
    %432 = arith.sitofp %431 : vector<8x512xi32> to vector<8x512xf32>
    %433 = arith.addf %427, %432 : vector<8x512xf32>
    %434 = vector.extract_strided_slice %366 {offsets = [0, 11], sizes = [8, 1], strides = [1, 1]} : vector<8x14xi32> to vector<8x1xi32>
    %435 = vector.broadcast %434 : vector<8x1xi32> to vector<8x512xi32>
    %436 = arith.cmpi eq, %435, %0 : vector<8x512xi32>
    %437 = arith.extui %436 : vector<8x512xi1> to vector<8x512xi32>
    %438 = arith.sitofp %437 : vector<8x512xi32> to vector<8x512xf32>
    %439 = arith.addf %433, %438 : vector<8x512xf32>
    %440 = vector.extract_strided_slice %366 {offsets = [0, 12], sizes = [8, 1], strides = [1, 1]} : vector<8x14xi32> to vector<8x1xi32>
    %441 = vector.broadcast %440 : vector<8x1xi32> to vector<8x512xi32>
    %442 = arith.cmpi eq, %441, %0 : vector<8x512xi32>
    %443 = arith.extui %442 : vector<8x512xi1> to vector<8x512xi32>
    %444 = arith.sitofp %443 : vector<8x512xi32> to vector<8x512xf32>
    %445 = arith.addf %439, %444 : vector<8x512xf32>
    %446 = vector.extract_strided_slice %366 {offsets = [0, 13], sizes = [8, 1], strides = [1, 1]} : vector<8x14xi32> to vector<8x1xi32>
    %447 = vector.broadcast %446 : vector<8x1xi32> to vector<8x512xi32>
    %448 = arith.cmpi eq, %447, %0 : vector<8x512xi32>
    %449 = arith.extui %448 : vector<8x512xi1> to vector<8x512xi32>
    %450 = arith.sitofp %449 : vector<8x512xi32> to vector<8x512xf32>
    %451 = arith.addf %445, %450 : vector<8x512xf32>
    %c0_31 = arith.constant 0 : index
    %c0_32 = arith.constant 0 : index
    %452 = vector.load %arg1[%c0_31, %c0_32] : memref<512x128xf32, #tpu.memory_space<vmem>>, vector<512x128xf32>
    %cst_33 = arith.constant dense<0.000000e+00> : vector<8x128xf32>
    %453 = tpu.matmul %451, %452, %cst_33 {dimension_numbers = #tpu.dot_dimension_numbers<[1], [0], [0], [1], [0, 0, 1, 1], [], []>} : vector<8x512xf32>, vector<512x128xf32>, vector<8x128xf32> -> vector<8x128xf32>
    %454 = vector.broadcast %1 : vector<1x128xf32> to vector<8x128xf32>
    %455 = arith.addf %453, %454 : vector<8x128xf32>
    %c32_34 = arith.constant 32 : index
    %c0_35 = arith.constant 0 : index
    %456 = vector.load %arg10[%c32_34, %c0_35] : memref<64x128xf32, #tpu.memory_space<vmem>>, vector<8x128xf32>
    tpu.vector_store %arg10[%c32_34, %c0_35], %455 {strides = array<i32>} : memref<64x128xf32, #tpu.memory_space<vmem>>, vector<8x128xf32>,
    %c40 = arith.constant 40 : index
    %c0_36 = arith.constant 0 : index
    %457 = vector.load %arg0[%c40, %c0_36] : memref<64x14xi32, #tpu.memory_space<vmem>>, vector<8x14xi32>
    %cst_37 = arith.constant 0.000000e+00 : f32
    %458 = vector.broadcast %cst_37 : f32 to vector<8x512xf32>
    %459 = vector.extract_strided_slice %457 {offsets = [0, 0], sizes = [8, 1], strides = [1, 1]} : vector<8x14xi32> to vector<8x1xi32>
    %460 = vector.broadcast %459 : vector<8x1xi32> to vector<8x512xi32>
    %461 = arith.cmpi eq, %460, %0 : vector<8x512xi32>
    %462 = arith.extui %461 : vector<8x512xi1> to vector<8x512xi32>
    %463 = arith.sitofp %462 : vector<8x512xi32> to vector<8x512xf32>
    %464 = arith.addf %458, %463 : vector<8x512xf32>
    %465 = vector.extract_strided_slice %457 {offsets = [0, 1], sizes = [8, 1], strides = [1, 1]} : vector<8x14xi32> to vector<8x1xi32>
    %466 = vector.broadcast %465 : vector<8x1xi32> to vector<8x512xi32>
    %467 = arith.cmpi eq, %466, %0 : vector<8x512xi32>
    %468 = arith.extui %467 : vector<8x512xi1> to vector<8x512xi32>
    %469 = arith.sitofp %468 : vector<8x512xi32> to vector<8x512xf32>
    %470 = arith.addf %464, %469 : vector<8x512xf32>
    %471 = vector.extract_strided_slice %457 {offsets = [0, 2], sizes = [8, 1], strides = [1, 1]} : vector<8x14xi32> to vector<8x1xi32>
    %472 = vector.broadcast %471 : vector<8x1xi32> to vector<8x512xi32>
    %473 = arith.cmpi eq, %472, %0 : vector<8x512xi32>
    %474 = arith.extui %473 : vector<8x512xi1> to vector<8x512xi32>
    %475 = arith.sitofp %474 : vector<8x512xi32> to vector<8x512xf32>
    %476 = arith.addf %470, %475 : vector<8x512xf32>
    %477 = vector.extract_strided_slice %457 {offsets = [0, 3], sizes = [8, 1], strides = [1, 1]} : vector<8x14xi32> to vector<8x1xi32>
    %478 = vector.broadcast %477 : vector<8x1xi32> to vector<8x512xi32>
    %479 = arith.cmpi eq, %478, %0 : vector<8x512xi32>
    %480 = arith.extui %479 : vector<8x512xi1> to vector<8x512xi32>
    %481 = arith.sitofp %480 : vector<8x512xi32> to vector<8x512xf32>
    %482 = arith.addf %476, %481 : vector<8x512xf32>
    %483 = vector.extract_strided_slice %457 {offsets = [0, 4], sizes = [8, 1], strides = [1, 1]} : vector<8x14xi32> to vector<8x1xi32>
    %484 = vector.broadcast %483 : vector<8x1xi32> to vector<8x512xi32>
    %485 = arith.cmpi eq, %484, %0 : vector<8x512xi32>
    %486 = arith.extui %485 : vector<8x512xi1> to vector<8x512xi32>
    %487 = arith.sitofp %486 : vector<8x512xi32> to vector<8x512xf32>
    %488 = arith.addf %482, %487 : vector<8x512xf32>
    %489 = vector.extract_strided_slice %457 {offsets = [0, 5], sizes = [8, 1], strides = [1, 1]} : vector<8x14xi32> to vector<8x1xi32>
    %490 = vector.broadcast %489 : vector<8x1xi32> to vector<8x512xi32>
    %491 = arith.cmpi eq, %490, %0 : vector<8x512xi32>
    %492 = arith.extui %491 : vector<8x512xi1> to vector<8x512xi32>
    %493 = arith.sitofp %492 : vector<8x512xi32> to vector<8x512xf32>
    %494 = arith.addf %488, %493 : vector<8x512xf32>
    %495 = vector.extract_strided_slice %457 {offsets = [0, 6], sizes = [8, 1], strides = [1, 1]} : vector<8x14xi32> to vector<8x1xi32>
    %496 = vector.broadcast %495 : vector<8x1xi32> to vector<8x512xi32>
    %497 = arith.cmpi eq, %496, %0 : vector<8x512xi32>
    %498 = arith.extui %497 : vector<8x512xi1> to vector<8x512xi32>
    %499 = arith.sitofp %498 : vector<8x512xi32> to vector<8x512xf32>
    %500 = arith.addf %494, %499 : vector<8x512xf32>
    %501 = vector.extract_strided_slice %457 {offsets = [0, 7], sizes = [8, 1], strides = [1, 1]} : vector<8x14xi32> to vector<8x1xi32>
    %502 = vector.broadcast %501 : vector<8x1xi32> to vector<8x512xi32>
    %503 = arith.cmpi eq, %502, %0 : vector<8x512xi32>
    %504 = arith.extui %503 : vector<8x512xi1> to vector<8x512xi32>
    %505 = arith.sitofp %504 : vector<8x512xi32> to vector<8x512xf32>
    %506 = arith.addf %500, %505 : vector<8x512xf32>
    %507 = vector.extract_strided_slice %457 {offsets = [0, 8], sizes = [8, 1], strides = [1, 1]} : vector<8x14xi32> to vector<8x1xi32>
    %508 = vector.broadcast %507 : vector<8x1xi32> to vector<8x512xi32>
    %509 = arith.cmpi eq, %508, %0 : vector<8x512xi32>
    %510 = arith.extui %509 : vector<8x512xi1> to vector<8x512xi32>
    %511 = arith.sitofp %510 : vector<8x512xi32> to vector<8x512xf32>
    %512 = arith.addf %506, %511 : vector<8x512xf32>
    %513 = vector.extract_strided_slice %457 {offsets = [0, 9], sizes = [8, 1], strides = [1, 1]} : vector<8x14xi32> to vector<8x1xi32>
    %514 = vector.broadcast %513 : vector<8x1xi32> to vector<8x512xi32>
    %515 = arith.cmpi eq, %514, %0 : vector<8x512xi32>
    %516 = arith.extui %515 : vector<8x512xi1> to vector<8x512xi32>
    %517 = arith.sitofp %516 : vector<8x512xi32> to vector<8x512xf32>
    %518 = arith.addf %512, %517 : vector<8x512xf32>
    %519 = vector.extract_strided_slice %457 {offsets = [0, 10], sizes = [8, 1], strides = [1, 1]} : vector<8x14xi32> to vector<8x1xi32>
    %520 = vector.broadcast %519 : vector<8x1xi32> to vector<8x512xi32>
    %521 = arith.cmpi eq, %520, %0 : vector<8x512xi32>
    %522 = arith.extui %521 : vector<8x512xi1> to vector<8x512xi32>
    %523 = arith.sitofp %522 : vector<8x512xi32> to vector<8x512xf32>
    %524 = arith.addf %518, %523 : vector<8x512xf32>
    %525 = vector.extract_strided_slice %457 {offsets = [0, 11], sizes = [8, 1], strides = [1, 1]} : vector<8x14xi32> to vector<8x1xi32>
    %526 = vector.broadcast %525 : vector<8x1xi32> to vector<8x512xi32>
    %527 = arith.cmpi eq, %526, %0 : vector<8x512xi32>
    %528 = arith.extui %527 : vector<8x512xi1> to vector<8x512xi32>
    %529 = arith.sitofp %528 : vector<8x512xi32> to vector<8x512xf32>
    %530 = arith.addf %524, %529 : vector<8x512xf32>
    %531 = vector.extract_strided_slice %457 {offsets = [0, 12], sizes = [8, 1], strides = [1, 1]} : vector<8x14xi32> to vector<8x1xi32>
    %532 = vector.broadcast %531 : vector<8x1xi32> to vector<8x512xi32>
    %533 = arith.cmpi eq, %532, %0 : vector<8x512xi32>
    %534 = arith.extui %533 : vector<8x512xi1> to vector<8x512xi32>
    %535 = arith.sitofp %534 : vector<8x512xi32> to vector<8x512xf32>
    %536 = arith.addf %530, %535 : vector<8x512xf32>
    %537 = vector.extract_strided_slice %457 {offsets = [0, 13], sizes = [8, 1], strides = [1, 1]} : vector<8x14xi32> to vector<8x1xi32>
    %538 = vector.broadcast %537 : vector<8x1xi32> to vector<8x512xi32>
    %539 = arith.cmpi eq, %538, %0 : vector<8x512xi32>
    %540 = arith.extui %539 : vector<8x512xi1> to vector<8x512xi32>
    %541 = arith.sitofp %540 : vector<8x512xi32> to vector<8x512xf32>
    %542 = arith.addf %536, %541 : vector<8x512xf32>
    %c0_38 = arith.constant 0 : index
    %c0_39 = arith.constant 0 : index
    %543 = vector.load %arg1[%c0_38, %c0_39] : memref<512x128xf32, #tpu.memory_space<vmem>>, vector<512x128xf32>
    %cst_40 = arith.constant dense<0.000000e+00> : vector<8x128xf32>
    %544 = tpu.matmul %542, %543, %cst_40 {dimension_numbers = #tpu.dot_dimension_numbers<[1], [0], [0], [1], [0, 0, 1, 1], [], []>} : vector<8x512xf32>, vector<512x128xf32>, vector<8x128xf32> -> vector<8x128xf32>
    %545 = vector.broadcast %1 : vector<1x128xf32> to vector<8x128xf32>
    %546 = arith.addf %544, %545 : vector<8x128xf32>
    %c40_41 = arith.constant 40 : index
    %c0_42 = arith.constant 0 : index
    %547 = vector.load %arg10[%c40_41, %c0_42] : memref<64x128xf32, #tpu.memory_space<vmem>>, vector<8x128xf32>
    tpu.vector_store %arg10[%c40_41, %c0_42], %546 {strides = array<i32>} : memref<64x128xf32, #tpu.memory_space<vmem>>, vector<8x128xf32>,
    %c48 = arith.constant 48 : index
    %c0_43 = arith.constant 0 : index
    %548 = vector.load %arg0[%c48, %c0_43] : memref<64x14xi32, #tpu.memory_space<vmem>>, vector<8x14xi32>
    %cst_44 = arith.constant 0.000000e+00 : f32
    %549 = vector.broadcast %cst_44 : f32 to vector<8x512xf32>
    %550 = vector.extract_strided_slice %548 {offsets = [0, 0], sizes = [8, 1], strides = [1, 1]} : vector<8x14xi32> to vector<8x1xi32>
    %551 = vector.broadcast %550 : vector<8x1xi32> to vector<8x512xi32>
    %552 = arith.cmpi eq, %551, %0 : vector<8x512xi32>
    %553 = arith.extui %552 : vector<8x512xi1> to vector<8x512xi32>
    %554 = arith.sitofp %553 : vector<8x512xi32> to vector<8x512xf32>
    %555 = arith.addf %549, %554 : vector<8x512xf32>
    %556 = vector.extract_strided_slice %548 {offsets = [0, 1], sizes = [8, 1], strides = [1, 1]} : vector<8x14xi32> to vector<8x1xi32>
    %557 = vector.broadcast %556 : vector<8x1xi32> to vector<8x512xi32>
    %558 = arith.cmpi eq, %557, %0 : vector<8x512xi32>
    %559 = arith.extui %558 : vector<8x512xi1> to vector<8x512xi32>
    %560 = arith.sitofp %559 : vector<8x512xi32> to vector<8x512xf32>
    %561 = arith.addf %555, %560 : vector<8x512xf32>
    %562 = vector.extract_strided_slice %548 {offsets = [0, 2], sizes = [8, 1], strides = [1, 1]} : vector<8x14xi32> to vector<8x1xi32>
    %563 = vector.broadcast %562 : vector<8x1xi32> to vector<8x512xi32>
    %564 = arith.cmpi eq, %563, %0 : vector<8x512xi32>
    %565 = arith.extui %564 : vector<8x512xi1> to vector<8x512xi32>
    %566 = arith.sitofp %565 : vector<8x512xi32> to vector<8x512xf32>
    %567 = arith.addf %561, %566 : vector<8x512xf32>
    %568 = vector.extract_strided_slice %548 {offsets = [0, 3], sizes = [8, 1], strides = [1, 1]} : vector<8x14xi32> to vector<8x1xi32>
    %569 = vector.broadcast %568 : vector<8x1xi32> to vector<8x512xi32>
    %570 = arith.cmpi eq, %569, %0 : vector<8x512xi32>
    %571 = arith.extui %570 : vector<8x512xi1> to vector<8x512xi32>
    %572 = arith.sitofp %571 : vector<8x512xi32> to vector<8x512xf32>
    %573 = arith.addf %567, %572 : vector<8x512xf32>
    %574 = vector.extract_strided_slice %548 {offsets = [0, 4], sizes = [8, 1], strides = [1, 1]} : vector<8x14xi32> to vector<8x1xi32>
    %575 = vector.broadcast %574 : vector<8x1xi32> to vector<8x512xi32>
    %576 = arith.cmpi eq, %575, %0 : vector<8x512xi32>
    %577 = arith.extui %576 : vector<8x512xi1> to vector<8x512xi32>
    %578 = arith.sitofp %577 : vector<8x512xi32> to vector<8x512xf32>
    %579 = arith.addf %573, %578 : vector<8x512xf32>
    %580 = vector.extract_strided_slice %548 {offsets = [0, 5], sizes = [8, 1], strides = [1, 1]} : vector<8x14xi32> to vector<8x1xi32>
    %581 = vector.broadcast %580 : vector<8x1xi32> to vector<8x512xi32>
    %582 = arith.cmpi eq, %581, %0 : vector<8x512xi32>
    %583 = arith.extui %582 : vector<8x512xi1> to vector<8x512xi32>
    %584 = arith.sitofp %583 : vector<8x512xi32> to vector<8x512xf32>
    %585 = arith.addf %579, %584 : vector<8x512xf32>
    %586 = vector.extract_strided_slice %548 {offsets = [0, 6], sizes = [8, 1], strides = [1, 1]} : vector<8x14xi32> to vector<8x1xi32>
    %587 = vector.broadcast %586 : vector<8x1xi32> to vector<8x512xi32>
    %588 = arith.cmpi eq, %587, %0 : vector<8x512xi32>
    %589 = arith.extui %588 : vector<8x512xi1> to vector<8x512xi32>
    %590 = arith.sitofp %589 : vector<8x512xi32> to vector<8x512xf32>
    %591 = arith.addf %585, %590 : vector<8x512xf32>
    %592 = vector.extract_strided_slice %548 {offsets = [0, 7], sizes = [8, 1], strides = [1, 1]} : vector<8x14xi32> to vector<8x1xi32>
    %593 = vector.broadcast %592 : vector<8x1xi32> to vector<8x512xi32>
    %594 = arith.cmpi eq, %593, %0 : vector<8x512xi32>
    %595 = arith.extui %594 : vector<8x512xi1> to vector<8x512xi32>
    %596 = arith.sitofp %595 : vector<8x512xi32> to vector<8x512xf32>
    %597 = arith.addf %591, %596 : vector<8x512xf32>
    %598 = vector.extract_strided_slice %548 {offsets = [0, 8], sizes = [8, 1], strides = [1, 1]} : vector<8x14xi32> to vector<8x1xi32>
    %599 = vector.broadcast %598 : vector<8x1xi32> to vector<8x512xi32>
    %600 = arith.cmpi eq, %599, %0 : vector<8x512xi32>
    %601 = arith.extui %600 : vector<8x512xi1> to vector<8x512xi32>
    %602 = arith.sitofp %601 : vector<8x512xi32> to vector<8x512xf32>
    %603 = arith.addf %597, %602 : vector<8x512xf32>
    %604 = vector.extract_strided_slice %548 {offsets = [0, 9], sizes = [8, 1], strides = [1, 1]} : vector<8x14xi32> to vector<8x1xi32>
    %605 = vector.broadcast %604 : vector<8x1xi32> to vector<8x512xi32>
    %606 = arith.cmpi eq, %605, %0 : vector<8x512xi32>
    %607 = arith.extui %606 : vector<8x512xi1> to vector<8x512xi32>
    %608 = arith.sitofp %607 : vector<8x512xi32> to vector<8x512xf32>
    %609 = arith.addf %603, %608 : vector<8x512xf32>
    %610 = vector.extract_strided_slice %548 {offsets = [0, 10], sizes = [8, 1], strides = [1, 1]} : vector<8x14xi32> to vector<8x1xi32>
    %611 = vector.broadcast %610 : vector<8x1xi32> to vector<8x512xi32>
    %612 = arith.cmpi eq, %611, %0 : vector<8x512xi32>
    %613 = arith.extui %612 : vector<8x512xi1> to vector<8x512xi32>
    %614 = arith.sitofp %613 : vector<8x512xi32> to vector<8x512xf32>
    %615 = arith.addf %609, %614 : vector<8x512xf32>
    %616 = vector.extract_strided_slice %548 {offsets = [0, 11], sizes = [8, 1], strides = [1, 1]} : vector<8x14xi32> to vector<8x1xi32>
    %617 = vector.broadcast %616 : vector<8x1xi32> to vector<8x512xi32>
    %618 = arith.cmpi eq, %617, %0 : vector<8x512xi32>
    %619 = arith.extui %618 : vector<8x512xi1> to vector<8x512xi32>
    %620 = arith.sitofp %619 : vector<8x512xi32> to vector<8x512xf32>
    %621 = arith.addf %615, %620 : vector<8x512xf32>
    %622 = vector.extract_strided_slice %548 {offsets = [0, 12], sizes = [8, 1], strides = [1, 1]} : vector<8x14xi32> to vector<8x1xi32>
    %623 = vector.broadcast %622 : vector<8x1xi32> to vector<8x512xi32>
    %624 = arith.cmpi eq, %623, %0 : vector<8x512xi32>
    %625 = arith.extui %624 : vector<8x512xi1> to vector<8x512xi32>
    %626 = arith.sitofp %625 : vector<8x512xi32> to vector<8x512xf32>
    %627 = arith.addf %621, %626 : vector<8x512xf32>
    %628 = vector.extract_strided_slice %548 {offsets = [0, 13], sizes = [8, 1], strides = [1, 1]} : vector<8x14xi32> to vector<8x1xi32>
    %629 = vector.broadcast %628 : vector<8x1xi32> to vector<8x512xi32>
    %630 = arith.cmpi eq, %629, %0 : vector<8x512xi32>
    %631 = arith.extui %630 : vector<8x512xi1> to vector<8x512xi32>
    %632 = arith.sitofp %631 : vector<8x512xi32> to vector<8x512xf32>
    %633 = arith.addf %627, %632 : vector<8x512xf32>
    %c0_45 = arith.constant 0 : index
    %c0_46 = arith.constant 0 : index
    %634 = vector.load %arg1[%c0_45, %c0_46] : memref<512x128xf32, #tpu.memory_space<vmem>>, vector<512x128xf32>
    %cst_47 = arith.constant dense<0.000000e+00> : vector<8x128xf32>
    %635 = tpu.matmul %633, %634, %cst_47 {dimension_numbers = #tpu.dot_dimension_numbers<[1], [0], [0], [1], [0, 0, 1, 1], [], []>} : vector<8x512xf32>, vector<512x128xf32>, vector<8x128xf32> -> vector<8x128xf32>
    %636 = vector.broadcast %1 : vector<1x128xf32> to vector<8x128xf32>
    %637 = arith.addf %635, %636 : vector<8x128xf32>
    %c48_48 = arith.constant 48 : index
    %c0_49 = arith.constant 0 : index
    %638 = vector.load %arg10[%c48_48, %c0_49] : memref<64x128xf32, #tpu.memory_space<vmem>>, vector<8x128xf32>
    tpu.vector_store %arg10[%c48_48, %c0_49], %637 {strides = array<i32>} : memref<64x128xf32, #tpu.memory_space<vmem>>, vector<8x128xf32>,
    %c56 = arith.constant 56 : index
    %c0_50 = arith.constant 0 : index
    %639 = vector.load %arg0[%c56, %c0_50] : memref<64x14xi32, #tpu.memory_space<vmem>>, vector<8x14xi32>
    %cst_51 = arith.constant 0.000000e+00 : f32
    %640 = vector.broadcast %cst_51 : f32 to vector<8x512xf32>
    %641 = vector.extract_strided_slice %639 {offsets = [0, 0], sizes = [8, 1], strides = [1, 1]} : vector<8x14xi32> to vector<8x1xi32>
    %642 = vector.broadcast %641 : vector<8x1xi32> to vector<8x512xi32>
    %643 = arith.cmpi eq, %642, %0 : vector<8x512xi32>
    %644 = arith.extui %643 : vector<8x512xi1> to vector<8x512xi32>
    %645 = arith.sitofp %644 : vector<8x512xi32> to vector<8x512xf32>
    %646 = arith.addf %640, %645 : vector<8x512xf32>
    %647 = vector.extract_strided_slice %639 {offsets = [0, 1], sizes = [8, 1], strides = [1, 1]} : vector<8x14xi32> to vector<8x1xi32>
    %648 = vector.broadcast %647 : vector<8x1xi32> to vector<8x512xi32>
    %649 = arith.cmpi eq, %648, %0 : vector<8x512xi32>
    %650 = arith.extui %649 : vector<8x512xi1> to vector<8x512xi32>
    %651 = arith.sitofp %650 : vector<8x512xi32> to vector<8x512xf32>
    %652 = arith.addf %646, %651 : vector<8x512xf32>
    %653 = vector.extract_strided_slice %639 {offsets = [0, 2], sizes = [8, 1], strides = [1, 1]} : vector<8x14xi32> to vector<8x1xi32>
    %654 = vector.broadcast %653 : vector<8x1xi32> to vector<8x512xi32>
    %655 = arith.cmpi eq, %654, %0 : vector<8x512xi32>
    %656 = arith.extui %655 : vector<8x512xi1> to vector<8x512xi32>
    %657 = arith.sitofp %656 : vector<8x512xi32> to vector<8x512xf32>
    %658 = arith.addf %652, %657 : vector<8x512xf32>
    %659 = vector.extract_strided_slice %639 {offsets = [0, 3], sizes = [8, 1], strides = [1, 1]} : vector<8x14xi32> to vector<8x1xi32>
    %660 = vector.broadcast %659 : vector<8x1xi32> to vector<8x512xi32>
    %661 = arith.cmpi eq, %660, %0 : vector<8x512xi32>
    %662 = arith.extui %661 : vector<8x512xi1> to vector<8x512xi32>
    %663 = arith.sitofp %662 : vector<8x512xi32> to vector<8x512xf32>
    %664 = arith.addf %658, %663 : vector<8x512xf32>
    %665 = vector.extract_strided_slice %639 {offsets = [0, 4], sizes = [8, 1], strides = [1, 1]} : vector<8x14xi32> to vector<8x1xi32>
    %666 = vector.broadcast %665 : vector<8x1xi32> to vector<8x512xi32>
    %667 = arith.cmpi eq, %666, %0 : vector<8x512xi32>
    %668 = arith.extui %667 : vector<8x512xi1> to vector<8x512xi32>
    %669 = arith.sitofp %668 : vector<8x512xi32> to vector<8x512xf32>
    %670 = arith.addf %664, %669 : vector<8x512xf32>
    %671 = vector.extract_strided_slice %639 {offsets = [0, 5], sizes = [8, 1], strides = [1, 1]} : vector<8x14xi32> to vector<8x1xi32>
    %672 = vector.broadcast %671 : vector<8x1xi32> to vector<8x512xi32>
    %673 = arith.cmpi eq, %672, %0 : vector<8x512xi32>
    %674 = arith.extui %673 : vector<8x512xi1> to vector<8x512xi32>
    %675 = arith.sitofp %674 : vector<8x512xi32> to vector<8x512xf32>
    %676 = arith.addf %670, %675 : vector<8x512xf32>
    %677 = vector.extract_strided_slice %639 {offsets = [0, 6], sizes = [8, 1], strides = [1, 1]} : vector<8x14xi32> to vector<8x1xi32>
    %678 = vector.broadcast %677 : vector<8x1xi32> to vector<8x512xi32>
    %679 = arith.cmpi eq, %678, %0 : vector<8x512xi32>
    %680 = arith.extui %679 : vector<8x512xi1> to vector<8x512xi32>
    %681 = arith.sitofp %680 : vector<8x512xi32> to vector<8x512xf32>
    %682 = arith.addf %676, %681 : vector<8x512xf32>
    %683 = vector.extract_strided_slice %639 {offsets = [0, 7], sizes = [8, 1], strides = [1, 1]} : vector<8x14xi32> to vector<8x1xi32>
    %684 = vector.broadcast %683 : vector<8x1xi32> to vector<8x512xi32>
    %685 = arith.cmpi eq, %684, %0 : vector<8x512xi32>
    %686 = arith.extui %685 : vector<8x512xi1> to vector<8x512xi32>
    %687 = arith.sitofp %686 : vector<8x512xi32> to vector<8x512xf32>
    %688 = arith.addf %682, %687 : vector<8x512xf32>
    %689 = vector.extract_strided_slice %639 {offsets = [0, 8], sizes = [8, 1], strides = [1, 1]} : vector<8x14xi32> to vector<8x1xi32>
    %690 = vector.broadcast %689 : vector<8x1xi32> to vector<8x512xi32>
    %691 = arith.cmpi eq, %690, %0 : vector<8x512xi32>
    %692 = arith.extui %691 : vector<8x512xi1> to vector<8x512xi32>
    %693 = arith.sitofp %692 : vector<8x512xi32> to vector<8x512xf32>
    %694 = arith.addf %688, %693 : vector<8x512xf32>
    %695 = vector.extract_strided_slice %639 {offsets = [0, 9], sizes = [8, 1], strides = [1, 1]} : vector<8x14xi32> to vector<8x1xi32>
    %696 = vector.broadcast %695 : vector<8x1xi32> to vector<8x512xi32>
    %697 = arith.cmpi eq, %696, %0 : vector<8x512xi32>
    %698 = arith.extui %697 : vector<8x512xi1> to vector<8x512xi32>
    %699 = arith.sitofp %698 : vector<8x512xi32> to vector<8x512xf32>
    %700 = arith.addf %694, %699 : vector<8x512xf32>
    %701 = vector.extract_strided_slice %639 {offsets = [0, 10], sizes = [8, 1], strides = [1, 1]} : vector<8x14xi32> to vector<8x1xi32>
    %702 = vector.broadcast %701 : vector<8x1xi32> to vector<8x512xi32>
    %703 = arith.cmpi eq, %702, %0 : vector<8x512xi32>
    %704 = arith.extui %703 : vector<8x512xi1> to vector<8x512xi32>
    %705 = arith.sitofp %704 : vector<8x512xi32> to vector<8x512xf32>
    %706 = arith.addf %700, %705 : vector<8x512xf32>
    %707 = vector.extract_strided_slice %639 {offsets = [0, 11], sizes = [8, 1], strides = [1, 1]} : vector<8x14xi32> to vector<8x1xi32>
    %708 = vector.broadcast %707 : vector<8x1xi32> to vector<8x512xi32>
    %709 = arith.cmpi eq, %708, %0 : vector<8x512xi32>
    %710 = arith.extui %709 : vector<8x512xi1> to vector<8x512xi32>
    %711 = arith.sitofp %710 : vector<8x512xi32> to vector<8x512xf32>
    %712 = arith.addf %706, %711 : vector<8x512xf32>
    %713 = vector.extract_strided_slice %639 {offsets = [0, 12], sizes = [8, 1], strides = [1, 1]} : vector<8x14xi32> to vector<8x1xi32>
    %714 = vector.broadcast %713 : vector<8x1xi32> to vector<8x512xi32>
    %715 = arith.cmpi eq, %714, %0 : vector<8x512xi32>
    %716 = arith.extui %715 : vector<8x512xi1> to vector<8x512xi32>
    %717 = arith.sitofp %716 : vector<8x512xi32> to vector<8x512xf32>
    %718 = arith.addf %712, %717 : vector<8x512xf32>
    %719 = vector.extract_strided_slice %639 {offsets = [0, 13], sizes = [8, 1], strides = [1, 1]} : vector<8x14xi32> to vector<8x1xi32>
    %720 = vector.broadcast %719 : vector<8x1xi32> to vector<8x512xi32>
    %721 = arith.cmpi eq, %720, %0 : vector<8x512xi32>
    %722 = arith.extui %721 : vector<8x512xi1> to vector<8x512xi32>
    %723 = arith.sitofp %722 : vector<8x512xi32> to vector<8x512xf32>
    %724 = arith.addf %718, %723 : vector<8x512xf32>
    %c0_52 = arith.constant 0 : index
    %c0_53 = arith.constant 0 : index
    %725 = vector.load %arg1[%c0_52, %c0_53] : memref<512x128xf32, #tpu.memory_space<vmem>>, vector<512x128xf32>
    %cst_54 = arith.constant dense<0.000000e+00> : vector<8x128xf32>
    %726 = tpu.matmul %724, %725, %cst_54 {dimension_numbers = #tpu.dot_dimension_numbers<[1], [0], [0], [1], [0, 0, 1, 1], [], []>} : vector<8x512xf32>, vector<512x128xf32>, vector<8x128xf32> -> vector<8x128xf32>
    %727 = vector.broadcast %1 : vector<1x128xf32> to vector<8x128xf32>
    %728 = arith.addf %726, %727 : vector<8x128xf32>
    %c56_55 = arith.constant 56 : index
    %c0_56 = arith.constant 0 : index
    %729 = vector.load %arg10[%c56_55, %c0_56] : memref<64x128xf32, #tpu.memory_space<vmem>>, vector<8x128xf32>
    tpu.vector_store %arg10[%c56_55, %c0_56], %728 {strides = array<i32>} : memref<64x128xf32, #tpu.memory_space<vmem>>, vector<8x128xf32>,
    %730 = tpu.iota {dimensions = array<i32: 1>} : vector<8x128xi32>
    %c64_i32 = arith.constant 64 : i32
    %731 = vector.broadcast %c64_i32 : i32 to vector<8x128xi32>
    %732 = arith.cmpi sge, %730, %731 : vector<8x128xi32>
    %c96_i32 = arith.constant 96 : i32
    %733 = vector.broadcast %c96_i32 : i32 to vector<8x128xi32>
    %734 = arith.cmpi slt, %730, %733 : vector<8x128xi32>
    %735 = arith.andi %732, %734 : vector<8x128xi1>
    %cst_57 = arith.constant 1.000000e+00 : f32
    %cst_58 = arith.constant 5.000000e-01 : f32
    %736 = vector.broadcast %cst_57 : f32 to vector<8x128xf32>
    %737 = vector.broadcast %cst_58 : f32 to vector<8x128xf32>
    %738 = arith.select %735, %736, %737 : vector<8x128xi1>, vector<8x128xf32>
    %cst_59 = arith.constant 0.000000e+00 : f32
    %cst_60 = arith.constant 5.000000e-01 : f32
    %739 = vector.broadcast %cst_59 : f32 to vector<8x128xf32>
    %740 = vector.broadcast %cst_60 : f32 to vector<8x128xf32>
    %741 = arith.select %735, %739, %740 : vector<8x128xi1>, vector<8x128xf32>
    %c0_61 = arith.constant 0 : index
    %c0_62 = arith.constant 0 : index
    %742 = vector.load %arg3[%c0_61, %c0_62] : memref<32x128xf32, #tpu.memory_space<vmem>>, vector<32x128xf32>
    %c0_63 = arith.constant 0 : index
    %c0_64 = arith.constant 0 : index
    %743 = vector.load %arg4[%c0_63, %c0_64] : memref<32x128xf32, #tpu.memory_space<vmem>>, vector<32x128xf32>
    %c0_65 = arith.constant 0 : index
    %c0_66 = arith.constant 0 : index
    %744 = vector.load %arg5[%c0_65, %c0_66] : memref<32x128xf32, #tpu.memory_space<vmem>>, vector<32x128xf32>
    %c0_67 = arith.constant 0 : index
    %c0_68 = arith.constant 0 : index
    %745 = vector.load %arg6[%c0_67, %c0_68] : memref<1x128xf32, #tpu.memory_space<vmem>>, vector<1x128xf32>
    %cst_69 = arith.constant 0.000000e+00 : f32
    %746 = vector.broadcast %cst_69 : f32 to vector<8x32xf32>
    %c0_i32 = arith.constant 0 : i32
    %c0_i32_70 = arith.constant 0 : i32
    %747 = arith.subi %c0_i32, %c0_i32_70 : i32
    %c7_i32 = arith.constant 7 : i32
    %748 = arith.minsi %747, %c7_i32 : i32
    %c8_i32 = arith.constant 8 : i32
    %749 = arith.muli %748, %c8_i32 : i32
    %750 = tpu.assume_multiple %749, 8 : i32
    %751 = arith.index_cast %750 : i32 to index
    %c0_71 = arith.constant 0 : index
    %752 = vector.load %arg10[%751, %c0_71] : memref<64x128xf32, #tpu.memory_space<vmem>>, vector<8x128xf32>
    %cst_72 = arith.constant dense<0.000000e+00> : vector<8x128xf32>
    %753 = tpu.matmul %746, %742, %cst_72 {dimension_numbers = #tpu.dot_dimension_numbers<[1], [0], [0], [1], [0, 0, 1, 1], [], []>} : vector<8x32xf32>, vector<32x128xf32>, vector<8x128xf32> -> vector<8x128xf32>
    %754 = arith.addf %752, %753 : vector<8x128xf32>
    %755 = arith.mulf %754, %738 : vector<8x128xf32>
    %756 = math.tanh %755 : vector<8x128xf32>
    %757 = arith.mulf %756, %738 : vector<8x128xf32>
    %758 = arith.addf %757, %741 : vector<8x128xf32>
    %759 = vector.extract_strided_slice %758 {offsets = [0, 0], sizes = [8, 32], strides = [1, 1]} : vector<8x128xf32> to vector<8x32xf32>
    %760 = vector.extract_strided_slice %758 {offsets = [0, 32], sizes = [8, 32], strides = [1, 1]} : vector<8x128xf32> to vector<8x32xf32>
    %761 = vector.extract_strided_slice %758 {offsets = [0, 64], sizes = [8, 32], strides = [1, 1]} : vector<8x128xf32> to vector<8x32xf32>
    %762 = vector.extract_strided_slice %758 {offsets = [0, 96], sizes = [8, 32], strides = [1, 1]} : vector<8x128xf32> to vector<8x32xf32>
    %763 = arith.mulf %760, %746 : vector<8x32xf32>
    %764 = arith.mulf %759, %761 : vector<8x32xf32>
    %765 = arith.addf %763, %764 : vector<8x32xf32>
    %766 = math.tanh %765 : vector<8x32xf32>
    %767 = arith.mulf %762, %766 : vector<8x32xf32>
    %c7_i32_73 = arith.constant 7 : i32
    %768 = arith.cmpi sle, %747, %c7_i32_73 : i32
    %769 = arith.select %768, %767, %746 : vector<8x32xf32>
    %770 = arith.select %768, %765, %746 : vector<8x32xf32>
    %c1_i32 = arith.constant 1 : i32
    %771 = arith.subi %c0_i32, %c1_i32 : i32
    %cst_74 = arith.constant dense<0.000000e+00> : vector<8x128xf32>
    %772 = tpu.matmul %746, %743, %cst_74 {dimension_numbers = #tpu.dot_dimension_numbers<[1], [0], [0], [1], [0, 0, 1, 1], [], []>} : vector<8x32xf32>, vector<32x128xf32>, vector<8x128xf32> -> vector<8x128xf32>
    %cst_75 = arith.constant dense<0.000000e+00> : vector<8x128xf32>
    %773 = tpu.matmul %746, %744, %cst_75 {dimension_numbers = #tpu.dot_dimension_numbers<[1], [0], [0], [1], [0, 0, 1, 1], [], []>} : vector<8x32xf32>, vector<32x128xf32>, vector<8x128xf32> -> vector<8x128xf32>
    %774 = arith.addf %772, %773 : vector<8x128xf32>
    %775 = vector.broadcast %745 : vector<1x128xf32> to vector<8x128xf32>
    %776 = arith.addf %774, %775 : vector<8x128xf32>
    %777 = arith.mulf %776, %738 : vector<8x128xf32>
    %778 = math.tanh %777 : vector<8x128xf32>
    %779 = arith.mulf %778, %738 : vector<8x128xf32>
    %780 = arith.addf %779, %741 : vector<8x128xf32>
    %781 = vector.extract_strided_slice %780 {offsets = [0, 0], sizes = [8, 32], strides = [1, 1]} : vector<8x128xf32> to vector<8x32xf32>
    %782 = vector.extract_strided_slice %780 {offsets = [0, 32], sizes = [8, 32], strides = [1, 1]} : vector<8x128xf32> to vector<8x32xf32>
    %783 = vector.extract_strided_slice %780 {offsets = [0, 64], sizes = [8, 32], strides = [1, 1]} : vector<8x128xf32> to vector<8x32xf32>
    %784 = vector.extract_strided_slice %780 {offsets = [0, 96], sizes = [8, 32], strides = [1, 1]} : vector<8x128xf32> to vector<8x32xf32>
    %785 = arith.mulf %782, %746 : vector<8x32xf32>
    %786 = arith.mulf %781, %783 : vector<8x32xf32>
    %787 = arith.addf %785, %786 : vector<8x32xf32>
    %788 = math.tanh %787 : vector<8x32xf32>
    %789 = arith.mulf %784, %788 : vector<8x32xf32>
    %c0_i32_76 = arith.constant 0 : i32
    %790 = arith.cmpi sge, %771, %c0_i32_76 : i32
    %791 = arith.select %790, %789, %746 : vector<8x32xf32>
    %792 = arith.select %790, %787, %746 : vector<8x32xf32>
    %c1_i32_77 = arith.constant 1 : i32
    %c0_i32_78 = arith.constant 0 : i32
    %793 = arith.subi %c1_i32_77, %c0_i32_78 : i32
    %c7_i32_79 = arith.constant 7 : i32
    %794 = arith.minsi %793, %c7_i32_79 : i32
    %c8_i32_80 = arith.constant 8 : i32
    %795 = arith.muli %794, %c8_i32_80 : i32
    %796 = tpu.assume_multiple %795, 8 : i32
    %797 = arith.index_cast %796 : i32 to index
    %c0_81 = arith.constant 0 : index
    %798 = vector.load %arg10[%797, %c0_81] : memref<64x128xf32, #tpu.memory_space<vmem>>, vector<8x128xf32>
    %cst_82 = arith.constant dense<0.000000e+00> : vector<8x128xf32>
    %799 = tpu.matmul %769, %742, %cst_82 {dimension_numbers = #tpu.dot_dimension_numbers<[1], [0], [0], [1], [0, 0, 1, 1], [], []>} : vector<8x32xf32>, vector<32x128xf32>, vector<8x128xf32> -> vector<8x128xf32>
    %800 = arith.addf %798, %799 : vector<8x128xf32>
    %801 = arith.mulf %800, %738 : vector<8x128xf32>
    %802 = math.tanh %801 : vector<8x128xf32>
    %803 = arith.mulf %802, %738 : vector<8x128xf32>
    %804 = arith.addf %803, %741 : vector<8x128xf32>
    %805 = vector.extract_strided_slice %804 {offsets = [0, 0], sizes = [8, 32], strides = [1, 1]} : vector<8x128xf32> to vector<8x32xf32>
    %806 = vector.extract_strided_slice %804 {offsets = [0, 32], sizes = [8, 32], strides = [1, 1]} : vector<8x128xf32> to vector<8x32xf32>
    %807 = vector.extract_strided_slice %804 {offsets = [0, 64], sizes = [8, 32], strides = [1, 1]} : vector<8x128xf32> to vector<8x32xf32>
    %808 = vector.extract_strided_slice %804 {offsets = [0, 96], sizes = [8, 32], strides = [1, 1]} : vector<8x128xf32> to vector<8x32xf32>
    %809 = arith.mulf %806, %770 : vector<8x32xf32>
    %810 = arith.mulf %805, %807 : vector<8x32xf32>
    %811 = arith.addf %809, %810 : vector<8x32xf32>
    %812 = math.tanh %811 : vector<8x32xf32>
    %813 = arith.mulf %808, %812 : vector<8x32xf32>
    %c7_i32_83 = arith.constant 7 : i32
    %814 = arith.cmpi sle, %793, %c7_i32_83 : i32
    %815 = arith.select %814, %813, %769 : vector<8x32xf32>
    %816 = arith.select %814, %811, %770 : vector<8x32xf32>
    %c1_i32_84 = arith.constant 1 : i32
    %817 = arith.subi %c1_i32_77, %c1_i32_84 : i32
    %cst_85 = arith.constant dense<0.000000e+00> : vector<8x128xf32>
    %818 = tpu.matmul %769, %743, %cst_85 {dimension_numbers = #tpu.dot_dimension_numbers<[1], [0], [0], [1], [0, 0, 1, 1], [], []>} : vector<8x32xf32>, vector<32x128xf32>, vector<8x128xf32> -> vector<8x128xf32>
    %cst_86 = arith.constant dense<0.000000e+00> : vector<8x128xf32>
    %819 = tpu.matmul %791, %744, %cst_86 {dimension_numbers = #tpu.dot_dimension_numbers<[1], [0], [0], [1], [0, 0, 1, 1], [], []>} : vector<8x32xf32>, vector<32x128xf32>, vector<8x128xf32> -> vector<8x128xf32>
    %820 = arith.addf %818, %819 : vector<8x128xf32>
    %821 = vector.broadcast %745 : vector<1x128xf32> to vector<8x128xf32>
    %822 = arith.addf %820, %821 : vector<8x128xf32>
    %823 = arith.mulf %822, %738 : vector<8x128xf32>
    %824 = math.tanh %823 : vector<8x128xf32>
    %825 = arith.mulf %824, %738 : vector<8x128xf32>
    %826 = arith.addf %825, %741 : vector<8x128xf32>
    %827 = vector.extract_strided_slice %826 {offsets = [0, 0], sizes = [8, 32], strides = [1, 1]} : vector<8x128xf32> to vector<8x32xf32>
    %828 = vector.extract_strided_slice %826 {offsets = [0, 32], sizes = [8, 32], strides = [1, 1]} : vector<8x128xf32> to vector<8x32xf32>
    %829 = vector.extract_strided_slice %826 {offsets = [0, 64], sizes = [8, 32], strides = [1, 1]} : vector<8x128xf32> to vector<8x32xf32>
    %830 = vector.extract_strided_slice %826 {offsets = [0, 96], sizes = [8, 32], strides = [1, 1]} : vector<8x128xf32> to vector<8x32xf32>
    %831 = arith.mulf %828, %792 : vector<8x32xf32>
    %832 = arith.mulf %827, %829 : vector<8x32xf32>
    %833 = arith.addf %831, %832 : vector<8x32xf32>
    %834 = math.tanh %833 : vector<8x32xf32>
    %835 = arith.mulf %830, %834 : vector<8x32xf32>
    %c0_i32_87 = arith.constant 0 : i32
    %836 = arith.cmpi sge, %817, %c0_i32_87 : i32
    %837 = arith.select %836, %835, %791 : vector<8x32xf32>
    %838 = arith.select %836, %833, %792 : vector<8x32xf32>
    %c2_i32 = arith.constant 2 : i32
    %c0_i32_88 = arith.constant 0 : i32
    %839 = arith.subi %c2_i32, %c0_i32_88 : i32
    %c7_i32_89 = arith.constant 7 : i32
    %840 = arith.minsi %839, %c7_i32_89 : i32
    %c8_i32_90 = arith.constant 8 : i32
    %841 = arith.muli %840, %c8_i32_90 : i32
    %842 = tpu.assume_multiple %841, 8 : i32
    %843 = arith.index_cast %842 : i32 to index
    %c0_91 = arith.constant 0 : index
    %844 = vector.load %arg10[%843, %c0_91] : memref<64x128xf32, #tpu.memory_space<vmem>>, vector<8x128xf32>
    %cst_92 = arith.constant dense<0.000000e+00> : vector<8x128xf32>
    %845 = tpu.matmul %815, %742, %cst_92 {dimension_numbers = #tpu.dot_dimension_numbers<[1], [0], [0], [1], [0, 0, 1, 1], [], []>} : vector<8x32xf32>, vector<32x128xf32>, vector<8x128xf32> -> vector<8x128xf32>
    %846 = arith.addf %844, %845 : vector<8x128xf32>
    %847 = arith.mulf %846, %738 : vector<8x128xf32>
    %848 = math.tanh %847 : vector<8x128xf32>
    %849 = arith.mulf %848, %738 : vector<8x128xf32>
    %850 = arith.addf %849, %741 : vector<8x128xf32>
    %851 = vector.extract_strided_slice %850 {offsets = [0, 0], sizes = [8, 32], strides = [1, 1]} : vector<8x128xf32> to vector<8x32xf32>
    %852 = vector.extract_strided_slice %850 {offsets = [0, 32], sizes = [8, 32], strides = [1, 1]} : vector<8x128xf32> to vector<8x32xf32>
    %853 = vector.extract_strided_slice %850 {offsets = [0, 64], sizes = [8, 32], strides = [1, 1]} : vector<8x128xf32> to vector<8x32xf32>
    %854 = vector.extract_strided_slice %850 {offsets = [0, 96], sizes = [8, 32], strides = [1, 1]} : vector<8x128xf32> to vector<8x32xf32>
    %855 = arith.mulf %852, %816 : vector<8x32xf32>
    %856 = arith.mulf %851, %853 : vector<8x32xf32>
    %857 = arith.addf %855, %856 : vector<8x32xf32>
    %858 = math.tanh %857 : vector<8x32xf32>
    %859 = arith.mulf %854, %858 : vector<8x32xf32>
    %c7_i32_93 = arith.constant 7 : i32
    %860 = arith.cmpi sle, %839, %c7_i32_93 : i32
    %861 = arith.select %860, %859, %815 : vector<8x32xf32>
    %862 = arith.select %860, %857, %816 : vector<8x32xf32>
    %c1_i32_94 = arith.constant 1 : i32
    %863 = arith.subi %c2_i32, %c1_i32_94 : i32
    %cst_95 = arith.constant dense<0.000000e+00> : vector<8x128xf32>
    %864 = tpu.matmul %815, %743, %cst_95 {dimension_numbers = #tpu.dot_dimension_numbers<[1], [0], [0], [1], [0, 0, 1, 1], [], []>} : vector<8x32xf32>, vector<32x128xf32>, vector<8x128xf32> -> vector<8x128xf32>
    %cst_96 = arith.constant dense<0.000000e+00> : vector<8x128xf32>
    %865 = tpu.matmul %837, %744, %cst_96 {dimension_numbers = #tpu.dot_dimension_numbers<[1], [0], [0], [1], [0, 0, 1, 1], [], []>} : vector<8x32xf32>, vector<32x128xf32>, vector<8x128xf32> -> vector<8x128xf32>
    %866 = arith.addf %864, %865 : vector<8x128xf32>
    %867 = vector.broadcast %745 : vector<1x128xf32> to vector<8x128xf32>
    %868 = arith.addf %866, %867 : vector<8x128xf32>
    %869 = arith.mulf %868, %738 : vector<8x128xf32>
    %870 = math.tanh %869 : vector<8x128xf32>
    %871 = arith.mulf %870, %738 : vector<8x128xf32>
    %872 = arith.addf %871, %741 : vector<8x128xf32>
    %873 = vector.extract_strided_slice %872 {offsets = [0, 0], sizes = [8, 32], strides = [1, 1]} : vector<8x128xf32> to vector<8x32xf32>
    %874 = vector.extract_strided_slice %872 {offsets = [0, 32], sizes = [8, 32], strides = [1, 1]} : vector<8x128xf32> to vector<8x32xf32>
    %875 = vector.extract_strided_slice %872 {offsets = [0, 64], sizes = [8, 32], strides = [1, 1]} : vector<8x128xf32> to vector<8x32xf32>
    %876 = vector.extract_strided_slice %872 {offsets = [0, 96], sizes = [8, 32], strides = [1, 1]} : vector<8x128xf32> to vector<8x32xf32>
    %877 = arith.mulf %874, %838 : vector<8x32xf32>
    %878 = arith.mulf %873, %875 : vector<8x32xf32>
    %879 = arith.addf %877, %878 : vector<8x32xf32>
    %880 = math.tanh %879 : vector<8x32xf32>
    %881 = arith.mulf %876, %880 : vector<8x32xf32>
    %c0_i32_97 = arith.constant 0 : i32
    %882 = arith.cmpi sge, %863, %c0_i32_97 : i32
    %883 = arith.select %882, %881, %837 : vector<8x32xf32>
    %884 = arith.select %882, %879, %838 : vector<8x32xf32>
    %c3_i32 = arith.constant 3 : i32
    %c0_i32_98 = arith.constant 0 : i32
    %885 = arith.subi %c3_i32, %c0_i32_98 : i32
    %c7_i32_99 = arith.constant 7 : i32
    %886 = arith.minsi %885, %c7_i32_99 : i32
    %c8_i32_100 = arith.constant 8 : i32
    %887 = arith.muli %886, %c8_i32_100 : i32
    %888 = tpu.assume_multiple %887, 8 : i32
    %889 = arith.index_cast %888 : i32 to index
    %c0_101 = arith.constant 0 : index
    %890 = vector.load %arg10[%889, %c0_101] : memref<64x128xf32, #tpu.memory_space<vmem>>, vector<8x128xf32>
    %cst_102 = arith.constant dense<0.000000e+00> : vector<8x128xf32>
    %891 = tpu.matmul %861, %742, %cst_102 {dimension_numbers = #tpu.dot_dimension_numbers<[1], [0], [0], [1], [0, 0, 1, 1], [], []>} : vector<8x32xf32>, vector<32x128xf32>, vector<8x128xf32> -> vector<8x128xf32>
    %892 = arith.addf %890, %891 : vector<8x128xf32>
    %893 = arith.mulf %892, %738 : vector<8x128xf32>
    %894 = math.tanh %893 : vector<8x128xf32>
    %895 = arith.mulf %894, %738 : vector<8x128xf32>
    %896 = arith.addf %895, %741 : vector<8x128xf32>
    %897 = vector.extract_strided_slice %896 {offsets = [0, 0], sizes = [8, 32], strides = [1, 1]} : vector<8x128xf32> to vector<8x32xf32>
    %898 = vector.extract_strided_slice %896 {offsets = [0, 32], sizes = [8, 32], strides = [1, 1]} : vector<8x128xf32> to vector<8x32xf32>
    %899 = vector.extract_strided_slice %896 {offsets = [0, 64], sizes = [8, 32], strides = [1, 1]} : vector<8x128xf32> to vector<8x32xf32>
    %900 = vector.extract_strided_slice %896 {offsets = [0, 96], sizes = [8, 32], strides = [1, 1]} : vector<8x128xf32> to vector<8x32xf32>
    %901 = arith.mulf %898, %862 : vector<8x32xf32>
    %902 = arith.mulf %897, %899 : vector<8x32xf32>
    %903 = arith.addf %901, %902 : vector<8x32xf32>
    %904 = math.tanh %903 : vector<8x32xf32>
    %905 = arith.mulf %900, %904 : vector<8x32xf32>
    %c7_i32_103 = arith.constant 7 : i32
    %906 = arith.cmpi sle, %885, %c7_i32_103 : i32
    %907 = arith.select %906, %905, %861 : vector<8x32xf32>
    %908 = arith.select %906, %903, %862 : vector<8x32xf32>
    %c1_i32_104 = arith.constant 1 : i32
    %909 = arith.subi %c3_i32, %c1_i32_104 : i32
    %cst_105 = arith.constant dense<0.000000e+00> : vector<8x128xf32>
    %910 = tpu.matmul %861, %743, %cst_105 {dimension_numbers = #tpu.dot_dimension_numbers<[1], [0], [0], [1], [0, 0, 1, 1], [], []>} : vector<8x32xf32>, vector<32x128xf32>, vector<8x128xf32> -> vector<8x128xf32>
    %cst_106 = arith.constant dense<0.000000e+00> : vector<8x128xf32>
    %911 = tpu.matmul %883, %744, %cst_106 {dimension_numbers = #tpu.dot_dimension_numbers<[1], [0], [0], [1], [0, 0, 1, 1], [], []>} : vector<8x32xf32>, vector<32x128xf32>, vector<8x128xf32> -> vector<8x128xf32>
    %912 = arith.addf %910, %911 : vector<8x128xf32>
    %913 = vector.broadcast %745 : vector<1x128xf32> to vector<8x128xf32>
    %914 = arith.addf %912, %913 : vector<8x128xf32>
    %915 = arith.mulf %914, %738 : vector<8x128xf32>
    %916 = math.tanh %915 : vector<8x128xf32>
    %917 = arith.mulf %916, %738 : vector<8x128xf32>
    %918 = arith.addf %917, %741 : vector<8x128xf32>
    %919 = vector.extract_strided_slice %918 {offsets = [0, 0], sizes = [8, 32], strides = [1, 1]} : vector<8x128xf32> to vector<8x32xf32>
    %920 = vector.extract_strided_slice %918 {offsets = [0, 32], sizes = [8, 32], strides = [1, 1]} : vector<8x128xf32> to vector<8x32xf32>
    %921 = vector.extract_strided_slice %918 {offsets = [0, 64], sizes = [8, 32], strides = [1, 1]} : vector<8x128xf32> to vector<8x32xf32>
    %922 = vector.extract_strided_slice %918 {offsets = [0, 96], sizes = [8, 32], strides = [1, 1]} : vector<8x128xf32> to vector<8x32xf32>
    %923 = arith.mulf %920, %884 : vector<8x32xf32>
    %924 = arith.mulf %919, %921 : vector<8x32xf32>
    %925 = arith.addf %923, %924 : vector<8x32xf32>
    %926 = math.tanh %925 : vector<8x32xf32>
    %927 = arith.mulf %922, %926 : vector<8x32xf32>
    %c0_i32_107 = arith.constant 0 : i32
    %928 = arith.cmpi sge, %909, %c0_i32_107 : i32
    %929 = arith.select %928, %927, %883 : vector<8x32xf32>
    %930 = arith.select %928, %925, %884 : vector<8x32xf32>
    %c4_i32 = arith.constant 4 : i32
    %c0_i32_108 = arith.constant 0 : i32
    %931 = arith.subi %c4_i32, %c0_i32_108 : i32
    %c7_i32_109 = arith.constant 7 : i32
    %932 = arith.minsi %931, %c7_i32_109 : i32
    %c8_i32_110 = arith.constant 8 : i32
    %933 = arith.muli %932, %c8_i32_110 : i32
    %934 = tpu.assume_multiple %933, 8 : i32
    %935 = arith.index_cast %934 : i32 to index
    %c0_111 = arith.constant 0 : index
    %936 = vector.load %arg10[%935, %c0_111] : memref<64x128xf32, #tpu.memory_space<vmem>>, vector<8x128xf32>
    %cst_112 = arith.constant dense<0.000000e+00> : vector<8x128xf32>
    %937 = tpu.matmul %907, %742, %cst_112 {dimension_numbers = #tpu.dot_dimension_numbers<[1], [0], [0], [1], [0, 0, 1, 1], [], []>} : vector<8x32xf32>, vector<32x128xf32>, vector<8x128xf32> -> vector<8x128xf32>
    %938 = arith.addf %936, %937 : vector<8x128xf32>
    %939 = arith.mulf %938, %738 : vector<8x128xf32>
    %940 = math.tanh %939 : vector<8x128xf32>
    %941 = arith.mulf %940, %738 : vector<8x128xf32>
    %942 = arith.addf %941, %741 : vector<8x128xf32>
    %943 = vector.extract_strided_slice %942 {offsets = [0, 0], sizes = [8, 32], strides = [1, 1]} : vector<8x128xf32> to vector<8x32xf32>
    %944 = vector.extract_strided_slice %942 {offsets = [0, 32], sizes = [8, 32], strides = [1, 1]} : vector<8x128xf32> to vector<8x32xf32>
    %945 = vector.extract_strided_slice %942 {offsets = [0, 64], sizes = [8, 32], strides = [1, 1]} : vector<8x128xf32> to vector<8x32xf32>
    %946 = vector.extract_strided_slice %942 {offsets = [0, 96], sizes = [8, 32], strides = [1, 1]} : vector<8x128xf32> to vector<8x32xf32>
    %947 = arith.mulf %944, %908 : vector<8x32xf32>
    %948 = arith.mulf %943, %945 : vector<8x32xf32>
    %949 = arith.addf %947, %948 : vector<8x32xf32>
    %950 = math.tanh %949 : vector<8x32xf32>
    %951 = arith.mulf %946, %950 : vector<8x32xf32>
    %c7_i32_113 = arith.constant 7 : i32
    %952 = arith.cmpi sle, %931, %c7_i32_113 : i32
    %953 = arith.select %952, %951, %907 : vector<8x32xf32>
    %954 = arith.select %952, %949, %908 : vector<8x32xf32>
    %c1_i32_114 = arith.constant 1 : i32
    %955 = arith.subi %c4_i32, %c1_i32_114 : i32
    %cst_115 = arith.constant dense<0.000000e+00> : vector<8x128xf32>
    %956 = tpu.matmul %907, %743, %cst_115 {dimension_numbers = #tpu.dot_dimension_numbers<[1], [0], [0], [1], [0, 0, 1, 1], [], []>} : vector<8x32xf32>, vector<32x128xf32>, vector<8x128xf32> -> vector<8x128xf32>
    %cst_116 = arith.constant dense<0.000000e+00> : vector<8x128xf32>
    %957 = tpu.matmul %929, %744, %cst_116 {dimension_numbers = #tpu.dot_dimension_numbers<[1], [0], [0], [1], [0, 0, 1, 1], [], []>} : vector<8x32xf32>, vector<32x128xf32>, vector<8x128xf32> -> vector<8x128xf32>
    %958 = arith.addf %956, %957 : vector<8x128xf32>
    %959 = vector.broadcast %745 : vector<1x128xf32> to vector<8x128xf32>
    %960 = arith.addf %958, %959 : vector<8x128xf32>
    %961 = arith.mulf %960, %738 : vector<8x128xf32>
    %962 = math.tanh %961 : vector<8x128xf32>
    %963 = arith.mulf %962, %738 : vector<8x128xf32>
    %964 = arith.addf %963, %741 : vector<8x128xf32>
    %965 = vector.extract_strided_slice %964 {offsets = [0, 0], sizes = [8, 32], strides = [1, 1]} : vector<8x128xf32> to vector<8x32xf32>
    %966 = vector.extract_strided_slice %964 {offsets = [0, 32], sizes = [8, 32], strides = [1, 1]} : vector<8x128xf32> to vector<8x32xf32>
    %967 = vector.extract_strided_slice %964 {offsets = [0, 64], sizes = [8, 32], strides = [1, 1]} : vector<8x128xf32> to vector<8x32xf32>
    %968 = vector.extract_strided_slice %964 {offsets = [0, 96], sizes = [8, 32], strides = [1, 1]} : vector<8x128xf32> to vector<8x32xf32>
    %969 = arith.mulf %966, %930 : vector<8x32xf32>
    %970 = arith.mulf %965, %967 : vector<8x32xf32>
    %971 = arith.addf %969, %970 : vector<8x32xf32>
    %972 = math.tanh %971 : vector<8x32xf32>
    %973 = arith.mulf %968, %972 : vector<8x32xf32>
    %c0_i32_117 = arith.constant 0 : i32
    %974 = arith.cmpi sge, %955, %c0_i32_117 : i32
    %975 = arith.select %974, %973, %929 : vector<8x32xf32>
    %976 = arith.select %974, %971, %930 : vector<8x32xf32>
    %c5_i32 = arith.constant 5 : i32
    %c0_i32_118 = arith.constant 0 : i32
    %977 = arith.subi %c5_i32, %c0_i32_118 : i32
    %c7_i32_119 = arith.constant 7 : i32
    %978 = arith.minsi %977, %c7_i32_119 : i32
    %c8_i32_120 = arith.constant 8 : i32
    %979 = arith.muli %978, %c8_i32_120 : i32
    %980 = tpu.assume_multiple %979, 8 : i32
    %981 = arith.index_cast %980 : i32 to index
    %c0_121 = arith.constant 0 : index
    %982 = vector.load %arg10[%981, %c0_121] : memref<64x128xf32, #tpu.memory_space<vmem>>, vector<8x128xf32>
    %cst_122 = arith.constant dense<0.000000e+00> : vector<8x128xf32>
    %983 = tpu.matmul %953, %742, %cst_122 {dimension_numbers = #tpu.dot_dimension_numbers<[1], [0], [0], [1], [0, 0, 1, 1], [], []>} : vector<8x32xf32>, vector<32x128xf32>, vector<8x128xf32> -> vector<8x128xf32>
    %984 = arith.addf %982, %983 : vector<8x128xf32>
    %985 = arith.mulf %984, %738 : vector<8x128xf32>
    %986 = math.tanh %985 : vector<8x128xf32>
    %987 = arith.mulf %986, %738 : vector<8x128xf32>
    %988 = arith.addf %987, %741 : vector<8x128xf32>
    %989 = vector.extract_strided_slice %988 {offsets = [0, 0], sizes = [8, 32], strides = [1, 1]} : vector<8x128xf32> to vector<8x32xf32>
    %990 = vector.extract_strided_slice %988 {offsets = [0, 32], sizes = [8, 32], strides = [1, 1]} : vector<8x128xf32> to vector<8x32xf32>
    %991 = vector.extract_strided_slice %988 {offsets = [0, 64], sizes = [8, 32], strides = [1, 1]} : vector<8x128xf32> to vector<8x32xf32>
    %992 = vector.extract_strided_slice %988 {offsets = [0, 96], sizes = [8, 32], strides = [1, 1]} : vector<8x128xf32> to vector<8x32xf32>
    %993 = arith.mulf %990, %954 : vector<8x32xf32>
    %994 = arith.mulf %989, %991 : vector<8x32xf32>
    %995 = arith.addf %993, %994 : vector<8x32xf32>
    %996 = math.tanh %995 : vector<8x32xf32>
    %997 = arith.mulf %992, %996 : vector<8x32xf32>
    %c7_i32_123 = arith.constant 7 : i32
    %998 = arith.cmpi sle, %977, %c7_i32_123 : i32
    %999 = arith.select %998, %997, %953 : vector<8x32xf32>
    %1000 = arith.select %998, %995, %954 : vector<8x32xf32>
    %c1_i32_124 = arith.constant 1 : i32
    %1001 = arith.subi %c5_i32, %c1_i32_124 : i32
    %cst_125 = arith.constant dense<0.000000e+00> : vector<8x128xf32>
    %1002 = tpu.matmul %953, %743, %cst_125 {dimension_numbers = #tpu.dot_dimension_numbers<[1], [0], [0], [1], [0, 0, 1, 1], [], []>} : vector<8x32xf32>, vector<32x128xf32>, vector<8x128xf32> -> vector<8x128xf32>
    %cst_126 = arith.constant dense<0.000000e+00> : vector<8x128xf32>
    %1003 = tpu.matmul %975, %744, %cst_126 {dimension_numbers = #tpu.dot_dimension_numbers<[1], [0], [0], [1], [0, 0, 1, 1], [], []>} : vector<8x32xf32>, vector<32x128xf32>, vector<8x128xf32> -> vector<8x128xf32>
    %1004 = arith.addf %1002, %1003 : vector<8x128xf32>
    %1005 = vector.broadcast %745 : vector<1x128xf32> to vector<8x128xf32>
    %1006 = arith.addf %1004, %1005 : vector<8x128xf32>
    %1007 = arith.mulf %1006, %738 : vector<8x128xf32>
    %1008 = math.tanh %1007 : vector<8x128xf32>
    %1009 = arith.mulf %1008, %738 : vector<8x128xf32>
    %1010 = arith.addf %1009, %741 : vector<8x128xf32>
    %1011 = vector.extract_strided_slice %1010 {offsets = [0, 0], sizes = [8, 32], strides = [1, 1]} : vector<8x128xf32> to vector<8x32xf32>
    %1012 = vector.extract_strided_slice %1010 {offsets = [0, 32], sizes = [8, 32], strides = [1, 1]} : vector<8x128xf32> to vector<8x32xf32>
    %1013 = vector.extract_strided_slice %1010 {offsets = [0, 64], sizes = [8, 32], strides = [1, 1]} : vector<8x128xf32> to vector<8x32xf32>
    %1014 = vector.extract_strided_slice %1010 {offsets = [0, 96], sizes = [8, 32], strides = [1, 1]} : vector<8x128xf32> to vector<8x32xf32>
    %1015 = arith.mulf %1012, %976 : vector<8x32xf32>
    %1016 = arith.mulf %1011, %1013 : vector<8x32xf32>
    %1017 = arith.addf %1015, %1016 : vector<8x32xf32>
    %1018 = math.tanh %1017 : vector<8x32xf32>
    %1019 = arith.mulf %1014, %1018 : vector<8x32xf32>
    %c0_i32_127 = arith.constant 0 : i32
    %1020 = arith.cmpi sge, %1001, %c0_i32_127 : i32
    %1021 = arith.select %1020, %1019, %975 : vector<8x32xf32>
    %1022 = arith.select %1020, %1017, %976 : vector<8x32xf32>
    %c6_i32 = arith.constant 6 : i32
    %c0_i32_128 = arith.constant 0 : i32
    %1023 = arith.subi %c6_i32, %c0_i32_128 : i32
    %c7_i32_129 = arith.constant 7 : i32
    %1024 = arith.minsi %1023, %c7_i32_129 : i32
    %c8_i32_130 = arith.constant 8 : i32
    %1025 = arith.muli %1024, %c8_i32_130 : i32
    %1026 = tpu.assume_multiple %1025, 8 : i32
    %1027 = arith.index_cast %1026 : i32 to index
    %c0_131 = arith.constant 0 : index
    %1028 = vector.load %arg10[%1027, %c0_131] : memref<64x128xf32, #tpu.memory_space<vmem>>, vector<8x128xf32>
    %cst_132 = arith.constant dense<0.000000e+00> : vector<8x128xf32>
    %1029 = tpu.matmul %999, %742, %cst_132 {dimension_numbers = #tpu.dot_dimension_numbers<[1], [0], [0], [1], [0, 0, 1, 1], [], []>} : vector<8x32xf32>, vector<32x128xf32>, vector<8x128xf32> -> vector<8x128xf32>
    %1030 = arith.addf %1028, %1029 : vector<8x128xf32>
    %1031 = arith.mulf %1030, %738 : vector<8x128xf32>
    %1032 = math.tanh %1031 : vector<8x128xf32>
    %1033 = arith.mulf %1032, %738 : vector<8x128xf32>
    %1034 = arith.addf %1033, %741 : vector<8x128xf32>
    %1035 = vector.extract_strided_slice %1034 {offsets = [0, 0], sizes = [8, 32], strides = [1, 1]} : vector<8x128xf32> to vector<8x32xf32>
    %1036 = vector.extract_strided_slice %1034 {offsets = [0, 32], sizes = [8, 32], strides = [1, 1]} : vector<8x128xf32> to vector<8x32xf32>
    %1037 = vector.extract_strided_slice %1034 {offsets = [0, 64], sizes = [8, 32], strides = [1, 1]} : vector<8x128xf32> to vector<8x32xf32>
    %1038 = vector.extract_strided_slice %1034 {offsets = [0, 96], sizes = [8, 32], strides = [1, 1]} : vector<8x128xf32> to vector<8x32xf32>
    %1039 = arith.mulf %1036, %1000 : vector<8x32xf32>
    %1040 = arith.mulf %1035, %1037 : vector<8x32xf32>
    %1041 = arith.addf %1039, %1040 : vector<8x32xf32>
    %1042 = math.tanh %1041 : vector<8x32xf32>
    %1043 = arith.mulf %1038, %1042 : vector<8x32xf32>
    %c7_i32_133 = arith.constant 7 : i32
    %1044 = arith.cmpi sle, %1023, %c7_i32_133 : i32
    %1045 = arith.select %1044, %1043, %999 : vector<8x32xf32>
    %1046 = arith.select %1044, %1041, %1000 : vector<8x32xf32>
    %c1_i32_134 = arith.constant 1 : i32
    %1047 = arith.subi %c6_i32, %c1_i32_134 : i32
    %cst_135 = arith.constant dense<0.000000e+00> : vector<8x128xf32>
    %1048 = tpu.matmul %999, %743, %cst_135 {dimension_numbers = #tpu.dot_dimension_numbers<[1], [0], [0], [1], [0, 0, 1, 1], [], []>} : vector<8x32xf32>, vector<32x128xf32>, vector<8x128xf32> -> vector<8x128xf32>
    %cst_136 = arith.constant dense<0.000000e+00> : vector<8x128xf32>
    %1049 = tpu.matmul %1021, %744, %cst_136 {dimension_numbers = #tpu.dot_dimension_numbers<[1], [0], [0], [1], [0, 0, 1, 1], [], []>} : vector<8x32xf32>, vector<32x128xf32>, vector<8x128xf32> -> vector<8x128xf32>
    %1050 = arith.addf %1048, %1049 : vector<8x128xf32>
    %1051 = vector.broadcast %745 : vector<1x128xf32> to vector<8x128xf32>
    %1052 = arith.addf %1050, %1051 : vector<8x128xf32>
    %1053 = arith.mulf %1052, %738 : vector<8x128xf32>
    %1054 = math.tanh %1053 : vector<8x128xf32>
    %1055 = arith.mulf %1054, %738 : vector<8x128xf32>
    %1056 = arith.addf %1055, %741 : vector<8x128xf32>
    %1057 = vector.extract_strided_slice %1056 {offsets = [0, 0], sizes = [8, 32], strides = [1, 1]} : vector<8x128xf32> to vector<8x32xf32>
    %1058 = vector.extract_strided_slice %1056 {offsets = [0, 32], sizes = [8, 32], strides = [1, 1]} : vector<8x128xf32> to vector<8x32xf32>
    %1059 = vector.extract_strided_slice %1056 {offsets = [0, 64], sizes = [8, 32], strides = [1, 1]} : vector<8x128xf32> to vector<8x32xf32>
    %1060 = vector.extract_strided_slice %1056 {offsets = [0, 96], sizes = [8, 32], strides = [1, 1]} : vector<8x128xf32> to vector<8x32xf32>
    %1061 = arith.mulf %1058, %1022 : vector<8x32xf32>
    %1062 = arith.mulf %1057, %1059 : vector<8x32xf32>
    %1063 = arith.addf %1061, %1062 : vector<8x32xf32>
    %1064 = math.tanh %1063 : vector<8x32xf32>
    %1065 = arith.mulf %1060, %1064 : vector<8x32xf32>
    %c0_i32_137 = arith.constant 0 : i32
    %1066 = arith.cmpi sge, %1047, %c0_i32_137 : i32
    %1067 = arith.select %1066, %1065, %1021 : vector<8x32xf32>
    %1068 = arith.select %1066, %1063, %1022 : vector<8x32xf32>
    %c7_i32_138 = arith.constant 7 : i32
    %c0_i32_139 = arith.constant 0 : i32
    %1069 = arith.subi %c7_i32_138, %c0_i32_139 : i32
    %c7_i32_140 = arith.constant 7 : i32
    %1070 = arith.minsi %1069, %c7_i32_140 : i32
    %c8_i32_141 = arith.constant 8 : i32
    %1071 = arith.muli %1070, %c8_i32_141 : i32
    %1072 = tpu.assume_multiple %1071, 8 : i32
    %1073 = arith.index_cast %1072 : i32 to index
    %c0_142 = arith.constant 0 : index
    %1074 = vector.load %arg10[%1073, %c0_142] : memref<64x128xf32, #tpu.memory_space<vmem>>, vector<8x128xf32>
    %cst_143 = arith.constant dense<0.000000e+00> : vector<8x128xf32>
    %1075 = tpu.matmul %1045, %742, %cst_143 {dimension_numbers = #tpu.dot_dimension_numbers<[1], [0], [0], [1], [0, 0, 1, 1], [], []>} : vector<8x32xf32>, vector<32x128xf32>, vector<8x128xf32> -> vector<8x128xf32>
    %1076 = arith.addf %1074, %1075 : vector<8x128xf32>
    %1077 = arith.mulf %1076, %738 : vector<8x128xf32>
    %1078 = math.tanh %1077 : vector<8x128xf32>
    %1079 = arith.mulf %1078, %738 : vector<8x128xf32>
    %1080 = arith.addf %1079, %741 : vector<8x128xf32>
    %1081 = vector.extract_strided_slice %1080 {offsets = [0, 0], sizes = [8, 32], strides = [1, 1]} : vector<8x128xf32> to vector<8x32xf32>
    %1082 = vector.extract_strided_slice %1080 {offsets = [0, 32], sizes = [8, 32], strides = [1, 1]} : vector<8x128xf32> to vector<8x32xf32>
    %1083 = vector.extract_strided_slice %1080 {offsets = [0, 64], sizes = [8, 32], strides = [1, 1]} : vector<8x128xf32> to vector<8x32xf32>
    %1084 = vector.extract_strided_slice %1080 {offsets = [0, 96], sizes = [8, 32], strides = [1, 1]} : vector<8x128xf32> to vector<8x32xf32>
    %1085 = arith.mulf %1082, %1046 : vector<8x32xf32>
    %1086 = arith.mulf %1081, %1083 : vector<8x32xf32>
    %1087 = arith.addf %1085, %1086 : vector<8x32xf32>
    %1088 = math.tanh %1087 : vector<8x32xf32>
    %1089 = arith.mulf %1084, %1088 : vector<8x32xf32>
    %c7_i32_144 = arith.constant 7 : i32
    %1090 = arith.cmpi sle, %1069, %c7_i32_144 : i32
    %1091 = arith.select %1090, %1089, %1045 : vector<8x32xf32>
    %1092 = arith.select %1090, %1087, %1046 : vector<8x32xf32>
    %c1_i32_145 = arith.constant 1 : i32
    %1093 = arith.subi %c7_i32_138, %c1_i32_145 : i32
    %cst_146 = arith.constant dense<0.000000e+00> : vector<8x128xf32>
    %1094 = tpu.matmul %1045, %743, %cst_146 {dimension_numbers = #tpu.dot_dimension_numbers<[1], [0], [0], [1], [0, 0, 1, 1], [], []>} : vector<8x32xf32>, vector<32x128xf32>, vector<8x128xf32> -> vector<8x128xf32>
    %cst_147 = arith.constant dense<0.000000e+00> : vector<8x128xf32>
    %1095 = tpu.matmul %1067, %744, %cst_147 {dimension_numbers = #tpu.dot_dimension_numbers<[1], [0], [0], [1], [0, 0, 1, 1], [], []>} : vector<8x32xf32>, vector<32x128xf32>, vector<8x128xf32> -> vector<8x128xf32>
    %1096 = arith.addf %1094, %1095 : vector<8x128xf32>
    %1097 = vector.broadcast %745 : vector<1x128xf32> to vector<8x128xf32>
    %1098 = arith.addf %1096, %1097 : vector<8x128xf32>
    %1099 = arith.mulf %1098, %738 : vector<8x128xf32>
    %1100 = math.tanh %1099 : vector<8x128xf32>
    %1101 = arith.mulf %1100, %738 : vector<8x128xf32>
    %1102 = arith.addf %1101, %741 : vector<8x128xf32>
    %1103 = vector.extract_strided_slice %1102 {offsets = [0, 0], sizes = [8, 32], strides = [1, 1]} : vector<8x128xf32> to vector<8x32xf32>
    %1104 = vector.extract_strided_slice %1102 {offsets = [0, 32], sizes = [8, 32], strides = [1, 1]} : vector<8x128xf32> to vector<8x32xf32>
    %1105 = vector.extract_strided_slice %1102 {offsets = [0, 64], sizes = [8, 32], strides = [1, 1]} : vector<8x128xf32> to vector<8x32xf32>
    %1106 = vector.extract_strided_slice %1102 {offsets = [0, 96], sizes = [8, 32], strides = [1, 1]} : vector<8x128xf32> to vector<8x32xf32>
    %1107 = arith.mulf %1104, %1068 : vector<8x32xf32>
    %1108 = arith.mulf %1103, %1105 : vector<8x32xf32>
    %1109 = arith.addf %1107, %1108 : vector<8x32xf32>
    %1110 = math.tanh %1109 : vector<8x32xf32>
    %1111 = arith.mulf %1106, %1110 : vector<8x32xf32>
    %c0_i32_148 = arith.constant 0 : i32
    %1112 = arith.cmpi sge, %1093, %c0_i32_148 : i32
    %1113 = arith.select %1112, %1111, %1067 : vector<8x32xf32>
    %1114 = arith.select %1112, %1109, %1068 : vector<8x32xf32>
    %c8_i32_149 = arith.constant 8 : i32
    %c0_i32_150 = arith.constant 0 : i32
    %1115 = arith.subi %c8_i32_149, %c0_i32_150 : i32
    %c7_i32_151 = arith.constant 7 : i32
    %1116 = arith.minsi %1115, %c7_i32_151 : i32
    %c8_i32_152 = arith.constant 8 : i32
    %1117 = arith.muli %1116, %c8_i32_152 : i32
    %1118 = tpu.assume_multiple %1117, 8 : i32
    %1119 = arith.index_cast %1118 : i32 to index
    %c0_153 = arith.constant 0 : index
    %1120 = vector.load %arg10[%1119, %c0_153] : memref<64x128xf32, #tpu.memory_space<vmem>>, vector<8x128xf32>
    %cst_154 = arith.constant dense<0.000000e+00> : vector<8x128xf32>
    %1121 = tpu.matmul %1091, %742, %cst_154 {dimension_numbers = #tpu.dot_dimension_numbers<[1], [0], [0], [1], [0, 0, 1, 1], [], []>} : vector<8x32xf32>, vector<32x128xf32>, vector<8x128xf32> -> vector<8x128xf32>
    %1122 = arith.addf %1120, %1121 : vector<8x128xf32>
    %1123 = arith.mulf %1122, %738 : vector<8x128xf32>
    %1124 = math.tanh %1123 : vector<8x128xf32>
    %1125 = arith.mulf %1124, %738 : vector<8x128xf32>
    %1126 = arith.addf %1125, %741 : vector<8x128xf32>
    %1127 = vector.extract_strided_slice %1126 {offsets = [0, 0], sizes = [8, 32], strides = [1, 1]} : vector<8x128xf32> to vector<8x32xf32>
    %1128 = vector.extract_strided_slice %1126 {offsets = [0, 32], sizes = [8, 32], strides = [1, 1]} : vector<8x128xf32> to vector<8x32xf32>
    %1129 = vector.extract_strided_slice %1126 {offsets = [0, 64], sizes = [8, 32], strides = [1, 1]} : vector<8x128xf32> to vector<8x32xf32>
    %1130 = vector.extract_strided_slice %1126 {offsets = [0, 96], sizes = [8, 32], strides = [1, 1]} : vector<8x128xf32> to vector<8x32xf32>
    %1131 = arith.mulf %1128, %1092 : vector<8x32xf32>
    %1132 = arith.mulf %1127, %1129 : vector<8x32xf32>
    %1133 = arith.addf %1131, %1132 : vector<8x32xf32>
    %1134 = math.tanh %1133 : vector<8x32xf32>
    %1135 = arith.mulf %1130, %1134 : vector<8x32xf32>
    %c7_i32_155 = arith.constant 7 : i32
    %1136 = arith.cmpi sle, %1115, %c7_i32_155 : i32
    %1137 = arith.select %1136, %1135, %1091 : vector<8x32xf32>
    %1138 = arith.select %1136, %1133, %1092 : vector<8x32xf32>
    %c1_i32_156 = arith.constant 1 : i32
    %1139 = arith.subi %c8_i32_149, %c1_i32_156 : i32
    %cst_157 = arith.constant dense<0.000000e+00> : vector<8x128xf32>
    %1140 = tpu.matmul %1091, %743, %cst_157 {dimension_numbers = #tpu.dot_dimension_numbers<[1], [0], [0], [1], [0, 0, 1, 1], [], []>} : vector<8x32xf32>, vector<32x128xf32>, vector<8x128xf32> -> vector<8x128xf32>
    %cst_158 = arith.constant dense<0.000000e+00> : vector<8x128xf32>
    %1141 = tpu.matmul %1113, %744, %cst_158 {dimension_numbers = #tpu.dot_dimension_numbers<[1], [0], [0], [1], [0, 0, 1, 1], [], []>} : vector<8x32xf32>, vector<32x128xf32>, vector<8x128xf32> -> vector<8x128xf32>
    %1142 = arith.addf %1140, %1141 : vector<8x128xf32>
    %1143 = vector.broadcast %745 : vector<1x128xf32> to vector<8x128xf32>
    %1144 = arith.addf %1142, %1143 : vector<8x128xf32>
    %1145 = arith.mulf %1144, %738 : vector<8x128xf32>
    %1146 = math.tanh %1145 : vector<8x128xf32>
    %1147 = arith.mulf %1146, %738 : vector<8x128xf32>
    %1148 = arith.addf %1147, %741 : vector<8x128xf32>
    %1149 = vector.extract_strided_slice %1148 {offsets = [0, 0], sizes = [8, 32], strides = [1, 1]} : vector<8x128xf32> to vector<8x32xf32>
    %1150 = vector.extract_strided_slice %1148 {offsets = [0, 32], sizes = [8, 32], strides = [1, 1]} : vector<8x128xf32> to vector<8x32xf32>
    %1151 = vector.extract_strided_slice %1148 {offsets = [0, 64], sizes = [8, 32], strides = [1, 1]} : vector<8x128xf32> to vector<8x32xf32>
    %1152 = vector.extract_strided_slice %1148 {offsets = [0, 96], sizes = [8, 32], strides = [1, 1]} : vector<8x128xf32> to vector<8x32xf32>
    %1153 = arith.mulf %1150, %1114 : vector<8x32xf32>
    %1154 = arith.mulf %1149, %1151 : vector<8x32xf32>
    %1155 = arith.addf %1153, %1154 : vector<8x32xf32>
    %1156 = math.tanh %1155 : vector<8x32xf32>
    %1157 = arith.mulf %1152, %1156 : vector<8x32xf32>
    %c0_i32_159 = arith.constant 0 : i32
    %1158 = arith.cmpi sge, %1139, %c0_i32_159 : i32
    %1159 = arith.select %1158, %1157, %1113 : vector<8x32xf32>
    %1160 = arith.select %1158, %1155, %1114 : vector<8x32xf32>
    %c9_i32 = arith.constant 9 : i32
    %c0_160 = arith.constant 0 : index
    %c0_161 = arith.constant 0 : index
    %1161 = vector.load %arg7[%c0_160, %c0_161] : memref<32x128xf32, #tpu.memory_space<vmem>>, vector<32x128xf32>
    %cst_162 = arith.constant dense<0.000000e+00> : vector<8x128xf32>
    %1162 = tpu.matmul %1159, %1161, %cst_162 {dimension_numbers = #tpu.dot_dimension_numbers<[1], [0], [0], [1], [0, 0, 1, 1], [], []>} : vector<8x32xf32>, vector<32x128xf32>, vector<8x128xf32> -> vector<8x128xf32>
    %c0_163 = arith.constant 0 : index
    %c0_164 = arith.constant 0 : index
    %1163 = vector.load %arg8[%c0_163, %c0_164] : memref<1x128xf32, #tpu.memory_space<vmem>>, vector<1x128xf32>
    %1164 = vector.broadcast %1163 : vector<1x128xf32> to vector<8x128xf32>
    %1165 = arith.addf %1162, %1164 : vector<8x128xf32>
    %c0_165 = arith.constant 0 : index
    %c0_166 = arith.constant 0 : index
    %1166 = vector.load %arg9[%c0_165, %c0_166] : memref<8x128xf32, #tpu.memory_space<vmem>>, vector<8x128xf32>
    tpu.vector_store %arg9[%c0_165, %c0_166], %1165 {strides = array<i32>} : memref<8x128xf32, #tpu.memory_space<vmem>>, vector<8x128xf32>,
    return
  }
}

</mosaic_0001>

<llo_original>
// kernel: lstm_with_embeddings_forward.1
$region0: #{lstm_with_embeddings_forward.1}
  #allocation0 [shape = 'u32[]', space=smem, size = 0x4, offset = 0x4, fixed_abs, tag = 'smem constant byte address 0x4 - core index']
  #allocation1 [shape = 'u32[144,128]{1,0:T(1,128)}', space=vmem, size = 0x12000, scoped, tag = 'internal scratch']
  #allocation2 [shape = 'f32[64,128]{1,0:T(8,128)}', space=vmem, size = 0x8000, scoped, tag = 'scratch operand']
  %s0 = inlined_call_operand.vmem [shape: s32[64,14], index: 0, kind: input, shape index: {}]
  %s1 = inlined_call_operand.hbm [shape: f32[512,128], index: 1, kind: input, shape index: {}]
  %s2 = inlined_call_operand.vmem [shape: f32[1,128], index: 2, kind: input, shape index: {}]
  %s3 = inlined_call_operand.vmem [shape: f32[32,128], index: 3, kind: input, shape index: {}]
  %s4 = inlined_call_operand.vmem [shape: f32[32,128], index: 4, kind: input, shape index: {}]
  %s5 = inlined_call_operand.vmem [shape: f32[32,128], index: 5, kind: input, shape index: {}]
  %s6 = inlined_call_operand.vmem [shape: f32[1,128], index: 6, kind: input, shape index: {}]
  %s7 = inlined_call_operand.vmem [shape: f32[32,128], index: 7, kind: input, shape index: {}]
  %s8 = inlined_call_operand.vmem [shape: f32[1,128], index: 8, kind: input, shape index: {}]
  %s9 = inlined_call_operand.vmem [shape: f32[8,128], index: 9, kind: output, shape index: {}]
  %s10 = sld [smem:[#allocation0]]
  $region50: #{lstm_with_embeddings_forward.1} parent=0
    _
  %s12 = ssub.s32 1, %s10
  %s13 = scalar_select 0, %s12, %s10
  $region1: #{lstm_with_embeddings_forward.1} parent=0
    #allocation3 [shape = 'u8[262144]{0}', space=vmem, size = 0x40000, scoped, tag = 'input window, operand 1, single buffered']
    #allocation4 [shape = 's32[1]{0}', space=sflag, size = 0x4, scoped, tag = 'scoped memory for lstm_with_embeddings_forward.1']
    %14 = vsyncpa [#allocation4], 0
    // Predicated region
    $region2: #{lstm_with_embeddings_forward.1} parent=1 // pred_check
      _
    $region3: #{lstm_with_embeddings_forward.1} parent=1 // pred_check_branch
      %16 = sbr.rel (0) target = $region5
    $region4: #{lstm_with_embeddings_forward.1} parent=1 // pred_region
      _
    $region5: #{lstm_with_embeddings_forward.1} parent=1 // pred_fallthru
      _
    // Predicated region
    $region6: #{lstm_with_embeddings_forward.1} parent=1 // pred_check
      _
    $region7: #{lstm_with_embeddings_forward.1} parent=1 // pred_check_branch
      %18 = sbr.rel (0) target = $region9
    $region8: #{lstm_with_embeddings_forward.1} parent=1 // pred_region
      %s20 = ssub.s32 8192, 8192
      %21 = vsyncadd [#allocation4], %s20
      %s22 = sshll.u32 [#allocation3], 4
      %s23 = int_to_ptr.vmem [resolvable:$true] %s22
      %28 = dma.hbm_to_vmem [thread:$0]  %s1, 8192, %s23, [#allocation4], 128, 128, 8
    $region9: #{lstm_with_embeddings_forward.1} parent=1 // pred_fallthru
      _
    // Predicated region
    $region10: #{lstm_with_embeddings_forward.1} parent=1 // pred_check
      _
    $region11: #{lstm_with_embeddings_forward.1} parent=1 // pred_check_branch
      %30 = sbr.rel (0) target = $region13
    $region12: #{lstm_with_embeddings_forward.1} parent=1 // pred_region
      _
    $region13: #{lstm_with_embeddings_forward.1} parent=1 // pred_fallthru
      _
    // Predicated region
    $region14: #{lstm_with_embeddings_forward.1} parent=1 // pred_check
      _
    $region15: #{lstm_with_embeddings_forward.1} parent=1 // pred_check_branch
      %32 = sbr.rel (0) target = $region17
    $region16: #{lstm_with_embeddings_forward.1} parent=1 // pred_region
      _
    $region17: #{lstm_with_embeddings_forward.1} parent=1 // pred_fallthru
      _
    // Predicated region
    $region18: #{lstm_with_embeddings_forward.1} parent=1 // pred_check
      _
    $region19: #{lstm_with_embeddings_forward.1} parent=1 // pred_check_branch
      %34 = sbr.rel (0) target = $region21
    $region20: #{lstm_with_embeddings_forward.1} parent=1 // pred_region
      _
    $region21: #{lstm_with_embeddings_forward.1} parent=1 // pred_fallthru
      _
    // Predicated region
    $region22: #{lstm_with_embeddings_forward.1} parent=1 // pred_check
      _
    $region23: #{lstm_with_embeddings_forward.1} parent=1 // pred_check_branch
      %36 = sbr.rel (0) target = $region25
    $region24: #{lstm_with_embeddings_forward.1} parent=1 // pred_region
      _
    $region25: #{lstm_with_embeddings_forward.1} parent=1 // pred_fallthru
      _
    // Predicated region
    $region26: #{lstm_with_embeddings_forward.1} parent=1 // pred_check
      _
    $region27: #{lstm_with_embeddings_forward.1} parent=1 // pred_check_branch
      %38 = sbr.rel (0) target = $region29
    $region28: #{lstm_with_embeddings_forward.1} parent=1 // pred_region
      _
    $region29: #{lstm_with_embeddings_forward.1} parent=1 // pred_fallthru
      _
    // Predicated region
    $region30: #{lstm_with_embeddings_forward.1} parent=1 // pred_check
      _
    $region31: #{lstm_with_embeddings_forward.1} parent=1 // pred_check_branch
      %40 = sbr.rel (0) target = $region33
    $region32: #{lstm_with_embeddings_forward.1} parent=1 // pred_region
      _
    $region33: #{lstm_with_embeddings_forward.1} parent=1 // pred_fallthru
      _
    // Predicated region
    $region34: #{lstm_with_embeddings_forward.1} parent=1 // pred_check
      _
    $region35: #{lstm_with_embeddings_forward.1} parent=1 // pred_check_branch
      %42 = sbr.rel (0) target = $region37
    $region36: #{lstm_with_embeddings_forward.1} parent=1 // pred_region
      _
    $region37: #{lstm_with_embeddings_forward.1} parent=1 // pred_fallthru
      _
    // Predicated region
    $region38: #{lstm_with_embeddings_forward.1} parent=1 // pred_check
      _
    $region39: #{lstm_with_embeddings_forward.1} parent=1 // pred_check_branch
      %44 = sbr.rel (0) target = $region41
    $region40: #{lstm_with_embeddings_forward.1} parent=1 // pred_region
      %45 = dma.done [#allocation4], 8192
    $region41: #{lstm_with_embeddings_forward.1} parent=1 // pred_fallthru
      _
    %v46 = vlaneseq
    %v47 = vand.u32 %v46, 127
    %v48 = vadd.s32 %v47, 128
    %v49 = vadd.s32 %v47, 256
    %v50 = vadd.s32 %v47, 384
    %v51 = vld [vmem:[%s2] sm:$0x1]
    %v52 = vld [vmem:[%s0] sm:$0xff]
    %53 = vset.pattern.permute.xlu0 0
    %54 = vperm.xlu0 %53, %v52
    %v55 = vpop.permute.xlu0 %54
    %vm56 = vcmp.eq.s32.totalorder %v55, %v47
    %vm57 = vcmp.eq.s32.totalorder %v55, %v48
    %vm58 = vcmp.eq.s32.totalorder %v55, %v49
    %vm59 = vcmp.eq.s32.totalorder %v55, %v50
    %v60 = vsel %vm56, 1, 0
    %v61 = vsel %vm57, 1, 0
    %v62 = vsel %vm58, 1, 0
    %v63 = vsel %vm59, 1, 0
    %v64 = vcvt.s32.f32 %v60
    %v65 = vcvt.s32.f32 %v61
    %v66 = vcvt.s32.f32 %v62
    %v67 = vcvt.s32.f32 %v63
    %v68 = vadd.f32 %v64, 0.0
    %v69 = vadd.f32 %v65, 0.0
    %v70 = vadd.f32 %v66, 0.0
    %v71 = vadd.f32 %v67, 0.0
    %72 = vset.pattern.permute.xlu0 1
    %73 = vperm.xlu0 %72, %v52
    %v74 = vpop.permute.xlu0 %73
    %vm75 = vcmp.eq.s32.totalorder %v74, %v47
    %vm76 = vcmp.eq.s32.totalorder %v74, %v48
    %vm77 = vcmp.eq.s32.totalorder %v74, %v49
    %vm78 = vcmp.eq.s32.totalorder %v74, %v50
    %v79 = vsel %vm75, 1, 0
    %v80 = vsel %vm76, 1, 0
    %v81 = vsel %vm77, 1, 0
    %v82 = vsel %vm78, 1, 0
    %v83 = vcvt.s32.f32 %v79
    %v84 = vcvt.s32.f32 %v80
    %v85 = vcvt.s32.f32 %v81
    %v86 = vcvt.s32.f32 %v82
    %v87 = vadd.f32 %v68, %v83
    %v88 = vadd.f32 %v69, %v84
    %v89 = vadd.f32 %v70, %v85
    %v90 = vadd.f32 %v71, %v86
    %91 = vset.pattern.permute.xlu0 2
    %92 = vperm.xlu0 %91, %v52
    %v93 = vpop.permute.xlu0 %92
    %vm94 = vcmp.eq.s32.totalorder %v93, %v47
    %vm95 = vcmp.eq.s32.totalorder %v93, %v48
    %vm96 = vcmp.eq.s32.totalorder %v93, %v49
    %vm97 = vcmp.eq.s32.totalorder %v93, %v50
    %v98 = vsel %vm94, 1, 0
    %v99 = vsel %vm95, 1, 0
    %v100 = vsel %vm96, 1, 0
    %v101 = vsel %vm97, 1, 0
    %v102 = vcvt.s32.f32 %v98
    %v103 = vcvt.s32.f32 %v99
    %v104 = vcvt.s32.f32 %v100
    %v105 = vcvt.s32.f32 %v101
    %v106 = vadd.f32 %v87, %v102
    %v107 = vadd.f32 %v88, %v103
    %v108 = vadd.f32 %v89, %v104
    %v109 = vadd.f32 %v90, %v105
    %110 = vset.pattern.permute.xlu0 3
    %111 = vperm.xlu0 %110, %v52
    %v112 = vpop.permute.xlu0 %111
    %vm113 = vcmp.eq.s32.totalorder %v112, %v47
    %vm114 = vcmp.eq.s32.totalorder %v112, %v48
    %vm115 = vcmp.eq.s32.totalorder %v112, %v49
    %vm116 = vcmp.eq.s32.totalorder %v112, %v50
    %v117 = vsel %vm113, 1, 0
    %v118 = vsel %vm114, 1, 0
    %v119 = vsel %vm115, 1, 0
    %v120 = vsel %vm116, 1, 0
    %v121 = vcvt.s32.f32 %v117
    %v122 = vcvt.s32.f32 %v118
    %v123 = vcvt.s32.f32 %v119
    %v124 = vcvt.s32.f32 %v120
    %v125 = vadd.f32 %v106, %v121
    %v126 = vadd.f32 %v107, %v122
    %v127 = vadd.f32 %v108, %v123
    %v128 = vadd.f32 %v109, %v124
    %129 = vset.pattern.permute.xlu0 4
    %130 = vperm.xlu0 %129, %v52
    %v131 = vpop.permute.xlu0 %130
    %vm132 = vcmp.eq.s32.totalorder %v131, %v47
    %vm133 = vcmp.eq.s32.totalorder %v131, %v48
    %vm134 = vcmp.eq.s32.totalorder %v131, %v49
    %vm135 = vcmp.eq.s32.totalorder %v131, %v50
    %v136 = vsel %vm132, 1, 0
    %v137 = vsel %vm133, 1, 0
    %v138 = vsel %vm134, 1, 0
    %v139 = vsel %vm135, 1, 0
    %v140 = vcvt.s32.f32 %v136
    %v141 = vcvt.s32.f32 %v137
    %v142 = vcvt.s32.f32 %v138
    %v143 = vcvt.s32.f32 %v139
    %v144 = vadd.f32 %v125, %v140
    %v145 = vadd.f32 %v126, %v141
    %v146 = vadd.f32 %v127, %v142
    %v147 = vadd.f32 %v128, %v143
    %148 = vset.pattern.permute.xlu0 5
    %149 = vperm.xlu0 %148, %v52
    %v150 = vpop.permute.xlu0 %149
    %vm151 = vcmp.eq.s32.totalorder %v150, %v47
    %vm152 = vcmp.eq.s32.totalorder %v150, %v48
    %vm153 = vcmp.eq.s32.totalorder %v150, %v49
    %vm154 = vcmp.eq.s32.totalorder %v150, %v50
    %v155 = vsel %vm151, 1, 0
    %v156 = vsel %vm152, 1, 0
    %v157 = vsel %vm153, 1, 0
    %v158 = vsel %vm154, 1, 0
    %v159 = vcvt.s32.f32 %v155
    %v160 = vcvt.s32.f32 %v156
    %v161 = vcvt.s32.f32 %v157
    %v162 = vcvt.s32.f32 %v158
    %v163 = vadd.f32 %v144, %v159
    %v164 = vadd.f32 %v145, %v160
    %v165 = vadd.f32 %v146, %v161
    %v166 = vadd.f32 %v147, %v162
    %167 = vset.pattern.permute.xlu0 6
    %168 = vperm.xlu0 %167, %v52
    %v169 = vpop.permute.xlu0 %168
    %vm170 = vcmp.eq.s32.totalorder %v169, %v47
    %vm171 = vcmp.eq.s32.totalorder %v169, %v48
    %vm172 = vcmp.eq.s32.totalorder %v169, %v49
    %vm173 = vcmp.eq.s32.totalorder %v169, %v50
    %v174 = vsel %vm170, 1, 0
    %v175 = vsel %vm171, 1, 0
    %v176 = vsel %vm172, 1, 0
    %v177 = vsel %vm173, 1, 0
    %v178 = vcvt.s32.f32 %v174
    %v179 = vcvt.s32.f32 %v175
    %v180 = vcvt.s32.f32 %v176
    %v181 = vcvt.s32.f32 %v177
    %v182 = vadd.f32 %v163, %v178
    %v183 = vadd.f32 %v164, %v179
    %v184 = vadd.f32 %v165, %v180
    %v185 = vadd.f32 %v166, %v181
    %186 = vset.pattern.permute.xlu0 7
    %187 = vperm.xlu0 %186, %v52
    %v188 = vpop.permute.xlu0 %187
    %vm189 = vcmp.eq.s32.totalorder %v188, %v47
    %vm190 = vcmp.eq.s32.totalorder %v188, %v48
    %vm191 = vcmp.eq.s32.totalorder %v188, %v49
    %vm192 = vcmp.eq.s32.totalorder %v188, %v50
    %v193 = vsel %vm189, 1, 0
    %v194 = vsel %vm190, 1, 0
    %v195 = vsel %vm191, 1, 0
    %v196 = vsel %vm192, 1, 0
    %v197 = vcvt.s32.f32 %v193
    %v198 = vcvt.s32.f32 %v194
    %v199 = vcvt.s32.f32 %v195
    %v200 = vcvt.s32.f32 %v196
    %v201 = vadd.f32 %v182, %v197
    %v202 = vadd.f32 %v183, %v198
    %v203 = vadd.f32 %v184, %v199
    %v204 = vadd.f32 %v185, %v200
    %205 = vset.pattern.permute.xlu0 8
    %206 = vperm.xlu0 %205, %v52
    %v207 = vpop.permute.xlu0 %206
    %vm208 = vcmp.eq.s32.totalorder %v207, %v47
    %vm209 = vcmp.eq.s32.totalorder %v207, %v48
    %vm210 = vcmp.eq.s32.totalorder %v207, %v49
    %vm211 = vcmp.eq.s32.totalorder %v207, %v50
    %v212 = vsel %vm208, 1, 0
    %v213 = vsel %vm209, 1, 0
    %v214 = vsel %vm210, 1, 0
    %v215 = vsel %vm211, 1, 0
    %v216 = vcvt.s32.f32 %v212
    %v217 = vcvt.s32.f32 %v213
    %v218 = vcvt.s32.f32 %v214
    %v219 = vcvt.s32.f32 %v215
    %v220 = vadd.f32 %v201, %v216
    %v221 = vadd.f32 %v202, %v217
    %v222 = vadd.f32 %v203, %v218
    %v223 = vadd.f32 %v204, %v219
    %224 = vset.pattern.permute.xlu0 9
    %225 = vperm.xlu0 %224, %v52
    %v226 = vpop.permute.xlu0 %225
    %vm227 = vcmp.eq.s32.totalorder %v226, %v47
    %vm228 = vcmp.eq.s32.totalorder %v226, %v48
    %vm229 = vcmp.eq.s32.totalorder %v226, %v49
    %vm230 = vcmp.eq.s32.totalorder %v226, %v50
    %v231 = vsel %vm227, 1, 0
    %v232 = vsel %vm228, 1, 0
    %v233 = vsel %vm229, 1, 0
    %v234 = vsel %vm230, 1, 0
    %v235 = vcvt.s32.f32 %v231
    %v236 = vcvt.s32.f32 %v232
    %v237 = vcvt.s32.f32 %v233
    %v238 = vcvt.s32.f32 %v234
    %v239 = vadd.f32 %v220, %v235
    %v240 = vadd.f32 %v221, %v236
    %v241 = vadd.f32 %v222, %v237
    %v242 = vadd.f32 %v223, %v238
    %243 = vset.pattern.permute.xlu0 10
    %244 = vperm.xlu0 %243, %v52
    %v245 = vpop.permute.xlu0 %244
    %vm246 = vcmp.eq.s32.totalorder %v245, %v47
    %vm247 = vcmp.eq.s32.totalorder %v245, %v48
    %vm248 = vcmp.eq.s32.totalorder %v245, %v49
    %vm249 = vcmp.eq.s32.totalorder %v245, %v50
    %v250 = vsel %vm246, 1, 0
    %v251 = vsel %vm247, 1, 0
    %v252 = vsel %vm248, 1, 0
    %v253 = vsel %vm249, 1, 0
    %v254 = vcvt.s32.f32 %v250
    %v255 = vcvt.s32.f32 %v251
    %v256 = vcvt.s32.f32 %v252
    %v257 = vcvt.s32.f32 %v253
    %v258 = vadd.f32 %v239, %v254
    %v259 = vadd.f32 %v240, %v255
    %v260 = vadd.f32 %v241, %v256
    %v261 = vadd.f32 %v242, %v257
    %262 = vset.pattern.permute.xlu0 11
    %263 = vperm.xlu0 %262, %v52
    %v264 = vpop.permute.xlu0 %263
    %vm265 = vcmp.eq.s32.totalorder %v264, %v47
    %vm266 = vcmp.eq.s32.totalorder %v264, %v48
    %vm267 = vcmp.eq.s32.totalorder %v264, %v49
    %vm268 = vcmp.eq.s32.totalorder %v264, %v50
    %v269 = vsel %vm265, 1, 0
    %v270 = vsel %vm266, 1, 0
    %v271 = vsel %vm267, 1, 0
    %v272 = vsel %vm268, 1, 0
    %v273 = vcvt.s32.f32 %v269
    %v274 = vcvt.s32.f32 %v270
    %v275 = vcvt.s32.f32 %v271
    %v276 = vcvt.s32.f32 %v272
    %v277 = vadd.f32 %v258, %v273
    %v278 = vadd.f32 %v259, %v274
    %v279 = vadd.f32 %v260, %v275
    %v280 = vadd.f32 %v261, %v276
    %281 = vset.pattern.permute.xlu0 12
    %282 = vperm.xlu0 %281, %v52
    %v283 = vpop.permute.xlu0 %282
    %vm284 = vcmp.eq.s32.totalorder %v283, %v47
    %vm285 = vcmp.eq.s32.totalorder %v283, %v48
    %vm286 = vcmp.eq.s32.totalorder %v283, %v49
    %vm287 = vcmp.eq.s32.totalorder %v283, %v50
    %v288 = vsel %vm284, 1, 0
    %v289 = vsel %vm285, 1, 0
    %v290 = vsel %vm286, 1, 0
    %v291 = vsel %vm287, 1, 0
    %v292 = vcvt.s32.f32 %v288
    %v293 = vcvt.s32.f32 %v289
    %v294 = vcvt.s32.f32 %v290
    %v295 = vcvt.s32.f32 %v291
    %v296 = vadd.f32 %v277, %v292
    %v297 = vadd.f32 %v278, %v293
    %v298 = vadd.f32 %v279, %v294
    %v299 = vadd.f32 %v280, %v295
    %300 = vset.pattern.permute.xlu0 13
    %301 = vperm.xlu0 %300, %v52
    %v302 = vpop.permute.xlu0 %301
    %vm303 = vcmp.eq.s32.totalorder %v302, %v47
    %vm304 = vcmp.eq.s32.totalorder %v302, %v48
    %vm305 = vcmp.eq.s32.totalorder %v302, %v49
    %vm306 = vcmp.eq.s32.totalorder %v302, %v50
    %v307 = vsel %vm303, 1, 0
    %v308 = vsel %vm304, 1, 0
    %v309 = vsel %vm305, 1, 0
    %v310 = vsel %vm306, 1, 0
    %v311 = vcvt.s32.f32 %v307
    %v312 = vcvt.s32.f32 %v308
    %v313 = vcvt.s32.f32 %v309
    %v314 = vcvt.s32.f32 %v310
    %v315 = vadd.f32 %v296, %v311
    %v316 = vadd.f32 %v297, %v312
    %v317 = vadd.f32 %v298, %v313
    %v318 = vadd.f32 %v299, %v314
    %v319 = vld [vmem:[#allocation3] sm:$0xff]
    %v320 = vld [vmem:[#allocation3 + $0x8] sm:$0xff]
    %v321 = vld [vmem:[#allocation3 + $0x10] sm:$0xff]
    %v322 = vld [vmem:[#allocation3 + $0x18] sm:$0xff]
    %v323 = vld [vmem:[#allocation3 + $0x20] sm:$0xff]
    %v324 = vld [vmem:[#allocation3 + $0x28] sm:$0xff]
    %v325 = vld [vmem:[#allocation3 + $0x30] sm:$0xff]
    %v326 = vld [vmem:[#allocation3 + $0x38] sm:$0xff]
    %v327 = vld [vmem:[#allocation3 + $0x40] sm:$0xff]
    %v328 = vld [vmem:[#allocation3 + $0x48] sm:$0xff]
    %v329 = vld [vmem:[#allocation3 + $0x50] sm:$0xff]
    %v330 = vld [vmem:[#allocation3 + $0x58] sm:$0xff]
    %v331 = vld [vmem:[#allocation3 + $0x60] sm:$0xff]
    %v332 = vld [vmem:[#allocation3 + $0x68] sm:$0xff]
    %v333 = vld [vmem:[#allocation3 + $0x70] sm:$0xff]
    %v334 = vld [vmem:[#allocation3 + $0x78] sm:$0xff]
    %v335 = vld [vmem:[#allocation3 + $0x80] sm:$0xff]
    %v336 = vld [vmem:[#allocation3 + $0x88] sm:$0xff]
    %v337 = vld [vmem:[#allocation3 + $0x90] sm:$0xff]
    %v338 = vld [vmem:[#allocation3 + $0x98] sm:$0xff]
    %v339 = vld [vmem:[#allocation3 + $0xa0] sm:$0xff]
    %v340 = vld [vmem:[#allocation3 + $0xa8] sm:$0xff]
    %v341 = vld [vmem:[#allocation3 + $0xb0] sm:$0xff]
    %v342 = vld [vmem:[#allocation3 + $0xb8] sm:$0xff]
    %v343 = vld [vmem:[#allocation3 + $0xc0] sm:$0xff]
    %v344 = vld [vmem:[#allocation3 + $0xc8] sm:$0xff]
    %v345 = vld [vmem:[#allocation3 + $0xd0] sm:$0xff]
    %v346 = vld [vmem:[#allocation3 + $0xd8] sm:$0xff]
    %v347 = vld [vmem:[#allocation3 + $0xe0] sm:$0xff]
    %v348 = vld [vmem:[#allocation3 + $0xe8] sm:$0xff]
    %v349 = vld [vmem:[#allocation3 + $0xf0] sm:$0xff]
    %v350 = vld [vmem:[#allocation3 + $0xf8] sm:$0xff]
    %v351 = vld [vmem:[#allocation3 + $0x100] sm:$0xff]
    %v352 = vld [vmem:[#allocation3 + $0x108] sm:$0xff]
    %v353 = vld [vmem:[#allocation3 + $0x110] sm:$0xff]
    %v354 = vld [vmem:[#allocation3 + $0x118] sm:$0xff]
    %v355 = vld [vmem:[#allocation3 + $0x120] sm:$0xff]
    %v356 = vld [vmem:[#allocation3 + $0x128] sm:$0xff]
    %v357 = vld [vmem:[#allocation3 + $0x130] sm:$0xff]
    %v358 = vld [vmem:[#allocation3 + $0x138] sm:$0xff]
    %v359 = vld [vmem:[#allocation3 + $0x140] sm:$0xff]
    %v360 = vld [vmem:[#allocation3 + $0x148] sm:$0xff]
    %v361 = vld [vmem:[#allocation3 + $0x150] sm:$0xff]
    %v362 = vld [vmem:[#allocation3 + $0x158] sm:$0xff]
    %v363 = vld [vmem:[#allocation3 + $0x160] sm:$0xff]
    %v364 = vld [vmem:[#allocation3 + $0x168] sm:$0xff]
    %v365 = vld [vmem:[#allocation3 + $0x170] sm:$0xff]
    %v366 = vld [vmem:[#allocation3 + $0x178] sm:$0xff]
    %v367 = vld [vmem:[#allocation3 + $0x180] sm:$0xff]
    %v368 = vld [vmem:[#allocation3 + $0x188] sm:$0xff]
    %v369 = vld [vmem:[#allocation3 + $0x190] sm:$0xff]
    %v370 = vld [vmem:[#allocation3 + $0x198] sm:$0xff]
    %v371 = vld [vmem:[#allocation3 + $0x1a0] sm:$0xff]
    %v372 = vld [vmem:[#allocation3 + $0x1a8] sm:$0xff]
    %v373 = vld [vmem:[#allocation3 + $0x1b0] sm:$0xff]
    %v374 = vld [vmem:[#allocation3 + $0x1b8] sm:$0xff]
    %v375 = vld [vmem:[#allocation3 + $0x1c0] sm:$0xff]
    %v376 = vld [vmem:[#allocation3 + $0x1c8] sm:$0xff]
    %v377 = vld [vmem:[#allocation3 + $0x1d0] sm:$0xff]
    %v378 = vld [vmem:[#allocation3 + $0x1d8] sm:$0xff]
    %v379 = vld [vmem:[#allocation3 + $0x1e0] sm:$0xff]
    %v380 = vld [vmem:[#allocation3 + $0x1e8] sm:$0xff]
    %v381 = vld [vmem:[#allocation3 + $0x1f0] sm:$0xff]
    %v382 = vld [vmem:[#allocation3 + $0x1f8] sm:$0xff]
    %v384 = vlaneseq
    %v385 = vshrl.u32 %v384, 7
    %v386 = vsub.s32 0, %v385
    %v387 = vrot.slane %v51, %v386
    %389 = vmatprep.subr.mxu0 0.0
    %390 = vmatpush1.msra.mxu0 %v319
    %391 = vmatprep.subr.mxu0 0.0
    %392 = vmatpush1.msra.mxu0 %v320
    %393 = vmatprep.subr.mxu0 0.0
    %394 = vmatpush1.msra.mxu0 %v321
    %395 = vmatprep.subr.mxu0 0.0
    %396 = vmatpush1.msra.mxu0 %v322
    %397 = vmatprep.subr.mxu0 0.0
    %398 = vmatpush1.msra.mxu0 %v323
    %399 = vmatprep.subr.mxu0 0.0
    %400 = vmatpush1.msra.mxu0 %v324
    %401 = vmatprep.subr.mxu0 0.0
    %402 = vmatpush1.msra.mxu0 %v325
    %403 = vmatprep.subr.mxu0 0.0
    %404 = vmatpush1.msra.mxu0 %v326
    %405 = vmatprep.subr.mxu0 0.0
    %406 = vmatpush1.msra.mxu0 %v327
    %407 = vmatprep.subr.mxu0 0.0
    %408 = vmatpush1.msra.mxu0 %v328
    %409 = vmatprep.subr.mxu0 0.0
    %410 = vmatpush1.msra.mxu0 %v329
    %411 = vmatprep.subr.mxu0 0.0
    %412 = vmatpush1.msra.mxu0 %v330
    %413 = vmatprep.subr.mxu0 0.0
    %414 = vmatpush1.msra.mxu0 %v331
    %415 = vmatprep.subr.mxu0 0.0
    %416 = vmatpush1.msra.mxu0 %v332
    %417 = vmatprep.subr.mxu0 0.0
    %418 = vmatpush1.msra.mxu0 %v333
    %419 = vmatprep.subr.mxu0 0.0
    %420 = vmatpush1.msra.mxu0 %v334
    %421 = vmatprep.subr.mxu0 0.0
    %422 = vmatpush1.msra.mxu0 %v335
    %423 = vmatprep.subr.mxu0 0.0
    %424 = vmatpush1.msra.mxu0 %v336
    %425 = vmatprep.subr.mxu0 0.0
    %426 = vmatpush1.msra.mxu0 %v337
    %427 = vmatprep.subr.mxu0 0.0
    %428 = vmatpush1.msra.mxu0 %v338
    %429 = vmatprep.subr.mxu0 0.0
    %430 = vmatpush1.msra.mxu0 %v339
    %431 = vmatprep.subr.mxu0 0.0
    %432 = vmatpush1.msra.mxu0 %v340
    %433 = vmatprep.subr.mxu0 0.0
    %434 = vmatpush1.msra.mxu0 %v341
    %435 = vmatprep.subr.mxu0 0.0
    %436 = vmatpush1.msra.mxu0 %v342
    %437 = vmatprep.subr.mxu0 0.0
    %438 = vmatpush1.msra.mxu0 %v343
    %439 = vmatprep.subr.mxu0 0.0
    %440 = vmatpush1.msra.mxu0 %v344
    %441 = vmatprep.subr.mxu0 0.0
    %442 = vmatpush1.msra.mxu0 %v345
    %443 = vmatprep.subr.mxu0 0.0
    %444 = vmatpush1.msra.mxu0 %v346
    %445 = vmatprep.subr.mxu0 0.0
    %446 = vmatpush1.msra.mxu0 %v347
    %447 = vmatprep.subr.mxu0 0.0
    %448 = vmatpush1.msra.mxu0 %v348
    %449 = vmatprep.subr.mxu0 0.0
    %450 = vmatpush1.msra.mxu0 %v349
    %451 = vmatprep.subr.mxu0 0.0
    %452 = vmatpush1.msra.mxu0 %v350
    %453 = vmatprep.mubr.f32.mxu0 %v316
    %454 = vmatmul.mubr.f32.gmra.mrb[0].mxu0 %v315
    %v455 = vpop.f32.mrb[0].mxu0
    %v456 = vadd.f32 %v387, %v455
    %v457 = vpop.f32.mrb[0].mxu0
    %458 = vdwg.mxu0
    %459 = vmatprep.subr.mxu0 0.0
    %460 = vmatpush1.msra.mxu0 %v351
    %461 = vmatprep.subr.mxu0 0.0
    %462 = vmatpush1.msra.mxu0 %v352
    %463 = vmatprep.subr.mxu0 0.0
    %464 = vmatpush1.msra.mxu0 %v353
    %465 = vmatprep.subr.mxu0 0.0
    %466 = vmatpush1.msra.mxu0 %v354
    %467 = vmatprep.subr.mxu0 0.0
    %468 = vmatpush1.msra.mxu0 %v355
    %469 = vmatprep.subr.mxu0 0.0
    %470 = vmatpush1.msra.mxu0 %v356
    %471 = vmatprep.subr.mxu0 0.0
    %472 = vmatpush1.msra.mxu0 %v357
    %473 = vmatprep.subr.mxu0 0.0
    %474 = vmatpush1.msra.mxu0 %v358
    %475 = vmatprep.subr.mxu0 0.0
    %476 = vmatpush1.msra.mxu0 %v359
    %477 = vmatprep.subr.mxu0 0.0
    %478 = vmatpush1.msra.mxu0 %v360
    %479 = vmatprep.subr.mxu0 0.0
    %480 = vmatpush1.msra.mxu0 %v361
    %481 = vmatprep.subr.mxu0 0.0
    %482 = vmatpush1.msra.mxu0 %v362
    %483 = vmatprep.subr.mxu0 0.0
    %484 = vmatpush1.msra.mxu0 %v363
    %485 = vmatprep.subr.mxu0 0.0
    %486 = vmatpush1.msra.mxu0 %v364
    %487 = vmatprep.subr.mxu0 0.0
    %488 = vmatpush1.msra.mxu0 %v365
    %489 = vmatprep.subr.mxu0 0.0
    %490 = vmatpush1.msra.mxu0 %v366
    %491 = vmatprep.subr.mxu0 0.0
    %492 = vmatpush1.msra.mxu0 %v367
    %493 = vmatprep.subr.mxu0 0.0
    %494 = vmatpush1.msra.mxu0 %v368
    %495 = vmatprep.subr.mxu0 0.0
    %496 = vmatpush1.msra.mxu0 %v369
    %497 = vmatprep.subr.mxu0 0.0
    %498 = vmatpush1.msra.mxu0 %v370
    %499 = vmatprep.subr.mxu0 0.0
    %500 = vmatpush1.msra.mxu0 %v371
    %501 = vmatprep.subr.mxu0 0.0
    %502 = vmatpush1.msra.mxu0 %v372
    %503 = vmatprep.subr.mxu0 0.0
    %504 = vmatpush1.msra.mxu0 %v373
    %505 = vmatprep.subr.mxu0 0.0
    %506 = vmatpush1.msra.mxu0 %v374
    %507 = vmatprep.subr.mxu0 0.0
    %508 = vmatpush1.msra.mxu0 %v375
    %509 = vmatprep.subr.mxu0 0.0
    %510 = vmatpush1.msra.mxu0 %v376
    %511 = vmatprep.subr.mxu0 0.0
    %512 = vmatpush1.msra.mxu0 %v377
    %513 = vmatprep.subr.mxu0 0.0
    %514 = vmatpush1.msra.mxu0 %v378
    %515 = vmatprep.subr.mxu0 0.0
    %516 = vmatpush1.msra.mxu0 %v379
    %517 = vmatprep.subr.mxu0 0.0
    %518 = vmatpush1.msra.mxu0 %v380
    %519 = vmatprep.subr.mxu0 0.0
    %520 = vmatpush1.msra.mxu0 %v381
    %521 = vmatprep.subr.mxu0 0.0
    %522 = vmatpush1.msra.mxu0 %v382
    %523 = vmatprep.mubr.f32.mxu0 %v318
    %524 = vmatmul.mubr.f32.gmra.mrb[0].mxu0 %v317
    %v525 = vpop.f32.mrb[0].mxu0
    %v526 = vadd.f32 %v456, %v525
    %v527 = vpop.f32.mrb[0].mxu0
    %528 = vdwg.mxu0
    %529 = vst [vmem:[#allocation2] sm:$0xff] %v526
    %v530 = vld [vmem:[%s0 + $0x8] sm:$0xff]
    %531 = vset.pattern.permute.xlu0 0
    %532 = vperm.xlu0 %531, %v530
    %v533 = vpop.permute.xlu0 %532
    %vm534 = vcmp.eq.s32.totalorder %v533, %v47
    %vm535 = vcmp.eq.s32.totalorder %v533, %v48
    %vm536 = vcmp.eq.s32.totalorder %v533, %v49
    %vm537 = vcmp.eq.s32.totalorder %v533, %v50
    %v538 = vsel %vm534, 1, 0
    %v539 = vsel %vm535, 1, 0
    %v540 = vsel %vm536, 1, 0
    %v541 = vsel %vm537, 1, 0
    %v542 = vcvt.s32.f32 %v538
    %v543 = vcvt.s32.f32 %v539
    %v544 = vcvt.s32.f32 %v540
    %v545 = vcvt.s32.f32 %v541
    %v546 = vadd.f32 %v542, 0.0
    %v547 = vadd.f32 %v543, 0.0
    %v548 = vadd.f32 %v544, 0.0
    %v549 = vadd.f32 %v545, 0.0
    %550 = vset.pattern.permute.xlu0 1
    %551 = vperm.xlu0 %550, %v530
    %v552 = vpop.permute.xlu0 %551
    %vm553 = vcmp.eq.s32.totalorder %v552, %v47
    %vm554 = vcmp.eq.s32.totalorder %v552, %v48
    %vm555 = vcmp.eq.s32.totalorder %v552, %v49
    %vm556 = vcmp.eq.s32.totalorder %v552, %v50
    %v557 = vsel %vm553, 1, 0
    %v558 = vsel %vm554, 1, 0
    %v559 = vsel %vm555, 1, 0
    %v560 = vsel %vm556, 1, 0
    %v561 = vcvt.s32.f32 %v557
    %v562 = vcvt.s32.f32 %v558
    %v563 = vcvt.s32.f32 %v559
    %v564 = vcvt.s32.f32 %v560
    %v565 = vadd.f32 %v546, %v561
    %v566 = vadd.f32 %v547, %v562
    %v567 = vadd.f32 %v548, %v563
    %v568 = vadd.f32 %v549, %v564
    %569 = vset.pattern.permute.xlu0 2
    %570 = vperm.xlu0 %569, %v530
    %v571 = vpop.permute.xlu0 %570
    %vm572 = vcmp.eq.s32.totalorder %v571, %v47
    %vm573 = vcmp.eq.s32.totalorder %v571, %v48
    %vm574 = vcmp.eq.s32.totalorder %v571, %v49
    %vm575 = vcmp.eq.s32.totalorder %v571, %v50
    %v576 = vsel %vm572, 1, 0
    %v577 = vsel %vm573, 1, 0
    %v578 = vsel %vm574, 1, 0
    %v579 = vsel %vm575, 1, 0
    %v580 = vcvt.s32.f32 %v576
    %v581 = vcvt.s32.f32 %v577
    %v582 = vcvt.s32.f32 %v578
    %v583 = vcvt.s32.f32 %v579
    %v584 = vadd.f32 %v565, %v580
    %v585 = vadd.f32 %v566, %v581
    %v586 = vadd.f32 %v567, %v582
    %v587 = vadd.f32 %v568, %v583
    %588 = vset.pattern.permute.xlu0 3
    %589 = vperm.xlu0 %588, %v530
    %v590 = vpop.permute.xlu0 %589
    %vm591 = vcmp.eq.s32.totalorder %v590, %v47
    %vm592 = vcmp.eq.s32.totalorder %v590, %v48
    %vm593 = vcmp.eq.s32.totalorder %v590, %v49
    %vm594 = vcmp.eq.s32.totalorder %v590, %v50
    %v595 = vsel %vm591, 1, 0
    %v596 = vsel %vm592, 1, 0
    %v597 = vsel %vm593, 1, 0
    %v598 = vsel %vm594, 1, 0
    %v599 = vcvt.s32.f32 %v595
    %v600 = vcvt.s32.f32 %v596
    %v601 = vcvt.s32.f32 %v597
    %v602 = vcvt.s32.f32 %v598
    %v603 = vadd.f32 %v584, %v599
    %v604 = vadd.f32 %v585, %v600
    %v605 = vadd.f32 %v586, %v601
    %v606 = vadd.f32 %v587, %v602
    %607 = vset.pattern.permute.xlu0 4
    %608 = vperm.xlu0 %607, %v530
    %v609 = vpop.permute.xlu0 %608
    %vm610 = vcmp.eq.s32.totalorder %v609, %v47
    %vm611 = vcmp.eq.s32.totalorder %v609, %v48
    %vm612 = vcmp.eq.s32.totalorder %v609, %v49
    %vm613 = vcmp.eq.s32.totalorder %v609, %v50
    %v614 = vsel %vm610, 1, 0
    %v615 = vsel %vm611, 1, 0
    %v616 = vsel %vm612, 1, 0
    %v617 = vsel %vm613, 1, 0
    %v618 = vcvt.s32.f32 %v614
    %v619 = vcvt.s32.f32 %v615
    %v620 = vcvt.s32.f32 %v616
    %v621 = vcvt.s32.f32 %v617
    %v622 = vadd.f32 %v603, %v618
    %v623 = vadd.f32 %v604, %v619
    %v624 = vadd.f32 %v605, %v620
    %v625 = vadd.f32 %v606, %v621
    %626 = vset.pattern.permute.xlu0 5
    %627 = vperm.xlu0 %626, %v530
    %v628 = vpop.permute.xlu0 %627
    %vm629 = vcmp.eq.s32.totalorder %v628, %v47
    %vm630 = vcmp.eq.s32.totalorder %v628, %v48
    %vm631 = vcmp.eq.s32.totalorder %v628, %v49
    %vm632 = vcmp.eq.s32.totalorder %v628, %v50
    %v633 = vsel %vm629, 1, 0
    %v634 = vsel %vm630, 1, 0
    %v635 = vsel %vm631, 1, 0
    %v636 = vsel %vm632, 1, 0
    %v637 = vcvt.s32.f32 %v633
    %v638 = vcvt.s32.f32 %v634
    %v639 = vcvt.s32.f32 %v635
    %v640 = vcvt.s32.f32 %v636
    %v641 = vadd.f32 %v622, %v637
    %v642 = vadd.f32 %v623, %v638
    %v643 = vadd.f32 %v624, %v639
    %v644 = vadd.f32 %v625, %v640
    %645 = vset.pattern.permute.xlu0 6
    %646 = vperm.xlu0 %645, %v530
    %v647 = vpop.permute.xlu0 %646
    %vm648 = vcmp.eq.s32.totalorder %v647, %v47
    %vm649 = vcmp.eq.s32.totalorder %v647, %v48
    %vm650 = vcmp.eq.s32.totalorder %v647, %v49
    %vm651 = vcmp.eq.s32.totalorder %v647, %v50
    %v652 = vsel %vm648, 1, 0
    %v653 = vsel %vm649, 1, 0
    %v654 = vsel %vm650, 1, 0
    %v655 = vsel %vm651, 1, 0
    %v656 = vcvt.s32.f32 %v652
    %v657 = vcvt.s32.f32 %v653
    %v658 = vcvt.s32.f32 %v654
    %v659 = vcvt.s32.f32 %v655
    %v660 = vadd.f32 %v641, %v656
    %v661 = vadd.f32 %v642, %v657
    %v662 = vadd.f32 %v643, %v658
    %v663 = vadd.f32 %v644, %v659
    %664 = vset.pattern.permute.xlu0 7
    %665 = vperm.xlu0 %664, %v530
    %v666 = vpop.permute.xlu0 %665
    %vm667 = vcmp.eq.s32.totalorder %v666, %v47
    %vm668 = vcmp.eq.s32.totalorder %v666, %v48
    %vm669 = vcmp.eq.s32.totalorder %v666, %v49
    %vm670 = vcmp.eq.s32.totalorder %v666, %v50
    %v671 = vsel %vm667, 1, 0
    %v672 = vsel %vm668, 1, 0
    %v673 = vsel %vm669, 1, 0
    %v674 = vsel %vm670, 1, 0
    %v675 = vcvt.s32.f32 %v671
    %v676 = vcvt.s32.f32 %v672
    %v677 = vcvt.s32.f32 %v673
    %v678 = vcvt.s32.f32 %v674
    %v679 = vadd.f32 %v660, %v675
    %v680 = vadd.f32 %v661, %v676
    %v681 = vadd.f32 %v662, %v677
    %v682 = vadd.f32 %v663, %v678
    %683 = vset.pattern.permute.xlu0 8
    %684 = vperm.xlu0 %683, %v530
    %v685 = vpop.permute.xlu0 %684
    %vm686 = vcmp.eq.s32.totalorder %v685, %v47
    %vm687 = vcmp.eq.s32.totalorder %v685, %v48
    %vm688 = vcmp.eq.s32.totalorder %v685, %v49
    %vm689 = vcmp.eq.s32.totalorder %v685, %v50
    %v690 = vsel %vm686, 1, 0
    %v691 = vsel %vm687, 1, 0
    %v692 = vsel %vm688, 1, 0
    %v693 = vsel %vm689, 1, 0
    %v694 = vcvt.s32.f32 %v690
    %v695 = vcvt.s32.f32 %v691
    %v696 = vcvt.s32.f32 %v692
    %v697 = vcvt.s32.f32 %v693
    %v698 = vadd.f32 %v679, %v694
    %v699 = vadd.f32 %v680, %v695
    %v700 = vadd.f32 %v681, %v696
    %v701 = vadd.f32 %v682, %v697
    %702 = vset.pattern.permute.xlu0 9
    %703 = vperm.xlu0 %702, %v530
    %v704 = vpop.permute.xlu0 %703
    %vm705 = vcmp.eq.s32.totalorder %v704, %v47
    %vm706 = vcmp.eq.s32.totalorder %v704, %v48
    %vm707 = vcmp.eq.s32.totalorder %v704, %v49
    %vm708 = vcmp.eq.s32.totalorder %v704, %v50
    %v709 = vsel %vm705, 1, 0
    %v710 = vsel %vm706, 1, 0
    %v711 = vsel %vm707, 1, 0
    %v712 = vsel %vm708, 1, 0
    %v713 = vcvt.s32.f32 %v709
    %v714 = vcvt.s32.f32 %v710
    %v715 = vcvt.s32.f32 %v711
    %v716 = vcvt.s32.f32 %v712
    %v717 = vadd.f32 %v698, %v713
    %v718 = vadd.f32 %v699, %v714
    %v719 = vadd.f32 %v700, %v715
    %v720 = vadd.f32 %v701, %v716
    %721 = vset.pattern.permute.xlu0 10
    %722 = vperm.xlu0 %721, %v530
    %v723 = vpop.permute.xlu0 %722
    %vm724 = vcmp.eq.s32.totalorder %v723, %v47
    %vm725 = vcmp.eq.s32.totalorder %v723, %v48
    %vm726 = vcmp.eq.s32.totalorder %v723, %v49
    %vm727 = vcmp.eq.s32.totalorder %v723, %v50
    %v728 = vsel %vm724, 1, 0
    %v729 = vsel %vm725, 1, 0
    %v730 = vsel %vm726, 1, 0
    %v731 = vsel %vm727, 1, 0
    %v732 = vcvt.s32.f32 %v728
    %v733 = vcvt.s32.f32 %v729
    %v734 = vcvt.s32.f32 %v730
    %v735 = vcvt.s32.f32 %v731
    %v736 = vadd.f32 %v717, %v732
    %v737 = vadd.f32 %v718, %v733
    %v738 = vadd.f32 %v719, %v734
    %v739 = vadd.f32 %v720, %v735
    %740 = vset.pattern.permute.xlu0 11
    %741 = vperm.xlu0 %740, %v530
    %v742 = vpop.permute.xlu0 %741
    %vm743 = vcmp.eq.s32.totalorder %v742, %v47
    %vm744 = vcmp.eq.s32.totalorder %v742, %v48
    %vm745 = vcmp.eq.s32.totalorder %v742, %v49
    %vm746 = vcmp.eq.s32.totalorder %v742, %v50
    %v747 = vsel %vm743, 1, 0
    %v748 = vsel %vm744, 1, 0
    %v749 = vsel %vm745, 1, 0
    %v750 = vsel %vm746, 1, 0
    %v751 = vcvt.s32.f32 %v747
    %v752 = vcvt.s32.f32 %v748
    %v753 = vcvt.s32.f32 %v749
    %v754 = vcvt.s32.f32 %v750
    %v755 = vadd.f32 %v736, %v751
    %v756 = vadd.f32 %v737, %v752
    %v757 = vadd.f32 %v738, %v753
    %v758 = vadd.f32 %v739, %v754
    %759 = vset.pattern.permute.xlu0 12
    %760 = vperm.xlu0 %759, %v530
    %v761 = vpop.permute.xlu0 %760
    %vm762 = vcmp.eq.s32.totalorder %v761, %v47
    %vm763 = vcmp.eq.s32.totalorder %v761, %v48
    %vm764 = vcmp.eq.s32.totalorder %v761, %v49
    %vm765 = vcmp.eq.s32.totalorder %v761, %v50
    %v766 = vsel %vm762, 1, 0
    %v767 = vsel %vm763, 1, 0
    %v768 = vsel %vm764, 1, 0
    %v769 = vsel %vm765, 1, 0
    %v770 = vcvt.s32.f32 %v766
    %v771 = vcvt.s32.f32 %v767
    %v772 = vcvt.s32.f32 %v768
    %v773 = vcvt.s32.f32 %v769
    %v774 = vadd.f32 %v755, %v770
    %v775 = vadd.f32 %v756, %v771
    %v776 = vadd.f32 %v757, %v772
    %v777 = vadd.f32 %v758, %v773
    %778 = vset.pattern.permute.xlu0 13
    %779 = vperm.xlu0 %778, %v530
    %v780 = vpop.permute.xlu0 %779
    %vm781 = vcmp.eq.s32.totalorder %v780, %v47
    %vm782 = vcmp.eq.s32.totalorder %v780, %v48
    %vm783 = vcmp.eq.s32.totalorder %v780, %v49
    %vm784 = vcmp.eq.s32.totalorder %v780, %v50
    %v785 = vsel %vm781, 1, 0
    %v786 = vsel %vm782, 1, 0
    %v787 = vsel %vm783, 1, 0
    %v788 = vsel %vm784, 1, 0
    %v789 = vcvt.s32.f32 %v785
    %v790 = vcvt.s32.f32 %v786
    %v791 = vcvt.s32.f32 %v787
    %v792 = vcvt.s32.f32 %v788
    %v793 = vadd.f32 %v774, %v789
    %v794 = vadd.f32 %v775, %v790
    %v795 = vadd.f32 %v776, %v791
    %v796 = vadd.f32 %v777, %v792
    %v797 = vld [vmem:[#allocation3] sm:$0xff]
    %v798 = vld [vmem:[#allocation3 + $0x8] sm:$0xff]
    %v799 = vld [vmem:[#allocation3 + $0x10] sm:$0xff]
    %v800 = vld [vmem:[#allocation3 + $0x18] sm:$0xff]
    %v801 = vld [vmem:[#allocation3 + $0x20] sm:$0xff]
    %v802 = vld [vmem:[#allocation3 + $0x28] sm:$0xff]
    %v803 = vld [vmem:[#allocation3 + $0x30] sm:$0xff]
    %v804 = vld [vmem:[#allocation3 + $0x38] sm:$0xff]
    %v805 = vld [vmem:[#allocation3 + $0x40] sm:$0xff]
    %v806 = vld [vmem:[#allocation3 + $0x48] sm:$0xff]
    %v807 = vld [vmem:[#allocation3 + $0x50] sm:$0xff]
    %v808 = vld [vmem:[#allocation3 + $0x58] sm:$0xff]
    %v809 = vld [vmem:[#allocation3 + $0x60] sm:$0xff]
    %v810 = vld [vmem:[#allocation3 + $0x68] sm:$0xff]
    %v811 = vld [vmem:[#allocation3 + $0x70] sm:$0xff]
    %v812 = vld [vmem:[#allocation3 + $0x78] sm:$0xff]
    %v813 = vld [vmem:[#allocation3 + $0x80] sm:$0xff]
    %v814 = vld [vmem:[#allocation3 + $0x88] sm:$0xff]
    %v815 = vld [vmem:[#allocation3 + $0x90] sm:$0xff]
    %v816 = vld [vmem:[#allocation3 + $0x98] sm:$0xff]
    %v817 = vld [vmem:[#allocation3 + $0xa0] sm:$0xff]
    %v818 = vld [vmem:[#allocation3 + $0xa8] sm:$0xff]
    %v819 = vld [vmem:[#allocation3 + $0xb0] sm:$0xff]
    %v820 = vld [vmem:[#allocation3 + $0xb8] sm:$0xff]
    %v821 = vld [vmem:[#allocation3 + $0xc0] sm:$0xff]
    %v822 = vld [vmem:[#allocation3 + $0xc8] sm:$0xff]
    %v823 = vld [vmem:[#allocation3 + $0xd0] sm:$0xff]
    %v824 = vld [vmem:[#allocation3 + $0xd8] sm:$0xff]
    %v825 = vld [vmem:[#allocation3 + $0xe0] sm:$0xff]
    %v826 = vld [vmem:[#allocation3 + $0xe8] sm:$0xff]
    %v827 = vld [vmem:[#allocation3 + $0xf0] sm:$0xff]
    %v828 = vld [vmem:[#allocation3 + $0xf8] sm:$0xff]
    %v829 = vld [vmem:[#allocation3 + $0x100] sm:$0xff]
    %v830 = vld [vmem:[#allocation3 + $0x108] sm:$0xff]
    %v831 = vld [vmem:[#allocation3 + $0x110] sm:$0xff]
    %v832 = vld [vmem:[#allocation3 + $0x118] sm:$0xff]
    %v833 = vld [vmem:[#allocation3 + $0x120] sm:$0xff]
    %v834 = vld [vmem:[#allocation3 + $0x128] sm:$0xff]
    %v835 = vld [vmem:[#allocation3 + $0x130] sm:$0xff]
    %v836 = vld [vmem:[#allocation3 + $0x138] sm:$0xff]
    %v837 = vld [vmem:[#allocation3 + $0x140] sm:$0xff]
    %v838 = vld [vmem:[#allocation3 + $0x148] sm:$0xff]
    %v839 = vld [vmem:[#allocation3 + $0x150] sm:$0xff]
    %v840 = vld [vmem:[#allocation3 + $0x158] sm:$0xff]
    %v841 = vld [vmem:[#allocation3 + $0x160] sm:$0xff]
    %v842 = vld [vmem:[#allocation3 + $0x168] sm:$0xff]
    %v843 = vld [vmem:[#allocation3 + $0x170] sm:$0xff]
    %v844 = vld [vmem:[#allocation3 + $0x178] sm:$0xff]
    %v845 = vld [vmem:[#allocation3 + $0x180] sm:$0xff]
    %v846 = vld [vmem:[#allocation3 + $0x188] sm:$0xff]
    %v847 = vld [vmem:[#allocation3 + $0x190] sm:$0xff]
    %v848 = vld [vmem:[#allocation3 + $0x198] sm:$0xff]
    %v849 = vld [vmem:[#allocation3 + $0x1a0] sm:$0xff]
    %v850 = vld [vmem:[#allocation3 + $0x1a8] sm:$0xff]
    %v851 = vld [vmem:[#allocation3 + $0x1b0] sm:$0xff]
    %v852 = vld [vmem:[#allocation3 + $0x1b8] sm:$0xff]
    %v853 = vld [vmem:[#allocation3 + $0x1c0] sm:$0xff]
    %v854 = vld [vmem:[#allocation3 + $0x1c8] sm:$0xff]
    %v855 = vld [vmem:[#allocation3 + $0x1d0] sm:$0xff]
    %v856 = vld [vmem:[#allocation3 + $0x1d8] sm:$0xff]
    %v857 = vld [vmem:[#allocation3 + $0x1e0] sm:$0xff]
    %v858 = vld [vmem:[#allocation3 + $0x1e8] sm:$0xff]
    %v859 = vld [vmem:[#allocation3 + $0x1f0] sm:$0xff]
    %v860 = vld [vmem:[#allocation3 + $0x1f8] sm:$0xff]
    %861 = vmatprep.subr.mxu0 0.0
    %862 = vmatpush1.msra.mxu0 %v797
    %863 = vmatprep.subr.mxu0 0.0
    %864 = vmatpush1.msra.mxu0 %v798
    %865 = vmatprep.subr.mxu0 0.0
    %866 = vmatpush1.msra.mxu0 %v799
    %867 = vmatprep.subr.mxu0 0.0
    %868 = vmatpush1.msra.mxu0 %v800
    %869 = vmatprep.subr.mxu0 0.0
    %870 = vmatpush1.msra.mxu0 %v801
    %871 = vmatprep.subr.mxu0 0.0
    %872 = vmatpush1.msra.mxu0 %v802
    %873 = vmatprep.subr.mxu0 0.0
    %874 = vmatpush1.msra.mxu0 %v803
    %875 = vmatprep.subr.mxu0 0.0
    %876 = vmatpush1.msra.mxu0 %v804
    %877 = vmatprep.subr.mxu0 0.0
    %878 = vmatpush1.msra.mxu0 %v805
    %879 = vmatprep.subr.mxu0 0.0
    %880 = vmatpush1.msra.mxu0 %v806
    %881 = vmatprep.subr.mxu0 0.0
    %882 = vmatpush1.msra.mxu0 %v807
    %883 = vmatprep.subr.mxu0 0.0
    %884 = vmatpush1.msra.mxu0 %v808
    %885 = vmatprep.subr.mxu0 0.0
    %886 = vmatpush1.msra.mxu0 %v809
    %887 = vmatprep.subr.mxu0 0.0
    %888 = vmatpush1.msra.mxu0 %v810
    %889 = vmatprep.subr.mxu0 0.0
    %890 = vmatpush1.msra.mxu0 %v811
    %891 = vmatprep.subr.mxu0 0.0
    %892 = vmatpush1.msra.mxu0 %v812
    %893 = vmatprep.subr.mxu0 0.0
    %894 = vmatpush1.msra.mxu0 %v813
    %895 = vmatprep.subr.mxu0 0.0
    %896 = vmatpush1.msra.mxu0 %v814
    %897 = vmatprep.subr.mxu0 0.0
    %898 = vmatpush1.msra.mxu0 %v815
    %899 = vmatprep.subr.mxu0 0.0
    %900 = vmatpush1.msra.mxu0 %v816
    %901 = vmatprep.subr.mxu0 0.0
    %902 = vmatpush1.msra.mxu0 %v817
    %903 = vmatprep.subr.mxu0 0.0
    %904 = vmatpush1.msra.mxu0 %v818
    %905 = vmatprep.subr.mxu0 0.0
    %906 = vmatpush1.msra.mxu0 %v819
    %907 = vmatprep.subr.mxu0 0.0
    %908 = vmatpush1.msra.mxu0 %v820
    %909 = vmatprep.subr.mxu0 0.0
    %910 = vmatpush1.msra.mxu0 %v821
    %911 = vmatprep.subr.mxu0 0.0
    %912 = vmatpush1.msra.mxu0 %v822
    %913 = vmatprep.subr.mxu0 0.0
    %914 = vmatpush1.msra.mxu0 %v823
    %915 = vmatprep.subr.mxu0 0.0
    %916 = vmatpush1.msra.mxu0 %v824
    %917 = vmatprep.subr.mxu0 0.0
    %918 = vmatpush1.msra.mxu0 %v825
    %919 = vmatprep.subr.mxu0 0.0
    %920 = vmatpush1.msra.mxu0 %v826
    %921 = vmatprep.subr.mxu0 0.0
    %922 = vmatpush1.msra.mxu0 %v827
    %923 = vmatprep.subr.mxu0 0.0
    %924 = vmatpush1.msra.mxu0 %v828
    %925 = vmatprep.mubr.f32.mxu0 %v794
    %926 = vmatmul.mubr.f32.gmra.mrb[0].mxu0 %v793
    %v927 = vpop.f32.mrb[0].mxu0
    %v928 = vadd.f32 %v387, %v927
    %v929 = vpop.f32.mrb[0].mxu0
    %930 = vdwg.mxu0
    %931 = vmatprep.subr.mxu0 0.0
    %932 = vmatpush1.msra.mxu0 %v829
    %933 = vmatprep.subr.mxu0 0.0
    %934 = vmatpush1.msra.mxu0 %v830
    %935 = vmatprep.subr.mxu0 0.0
    %936 = vmatpush1.msra.mxu0 %v831
    %937 = vmatprep.subr.mxu0 0.0
    %938 = vmatpush1.msra.mxu0 %v832
    %939 = vmatprep.subr.mxu0 0.0
    %940 = vmatpush1.msra.mxu0 %v833
    %941 = vmatprep.subr.mxu0 0.0
    %942 = vmatpush1.msra.mxu0 %v834
    %943 = vmatprep.subr.mxu0 0.0
    %944 = vmatpush1.msra.mxu0 %v835
    %945 = vmatprep.subr.mxu0 0.0
    %946 = vmatpush1.msra.mxu0 %v836
    %947 = vmatprep.subr.mxu0 0.0
    %948 = vmatpush1.msra.mxu0 %v837
    %949 = vmatprep.subr.mxu0 0.0
    %950 = vmatpush1.msra.mxu0 %v838
    %951 = vmatprep.subr.mxu0 0.0
    %952 = vmatpush1.msra.mxu0 %v839
    %953 = vmatprep.subr.mxu0 0.0
    %954 = vmatpush1.msra.mxu0 %v840
    %955 = vmatprep.subr.mxu0 0.0
    %956 = vmatpush1.msra.mxu0 %v841
    %957 = vmatprep.subr.mxu0 0.0
    %958 = vmatpush1.msra.mxu0 %v842
    %959 = vmatprep.subr.mxu0 0.0
    %960 = vmatpush1.msra.mxu0 %v843
    %961 = vmatprep.subr.mxu0 0.0
    %962 = vmatpush1.msra.mxu0 %v844
    %963 = vmatprep.subr.mxu0 0.0
    %964 = vmatpush1.msra.mxu0 %v845
    %965 = vmatprep.subr.mxu0 0.0
    %966 = vmatpush1.msra.mxu0 %v846
    %967 = vmatprep.subr.mxu0 0.0
    %968 = vmatpush1.msra.mxu0 %v847
    %969 = vmatprep.subr.mxu0 0.0
    %970 = vmatpush1.msra.mxu0 %v848
    %971 = vmatprep.subr.mxu0 0.0
    %972 = vmatpush1.msra.mxu0 %v849
    %973 = vmatprep.subr.mxu0 0.0
    %974 = vmatpush1.msra.mxu0 %v850
    %975 = vmatprep.subr.mxu0 0.0
    %976 = vmatpush1.msra.mxu0 %v851
    %977 = vmatprep.subr.mxu0 0.0
    %978 = vmatpush1.msra.mxu0 %v852
    %979 = vmatprep.subr.mxu0 0.0
    %980 = vmatpush1.msra.mxu0 %v853
    %981 = vmatprep.subr.mxu0 0.0
    %982 = vmatpush1.msra.mxu0 %v854
    %983 = vmatprep.subr.mxu0 0.0
    %984 = vmatpush1.msra.mxu0 %v855
    %985 = vmatprep.subr.mxu0 0.0
    %986 = vmatpush1.msra.mxu0 %v856
    %987 = vmatprep.subr.mxu0 0.0
    %988 = vmatpush1.msra.mxu0 %v857
    %989 = vmatprep.subr.mxu0 0.0
    %990 = vmatpush1.msra.mxu0 %v858
    %991 = vmatprep.subr.mxu0 0.0
    %992 = vmatpush1.msra.mxu0 %v859
    %993 = vmatprep.subr.mxu0 0.0
    %994 = vmatpush1.msra.mxu0 %v860
    %995 = vmatprep.mubr.f32.mxu0 %v796
    %996 = vmatmul.mubr.f32.gmra.mrb[0].mxu0 %v795
    %v997 = vpop.f32.mrb[0].mxu0
    %v998 = vadd.f32 %v928, %v997
    %v999 = vpop.f32.mrb[0].mxu0
    %1000 = vdwg.mxu0
    %1001 = vst [vmem:[#allocation2 + $0x8] sm:$0xff] %v998
    %v1002 = vld [vmem:[%s0 + $0x10] sm:$0xff]
    %1003 = vset.pattern.permute.xlu0 0
    %1004 = vperm.xlu0 %1003, %v1002
    %v1005 = vpop.permute.xlu0 %1004
    %vm1006 = vcmp.eq.s32.totalorder %v1005, %v47
    %vm1007 = vcmp.eq.s32.totalorder %v1005, %v48
    %vm1008 = vcmp.eq.s32.totalorder %v1005, %v49
    %vm1009 = vcmp.eq.s32.totalorder %v1005, %v50
    %v1010 = vsel %vm1006, 1, 0
    %v1011 = vsel %vm1007, 1, 0
    %v1012 = vsel %vm1008, 1, 0
    %v1013 = vsel %vm1009, 1, 0
    %v1014 = vcvt.s32.f32 %v1010
    %v1015 = vcvt.s32.f32 %v1011
    %v1016 = vcvt.s32.f32 %v1012
    %v1017 = vcvt.s32.f32 %v1013
    %v1018 = vadd.f32 %v1014, 0.0
    %v1019 = vadd.f32 %v1015, 0.0
    %v1020 = vadd.f32 %v1016, 0.0
    %v1021 = vadd.f32 %v1017, 0.0
    %1022 = vset.pattern.permute.xlu0 1
    %1023 = vperm.xlu0 %1022, %v1002
    %v1024 = vpop.permute.xlu0 %1023
    %vm1025 = vcmp.eq.s32.totalorder %v1024, %v47
    %vm1026 = vcmp.eq.s32.totalorder %v1024, %v48
    %vm1027 = vcmp.eq.s32.totalorder %v1024, %v49
    %vm1028 = vcmp.eq.s32.totalorder %v1024, %v50
    %v1029 = vsel %vm1025, 1, 0
    %v1030 = vsel %vm1026, 1, 0
    %v1031 = vsel %vm1027, 1, 0
    %v1032 = vsel %vm1028, 1, 0
    %v1033 = vcvt.s32.f32 %v1029
    %v1034 = vcvt.s32.f32 %v1030
    %v1035 = vcvt.s32.f32 %v1031
    %v1036 = vcvt.s32.f32 %v1032
    %v1037 = vadd.f32 %v1018, %v1033
    %v1038 = vadd.f32 %v1019, %v1034
    %v1039 = vadd.f32 %v1020, %v1035
    %v1040 = vadd.f32 %v1021, %v1036
    %1041 = vset.pattern.permute.xlu0 2
    %1042 = vperm.xlu0 %1041, %v1002
    %v1043 = vpop.permute.xlu0 %1042
    %vm1044 = vcmp.eq.s32.totalorder %v1043, %v47
    %vm1045 = vcmp.eq.s32.totalorder %v1043, %v48
    %vm1046 = vcmp.eq.s32.totalorder %v1043, %v49
    %vm1047 = vcmp.eq.s32.totalorder %v1043, %v50
    %v1048 = vsel %vm1044, 1, 0
    %v1049 = vsel %vm1045, 1, 0
    %v1050 = vsel %vm1046, 1, 0
    %v1051 = vsel %vm1047, 1, 0
    %v1052 = vcvt.s32.f32 %v1048
    %v1053 = vcvt.s32.f32 %v1049
    %v1054 = vcvt.s32.f32 %v1050
    %v1055 = vcvt.s32.f32 %v1051
    %v1056 = vadd.f32 %v1037, %v1052
    %v1057 = vadd.f32 %v1038, %v1053
    %v1058 = vadd.f32 %v1039, %v1054
    %v1059 = vadd.f32 %v1040, %v1055
    %1060 = vset.pattern.permute.xlu0 3
    %1061 = vperm.xlu0 %1060, %v1002
    %v1062 = vpop.permute.xlu0 %1061
    %vm1063 = vcmp.eq.s32.totalorder %v1062, %v47
    %vm1064 = vcmp.eq.s32.totalorder %v1062, %v48
    %vm1065 = vcmp.eq.s32.totalorder %v1062, %v49
    %vm1066 = vcmp.eq.s32.totalorder %v1062, %v50
    %v1067 = vsel %vm1063, 1, 0
    %v1068 = vsel %vm1064, 1, 0
    %v1069 = vsel %vm1065, 1, 0
    %v1070 = vsel %vm1066, 1, 0
    %v1071 = vcvt.s32.f32 %v1067
    %v1072 = vcvt.s32.f32 %v1068
    %v1073 = vcvt.s32.f32 %v1069
    %v1074 = vcvt.s32.f32 %v1070
    %v1075 = vadd.f32 %v1056, %v1071
    %v1076 = vadd.f32 %v1057, %v1072
    %v1077 = vadd.f32 %v1058, %v1073
    %v1078 = vadd.f32 %v1059, %v1074
    %1079 = vset.pattern.permute.xlu0 4
    %1080 = vperm.xlu0 %1079, %v1002
    %v1081 = vpop.permute.xlu0 %1080
    %vm1082 = vcmp.eq.s32.totalorder %v1081, %v47
    %vm1083 = vcmp.eq.s32.totalorder %v1081, %v48
    %vm1084 = vcmp.eq.s32.totalorder %v1081, %v49
    %vm1085 = vcmp.eq.s32.totalorder %v1081, %v50
    %v1086 = vsel %vm1082, 1, 0
    %v1087 = vsel %vm1083, 1, 0
    %v1088 = vsel %vm1084, 1, 0
    %v1089 = vsel %vm1085, 1, 0
    %v1090 = vcvt.s32.f32 %v1086
    %v1091 = vcvt.s32.f32 %v1087
    %v1092 = vcvt.s32.f32 %v1088
    %v1093 = vcvt.s32.f32 %v1089
    %v1094 = vadd.f32 %v1075, %v1090
    %v1095 = vadd.f32 %v1076, %v1091
    %v1096 = vadd.f32 %v1077, %v1092
    %v1097 = vadd.f32 %v1078, %v1093
    %1098 = vset.pattern.permute.xlu0 5
    %1099 = vperm.xlu0 %1098, %v1002
    %v1100 = vpop.permute.xlu0 %1099
    %vm1101 = vcmp.eq.s32.totalorder %v1100, %v47
    %vm1102 = vcmp.eq.s32.totalorder %v1100, %v48
    %vm1103 = vcmp.eq.s32.totalorder %v1100, %v49
    %vm1104 = vcmp.eq.s32.totalorder %v1100, %v50
    %v1105 = vsel %vm1101, 1, 0
    %v1106 = vsel %vm1102, 1, 0
    %v1107 = vsel %vm1103, 1, 0
    %v1108 = vsel %vm1104, 1, 0
    %v1109 = vcvt.s32.f32 %v1105
    %v1110 = vcvt.s32.f32 %v1106
    %v1111 = vcvt.s32.f32 %v1107
    %v1112 = vcvt.s32.f32 %v1108
    %v1113 = vadd.f32 %v1094, %v1109
    %v1114 = vadd.f32 %v1095, %v1110
    %v1115 = vadd.f32 %v1096, %v1111
    %v1116 = vadd.f32 %v1097, %v1112
    %1117 = vset.pattern.permute.xlu0 6
    %1118 = vperm.xlu0 %1117, %v1002
    %v1119 = vpop.permute.xlu0 %1118
    %vm1120 = vcmp.eq.s32.totalorder %v1119, %v47
    %vm1121 = vcmp.eq.s32.totalorder %v1119, %v48
    %vm1122 = vcmp.eq.s32.totalorder %v1119, %v49
    %vm1123 = vcmp.eq.s32.totalorder %v1119, %v50
    %v1124 = vsel %vm1120, 1, 0
    %v1125 = vsel %vm1121, 1, 0
    %v1126 = vsel %vm1122, 1, 0
    %v1127 = vsel %vm1123, 1, 0
    %v1128 = vcvt.s32.f32 %v1124
    %v1129 = vcvt.s32.f32 %v1125
    %v1130 = vcvt.s32.f32 %v1126
    %v1131 = vcvt.s32.f32 %v1127
    %v1132 = vadd.f32 %v1113, %v1128
    %v1133 = vadd.f32 %v1114, %v1129
    %v1134 = vadd.f32 %v1115, %v1130
    %v1135 = vadd.f32 %v1116, %v1131
    %1136 = vset.pattern.permute.xlu0 7
    %1137 = vperm.xlu0 %1136, %v1002
    %v1138 = vpop.permute.xlu0 %1137
    %vm1139 = vcmp.eq.s32.totalorder %v1138, %v47
    %vm1140 = vcmp.eq.s32.totalorder %v1138, %v48
    %vm1141 = vcmp.eq.s32.totalorder %v1138, %v49
    %vm1142 = vcmp.eq.s32.totalorder %v1138, %v50
    %v1143 = vsel %vm1139, 1, 0
    %v1144 = vsel %vm1140, 1, 0
    %v1145 = vsel %vm1141, 1, 0
    %v1146 = vsel %vm1142, 1, 0
    %v1147 = vcvt.s32.f32 %v1143
    %v1148 = vcvt.s32.f32 %v1144
    %v1149 = vcvt.s32.f32 %v1145
    %v1150 = vcvt.s32.f32 %v1146
    %v1151 = vadd.f32 %v1132, %v1147
    %v1152 = vadd.f32 %v1133, %v1148
    %v1153 = vadd.f32 %v1134, %v1149
    %v1154 = vadd.f32 %v1135, %v1150
    %1155 = vset.pattern.permute.xlu0 8
    %1156 = vperm.xlu0 %1155, %v1002
    %v1157 = vpop.permute.xlu0 %1156
    %vm1158 = vcmp.eq.s32.totalorder %v1157, %v47
    %vm1159 = vcmp.eq.s32.totalorder %v1157, %v48
    %vm1160 = vcmp.eq.s32.totalorder %v1157, %v49
    %vm1161 = vcmp.eq.s32.totalorder %v1157, %v50
    %v1162 = vsel %vm1158, 1, 0
    %v1163 = vsel %vm1159, 1, 0
    %v1164 = vsel %vm1160, 1, 0
    %v1165 = vsel %vm1161, 1, 0
    %v1166 = vcvt.s32.f32 %v1162
    %v1167 = vcvt.s32.f32 %v1163
    %v1168 = vcvt.s32.f32 %v1164
    %v1169 = vcvt.s32.f32 %v1165
    %v1170 = vadd.f32 %v1151, %v1166
    %v1171 = vadd.f32 %v1152, %v1167
    %v1172 = vadd.f32 %v1153, %v1168
    %v1173 = vadd.f32 %v1154, %v1169
    %1174 = vset.pattern.permute.xlu0 9
    %1175 = vperm.xlu0 %1174, %v1002
    %v1176 = vpop.permute.xlu0 %1175
    %vm1177 = vcmp.eq.s32.totalorder %v1176, %v47
    %vm1178 = vcmp.eq.s32.totalorder %v1176, %v48
    %vm1179 = vcmp.eq.s32.totalorder %v1176, %v49
    %vm1180 = vcmp.eq.s32.totalorder %v1176, %v50
    %v1181 = vsel %vm1177, 1, 0
    %v1182 = vsel %vm1178, 1, 0
    %v1183 = vsel %vm1179, 1, 0
    %v1184 = vsel %vm1180, 1, 0
    %v1185 = vcvt.s32.f32 %v1181
    %v1186 = vcvt.s32.f32 %v1182
    %v1187 = vcvt.s32.f32 %v1183
    %v1188 = vcvt.s32.f32 %v1184
    %v1189 = vadd.f32 %v1170, %v1185
    %v1190 = vadd.f32 %v1171, %v1186
    %v1191 = vadd.f32 %v1172, %v1187
    %v1192 = vadd.f32 %v1173, %v1188
    %1193 = vset.pattern.permute.xlu0 10
    %1194 = vperm.xlu0 %1193, %v1002
    %v1195 = vpop.permute.xlu0 %1194
    %vm1196 = vcmp.eq.s32.totalorder %v1195, %v47
    %vm1197 = vcmp.eq.s32.totalorder %v1195, %v48
    %vm1198 = vcmp.eq.s32.totalorder %v1195, %v49
    %vm1199 = vcmp.eq.s32.totalorder %v1195, %v50
    %v1200 = vsel %vm1196, 1, 0
    %v1201 = vsel %vm1197, 1, 0
    %v1202 = vsel %vm1198, 1, 0
    %v1203 = vsel %vm1199, 1, 0
    %v1204 = vcvt.s32.f32 %v1200
    %v1205 = vcvt.s32.f32 %v1201
    %v1206 = vcvt.s32.f32 %v1202
    %v1207 = vcvt.s32.f32 %v1203
    %v1208 = vadd.f32 %v1189, %v1204
    %v1209 = vadd.f32 %v1190, %v1205
    %v1210 = vadd.f32 %v1191, %v1206
    %v1211 = vadd.f32 %v1192, %v1207
    %1212 = vset.pattern.permute.xlu0 11
    %1213 = vperm.xlu0 %1212, %v1002
    %v1214 = vpop.permute.xlu0 %1213
    %vm1215 = vcmp.eq.s32.totalorder %v1214, %v47
    %vm1216 = vcmp.eq.s32.totalorder %v1214, %v48
    %vm1217 = vcmp.eq.s32.totalorder %v1214, %v49
    %vm1218 = vcmp.eq.s32.totalorder %v1214, %v50
    %v1219 = vsel %vm1215, 1, 0
    %v1220 = vsel %vm1216, 1, 0
    %v1221 = vsel %vm1217, 1, 0
    %v1222 = vsel %vm1218, 1, 0
    %v1223 = vcvt.s32.f32 %v1219
    %v1224 = vcvt.s32.f32 %v1220
    %v1225 = vcvt.s32.f32 %v1221
    %v1226 = vcvt.s32.f32 %v1222
    %v1227 = vadd.f32 %v1208, %v1223
    %v1228 = vadd.f32 %v1209, %v1224
    %v1229 = vadd.f32 %v1210, %v1225
    %v1230 = vadd.f32 %v1211, %v1226
    %1231 = vset.pattern.permute.xlu0 12
    %1232 = vperm.xlu0 %1231, %v1002
    %v1233 = vpop.permute.xlu0 %1232
    %vm1234 = vcmp.eq.s32.totalorder %v1233, %v47
    %vm1235 = vcmp.eq.s32.totalorder %v1233, %v48
    %vm1236 = vcmp.eq.s32.totalorder %v1233, %v49
    %vm1237 = vcmp.eq.s32.totalorder %v1233, %v50
    %v1238 = vsel %vm1234, 1, 0
    %v1239 = vsel %vm1235, 1, 0
    %v1240 = vsel %vm1236, 1, 0
    %v1241 = vsel %vm1237, 1, 0
    %v1242 = vcvt.s32.f32 %v1238
    %v1243 = vcvt.s32.f32 %v1239
    %v1244 = vcvt.s32.f32 %v1240
    %v1245 = vcvt.s32.f32 %v1241
    %v1246 = vadd.f32 %v1227, %v1242
    %v1247 = vadd.f32 %v1228, %v1243
    %v1248 = vadd.f32 %v1229, %v1244
    %v1249 = vadd.f32 %v1230, %v1245
    %1250 = vset.pattern.permute.xlu0 13
    %1251 = vperm.xlu0 %1250, %v1002
    %v1252 = vpop.permute.xlu0 %1251
    %vm1253 = vcmp.eq.s32.totalorder %v1252, %v47
    %vm1254 = vcmp.eq.s32.totalorder %v1252, %v48
    %vm1255 = vcmp.eq.s32.totalorder %v1252, %v49
    %vm1256 = vcmp.eq.s32.totalorder %v1252, %v50
    %v1257 = vsel %vm1253, 1, 0
    %v1258 = vsel %vm1254, 1, 0
    %v1259 = vsel %vm1255, 1, 0
    %v1260 = vsel %vm1256, 1, 0
    %v1261 = vcvt.s32.f32 %v1257
    %v1262 = vcvt.s32.f32 %v1258
    %v1263 = vcvt.s32.f32 %v1259
    %v1264 = vcvt.s32.f32 %v1260
    %v1265 = vadd.f32 %v1246, %v1261
    %v1266 = vadd.f32 %v1247, %v1262
    %v1267 = vadd.f32 %v1248, %v1263
    %v1268 = vadd.f32 %v1249, %v1264
    %v1269 = vld [vmem:[#allocation3] sm:$0xff]
    %v1270 = vld [vmem:[#allocation3 + $0x8] sm:$0xff]
    %v1271 = vld [vmem:[#allocation3 + $0x10] sm:$0xff]
    %v1272 = vld [vmem:[#allocation3 + $0x18] sm:$0xff]
    %v1273 = vld [vmem:[#allocation3 + $0x20] sm:$0xff]
    %v1274 = vld [vmem:[#allocation3 + $0x28] sm:$0xff]
    %v1275 = vld [vmem:[#allocation3 + $0x30] sm:$0xff]
    %v1276 = vld [vmem:[#allocation3 + $0x38] sm:$0xff]
    %v1277 = vld [vmem:[#allocation3 + $0x40] sm:$0xff]
    %v1278 = vld [vmem:[#allocation3 + $0x48] sm:$0xff]
    %v1279 = vld [vmem:[#allocation3 + $0x50] sm:$0xff]
    %v1280 = vld [vmem:[#allocation3 + $0x58] sm:$0xff]
    %v1281 = vld [vmem:[#allocation3 + $0x60] sm:$0xff]
    %v1282 = vld [vmem:[#allocation3 + $0x68] sm:$0xff]
    %v1283 = vld [vmem:[#allocation3 + $0x70] sm:$0xff]
    %v1284 = vld [vmem:[#allocation3 + $0x78] sm:$0xff]
    %v1285 = vld [vmem:[#allocation3 + $0x80] sm:$0xff]
    %v1286 = vld [vmem:[#allocation3 + $0x88] sm:$0xff]
    %v1287 = vld [vmem:[#allocation3 + $0x90] sm:$0xff]
    %v1288 = vld [vmem:[#allocation3 + $0x98] sm:$0xff]
    %v1289 = vld [vmem:[#allocation3 + $0xa0] sm:$0xff]
    %v1290 = vld [vmem:[#allocation3 + $0xa8] sm:$0xff]
    %v1291 = vld [vmem:[#allocation3 + $0xb0] sm:$0xff]
    %v1292 = vld [vmem:[#allocation3 + $0xb8] sm:$0xff]
    %v1293 = vld [vmem:[#allocation3 + $0xc0] sm:$0xff]
    %v1294 = vld [vmem:[#allocation3 + $0xc8] sm:$0xff]
    %v1295 = vld [vmem:[#allocation3 + $0xd0] sm:$0xff]
    %v1296 = vld [vmem:[#allocation3 + $0xd8] sm:$0xff]
    %v1297 = vld [vmem:[#allocation3 + $0xe0] sm:$0xff]
    %v1298 = vld [vmem:[#allocation3 + $0xe8] sm:$0xff]
    %v1299 = vld [vmem:[#allocation3 + $0xf0] sm:$0xff]
    %v1300 = vld [vmem:[#allocation3 + $0xf8] sm:$0xff]
    %v1301 = vld [vmem:[#allocation3 + $0x100] sm:$0xff]
    %v1302 = vld [vmem:[#allocation3 + $0x108] sm:$0xff]
    %v1303 = vld [vmem:[#allocation3 + $0x110] sm:$0xff]
    %v1304 = vld [vmem:[#allocation3 + $0x118] sm:$0xff]
    %v1305 = vld [vmem:[#allocation3 + $0x120] sm:$0xff]
    %v1306 = vld [vmem:[#allocation3 + $0x128] sm:$0xff]
    %v1307 = vld [vmem:[#allocation3 + $0x130] sm:$0xff]
    %v1308 = vld [vmem:[#allocation3 + $0x138] sm:$0xff]
    %v1309 = vld [vmem:[#allocation3 + $0x140] sm:$0xff]
    %v1310 = vld [vmem:[#allocation3 + $0x148] sm:$0xff]
    %v1311 = vld [vmem:[#allocation3 + $0x150] sm:$0xff]
    %v1312 = vld [vmem:[#allocation3 + $0x158] sm:$0xff]
    %v1313 = vld [vmem:[#allocation3 + $0x160] sm:$0xff]
    %v1314 = vld [vmem:[#allocation3 + $0x168] sm:$0xff]
    %v1315 = vld [vmem:[#allocation3 + $0x170] sm:$0xff]
    %v1316 = vld [vmem:[#allocation3 + $0x178] sm:$0xff]
    %v1317 = vld [vmem:[#allocation3 + $0x180] sm:$0xff]
    %v1318 = vld [vmem:[#allocation3 + $0x188] sm:$0xff]
    %v1319 = vld [vmem:[#allocation3 + $0x190] sm:$0xff]
    %v1320 = vld [vmem:[#allocation3 + $0x198] sm:$0xff]
    %v1321 = vld [vmem:[#allocation3 + $0x1a0] sm:$0xff]
    %v1322 = vld [vmem:[#allocation3 + $0x1a8] sm:$0xff]
    %v1323 = vld [vmem:[#allocation3 + $0x1b0] sm:$0xff]
    %v1324 = vld [vmem:[#allocation3 + $0x1b8] sm:$0xff]
    %v1325 = vld [vmem:[#allocation3 + $0x1c0] sm:$0xff]
    %v1326 = vld [vmem:[#allocation3 + $0x1c8] sm:$0xff]
    %v1327 = vld [vmem:[#allocation3 + $0x1d0] sm:$0xff]
    %v1328 = vld [vmem:[#allocation3 + $0x1d8] sm:$0xff]
    %v1329 = vld [vmem:[#allocation3 + $0x1e0] sm:$0xff]
    %v1330 = vld [vmem:[#allocation3 + $0x1e8] sm:$0xff]
    %v1331 = vld [vmem:[#allocation3 + $0x1f0] sm:$0xff]
    %v1332 = vld [vmem:[#allocation3 + $0x1f8] sm:$0xff]
    %1333 = vmatprep.subr.mxu0 0.0
    %1334 = vmatpush1.msra.mxu0 %v1269
    %1335 = vmatprep.subr.mxu0 0.0
    %1336 = vmatpush1.msra.mxu0 %v1270
    %1337 = vmatprep.subr.mxu0 0.0
    %1338 = vmatpush1.msra.mxu0 %v1271
    %1339 = vmatprep.subr.mxu0 0.0
    %1340 = vmatpush1.msra.mxu0 %v1272
    %1341 = vmatprep.subr.mxu0 0.0
    %1342 = vmatpush1.msra.mxu0 %v1273
    %1343 = vmatprep.subr.mxu0 0.0
    %1344 = vmatpush1.msra.mxu0 %v1274
    %1345 = vmatprep.subr.mxu0 0.0
    %1346 = vmatpush1.msra.mxu0 %v1275
    %1347 = vmatprep.subr.mxu0 0.0
    %1348 = vmatpush1.msra.mxu0 %v1276
    %1349 = vmatprep.subr.mxu0 0.0
    %1350 = vmatpush1.msra.mxu0 %v1277
    %1351 = vmatprep.subr.mxu0 0.0
    %1352 = vmatpush1.msra.mxu0 %v1278
    %1353 = vmatprep.subr.mxu0 0.0
    %1354 = vmatpush1.msra.mxu0 %v1279
    %1355 = vmatprep.subr.mxu0 0.0
    %1356 = vmatpush1.msra.mxu0 %v1280
    %1357 = vmatprep.subr.mxu0 0.0
    %1358 = vmatpush1.msra.mxu0 %v1281
    %1359 = vmatprep.subr.mxu0 0.0
    %1360 = vmatpush1.msra.mxu0 %v1282
    %1361 = vmatprep.subr.mxu0 0.0
    %1362 = vmatpush1.msra.mxu0 %v1283
    %1363 = vmatprep.subr.mxu0 0.0
    %1364 = vmatpush1.msra.mxu0 %v1284
    %1365 = vmatprep.subr.mxu0 0.0
    %1366 = vmatpush1.msra.mxu0 %v1285
    %1367 = vmatprep.subr.mxu0 0.0
    %1368 = vmatpush1.msra.mxu0 %v1286
    %1369 = vmatprep.subr.mxu0 0.0
    %1370 = vmatpush1.msra.mxu0 %v1287
    %1371 = vmatprep.subr.mxu0 0.0
    %1372 = vmatpush1.msra.mxu0 %v1288
    %1373 = vmatprep.subr.mxu0 0.0
    %1374 = vmatpush1.msra.mxu0 %v1289
    %1375 = vmatprep.subr.mxu0 0.0
    %1376 = vmatpush1.msra.mxu0 %v1290
    %1377 = vmatprep.subr.mxu0 0.0
    %1378 = vmatpush1.msra.mxu0 %v1291
    %1379 = vmatprep.subr.mxu0 0.0
    %1380 = vmatpush1.msra.mxu0 %v1292
    %1381 = vmatprep.subr.mxu0 0.0
    %1382 = vmatpush1.msra.mxu0 %v1293
    %1383 = vmatprep.subr.mxu0 0.0
    %1384 = vmatpush1.msra.mxu0 %v1294
    %1385 = vmatprep.subr.mxu0 0.0
    %1386 = vmatpush1.msra.mxu0 %v1295
    %1387 = vmatprep.subr.mxu0 0.0
    %1388 = vmatpush1.msra.mxu0 %v1296
    %1389 = vmatprep.subr.mxu0 0.0
    %1390 = vmatpush1.msra.mxu0 %v1297
    %1391 = vmatprep.subr.mxu0 0.0
    %1392 = vmatpush1.msra.mxu0 %v1298
    %1393 = vmatprep.subr.mxu0 0.0
    %1394 = vmatpush1.msra.mxu0 %v1299
    %1395 = vmatprep.subr.mxu0 0.0
    %1396 = vmatpush1.msra.mxu0 %v1300
    %1397 = vmatprep.mubr.f32.mxu0 %v1266
    %1398 = vmatmul.mubr.f32.gmra.mrb[0].mxu0 %v1265
    %v1399 = vpop.f32.mrb[0].mxu0
    %v1400 = vadd.f32 %v387, %v1399
    %v1401 = vpop.f32.mrb[0].mxu0
    %1402 = vdwg.mxu0
    %1403 = vmatprep.subr.mxu0 0.0
    %1404 = vmatpush1.msra.mxu0 %v1301
    %1405 = vmatprep.subr.mxu0 0.0
    %1406 = vmatpush1.msra.mxu0 %v1302
    %1407 = vmatprep.subr.mxu0 0.0
    %1408 = vmatpush1.msra.mxu0 %v1303
    %1409 = vmatprep.subr.mxu0 0.0
    %1410 = vmatpush1.msra.mxu0 %v1304
    %1411 = vmatprep.subr.mxu0 0.0
    %1412 = vmatpush1.msra.mxu0 %v1305
    %1413 = vmatprep.subr.mxu0 0.0
    %1414 = vmatpush1.msra.mxu0 %v1306
    %1415 = vmatprep.subr.mxu0 0.0
    %1416 = vmatpush1.msra.mxu0 %v1307
    %1417 = vmatprep.subr.mxu0 0.0
    %1418 = vmatpush1.msra.mxu0 %v1308
    %1419 = vmatprep.subr.mxu0 0.0
    %1420 = vmatpush1.msra.mxu0 %v1309
    %1421 = vmatprep.subr.mxu0 0.0
    %1422 = vmatpush1.msra.mxu0 %v1310
    %1423 = vmatprep.subr.mxu0 0.0
    %1424 = vmatpush1.msra.mxu0 %v1311
    %1425 = vmatprep.subr.mxu0 0.0
    %1426 = vmatpush1.msra.mxu0 %v1312
    %1427 = vmatprep.subr.mxu0 0.0
    %1428 = vmatpush1.msra.mxu0 %v1313
    %1429 = vmatprep.subr.mxu0 0.0
    %1430 = vmatpush1.msra.mxu0 %v1314
    %1431 = vmatprep.subr.mxu0 0.0
    %1432 = vmatpush1.msra.mxu0 %v1315
    %1433 = vmatprep.subr.mxu0 0.0
    %1434 = vmatpush1.msra.mxu0 %v1316
    %1435 = vmatprep.subr.mxu0 0.0
    %1436 = vmatpush1.msra.mxu0 %v1317
    %1437 = vmatprep.subr.mxu0 0.0
    %1438 = vmatpush1.msra.mxu0 %v1318
    %1439 = vmatprep.subr.mxu0 0.0
    %1440 = vmatpush1.msra.mxu0 %v1319
    %1441 = vmatprep.subr.mxu0 0.0
    %1442 = vmatpush1.msra.mxu0 %v1320
    %1443 = vmatprep.subr.mxu0 0.0
    %1444 = vmatpush1.msra.mxu0 %v1321
    %1445 = vmatprep.subr.mxu0 0.0
    %1446 = vmatpush1.msra.mxu0 %v1322
    %1447 = vmatprep.subr.mxu0 0.0
    %1448 = vmatpush1.msra.mxu0 %v1323
    %1449 = vmatprep.subr.mxu0 0.0
    %1450 = vmatpush1.msra.mxu0 %v1324
    %1451 = vmatprep.subr.mxu0 0.0
    %1452 = vmatpush1.msra.mxu0 %v1325
    %1453 = vmatprep.subr.mxu0 0.0
    %1454 = vmatpush1.msra.mxu0 %v1326
    %1455 = vmatprep.subr.mxu0 0.0
    %1456 = vmatpush1.msra.mxu0 %v1327
    %1457 = vmatprep.subr.mxu0 0.0
    %1458 = vmatpush1.msra.mxu0 %v1328
    %1459 = vmatprep.subr.mxu0 0.0
    %1460 = vmatpush1.msra.mxu0 %v1329
    %1461 = vmatprep.subr.mxu0 0.0
    %1462 = vmatpush1.msra.mxu0 %v1330
    %1463 = vmatprep.subr.mxu0 0.0
    %1464 = vmatpush1.msra.mxu0 %v1331
    %1465 = vmatprep.subr.mxu0 0.0
    %1466 = vmatpush1.msra.mxu0 %v1332
    %1467 = vmatprep.mubr.f32.mxu0 %v1268
    %1468 = vmatmul.mubr.f32.gmra.mrb[0].mxu0 %v1267
    %v1469 = vpop.f32.mrb[0].mxu0
    %v1470 = vadd.f32 %v1400, %v1469
    %v1471 = vpop.f32.mrb[0].mxu0
    %1472 = vdwg.mxu0
    %1473 = vst [vmem:[#allocation2 + $0x10] sm:$0xff] %v1470
    %v1474 = vld [vmem:[%s0 + $0x18] sm:$0xff]
    %1475 = vset.pattern.permute.xlu0 0
    %1476 = vperm.xlu0 %1475, %v1474
    %v1477 = vpop.permute.xlu0 %1476
    %vm1478 = vcmp.eq.s32.totalorder %v1477, %v47
    %vm1479 = vcmp.eq.s32.totalorder %v1477, %v48
    %vm1480 = vcmp.eq.s32.totalorder %v1477, %v49
    %vm1481 = vcmp.eq.s32.totalorder %v1477, %v50
    %v1482 = vsel %vm1478, 1, 0
    %v1483 = vsel %vm1479, 1, 0
    %v1484 = vsel %vm1480, 1, 0
    %v1485 = vsel %vm1481, 1, 0
    %v1486 = vcvt.s32.f32 %v1482
    %v1487 = vcvt.s32.f32 %v1483
    %v1488 = vcvt.s32.f32 %v1484
    %v1489 = vcvt.s32.f32 %v1485
    %v1490 = vadd.f32 %v1486, 0.0
    %v1491 = vadd.f32 %v1487, 0.0
    %v1492 = vadd.f32 %v1488, 0.0
    %v1493 = vadd.f32 %v1489, 0.0
    %1494 = vset.pattern.permute.xlu0 1
    %1495 = vperm.xlu0 %1494, %v1474
    %v1496 = vpop.permute.xlu0 %1495
    %vm1497 = vcmp.eq.s32.totalorder %v1496, %v47
    %vm1498 = vcmp.eq.s32.totalorder %v1496, %v48
    %vm1499 = vcmp.eq.s32.totalorder %v1496, %v49
    %vm1500 = vcmp.eq.s32.totalorder %v1496, %v50
    %v1501 = vsel %vm1497, 1, 0
    %v1502 = vsel %vm1498, 1, 0
    %v1503 = vsel %vm1499, 1, 0
    %v1504 = vsel %vm1500, 1, 0
    %v1505 = vcvt.s32.f32 %v1501
    %v1506 = vcvt.s32.f32 %v1502
    %v1507 = vcvt.s32.f32 %v1503
    %v1508 = vcvt.s32.f32 %v1504
    %v1509 = vadd.f32 %v1490, %v1505
    %v1510 = vadd.f32 %v1491, %v1506
    %v1511 = vadd.f32 %v1492, %v1507
    %v1512 = vadd.f32 %v1493, %v1508
    %1513 = vset.pattern.permute.xlu0 2
    %1514 = vperm.xlu0 %1513, %v1474
    %v1515 = vpop.permute.xlu0 %1514
    %vm1516 = vcmp.eq.s32.totalorder %v1515, %v47
    %vm1517 = vcmp.eq.s32.totalorder %v1515, %v48
    %vm1518 = vcmp.eq.s32.totalorder %v1515, %v49
    %vm1519 = vcmp.eq.s32.totalorder %v1515, %v50
    %v1520 = vsel %vm1516, 1, 0
    %v1521 = vsel %vm1517, 1, 0
    %v1522 = vsel %vm1518, 1, 0
    %v1523 = vsel %vm1519, 1, 0
    %v1524 = vcvt.s32.f32 %v1520
    %v1525 = vcvt.s32.f32 %v1521
    %v1526 = vcvt.s32.f32 %v1522
    %v1527 = vcvt.s32.f32 %v1523
    %v1528 = vadd.f32 %v1509, %v1524
    %v1529 = vadd.f32 %v1510, %v1525
    %v1530 = vadd.f32 %v1511, %v1526
    %v1531 = vadd.f32 %v1512, %v1527
    %1532 = vset.pattern.permute.xlu0 3
    %1533 = vperm.xlu0 %1532, %v1474
    %v1534 = vpop.permute.xlu0 %1533
    %vm1535 = vcmp.eq.s32.totalorder %v1534, %v47
    %vm1536 = vcmp.eq.s32.totalorder %v1534, %v48
    %vm1537 = vcmp.eq.s32.totalorder %v1534, %v49
    %vm1538 = vcmp.eq.s32.totalorder %v1534, %v50
    %v1539 = vsel %vm1535, 1, 0
    %v1540 = vsel %vm1536, 1, 0
    %v1541 = vsel %vm1537, 1, 0
    %v1542 = vsel %vm1538, 1, 0
    %v1543 = vcvt.s32.f32 %v1539
    %v1544 = vcvt.s32.f32 %v1540
    %v1545 = vcvt.s32.f32 %v1541
    %v1546 = vcvt.s32.f32 %v1542
    %v1547 = vadd.f32 %v1528, %v1543
    %v1548 = vadd.f32 %v1529, %v1544
    %v1549 = vadd.f32 %v1530, %v1545
    %v1550 = vadd.f32 %v1531, %v1546
    %1551 = vset.pattern.permute.xlu0 4
    %1552 = vperm.xlu0 %1551, %v1474
    %v1553 = vpop.permute.xlu0 %1552
    %vm1554 = vcmp.eq.s32.totalorder %v1553, %v47
    %vm1555 = vcmp.eq.s32.totalorder %v1553, %v48
    %vm1556 = vcmp.eq.s32.totalorder %v1553, %v49
    %vm1557 = vcmp.eq.s32.totalorder %v1553, %v50
    %v1558 = vsel %vm1554, 1, 0
    %v1559 = vsel %vm1555, 1, 0
    %v1560 = vsel %vm1556, 1, 0
    %v1561 = vsel %vm1557, 1, 0
    %v1562 = vcvt.s32.f32 %v1558
    %v1563 = vcvt.s32.f32 %v1559
    %v1564 = vcvt.s32.f32 %v1560
    %v1565 = vcvt.s32.f32 %v1561
    %v1566 = vadd.f32 %v1547, %v1562
    %v1567 = vadd.f32 %v1548, %v1563
    %v1568 = vadd.f32 %v1549, %v1564
    %v1569 = vadd.f32 %v1550, %v1565
    %1570 = vset.pattern.permute.xlu0 5
    %1571 = vperm.xlu0 %1570, %v1474
    %v1572 = vpop.permute.xlu0 %1571
    %vm1573 = vcmp.eq.s32.totalorder %v1572, %v47
    %vm1574 = vcmp.eq.s32.totalorder %v1572, %v48
    %vm1575 = vcmp.eq.s32.totalorder %v1572, %v49
    %vm1576 = vcmp.eq.s32.totalorder %v1572, %v50
    %v1577 = vsel %vm1573, 1, 0
    %v1578 = vsel %vm1574, 1, 0
    %v1579 = vsel %vm1575, 1, 0
    %v1580 = vsel %vm1576, 1, 0
    %v1581 = vcvt.s32.f32 %v1577
    %v1582 = vcvt.s32.f32 %v1578
    %v1583 = vcvt.s32.f32 %v1579
    %v1584 = vcvt.s32.f32 %v1580
    %v1585 = vadd.f32 %v1566, %v1581
    %v1586 = vadd.f32 %v1567, %v1582
    %v1587 = vadd.f32 %v1568, %v1583
    %v1588 = vadd.f32 %v1569, %v1584
    %1589 = vset.pattern.permute.xlu0 6
    %1590 = vperm.xlu0 %1589, %v1474
    %v1591 = vpop.permute.xlu0 %1590
    %vm1592 = vcmp.eq.s32.totalorder %v1591, %v47
    %vm1593 = vcmp.eq.s32.totalorder %v1591, %v48
    %vm1594 = vcmp.eq.s32.totalorder %v1591, %v49
    %vm1595 = vcmp.eq.s32.totalorder %v1591, %v50
    %v1596 = vsel %vm1592, 1, 0
    %v1597 = vsel %vm1593, 1, 0
    %v1598 = vsel %vm1594, 1, 0
    %v1599 = vsel %vm1595, 1, 0
    %v1600 = vcvt.s32.f32 %v1596
    %v1601 = vcvt.s32.f32 %v1597
    %v1602 = vcvt.s32.f32 %v1598
    %v1603 = vcvt.s32.f32 %v1599
    %v1604 = vadd.f32 %v1585, %v1600
    %v1605 = vadd.f32 %v1586, %v1601
    %v1606 = vadd.f32 %v1587, %v1602
    %v1607 = vadd.f32 %v1588, %v1603
    %1608 = vset.pattern.permute.xlu0 7
    %1609 = vperm.xlu0 %1608, %v1474
    %v1610 = vpop.permute.xlu0 %1609
    %vm1611 = vcmp.eq.s32.totalorder %v1610, %v47
    %vm1612 = vcmp.eq.s32.totalorder %v1610, %v48
    %vm1613 = vcmp.eq.s32.totalorder %v1610, %v49
    %vm1614 = vcmp.eq.s32.totalorder %v1610, %v50
    %v1615 = vsel %vm1611, 1, 0
    %v1616 = vsel %vm1612, 1, 0
    %v1617 = vsel %vm1613, 1, 0
    %v1618 = vsel %vm1614, 1, 0
    %v1619 = vcvt.s32.f32 %v1615
    %v1620 = vcvt.s32.f32 %v1616
    %v1621 = vcvt.s32.f32 %v1617
    %v1622 = vcvt.s32.f32 %v1618
    %v1623 = vadd.f32 %v1604, %v1619
    %v1624 = vadd.f32 %v1605, %v1620
    %v1625 = vadd.f32 %v1606, %v1621
    %v1626 = vadd.f32 %v1607, %v1622
    %1627 = vset.pattern.permute.xlu0 8
    %1628 = vperm.xlu0 %1627, %v1474
    %v1629 = vpop.permute.xlu0 %1628
    %vm1630 = vcmp.eq.s32.totalorder %v1629, %v47
    %vm1631 = vcmp.eq.s32.totalorder %v1629, %v48
    %vm1632 = vcmp.eq.s32.totalorder %v1629, %v49
    %vm1633 = vcmp.eq.s32.totalorder %v1629, %v50
    %v1634 = vsel %vm1630, 1, 0
    %v1635 = vsel %vm1631, 1, 0
    %v1636 = vsel %vm1632, 1, 0
    %v1637 = vsel %vm1633, 1, 0
    %v1638 = vcvt.s32.f32 %v1634
    %v1639 = vcvt.s32.f32 %v1635
    %v1640 = vcvt.s32.f32 %v1636
    %v1641 = vcvt.s32.f32 %v1637
    %v1642 = vadd.f32 %v1623, %v1638
    %v1643 = vadd.f32 %v1624, %v1639
    %v1644 = vadd.f32 %v1625, %v1640
    %v1645 = vadd.f32 %v1626, %v1641
    %1646 = vset.pattern.permute.xlu0 9
    %1647 = vperm.xlu0 %1646, %v1474
    %v1648 = vpop.permute.xlu0 %1647
    %vm1649 = vcmp.eq.s32.totalorder %v1648, %v47
    %vm1650 = vcmp.eq.s32.totalorder %v1648, %v48
    %vm1651 = vcmp.eq.s32.totalorder %v1648, %v49
    %vm1652 = vcmp.eq.s32.totalorder %v1648, %v50
    %v1653 = vsel %vm1649, 1, 0
    %v1654 = vsel %vm1650, 1, 0
    %v1655 = vsel %vm1651, 1, 0
    %v1656 = vsel %vm1652, 1, 0
    %v1657 = vcvt.s32.f32 %v1653
    %v1658 = vcvt.s32.f32 %v1654
    %v1659 = vcvt.s32.f32 %v1655
    %v1660 = vcvt.s32.f32 %v1656
    %v1661 = vadd.f32 %v1642, %v1657
    %v1662 = vadd.f32 %v1643, %v1658
    %v1663 = vadd.f32 %v1644, %v1659
    %v1664 = vadd.f32 %v1645, %v1660
    %1665 = vset.pattern.permute.xlu0 10
    %1666 = vperm.xlu0 %1665, %v1474
    %v1667 = vpop.permute.xlu0 %1666
    %vm1668 = vcmp.eq.s32.totalorder %v1667, %v47
    %vm1669 = vcmp.eq.s32.totalorder %v1667, %v48
    %vm1670 = vcmp.eq.s32.totalorder %v1667, %v49
    %vm1671 = vcmp.eq.s32.totalorder %v1667, %v50
    %v1672 = vsel %vm1668, 1, 0
    %v1673 = vsel %vm1669, 1, 0
    %v1674 = vsel %vm1670, 1, 0
    %v1675 = vsel %vm1671, 1, 0
    %v1676 = vcvt.s32.f32 %v1672
    %v1677 = vcvt.s32.f32 %v1673
    %v1678 = vcvt.s32.f32 %v1674
    %v1679 = vcvt.s32.f32 %v1675
    %v1680 = vadd.f32 %v1661, %v1676
    %v1681 = vadd.f32 %v1662, %v1677
    %v1682 = vadd.f32 %v1663, %v1678
    %v1683 = vadd.f32 %v1664, %v1679
    %1684 = vset.pattern.permute.xlu0 11
    %1685 = vperm.xlu0 %1684, %v1474
    %v1686 = vpop.permute.xlu0 %1685
    %vm1687 = vcmp.eq.s32.totalorder %v1686, %v47
    %vm1688 = vcmp.eq.s32.totalorder %v1686, %v48
    %vm1689 = vcmp.eq.s32.totalorder %v1686, %v49
    %vm1690 = vcmp.eq.s32.totalorder %v1686, %v50
    %v1691 = vsel %vm1687, 1, 0
    %v1692 = vsel %vm1688, 1, 0
    %v1693 = vsel %vm1689, 1, 0
    %v1694 = vsel %vm1690, 1, 0
    %v1695 = vcvt.s32.f32 %v1691
    %v1696 = vcvt.s32.f32 %v1692
    %v1697 = vcvt.s32.f32 %v1693
    %v1698 = vcvt.s32.f32 %v1694
    %v1699 = vadd.f32 %v1680, %v1695
    %v1700 = vadd.f32 %v1681, %v1696
    %v1701 = vadd.f32 %v1682, %v1697
    %v1702 = vadd.f32 %v1683, %v1698
    %1703 = vset.pattern.permute.xlu0 12
    %1704 = vperm.xlu0 %1703, %v1474
    %v1705 = vpop.permute.xlu0 %1704
    %vm1706 = vcmp.eq.s32.totalorder %v1705, %v47
    %vm1707 = vcmp.eq.s32.totalorder %v1705, %v48
    %vm1708 = vcmp.eq.s32.totalorder %v1705, %v49
    %vm1709 = vcmp.eq.s32.totalorder %v1705, %v50
    %v1710 = vsel %vm1706, 1, 0
    %v1711 = vsel %vm1707, 1, 0
    %v1712 = vsel %vm1708, 1, 0
    %v1713 = vsel %vm1709, 1, 0
    %v1714 = vcvt.s32.f32 %v1710
    %v1715 = vcvt.s32.f32 %v1711
    %v1716 = vcvt.s32.f32 %v1712
    %v1717 = vcvt.s32.f32 %v1713
    %v1718 = vadd.f32 %v1699, %v1714
    %v1719 = vadd.f32 %v1700, %v1715
    %v1720 = vadd.f32 %v1701, %v1716
    %v1721 = vadd.f32 %v1702, %v1717
    %1722 = vset.pattern.permute.xlu0 13
    %1723 = vperm.xlu0 %1722, %v1474
    %v1724 = vpop.permute.xlu0 %1723
    %vm1725 = vcmp.eq.s32.totalorder %v1724, %v47
    %vm1726 = vcmp.eq.s32.totalorder %v1724, %v48
    %vm1727 = vcmp.eq.s32.totalorder %v1724, %v49
    %vm1728 = vcmp.eq.s32.totalorder %v1724, %v50
    %v1729 = vsel %vm1725, 1, 0
    %v1730 = vsel %vm1726, 1, 0
    %v1731 = vsel %vm1727, 1, 0
    %v1732 = vsel %vm1728, 1, 0
    %v1733 = vcvt.s32.f32 %v1729
    %v1734 = vcvt.s32.f32 %v1730
    %v1735 = vcvt.s32.f32 %v1731
    %v1736 = vcvt.s32.f32 %v1732
    %v1737 = vadd.f32 %v1718, %v1733
    %v1738 = vadd.f32 %v1719, %v1734
    %v1739 = vadd.f32 %v1720, %v1735
    %v1740 = vadd.f32 %v1721, %v1736
    %v1741 = vld [vmem:[#allocation3] sm:$0xff]
    %v1742 = vld [vmem:[#allocation3 + $0x8] sm:$0xff]
    %v1743 = vld [vmem:[#allocation3 + $0x10] sm:$0xff]
    %v1744 = vld [vmem:[#allocation3 + $0x18] sm:$0xff]
    %v1745 = vld [vmem:[#allocation3 + $0x20] sm:$0xff]
    %v1746 = vld [vmem:[#allocation3 + $0x28] sm:$0xff]
    %v1747 = vld [vmem:[#allocation3 + $0x30] sm:$0xff]
    %v1748 = vld [vmem:[#allocation3 + $0x38] sm:$0xff]
    %v1749 = vld [vmem:[#allocation3 + $0x40] sm:$0xff]
    %v1750 = vld [vmem:[#allocation3 + $0x48] sm:$0xff]
    %v1751 = vld [vmem:[#allocation3 + $0x50] sm:$0xff]
    %v1752 = vld [vmem:[#allocation3 + $0x58] sm:$0xff]
    %v1753 = vld [vmem:[#allocation3 + $0x60] sm:$0xff]
    %v1754 = vld [vmem:[#allocation3 + $0x68] sm:$0xff]
    %v1755 = vld [vmem:[#allocation3 + $0x70] sm:$0xff]
    %v1756 = vld [vmem:[#allocation3 + $0x78] sm:$0xff]
    %v1757 = vld [vmem:[#allocation3 + $0x80] sm:$0xff]
    %v1758 = vld [vmem:[#allocation3 + $0x88] sm:$0xff]
    %v1759 = vld [vmem:[#allocation3 + $0x90] sm:$0xff]
    %v1760 = vld [vmem:[#allocation3 + $0x98] sm:$0xff]
    %v1761 = vld [vmem:[#allocation3 + $0xa0] sm:$0xff]
    %v1762 = vld [vmem:[#allocation3 + $0xa8] sm:$0xff]
    %v1763 = vld [vmem:[#allocation3 + $0xb0] sm:$0xff]
    %v1764 = vld [vmem:[#allocation3 + $0xb8] sm:$0xff]
    %v1765 = vld [vmem:[#allocation3 + $0xc0] sm:$0xff]
    %v1766 = vld [vmem:[#allocation3 + $0xc8] sm:$0xff]
    %v1767 = vld [vmem:[#allocation3 + $0xd0] sm:$0xff]
    %v1768 = vld [vmem:[#allocation3 + $0xd8] sm:$0xff]
    %v1769 = vld [vmem:[#allocation3 + $0xe0] sm:$0xff]
    %v1770 = vld [vmem:[#allocation3 + $0xe8] sm:$0xff]
    %v1771 = vld [vmem:[#allocation3 + $0xf0] sm:$0xff]
    %v1772 = vld [vmem:[#allocation3 + $0xf8] sm:$0xff]
    %v1773 = vld [vmem:[#allocation3 + $0x100] sm:$0xff]
    %v1774 = vld [vmem:[#allocation3 + $0x108] sm:$0xff]
    %v1775 = vld [vmem:[#allocation3 + $0x110] sm:$0xff]
    %v1776 = vld [vmem:[#allocation3 + $0x118] sm:$0xff]
    %v1777 = vld [vmem:[#allocation3 + $0x120] sm:$0xff]
    %v1778 = vld [vmem:[#allocation3 + $0x128] sm:$0xff]
    %v1779 = vld [vmem:[#allocation3 + $0x130] sm:$0xff]
    %v1780 = vld [vmem:[#allocation3 + $0x138] sm:$0xff]
    %v1781 = vld [vmem:[#allocation3 + $0x140] sm:$0xff]
    %v1782 = vld [vmem:[#allocation3 + $0x148] sm:$0xff]
    %v1783 = vld [vmem:[#allocation3 + $0x150] sm:$0xff]
    %v1784 = vld [vmem:[#allocation3 + $0x158] sm:$0xff]
    %v1785 = vld [vmem:[#allocation3 + $0x160] sm:$0xff]
    %v1786 = vld [vmem:[#allocation3 + $0x168] sm:$0xff]
    %v1787 = vld [vmem:[#allocation3 + $0x170] sm:$0xff]
    %v1788 = vld [vmem:[#allocation3 + $0x178] sm:$0xff]
    %v1789 = vld [vmem:[#allocation3 + $0x180] sm:$0xff]
    %v1790 = vld [vmem:[#allocation3 + $0x188] sm:$0xff]
    %v1791 = vld [vmem:[#allocation3 + $0x190] sm:$0xff]
    %v1792 = vld [vmem:[#allocation3 + $0x198] sm:$0xff]
    %v1793 = vld [vmem:[#allocation3 + $0x1a0] sm:$0xff]
    %v1794 = vld [vmem:[#allocation3 + $0x1a8] sm:$0xff]
    %v1795 = vld [vmem:[#allocation3 + $0x1b0] sm:$0xff]
    %v1796 = vld [vmem:[#allocation3 + $0x1b8] sm:$0xff]
    %v1797 = vld [vmem:[#allocation3 + $0x1c0] sm:$0xff]
    %v1798 = vld [vmem:[#allocation3 + $0x1c8] sm:$0xff]
    %v1799 = vld [vmem:[#allocation3 + $0x1d0] sm:$0xff]
    %v1800 = vld [vmem:[#allocation3 + $0x1d8] sm:$0xff]
    %v1801 = vld [vmem:[#allocation3 + $0x1e0] sm:$0xff]
    %v1802 = vld [vmem:[#allocation3 + $0x1e8] sm:$0xff]
    %v1803 = vld [vmem:[#allocation3 + $0x1f0] sm:$0xff]
    %v1804 = vld [vmem:[#allocation3 + $0x1f8] sm:$0xff]
    %1805 = vmatprep.subr.mxu0 0.0
    %1806 = vmatpush1.msra.mxu0 %v1741
    %1807 = vmatprep.subr.mxu0 0.0
    %1808 = vmatpush1.msra.mxu0 %v1742
    %1809 = vmatprep.subr.mxu0 0.0
    %1810 = vmatpush1.msra.mxu0 %v1743
    %1811 = vmatprep.subr.mxu0 0.0
    %1812 = vmatpush1.msra.mxu0 %v1744
    %1813 = vmatprep.subr.mxu0 0.0
    %1814 = vmatpush1.msra.mxu0 %v1745
    %1815 = vmatprep.subr.mxu0 0.0
    %1816 = vmatpush1.msra.mxu0 %v1746
    %1817 = vmatprep.subr.mxu0 0.0
    %1818 = vmatpush1.msra.mxu0 %v1747
    %1819 = vmatprep.subr.mxu0 0.0
    %1820 = vmatpush1.msra.mxu0 %v1748
    %1821 = vmatprep.subr.mxu0 0.0
    %1822 = vmatpush1.msra.mxu0 %v1749
    %1823 = vmatprep.subr.mxu0 0.0
    %1824 = vmatpush1.msra.mxu0 %v1750
    %1825 = vmatprep.subr.mxu0 0.0
    %1826 = vmatpush1.msra.mxu0 %v1751
    %1827 = vmatprep.subr.mxu0 0.0
    %1828 = vmatpush1.msra.mxu0 %v1752
    %1829 = vmatprep.subr.mxu0 0.0
    %1830 = vmatpush1.msra.mxu0 %v1753
    %1831 = vmatprep.subr.mxu0 0.0
    %1832 = vmatpush1.msra.mxu0 %v1754
    %1833 = vmatprep.subr.mxu0 0.0
    %1834 = vmatpush1.msra.mxu0 %v1755
    %1835 = vmatprep.subr.mxu0 0.0
    %1836 = vmatpush1.msra.mxu0 %v1756
    %1837 = vmatprep.subr.mxu0 0.0
    %1838 = vmatpush1.msra.mxu0 %v1757
    %1839 = vmatprep.subr.mxu0 0.0
    %1840 = vmatpush1.msra.mxu0 %v1758
    %1841 = vmatprep.subr.mxu0 0.0
    %1842 = vmatpush1.msra.mxu0 %v1759
    %1843 = vmatprep.subr.mxu0 0.0
    %1844 = vmatpush1.msra.mxu0 %v1760
    %1845 = vmatprep.subr.mxu0 0.0
    %1846 = vmatpush1.msra.mxu0 %v1761
    %1847 = vmatprep.subr.mxu0 0.0
    %1848 = vmatpush1.msra.mxu0 %v1762
    %1849 = vmatprep.subr.mxu0 0.0
    %1850 = vmatpush1.msra.mxu0 %v1763
    %1851 = vmatprep.subr.mxu0 0.0
    %1852 = vmatpush1.msra.mxu0 %v1764
    %1853 = vmatprep.subr.mxu0 0.0
    %1854 = vmatpush1.msra.mxu0 %v1765
    %1855 = vmatprep.subr.mxu0 0.0
    %1856 = vmatpush1.msra.mxu0 %v1766
    %1857 = vmatprep.subr.mxu0 0.0
    %1858 = vmatpush1.msra.mxu0 %v1767
    %1859 = vmatprep.subr.mxu0 0.0
    %1860 = vmatpush1.msra.mxu0 %v1768
    %1861 = vmatprep.subr.mxu0 0.0
    %1862 = vmatpush1.msra.mxu0 %v1769
    %1863 = vmatprep.subr.mxu0 0.0
    %1864 = vmatpush1.msra.mxu0 %v1770
    %1865 = vmatprep.subr.mxu0 0.0
    %1866 = vmatpush1.msra.mxu0 %v1771
    %1867 = vmatprep.subr.mxu0 0.0
    %1868 = vmatpush1.msra.mxu0 %v1772
    %1869 = vmatprep.mubr.f32.mxu0 %v1738
    %1870 = vmatmul.mubr.f32.gmra.mrb[0].mxu0 %v1737
    %v1871 = vpop.f32.mrb[0].mxu0
    %v1872 = vadd.f32 %v387, %v1871
    %v1873 = vpop.f32.mrb[0].mxu0
    %1874 = vdwg.mxu0
    %1875 = vmatprep.subr.mxu0 0.0
    %1876 = vmatpush1.msra.mxu0 %v1773
    %1877 = vmatprep.subr.mxu0 0.0
    %1878 = vmatpush1.msra.mxu0 %v1774
    %1879 = vmatprep.subr.mxu0 0.0
    %1880 = vmatpush1.msra.mxu0 %v1775
    %1881 = vmatprep.subr.mxu0 0.0
    %1882 = vmatpush1.msra.mxu0 %v1776
    %1883 = vmatprep.subr.mxu0 0.0
    %1884 = vmatpush1.msra.mxu0 %v1777
    %1885 = vmatprep.subr.mxu0 0.0
    %1886 = vmatpush1.msra.mxu0 %v1778
    %1887 = vmatprep.subr.mxu0 0.0
    %1888 = vmatpush1.msra.mxu0 %v1779
    %1889 = vmatprep.subr.mxu0 0.0
    %1890 = vmatpush1.msra.mxu0 %v1780
    %1891 = vmatprep.subr.mxu0 0.0
    %1892 = vmatpush1.msra.mxu0 %v1781
    %1893 = vmatprep.subr.mxu0 0.0
    %1894 = vmatpush1.msra.mxu0 %v1782
    %1895 = vmatprep.subr.mxu0 0.0
    %1896 = vmatpush1.msra.mxu0 %v1783
    %1897 = vmatprep.subr.mxu0 0.0
    %1898 = vmatpush1.msra.mxu0 %v1784
    %1899 = vmatprep.subr.mxu0 0.0
    %1900 = vmatpush1.msra.mxu0 %v1785
    %1901 = vmatprep.subr.mxu0 0.0
    %1902 = vmatpush1.msra.mxu0 %v1786
    %1903 = vmatprep.subr.mxu0 0.0
    %1904 = vmatpush1.msra.mxu0 %v1787
    %1905 = vmatprep.subr.mxu0 0.0
    %1906 = vmatpush1.msra.mxu0 %v1788
    %1907 = vmatprep.subr.mxu0 0.0
    %1908 = vmatpush1.msra.mxu0 %v1789
    %1909 = vmatprep.subr.mxu0 0.0
    %1910 = vmatpush1.msra.mxu0 %v1790
    %1911 = vmatprep.subr.mxu0 0.0
    %1912 = vmatpush1.msra.mxu0 %v1791
    %1913 = vmatprep.subr.mxu0 0.0
    %1914 = vmatpush1.msra.mxu0 %v1792
    %1915 = vmatprep.subr.mxu0 0.0
    %1916 = vmatpush1.msra.mxu0 %v1793
    %1917 = vmatprep.subr.mxu0 0.0
    %1918 = vmatpush1.msra.mxu0 %v1794
    %1919 = vmatprep.subr.mxu0 0.0
    %1920 = vmatpush1.msra.mxu0 %v1795
    %1921 = vmatprep.subr.mxu0 0.0
    %1922 = vmatpush1.msra.mxu0 %v1796
    %1923 = vmatprep.subr.mxu0 0.0
    %1924 = vmatpush1.msra.mxu0 %v1797
    %1925 = vmatprep.subr.mxu0 0.0
    %1926 = vmatpush1.msra.mxu0 %v1798
    %1927 = vmatprep.subr.mxu0 0.0
    %1928 = vmatpush1.msra.mxu0 %v1799
    %1929 = vmatprep.subr.mxu0 0.0
    %1930 = vmatpush1.msra.mxu0 %v1800
    %1931 = vmatprep.subr.mxu0 0.0
    %1932 = vmatpush1.msra.mxu0 %v1801
    %1933 = vmatprep.subr.mxu0 0.0
    %1934 = vmatpush1.msra.mxu0 %v1802
    %1935 = vmatprep.subr.mxu0 0.0
    %1936 = vmatpush1.msra.mxu0 %v1803
    %1937 = vmatprep.subr.mxu0 0.0
    %1938 = vmatpush1.msra.mxu0 %v1804
    %1939 = vmatprep.mubr.f32.mxu0 %v1740
    %1940 = vmatmul.mubr.f32.gmra.mrb[0].mxu0 %v1739
    %v1941 = vpop.f32.mrb[0].mxu0
    %v1942 = vadd.f32 %v1872, %v1941
    %v1943 = vpop.f32.mrb[0].mxu0
    %1944 = vdwg.mxu0
    %1945 = vst [vmem:[#allocation2 + $0x18] sm:$0xff] %v1942
    %v1946 = vld [vmem:[%s0 + $0x20] sm:$0xff]
    %1947 = vset.pattern.permute.xlu0 0
    %1948 = vperm.xlu0 %1947, %v1946
    %v1949 = vpop.permute.xlu0 %1948
    %vm1950 = vcmp.eq.s32.totalorder %v1949, %v47
    %vm1951 = vcmp.eq.s32.totalorder %v1949, %v48
    %vm1952 = vcmp.eq.s32.totalorder %v1949, %v49
    %vm1953 = vcmp.eq.s32.totalorder %v1949, %v50
    %v1954 = vsel %vm1950, 1, 0
    %v1955 = vsel %vm1951, 1, 0
    %v1956 = vsel %vm1952, 1, 0
    %v1957 = vsel %vm1953, 1, 0
    %v1958 = vcvt.s32.f32 %v1954
    %v1959 = vcvt.s32.f32 %v1955
    %v1960 = vcvt.s32.f32 %v1956
    %v1961 = vcvt.s32.f32 %v1957
    %v1962 = vadd.f32 %v1958, 0.0
    %v1963 = vadd.f32 %v1959, 0.0
    %v1964 = vadd.f32 %v1960, 0.0
    %v1965 = vadd.f32 %v1961, 0.0
    %1966 = vset.pattern.permute.xlu0 1
    %1967 = vperm.xlu0 %1966, %v1946
    %v1968 = vpop.permute.xlu0 %1967
    %vm1969 = vcmp.eq.s32.totalorder %v1968, %v47
    %vm1970 = vcmp.eq.s32.totalorder %v1968, %v48
    %vm1971 = vcmp.eq.s32.totalorder %v1968, %v49
    %vm1972 = vcmp.eq.s32.totalorder %v1968, %v50
    %v1973 = vsel %vm1969, 1, 0
    %v1974 = vsel %vm1970, 1, 0
    %v1975 = vsel %vm1971, 1, 0
    %v1976 = vsel %vm1972, 1, 0
    %v1977 = vcvt.s32.f32 %v1973
    %v1978 = vcvt.s32.f32 %v1974
    %v1979 = vcvt.s32.f32 %v1975
    %v1980 = vcvt.s32.f32 %v1976
    %v1981 = vadd.f32 %v1962, %v1977
    %v1982 = vadd.f32 %v1963, %v1978
    %v1983 = vadd.f32 %v1964, %v1979
    %v1984 = vadd.f32 %v1965, %v1980
    %1985 = vset.pattern.permute.xlu0 2
    %1986 = vperm.xlu0 %1985, %v1946
    %v1987 = vpop.permute.xlu0 %1986
    %vm1988 = vcmp.eq.s32.totalorder %v1987, %v47
    %vm1989 = vcmp.eq.s32.totalorder %v1987, %v48
    %vm1990 = vcmp.eq.s32.totalorder %v1987, %v49
    %vm1991 = vcmp.eq.s32.totalorder %v1987, %v50
    %v1992 = vsel %vm1988, 1, 0
    %v1993 = vsel %vm1989, 1, 0
    %v1994 = vsel %vm1990, 1, 0
    %v1995 = vsel %vm1991, 1, 0
    %v1996 = vcvt.s32.f32 %v1992
    %v1997 = vcvt.s32.f32 %v1993
    %v1998 = vcvt.s32.f32 %v1994
    %v1999 = vcvt.s32.f32 %v1995
    %v2000 = vadd.f32 %v1981, %v1996
    %v2001 = vadd.f32 %v1982, %v1997
    %v2002 = vadd.f32 %v1983, %v1998
    %v2003 = vadd.f32 %v1984, %v1999
    %2004 = vset.pattern.permute.xlu0 3
    %2005 = vperm.xlu0 %2004, %v1946
    %v2006 = vpop.permute.xlu0 %2005
    %vm2007 = vcmp.eq.s32.totalorder %v2006, %v47
    %vm2008 = vcmp.eq.s32.totalorder %v2006, %v48
    %vm2009 = vcmp.eq.s32.totalorder %v2006, %v49
    %vm2010 = vcmp.eq.s32.totalorder %v2006, %v50
    %v2011 = vsel %vm2007, 1, 0
    %v2012 = vsel %vm2008, 1, 0
    %v2013 = vsel %vm2009, 1, 0
    %v2014 = vsel %vm2010, 1, 0
    %v2015 = vcvt.s32.f32 %v2011
    %v2016 = vcvt.s32.f32 %v2012
    %v2017 = vcvt.s32.f32 %v2013
    %v2018 = vcvt.s32.f32 %v2014
    %v2019 = vadd.f32 %v2000, %v2015
    %v2020 = vadd.f32 %v2001, %v2016
    %v2021 = vadd.f32 %v2002, %v2017
    %v2022 = vadd.f32 %v2003, %v2018
    %2023 = vset.pattern.permute.xlu0 4
    %2024 = vperm.xlu0 %2023, %v1946
    %v2025 = vpop.permute.xlu0 %2024
    %vm2026 = vcmp.eq.s32.totalorder %v2025, %v47
    %vm2027 = vcmp.eq.s32.totalorder %v2025, %v48
    %vm2028 = vcmp.eq.s32.totalorder %v2025, %v49
    %vm2029 = vcmp.eq.s32.totalorder %v2025, %v50
    %v2030 = vsel %vm2026, 1, 0
    %v2031 = vsel %vm2027, 1, 0
    %v2032 = vsel %vm2028, 1, 0
    %v2033 = vsel %vm2029, 1, 0
    %v2034 = vcvt.s32.f32 %v2030
    %v2035 = vcvt.s32.f32 %v2031
    %v2036 = vcvt.s32.f32 %v2032
    %v2037 = vcvt.s32.f32 %v2033
    %v2038 = vadd.f32 %v2019, %v2034
    %v2039 = vadd.f32 %v2020, %v2035
    %v2040 = vadd.f32 %v2021, %v2036
    %v2041 = vadd.f32 %v2022, %v2037
    %2042 = vset.pattern.permute.xlu0 5
    %2043 = vperm.xlu0 %2042, %v1946
    %v2044 = vpop.permute.xlu0 %2043
    %vm2045 = vcmp.eq.s32.totalorder %v2044, %v47
    %vm2046 = vcmp.eq.s32.totalorder %v2044, %v48
    %vm2047 = vcmp.eq.s32.totalorder %v2044, %v49
    %vm2048 = vcmp.eq.s32.totalorder %v2044, %v50
    %v2049 = vsel %vm2045, 1, 0
    %v2050 = vsel %vm2046, 1, 0
    %v2051 = vsel %vm2047, 1, 0
    %v2052 = vsel %vm2048, 1, 0
    %v2053 = vcvt.s32.f32 %v2049
    %v2054 = vcvt.s32.f32 %v2050
    %v2055 = vcvt.s32.f32 %v2051
    %v2056 = vcvt.s32.f32 %v2052
    %v2057 = vadd.f32 %v2038, %v2053
    %v2058 = vadd.f32 %v2039, %v2054
    %v2059 = vadd.f32 %v2040, %v2055
    %v2060 = vadd.f32 %v2041, %v2056
    %2061 = vset.pattern.permute.xlu0 6
    %2062 = vperm.xlu0 %2061, %v1946
    %v2063 = vpop.permute.xlu0 %2062
    %vm2064 = vcmp.eq.s32.totalorder %v2063, %v47
    %vm2065 = vcmp.eq.s32.totalorder %v2063, %v48
    %vm2066 = vcmp.eq.s32.totalorder %v2063, %v49
    %vm2067 = vcmp.eq.s32.totalorder %v2063, %v50
    %v2068 = vsel %vm2064, 1, 0
    %v2069 = vsel %vm2065, 1, 0
    %v2070 = vsel %vm2066, 1, 0
    %v2071 = vsel %vm2067, 1, 0
    %v2072 = vcvt.s32.f32 %v2068
    %v2073 = vcvt.s32.f32 %v2069
    %v2074 = vcvt.s32.f32 %v2070
    %v2075 = vcvt.s32.f32 %v2071
    %v2076 = vadd.f32 %v2057, %v2072
    %v2077 = vadd.f32 %v2058, %v2073
    %v2078 = vadd.f32 %v2059, %v2074
    %v2079 = vadd.f32 %v2060, %v2075
    %2080 = vset.pattern.permute.xlu0 7
    %2081 = vperm.xlu0 %2080, %v1946
    %v2082 = vpop.permute.xlu0 %2081
    %vm2083 = vcmp.eq.s32.totalorder %v2082, %v47
    %vm2084 = vcmp.eq.s32.totalorder %v2082, %v48
    %vm2085 = vcmp.eq.s32.totalorder %v2082, %v49
    %vm2086 = vcmp.eq.s32.totalorder %v2082, %v50
    %v2087 = vsel %vm2083, 1, 0
    %v2088 = vsel %vm2084, 1, 0
    %v2089 = vsel %vm2085, 1, 0
    %v2090 = vsel %vm2086, 1, 0
    %v2091 = vcvt.s32.f32 %v2087
    %v2092 = vcvt.s32.f32 %v2088
    %v2093 = vcvt.s32.f32 %v2089
    %v2094 = vcvt.s32.f32 %v2090
    %v2095 = vadd.f32 %v2076, %v2091
    %v2096 = vadd.f32 %v2077, %v2092
    %v2097 = vadd.f32 %v2078, %v2093
    %v2098 = vadd.f32 %v2079, %v2094
    %2099 = vset.pattern.permute.xlu0 8
    %2100 = vperm.xlu0 %2099, %v1946
    %v2101 = vpop.permute.xlu0 %2100
    %vm2102 = vcmp.eq.s32.totalorder %v2101, %v47
    %vm2103 = vcmp.eq.s32.totalorder %v2101, %v48
    %vm2104 = vcmp.eq.s32.totalorder %v2101, %v49
    %vm2105 = vcmp.eq.s32.totalorder %v2101, %v50
    %v2106 = vsel %vm2102, 1, 0
    %v2107 = vsel %vm2103, 1, 0
    %v2108 = vsel %vm2104, 1, 0
    %v2109 = vsel %vm2105, 1, 0
    %v2110 = vcvt.s32.f32 %v2106
    %v2111 = vcvt.s32.f32 %v2107
    %v2112 = vcvt.s32.f32 %v2108
    %v2113 = vcvt.s32.f32 %v2109
    %v2114 = vadd.f32 %v2095, %v2110
    %v2115 = vadd.f32 %v2096, %v2111
    %v2116 = vadd.f32 %v2097, %v2112
    %v2117 = vadd.f32 %v2098, %v2113
    %2118 = vset.pattern.permute.xlu0 9
    %2119 = vperm.xlu0 %2118, %v1946
    %v2120 = vpop.permute.xlu0 %2119
    %vm2121 = vcmp.eq.s32.totalorder %v2120, %v47
    %vm2122 = vcmp.eq.s32.totalorder %v2120, %v48
    %vm2123 = vcmp.eq.s32.totalorder %v2120, %v49
    %vm2124 = vcmp.eq.s32.totalorder %v2120, %v50
    %v2125 = vsel %vm2121, 1, 0
    %v2126 = vsel %vm2122, 1, 0
    %v2127 = vsel %vm2123, 1, 0
    %v2128 = vsel %vm2124, 1, 0
    %v2129 = vcvt.s32.f32 %v2125
    %v2130 = vcvt.s32.f32 %v2126
    %v2131 = vcvt.s32.f32 %v2127
    %v2132 = vcvt.s32.f32 %v2128
    %v2133 = vadd.f32 %v2114, %v2129
    %v2134 = vadd.f32 %v2115, %v2130
    %v2135 = vadd.f32 %v2116, %v2131
    %v2136 = vadd.f32 %v2117, %v2132
    %2137 = vset.pattern.permute.xlu0 10
    %2138 = vperm.xlu0 %2137, %v1946
    %v2139 = vpop.permute.xlu0 %2138
    %vm2140 = vcmp.eq.s32.totalorder %v2139, %v47
    %vm2141 = vcmp.eq.s32.totalorder %v2139, %v48
    %vm2142 = vcmp.eq.s32.totalorder %v2139, %v49
    %vm2143 = vcmp.eq.s32.totalorder %v2139, %v50
    %v2144 = vsel %vm2140, 1, 0
    %v2145 = vsel %vm2141, 1, 0
    %v2146 = vsel %vm2142, 1, 0
    %v2147 = vsel %vm2143, 1, 0
    %v2148 = vcvt.s32.f32 %v2144
    %v2149 = vcvt.s32.f32 %v2145
    %v2150 = vcvt.s32.f32 %v2146
    %v2151 = vcvt.s32.f32 %v2147
    %v2152 = vadd.f32 %v2133, %v2148
    %v2153 = vadd.f32 %v2134, %v2149
    %v2154 = vadd.f32 %v2135, %v2150
    %v2155 = vadd.f32 %v2136, %v2151
    %2156 = vset.pattern.permute.xlu0 11
    %2157 = vperm.xlu0 %2156, %v1946
    %v2158 = vpop.permute.xlu0 %2157
    %vm2159 = vcmp.eq.s32.totalorder %v2158, %v47
    %vm2160 = vcmp.eq.s32.totalorder %v2158, %v48
    %vm2161 = vcmp.eq.s32.totalorder %v2158, %v49
    %vm2162 = vcmp.eq.s32.totalorder %v2158, %v50
    %v2163 = vsel %vm2159, 1, 0
    %v2164 = vsel %vm2160, 1, 0
    %v2165 = vsel %vm2161, 1, 0
    %v2166 = vsel %vm2162, 1, 0
    %v2167 = vcvt.s32.f32 %v2163
    %v2168 = vcvt.s32.f32 %v2164
    %v2169 = vcvt.s32.f32 %v2165
    %v2170 = vcvt.s32.f32 %v2166
    %v2171 = vadd.f32 %v2152, %v2167
    %v2172 = vadd.f32 %v2153, %v2168
    %v2173 = vadd.f32 %v2154, %v2169
    %v2174 = vadd.f32 %v2155, %v2170
    %2175 = vset.pattern.permute.xlu0 12
    %2176 = vperm.xlu0 %2175, %v1946
    %v2177 = vpop.permute.xlu0 %2176
    %vm2178 = vcmp.eq.s32.totalorder %v2177, %v47
    %vm2179 = vcmp.eq.s32.totalorder %v2177, %v48
    %vm2180 = vcmp.eq.s32.totalorder %v2177, %v49
    %vm2181 = vcmp.eq.s32.totalorder %v2177, %v50
    %v2182 = vsel %vm2178, 1, 0
    %v2183 = vsel %vm2179, 1, 0
    %v2184 = vsel %vm2180, 1, 0
    %v2185 = vsel %vm2181, 1, 0
    %v2186 = vcvt.s32.f32 %v2182
    %v2187 = vcvt.s32.f32 %v2183
    %v2188 = vcvt.s32.f32 %v2184
    %v2189 = vcvt.s32.f32 %v2185
    %v2190 = vadd.f32 %v2171, %v2186
    %v2191 = vadd.f32 %v2172, %v2187
    %v2192 = vadd.f32 %v2173, %v2188
    %v2193 = vadd.f32 %v2174, %v2189
    %2194 = vset.pattern.permute.xlu0 13
    %2195 = vperm.xlu0 %2194, %v1946
    %v2196 = vpop.permute.xlu0 %2195
    %vm2197 = vcmp.eq.s32.totalorder %v2196, %v47
    %vm2198 = vcmp.eq.s32.totalorder %v2196, %v48
    %vm2199 = vcmp.eq.s32.totalorder %v2196, %v49
    %vm2200 = vcmp.eq.s32.totalorder %v2196, %v50
    %v2201 = vsel %vm2197, 1, 0
    %v2202 = vsel %vm2198, 1, 0
    %v2203 = vsel %vm2199, 1, 0
    %v2204 = vsel %vm2200, 1, 0
    %v2205 = vcvt.s32.f32 %v2201
    %v2206 = vcvt.s32.f32 %v2202
    %v2207 = vcvt.s32.f32 %v2203
    %v2208 = vcvt.s32.f32 %v2204
    %v2209 = vadd.f32 %v2190, %v2205
    %v2210 = vadd.f32 %v2191, %v2206
    %v2211 = vadd.f32 %v2192, %v2207
    %v2212 = vadd.f32 %v2193, %v2208
    %v2213 = vld [vmem:[#allocation3] sm:$0xff]
    %v2214 = vld [vmem:[#allocation3 + $0x8] sm:$0xff]
    %v2215 = vld [vmem:[#allocation3 + $0x10] sm:$0xff]
    %v2216 = vld [vmem:[#allocation3 + $0x18] sm:$0xff]
    %v2217 = vld [vmem:[#allocation3 + $0x20] sm:$0xff]
    %v2218 = vld [vmem:[#allocation3 + $0x28] sm:$0xff]
    %v2219 = vld [vmem:[#allocation3 + $0x30] sm:$0xff]
    %v2220 = vld [vmem:[#allocation3 + $0x38] sm:$0xff]
    %v2221 = vld [vmem:[#allocation3 + $0x40] sm:$0xff]
    %v2222 = vld [vmem:[#allocation3 + $0x48] sm:$0xff]
    %v2223 = vld [vmem:[#allocation3 + $0x50] sm:$0xff]
    %v2224 = vld [vmem:[#allocation3 + $0x58] sm:$0xff]
    %v2225 = vld [vmem:[#allocation3 + $0x60] sm:$0xff]
    %v2226 = vld [vmem:[#allocation3 + $0x68] sm:$0xff]
    %v2227 = vld [vmem:[#allocation3 + $0x70] sm:$0xff]
    %v2228 = vld [vmem:[#allocation3 + $0x78] sm:$0xff]
    %v2229 = vld [vmem:[#allocation3 + $0x80] sm:$0xff]
    %v2230 = vld [vmem:[#allocation3 + $0x88] sm:$0xff]
    %v2231 = vld [vmem:[#allocation3 + $0x90] sm:$0xff]
    %v2232 = vld [vmem:[#allocation3 + $0x98] sm:$0xff]
    %v2233 = vld [vmem:[#allocation3 + $0xa0] sm:$0xff]
    %v2234 = vld [vmem:[#allocation3 + $0xa8] sm:$0xff]
    %v2235 = vld [vmem:[#allocation3 + $0xb0] sm:$0xff]
    %v2236 = vld [vmem:[#allocation3 + $0xb8] sm:$0xff]
    %v2237 = vld [vmem:[#allocation3 + $0xc0] sm:$0xff]
    %v2238 = vld [vmem:[#allocation3 + $0xc8] sm:$0xff]
    %v2239 = vld [vmem:[#allocation3 + $0xd0] sm:$0xff]
    %v2240 = vld [vmem:[#allocation3 + $0xd8] sm:$0xff]
    %v2241 = vld [vmem:[#allocation3 + $0xe0] sm:$0xff]
    %v2242 = vld [vmem:[#allocation3 + $0xe8] sm:$0xff]
    %v2243 = vld [vmem:[#allocation3 + $0xf0] sm:$0xff]
    %v2244 = vld [vmem:[#allocation3 + $0xf8] sm:$0xff]
    %v2245 = vld [vmem:[#allocation3 + $0x100] sm:$0xff]
    %v2246 = vld [vmem:[#allocation3 + $0x108] sm:$0xff]
    %v2247 = vld [vmem:[#allocation3 + $0x110] sm:$0xff]
    %v2248 = vld [vmem:[#allocation3 + $0x118] sm:$0xff]
    %v2249 = vld [vmem:[#allocation3 + $0x120] sm:$0xff]
    %v2250 = vld [vmem:[#allocation3 + $0x128] sm:$0xff]
    %v2251 = vld [vmem:[#allocation3 + $0x130] sm:$0xff]
    %v2252 = vld [vmem:[#allocation3 + $0x138] sm:$0xff]
    %v2253 = vld [vmem:[#allocation3 + $0x140] sm:$0xff]
    %v2254 = vld [vmem:[#allocation3 + $0x148] sm:$0xff]
    %v2255 = vld [vmem:[#allocation3 + $0x150] sm:$0xff]
    %v2256 = vld [vmem:[#allocation3 + $0x158] sm:$0xff]
    %v2257 = vld [vmem:[#allocation3 + $0x160] sm:$0xff]
    %v2258 = vld [vmem:[#allocation3 + $0x168] sm:$0xff]
    %v2259 = vld [vmem:[#allocation3 + $0x170] sm:$0xff]
    %v2260 = vld [vmem:[#allocation3 + $0x178] sm:$0xff]
    %v2261 = vld [vmem:[#allocation3 + $0x180] sm:$0xff]
    %v2262 = vld [vmem:[#allocation3 + $0x188] sm:$0xff]
    %v2263 = vld [vmem:[#allocation3 + $0x190] sm:$0xff]
    %v2264 = vld [vmem:[#allocation3 + $0x198] sm:$0xff]
    %v2265 = vld [vmem:[#allocation3 + $0x1a0] sm:$0xff]
    %v2266 = vld [vmem:[#allocation3 + $0x1a8] sm:$0xff]
    %v2267 = vld [vmem:[#allocation3 + $0x1b0] sm:$0xff]
    %v2268 = vld [vmem:[#allocation3 + $0x1b8] sm:$0xff]
    %v2269 = vld [vmem:[#allocation3 + $0x1c0] sm:$0xff]
    %v2270 = vld [vmem:[#allocation3 + $0x1c8] sm:$0xff]
    %v2271 = vld [vmem:[#allocation3 + $0x1d0] sm:$0xff]
    %v2272 = vld [vmem:[#allocation3 + $0x1d8] sm:$0xff]
    %v2273 = vld [vmem:[#allocation3 + $0x1e0] sm:$0xff]
    %v2274 = vld [vmem:[#allocation3 + $0x1e8] sm:$0xff]
    %v2275 = vld [vmem:[#allocation3 + $0x1f0] sm:$0xff]
    %v2276 = vld [vmem:[#allocation3 + $0x1f8] sm:$0xff]
    %2277 = vmatprep.subr.mxu0 0.0
    %2278 = vmatpush1.msra.mxu0 %v2213
    %2279 = vmatprep.subr.mxu0 0.0
    %2280 = vmatpush1.msra.mxu0 %v2214
    %2281 = vmatprep.subr.mxu0 0.0
    %2282 = vmatpush1.msra.mxu0 %v2215
    %2283 = vmatprep.subr.mxu0 0.0
    %2284 = vmatpush1.msra.mxu0 %v2216
    %2285 = vmatprep.subr.mxu0 0.0
    %2286 = vmatpush1.msra.mxu0 %v2217
    %2287 = vmatprep.subr.mxu0 0.0
    %2288 = vmatpush1.msra.mxu0 %v2218
    %2289 = vmatprep.subr.mxu0 0.0
    %2290 = vmatpush1.msra.mxu0 %v2219
    %2291 = vmatprep.subr.mxu0 0.0
    %2292 = vmatpush1.msra.mxu0 %v2220
    %2293 = vmatprep.subr.mxu0 0.0
    %2294 = vmatpush1.msra.mxu0 %v2221
    %2295 = vmatprep.subr.mxu0 0.0
    %2296 = vmatpush1.msra.mxu0 %v2222
    %2297 = vmatprep.subr.mxu0 0.0
    %2298 = vmatpush1.msra.mxu0 %v2223
    %2299 = vmatprep.subr.mxu0 0.0
    %2300 = vmatpush1.msra.mxu0 %v2224
    %2301 = vmatprep.subr.mxu0 0.0
    %2302 = vmatpush1.msra.mxu0 %v2225
    %2303 = vmatprep.subr.mxu0 0.0
    %2304 = vmatpush1.msra.mxu0 %v2226
    %2305 = vmatprep.subr.mxu0 0.0
    %2306 = vmatpush1.msra.mxu0 %v2227
    %2307 = vmatprep.subr.mxu0 0.0
    %2308 = vmatpush1.msra.mxu0 %v2228
    %2309 = vmatprep.subr.mxu0 0.0
    %2310 = vmatpush1.msra.mxu0 %v2229
    %2311 = vmatprep.subr.mxu0 0.0
    %2312 = vmatpush1.msra.mxu0 %v2230
    %2313 = vmatprep.subr.mxu0 0.0
    %2314 = vmatpush1.msra.mxu0 %v2231
    %2315 = vmatprep.subr.mxu0 0.0
    %2316 = vmatpush1.msra.mxu0 %v2232
    %2317 = vmatprep.subr.mxu0 0.0
    %2318 = vmatpush1.msra.mxu0 %v2233
    %2319 = vmatprep.subr.mxu0 0.0
    %2320 = vmatpush1.msra.mxu0 %v2234
    %2321 = vmatprep.subr.mxu0 0.0
    %2322 = vmatpush1.msra.mxu0 %v2235
    %2323 = vmatprep.subr.mxu0 0.0
    %2324 = vmatpush1.msra.mxu0 %v2236
    %2325 = vmatprep.subr.mxu0 0.0
    %2326 = vmatpush1.msra.mxu0 %v2237
    %2327 = vmatprep.subr.mxu0 0.0
    %2328 = vmatpush1.msra.mxu0 %v2238
    %2329 = vmatprep.subr.mxu0 0.0
    %2330 = vmatpush1.msra.mxu0 %v2239
    %2331 = vmatprep.subr.mxu0 0.0
    %2332 = vmatpush1.msra.mxu0 %v2240
    %2333 = vmatprep.subr.mxu0 0.0
    %2334 = vmatpush1.msra.mxu0 %v2241
    %2335 = vmatprep.subr.mxu0 0.0
    %2336 = vmatpush1.msra.mxu0 %v2242
    %2337 = vmatprep.subr.mxu0 0.0
    %2338 = vmatpush1.msra.mxu0 %v2243
    %2339 = vmatprep.subr.mxu0 0.0
    %2340 = vmatpush1.msra.mxu0 %v2244
    %2341 = vmatprep.mubr.f32.mxu0 %v2210
    %2342 = vmatmul.mubr.f32.gmra.mrb[0].mxu0 %v2209
    %v2343 = vpop.f32.mrb[0].mxu0
    %v2344 = vadd.f32 %v387, %v2343
    %v2345 = vpop.f32.mrb[0].mxu0
    %2346 = vdwg.mxu0
    %2347 = vmatprep.subr.mxu0 0.0
    %2348 = vmatpush1.msra.mxu0 %v2245
    %2349 = vmatprep.subr.mxu0 0.0
    %2350 = vmatpush1.msra.mxu0 %v2246
    %2351 = vmatprep.subr.mxu0 0.0
    %2352 = vmatpush1.msra.mxu0 %v2247
    %2353 = vmatprep.subr.mxu0 0.0
    %2354 = vmatpush1.msra.mxu0 %v2248
    %2355 = vmatprep.subr.mxu0 0.0
    %2356 = vmatpush1.msra.mxu0 %v2249
    %2357 = vmatprep.subr.mxu0 0.0
    %2358 = vmatpush1.msra.mxu0 %v2250
    %2359 = vmatprep.subr.mxu0 0.0
    %2360 = vmatpush1.msra.mxu0 %v2251
    %2361 = vmatprep.subr.mxu0 0.0
    %2362 = vmatpush1.msra.mxu0 %v2252
    %2363 = vmatprep.subr.mxu0 0.0
    %2364 = vmatpush1.msra.mxu0 %v2253
    %2365 = vmatprep.subr.mxu0 0.0
    %2366 = vmatpush1.msra.mxu0 %v2254
    %2367 = vmatprep.subr.mxu0 0.0
    %2368 = vmatpush1.msra.mxu0 %v2255
    %2369 = vmatprep.subr.mxu0 0.0
    %2370 = vmatpush1.msra.mxu0 %v2256
    %2371 = vmatprep.subr.mxu0 0.0
    %2372 = vmatpush1.msra.mxu0 %v2257
    %2373 = vmatprep.subr.mxu0 0.0
    %2374 = vmatpush1.msra.mxu0 %v2258
    %2375 = vmatprep.subr.mxu0 0.0
    %2376 = vmatpush1.msra.mxu0 %v2259
    %2377 = vmatprep.subr.mxu0 0.0
    %2378 = vmatpush1.msra.mxu0 %v2260
    %2379 = vmatprep.subr.mxu0 0.0
    %2380 = vmatpush1.msra.mxu0 %v2261
    %2381 = vmatprep.subr.mxu0 0.0
    %2382 = vmatpush1.msra.mxu0 %v2262
    %2383 = vmatprep.subr.mxu0 0.0
    %2384 = vmatpush1.msra.mxu0 %v2263
    %2385 = vmatprep.subr.mxu0 0.0
    %2386 = vmatpush1.msra.mxu0 %v2264
    %2387 = vmatprep.subr.mxu0 0.0
    %2388 = vmatpush1.msra.mxu0 %v2265
    %2389 = vmatprep.subr.mxu0 0.0
    %2390 = vmatpush1.msra.mxu0 %v2266
    %2391 = vmatprep.subr.mxu0 0.0
    %2392 = vmatpush1.msra.mxu0 %v2267
    %2393 = vmatprep.subr.mxu0 0.0
    %2394 = vmatpush1.msra.mxu0 %v2268
    %2395 = vmatprep.subr.mxu0 0.0
    %2396 = vmatpush1.msra.mxu0 %v2269
    %2397 = vmatprep.subr.mxu0 0.0
    %2398 = vmatpush1.msra.mxu0 %v2270
    %2399 = vmatprep.subr.mxu0 0.0
    %2400 = vmatpush1.msra.mxu0 %v2271
    %2401 = vmatprep.subr.mxu0 0.0
    %2402 = vmatpush1.msra.mxu0 %v2272
    %2403 = vmatprep.subr.mxu0 0.0
    %2404 = vmatpush1.msra.mxu0 %v2273
    %2405 = vmatprep.subr.mxu0 0.0
    %2406 = vmatpush1.msra.mxu0 %v2274
    %2407 = vmatprep.subr.mxu0 0.0
    %2408 = vmatpush1.msra.mxu0 %v2275
    %2409 = vmatprep.subr.mxu0 0.0
    %2410 = vmatpush1.msra.mxu0 %v2276
    %2411 = vmatprep.mubr.f32.mxu0 %v2212
    %2412 = vmatmul.mubr.f32.gmra.mrb[0].mxu0 %v2211
    %v2413 = vpop.f32.mrb[0].mxu0
    %v2414 = vadd.f32 %v2344, %v2413
    %v2415 = vpop.f32.mrb[0].mxu0
    %2416 = vdwg.mxu0
    %2417 = vst [vmem:[#allocation2 + $0x20] sm:$0xff] %v2414
    %v2418 = vld [vmem:[%s0 + $0x28] sm:$0xff]
    %2419 = vset.pattern.permute.xlu0 0
    %2420 = vperm.xlu0 %2419, %v2418
    %v2421 = vpop.permute.xlu0 %2420
    %vm2422 = vcmp.eq.s32.totalorder %v2421, %v47
    %vm2423 = vcmp.eq.s32.totalorder %v2421, %v48
    %vm2424 = vcmp.eq.s32.totalorder %v2421, %v49
    %vm2425 = vcmp.eq.s32.totalorder %v2421, %v50
    %v2426 = vsel %vm2422, 1, 0
    %v2427 = vsel %vm2423, 1, 0
    %v2428 = vsel %vm2424, 1, 0
    %v2429 = vsel %vm2425, 1, 0
    %v2430 = vcvt.s32.f32 %v2426
    %v2431 = vcvt.s32.f32 %v2427
    %v2432 = vcvt.s32.f32 %v2428
    %v2433 = vcvt.s32.f32 %v2429
    %v2434 = vadd.f32 %v2430, 0.0
    %v2435 = vadd.f32 %v2431, 0.0
    %v2436 = vadd.f32 %v2432, 0.0
    %v2437 = vadd.f32 %v2433, 0.0
    %2438 = vset.pattern.permute.xlu0 1
    %2439 = vperm.xlu0 %2438, %v2418
    %v2440 = vpop.permute.xlu0 %2439
    %vm2441 = vcmp.eq.s32.totalorder %v2440, %v47
    %vm2442 = vcmp.eq.s32.totalorder %v2440, %v48
    %vm2443 = vcmp.eq.s32.totalorder %v2440, %v49
    %vm2444 = vcmp.eq.s32.totalorder %v2440, %v50
    %v2445 = vsel %vm2441, 1, 0
    %v2446 = vsel %vm2442, 1, 0
    %v2447 = vsel %vm2443, 1, 0
    %v2448 = vsel %vm2444, 1, 0
    %v2449 = vcvt.s32.f32 %v2445
    %v2450 = vcvt.s32.f32 %v2446
    %v2451 = vcvt.s32.f32 %v2447
    %v2452 = vcvt.s32.f32 %v2448
    %v2453 = vadd.f32 %v2434, %v2449
    %v2454 = vadd.f32 %v2435, %v2450
    %v2455 = vadd.f32 %v2436, %v2451
    %v2456 = vadd.f32 %v2437, %v2452
    %2457 = vset.pattern.permute.xlu0 2
    %2458 = vperm.xlu0 %2457, %v2418
    %v2459 = vpop.permute.xlu0 %2458
    %vm2460 = vcmp.eq.s32.totalorder %v2459, %v47
    %vm2461 = vcmp.eq.s32.totalorder %v2459, %v48
    %vm2462 = vcmp.eq.s32.totalorder %v2459, %v49
    %vm2463 = vcmp.eq.s32.totalorder %v2459, %v50
    %v2464 = vsel %vm2460, 1, 0
    %v2465 = vsel %vm2461, 1, 0
    %v2466 = vsel %vm2462, 1, 0
    %v2467 = vsel %vm2463, 1, 0
    %v2468 = vcvt.s32.f32 %v2464
    %v2469 = vcvt.s32.f32 %v2465
    %v2470 = vcvt.s32.f32 %v2466
    %v2471 = vcvt.s32.f32 %v2467
    %v2472 = vadd.f32 %v2453, %v2468
    %v2473 = vadd.f32 %v2454, %v2469
    %v2474 = vadd.f32 %v2455, %v2470
    %v2475 = vadd.f32 %v2456, %v2471
    %2476 = vset.pattern.permute.xlu0 3
    %2477 = vperm.xlu0 %2476, %v2418
    %v2478 = vpop.permute.xlu0 %2477
    %vm2479 = vcmp.eq.s32.totalorder %v2478, %v47
    %vm2480 = vcmp.eq.s32.totalorder %v2478, %v48
    %vm2481 = vcmp.eq.s32.totalorder %v2478, %v49
    %vm2482 = vcmp.eq.s32.totalorder %v2478, %v50
    %v2483 = vsel %vm2479, 1, 0
    %v2484 = vsel %vm2480, 1, 0
    %v2485 = vsel %vm2481, 1, 0
    %v2486 = vsel %vm2482, 1, 0
    %v2487 = vcvt.s32.f32 %v2483
    %v2488 = vcvt.s32.f32 %v2484
    %v2489 = vcvt.s32.f32 %v2485
    %v2490 = vcvt.s32.f32 %v2486
    %v2491 = vadd.f32 %v2472, %v2487
    %v2492 = vadd.f32 %v2473, %v2488
    %v2493 = vadd.f32 %v2474, %v2489
    %v2494 = vadd.f32 %v2475, %v2490
    %2495 = vset.pattern.permute.xlu0 4
    %2496 = vperm.xlu0 %2495, %v2418
    %v2497 = vpop.permute.xlu0 %2496
    %vm2498 = vcmp.eq.s32.totalorder %v2497, %v47
    %vm2499 = vcmp.eq.s32.totalorder %v2497, %v48
    %vm2500 = vcmp.eq.s32.totalorder %v2497, %v49
    %vm2501 = vcmp.eq.s32.totalorder %v2497, %v50
    %v2502 = vsel %vm2498, 1, 0
    %v2503 = vsel %vm2499, 1, 0
    %v2504 = vsel %vm2500, 1, 0
    %v2505 = vsel %vm2501, 1, 0
    %v2506 = vcvt.s32.f32 %v2502
    %v2507 = vcvt.s32.f32 %v2503
    %v2508 = vcvt.s32.f32 %v2504
    %v2509 = vcvt.s32.f32 %v2505
    %v2510 = vadd.f32 %v2491, %v2506
    %v2511 = vadd.f32 %v2492, %v2507
    %v2512 = vadd.f32 %v2493, %v2508
    %v2513 = vadd.f32 %v2494, %v2509
    %2514 = vset.pattern.permute.xlu0 5
    %2515 = vperm.xlu0 %2514, %v2418
    %v2516 = vpop.permute.xlu0 %2515
    %vm2517 = vcmp.eq.s32.totalorder %v2516, %v47
    %vm2518 = vcmp.eq.s32.totalorder %v2516, %v48
    %vm2519 = vcmp.eq.s32.totalorder %v2516, %v49
    %vm2520 = vcmp.eq.s32.totalorder %v2516, %v50
    %v2521 = vsel %vm2517, 1, 0
    %v2522 = vsel %vm2518, 1, 0
    %v2523 = vsel %vm2519, 1, 0
    %v2524 = vsel %vm2520, 1, 0
    %v2525 = vcvt.s32.f32 %v2521
    %v2526 = vcvt.s32.f32 %v2522
    %v2527 = vcvt.s32.f32 %v2523
    %v2528 = vcvt.s32.f32 %v2524
    %v2529 = vadd.f32 %v2510, %v2525
    %v2530 = vadd.f32 %v2511, %v2526
    %v2531 = vadd.f32 %v2512, %v2527
    %v2532 = vadd.f32 %v2513, %v2528
    %2533 = vset.pattern.permute.xlu0 6
    %2534 = vperm.xlu0 %2533, %v2418
    %v2535 = vpop.permute.xlu0 %2534
    %vm2536 = vcmp.eq.s32.totalorder %v2535, %v47
    %vm2537 = vcmp.eq.s32.totalorder %v2535, %v48
    %vm2538 = vcmp.eq.s32.totalorder %v2535, %v49
    %vm2539 = vcmp.eq.s32.totalorder %v2535, %v50
    %v2540 = vsel %vm2536, 1, 0
    %v2541 = vsel %vm2537, 1, 0
    %v2542 = vsel %vm2538, 1, 0
    %v2543 = vsel %vm2539, 1, 0
    %v2544 = vcvt.s32.f32 %v2540
    %v2545 = vcvt.s32.f32 %v2541
    %v2546 = vcvt.s32.f32 %v2542
    %v2547 = vcvt.s32.f32 %v2543
    %v2548 = vadd.f32 %v2529, %v2544
    %v2549 = vadd.f32 %v2530, %v2545
    %v2550 = vadd.f32 %v2531, %v2546
    %v2551 = vadd.f32 %v2532, %v2547
    %2552 = vset.pattern.permute.xlu0 7
    %2553 = vperm.xlu0 %2552, %v2418
    %v2554 = vpop.permute.xlu0 %2553
    %vm2555 = vcmp.eq.s32.totalorder %v2554, %v47
    %vm2556 = vcmp.eq.s32.totalorder %v2554, %v48
    %vm2557 = vcmp.eq.s32.totalorder %v2554, %v49
    %vm2558 = vcmp.eq.s32.totalorder %v2554, %v50
    %v2559 = vsel %vm2555, 1, 0
    %v2560 = vsel %vm2556, 1, 0
    %v2561 = vsel %vm2557, 1, 0
    %v2562 = vsel %vm2558, 1, 0
    %v2563 = vcvt.s32.f32 %v2559
    %v2564 = vcvt.s32.f32 %v2560
    %v2565 = vcvt.s32.f32 %v2561
    %v2566 = vcvt.s32.f32 %v2562
    %v2567 = vadd.f32 %v2548, %v2563
    %v2568 = vadd.f32 %v2549, %v2564
    %v2569 = vadd.f32 %v2550, %v2565
    %v2570 = vadd.f32 %v2551, %v2566
    %2571 = vset.pattern.permute.xlu0 8
    %2572 = vperm.xlu0 %2571, %v2418
    %v2573 = vpop.permute.xlu0 %2572
    %vm2574 = vcmp.eq.s32.totalorder %v2573, %v47
    %vm2575 = vcmp.eq.s32.totalorder %v2573, %v48
    %vm2576 = vcmp.eq.s32.totalorder %v2573, %v49
    %vm2577 = vcmp.eq.s32.totalorder %v2573, %v50
    %v2578 = vsel %vm2574, 1, 0
    %v2579 = vsel %vm2575, 1, 0
    %v2580 = vsel %vm2576, 1, 0
    %v2581 = vsel %vm2577, 1, 0
    %v2582 = vcvt.s32.f32 %v2578
    %v2583 = vcvt.s32.f32 %v2579
    %v2584 = vcvt.s32.f32 %v2580
    %v2585 = vcvt.s32.f32 %v2581
    %v2586 = vadd.f32 %v2567, %v2582
    %v2587 = vadd.f32 %v2568, %v2583
    %v2588 = vadd.f32 %v2569, %v2584
    %v2589 = vadd.f32 %v2570, %v2585
    %2590 = vset.pattern.permute.xlu0 9
    %2591 = vperm.xlu0 %2590, %v2418
    %v2592 = vpop.permute.xlu0 %2591
    %vm2593 = vcmp.eq.s32.totalorder %v2592, %v47
    %vm2594 = vcmp.eq.s32.totalorder %v2592, %v48
    %vm2595 = vcmp.eq.s32.totalorder %v2592, %v49
    %vm2596 = vcmp.eq.s32.totalorder %v2592, %v50
    %v2597 = vsel %vm2593, 1, 0
    %v2598 = vsel %vm2594, 1, 0
    %v2599 = vsel %vm2595, 1, 0
    %v2600 = vsel %vm2596, 1, 0
    %v2601 = vcvt.s32.f32 %v2597
    %v2602 = vcvt.s32.f32 %v2598
    %v2603 = vcvt.s32.f32 %v2599
    %v2604 = vcvt.s32.f32 %v2600
    %v2605 = vadd.f32 %v2586, %v2601
    %v2606 = vadd.f32 %v2587, %v2602
    %v2607 = vadd.f32 %v2588, %v2603
    %v2608 = vadd.f32 %v2589, %v2604
    %2609 = vset.pattern.permute.xlu0 10
    %2610 = vperm.xlu0 %2609, %v2418
    %v2611 = vpop.permute.xlu0 %2610
    %vm2612 = vcmp.eq.s32.totalorder %v2611, %v47
    %vm2613 = vcmp.eq.s32.totalorder %v2611, %v48
    %vm2614 = vcmp.eq.s32.totalorder %v2611, %v49
    %vm2615 = vcmp.eq.s32.totalorder %v2611, %v50
    %v2616 = vsel %vm2612, 1, 0
    %v2617 = vsel %vm2613, 1, 0
    %v2618 = vsel %vm2614, 1, 0
    %v2619 = vsel %vm2615, 1, 0
    %v2620 = vcvt.s32.f32 %v2616
    %v2621 = vcvt.s32.f32 %v2617
    %v2622 = vcvt.s32.f32 %v2618
    %v2623 = vcvt.s32.f32 %v2619
    %v2624 = vadd.f32 %v2605, %v2620
    %v2625 = vadd.f32 %v2606, %v2621
    %v2626 = vadd.f32 %v2607, %v2622
    %v2627 = vadd.f32 %v2608, %v2623
    %2628 = vset.pattern.permute.xlu0 11
    %2629 = vperm.xlu0 %2628, %v2418
    %v2630 = vpop.permute.xlu0 %2629
    %vm2631 = vcmp.eq.s32.totalorder %v2630, %v47
    %vm2632 = vcmp.eq.s32.totalorder %v2630, %v48
    %vm2633 = vcmp.eq.s32.totalorder %v2630, %v49
    %vm2634 = vcmp.eq.s32.totalorder %v2630, %v50
    %v2635 = vsel %vm2631, 1, 0
    %v2636 = vsel %vm2632, 1, 0
    %v2637 = vsel %vm2633, 1, 0
    %v2638 = vsel %vm2634, 1, 0
    %v2639 = vcvt.s32.f32 %v2635
    %v2640 = vcvt.s32.f32 %v2636
    %v2641 = vcvt.s32.f32 %v2637
    %v2642 = vcvt.s32.f32 %v2638
    %v2643 = vadd.f32 %v2624, %v2639
    %v2644 = vadd.f32 %v2625, %v2640
    %v2645 = vadd.f32 %v2626, %v2641
    %v2646 = vadd.f32 %v2627, %v2642
    %2647 = vset.pattern.permute.xlu0 12
    %2648 = vperm.xlu0 %2647, %v2418
    %v2649 = vpop.permute.xlu0 %2648
    %vm2650 = vcmp.eq.s32.totalorder %v2649, %v47
    %vm2651 = vcmp.eq.s32.totalorder %v2649, %v48
    %vm2652 = vcmp.eq.s32.totalorder %v2649, %v49
    %vm2653 = vcmp.eq.s32.totalorder %v2649, %v50
    %v2654 = vsel %vm2650, 1, 0
    %v2655 = vsel %vm2651, 1, 0
    %v2656 = vsel %vm2652, 1, 0
    %v2657 = vsel %vm2653, 1, 0
    %v2658 = vcvt.s32.f32 %v2654
    %v2659 = vcvt.s32.f32 %v2655
    %v2660 = vcvt.s32.f32 %v2656
    %v2661 = vcvt.s32.f32 %v2657
    %v2662 = vadd.f32 %v2643, %v2658
    %v2663 = vadd.f32 %v2644, %v2659
    %v2664 = vadd.f32 %v2645, %v2660
    %v2665 = vadd.f32 %v2646, %v2661
    %2666 = vset.pattern.permute.xlu0 13
    %2667 = vperm.xlu0 %2666, %v2418
    %v2668 = vpop.permute.xlu0 %2667
    %vm2669 = vcmp.eq.s32.totalorder %v2668, %v47
    %vm2670 = vcmp.eq.s32.totalorder %v2668, %v48
    %vm2671 = vcmp.eq.s32.totalorder %v2668, %v49
    %vm2672 = vcmp.eq.s32.totalorder %v2668, %v50
    %v2673 = vsel %vm2669, 1, 0
    %v2674 = vsel %vm2670, 1, 0
    %v2675 = vsel %vm2671, 1, 0
    %v2676 = vsel %vm2672, 1, 0
    %v2677 = vcvt.s32.f32 %v2673
    %v2678 = vcvt.s32.f32 %v2674
    %v2679 = vcvt.s32.f32 %v2675
    %v2680 = vcvt.s32.f32 %v2676
    %v2681 = vadd.f32 %v2662, %v2677
    %v2682 = vadd.f32 %v2663, %v2678
    %v2683 = vadd.f32 %v2664, %v2679
    %v2684 = vadd.f32 %v2665, %v2680
    %v2685 = vld [vmem:[#allocation3] sm:$0xff]
    %v2686 = vld [vmem:[#allocation3 + $0x8] sm:$0xff]
    %v2687 = vld [vmem:[#allocation3 + $0x10] sm:$0xff]
    %v2688 = vld [vmem:[#allocation3 + $0x18] sm:$0xff]
    %v2689 = vld [vmem:[#allocation3 + $0x20] sm:$0xff]
    %v2690 = vld [vmem:[#allocation3 + $0x28] sm:$0xff]
    %v2691 = vld [vmem:[#allocation3 + $0x30] sm:$0xff]
    %v2692 = vld [vmem:[#allocation3 + $0x38] sm:$0xff]
    %v2693 = vld [vmem:[#allocation3 + $0x40] sm:$0xff]
    %v2694 = vld [vmem:[#allocation3 + $0x48] sm:$0xff]
    %v2695 = vld [vmem:[#allocation3 + $0x50] sm:$0xff]
    %v2696 = vld [vmem:[#allocation3 + $0x58] sm:$0xff]
    %v2697 = vld [vmem:[#allocation3 + $0x60] sm:$0xff]
    %v2698 = vld [vmem:[#allocation3 + $0x68] sm:$0xff]
    %v2699 = vld [vmem:[#allocation3 + $0x70] sm:$0xff]
    %v2700 = vld [vmem:[#allocation3 + $0x78] sm:$0xff]
    %v2701 = vld [vmem:[#allocation3 + $0x80] sm:$0xff]
    %v2702 = vld [vmem:[#allocation3 + $0x88] sm:$0xff]
    %v2703 = vld [vmem:[#allocation3 + $0x90] sm:$0xff]
    %v2704 = vld [vmem:[#allocation3 + $0x98] sm:$0xff]
    %v2705 = vld [vmem:[#allocation3 + $0xa0] sm:$0xff]
    %v2706 = vld [vmem:[#allocation3 + $0xa8] sm:$0xff]
    %v2707 = vld [vmem:[#allocation3 + $0xb0] sm:$0xff]
    %v2708 = vld [vmem:[#allocation3 + $0xb8] sm:$0xff]
    %v2709 = vld [vmem:[#allocation3 + $0xc0] sm:$0xff]
    %v2710 = vld [vmem:[#allocation3 + $0xc8] sm:$0xff]
    %v2711 = vld [vmem:[#allocation3 + $0xd0] sm:$0xff]
    %v2712 = vld [vmem:[#allocation3 + $0xd8] sm:$0xff]
    %v2713 = vld [vmem:[#allocation3 + $0xe0] sm:$0xff]
    %v2714 = vld [vmem:[#allocation3 + $0xe8] sm:$0xff]
    %v2715 = vld [vmem:[#allocation3 + $0xf0] sm:$0xff]
    %v2716 = vld [vmem:[#allocation3 + $0xf8] sm:$0xff]
    %v2717 = vld [vmem:[#allocation3 + $0x100] sm:$0xff]
    %v2718 = vld [vmem:[#allocation3 + $0x108] sm:$0xff]
    %v2719 = vld [vmem:[#allocation3 + $0x110] sm:$0xff]
    %v2720 = vld [vmem:[#allocation3 + $0x118] sm:$0xff]
    %v2721 = vld [vmem:[#allocation3 + $0x120] sm:$0xff]
    %v2722 = vld [vmem:[#allocation3 + $0x128] sm:$0xff]
    %v2723 = vld [vmem:[#allocation3 + $0x130] sm:$0xff]
    %v2724 = vld [vmem:[#allocation3 + $0x138] sm:$0xff]
    %v2725 = vld [vmem:[#allocation3 + $0x140] sm:$0xff]
    %v2726 = vld [vmem:[#allocation3 + $0x148] sm:$0xff]
    %v2727 = vld [vmem:[#allocation3 + $0x150] sm:$0xff]
    %v2728 = vld [vmem:[#allocation3 + $0x158] sm:$0xff]
    %v2729 = vld [vmem:[#allocation3 + $0x160] sm:$0xff]
    %v2730 = vld [vmem:[#allocation3 + $0x168] sm:$0xff]
    %v2731 = vld [vmem:[#allocation3 + $0x170] sm:$0xff]
    %v2732 = vld [vmem:[#allocation3 + $0x178] sm:$0xff]
    %v2733 = vld [vmem:[#allocation3 + $0x180] sm:$0xff]
    %v2734 = vld [vmem:[#allocation3 + $0x188] sm:$0xff]
    %v2735 = vld [vmem:[#allocation3 + $0x190] sm:$0xff]
    %v2736 = vld [vmem:[#allocation3 + $0x198] sm:$0xff]
    %v2737 = vld [vmem:[#allocation3 + $0x1a0] sm:$0xff]
    %v2738 = vld [vmem:[#allocation3 + $0x1a8] sm:$0xff]
    %v2739 = vld [vmem:[#allocation3 + $0x1b0] sm:$0xff]
    %v2740 = vld [vmem:[#allocation3 + $0x1b8] sm:$0xff]
    %v2741 = vld [vmem:[#allocation3 + $0x1c0] sm:$0xff]
    %v2742 = vld [vmem:[#allocation3 + $0x1c8] sm:$0xff]
    %v2743 = vld [vmem:[#allocation3 + $0x1d0] sm:$0xff]
    %v2744 = vld [vmem:[#allocation3 + $0x1d8] sm:$0xff]
    %v2745 = vld [vmem:[#allocation3 + $0x1e0] sm:$0xff]
    %v2746 = vld [vmem:[#allocation3 + $0x1e8] sm:$0xff]
    %v2747 = vld [vmem:[#allocation3 + $0x1f0] sm:$0xff]
    %v2748 = vld [vmem:[#allocation3 + $0x1f8] sm:$0xff]
    %2749 = vmatprep.subr.mxu0 0.0
    %2750 = vmatpush1.msra.mxu0 %v2685
    %2751 = vmatprep.subr.mxu0 0.0
    %2752 = vmatpush1.msra.mxu0 %v2686
    %2753 = vmatprep.subr.mxu0 0.0
    %2754 = vmatpush1.msra.mxu0 %v2687
    %2755 = vmatprep.subr.mxu0 0.0
    %2756 = vmatpush1.msra.mxu0 %v2688
    %2757 = vmatprep.subr.mxu0 0.0
    %2758 = vmatpush1.msra.mxu0 %v2689
    %2759 = vmatprep.subr.mxu0 0.0
    %2760 = vmatpush1.msra.mxu0 %v2690
    %2761 = vmatprep.subr.mxu0 0.0
    %2762 = vmatpush1.msra.mxu0 %v2691
    %2763 = vmatprep.subr.mxu0 0.0
    %2764 = vmatpush1.msra.mxu0 %v2692
    %2765 = vmatprep.subr.mxu0 0.0
    %2766 = vmatpush1.msra.mxu0 %v2693
    %2767 = vmatprep.subr.mxu0 0.0
    %2768 = vmatpush1.msra.mxu0 %v2694
    %2769 = vmatprep.subr.mxu0 0.0
    %2770 = vmatpush1.msra.mxu0 %v2695
    %2771 = vmatprep.subr.mxu0 0.0
    %2772 = vmatpush1.msra.mxu0 %v2696
    %2773 = vmatprep.subr.mxu0 0.0
    %2774 = vmatpush1.msra.mxu0 %v2697
    %2775 = vmatprep.subr.mxu0 0.0
    %2776 = vmatpush1.msra.mxu0 %v2698
    %2777 = vmatprep.subr.mxu0 0.0
    %2778 = vmatpush1.msra.mxu0 %v2699
    %2779 = vmatprep.subr.mxu0 0.0
    %2780 = vmatpush1.msra.mxu0 %v2700
    %2781 = vmatprep.subr.mxu0 0.0
    %2782 = vmatpush1.msra.mxu0 %v2701
    %2783 = vmatprep.subr.mxu0 0.0
    %2784 = vmatpush1.msra.mxu0 %v2702
    %2785 = vmatprep.subr.mxu0 0.0
    %2786 = vmatpush1.msra.mxu0 %v2703
    %2787 = vmatprep.subr.mxu0 0.0
    %2788 = vmatpush1.msra.mxu0 %v2704
    %2789 = vmatprep.subr.mxu0 0.0
    %2790 = vmatpush1.msra.mxu0 %v2705
    %2791 = vmatprep.subr.mxu0 0.0
    %2792 = vmatpush1.msra.mxu0 %v2706
    %2793 = vmatprep.subr.mxu0 0.0
    %2794 = vmatpush1.msra.mxu0 %v2707
    %2795 = vmatprep.subr.mxu0 0.0
    %2796 = vmatpush1.msra.mxu0 %v2708
    %2797 = vmatprep.subr.mxu0 0.0
    %2798 = vmatpush1.msra.mxu0 %v2709
    %2799 = vmatprep.subr.mxu0 0.0
    %2800 = vmatpush1.msra.mxu0 %v2710
    %2801 = vmatprep.subr.mxu0 0.0
    %2802 = vmatpush1.msra.mxu0 %v2711
    %2803 = vmatprep.subr.mxu0 0.0
    %2804 = vmatpush1.msra.mxu0 %v2712
    %2805 = vmatprep.subr.mxu0 0.0
    %2806 = vmatpush1.msra.mxu0 %v2713
    %2807 = vmatprep.subr.mxu0 0.0
    %2808 = vmatpush1.msra.mxu0 %v2714
    %2809 = vmatprep.subr.mxu0 0.0
    %2810 = vmatpush1.msra.mxu0 %v2715
    %2811 = vmatprep.subr.mxu0 0.0
    %2812 = vmatpush1.msra.mxu0 %v2716
    %2813 = vmatprep.mubr.f32.mxu0 %v2682
    %2814 = vmatmul.mubr.f32.gmra.mrb[0].mxu0 %v2681
    %v2815 = vpop.f32.mrb[0].mxu0
    %v2816 = vadd.f32 %v387, %v2815
    %v2817 = vpop.f32.mrb[0].mxu0
    %2818 = vdwg.mxu0
    %2819 = vmatprep.subr.mxu0 0.0
    %2820 = vmatpush1.msra.mxu0 %v2717
    %2821 = vmatprep.subr.mxu0 0.0
    %2822 = vmatpush1.msra.mxu0 %v2718
    %2823 = vmatprep.subr.mxu0 0.0
    %2824 = vmatpush1.msra.mxu0 %v2719
    %2825 = vmatprep.subr.mxu0 0.0
    %2826 = vmatpush1.msra.mxu0 %v2720
    %2827 = vmatprep.subr.mxu0 0.0
    %2828 = vmatpush1.msra.mxu0 %v2721
    %2829 = vmatprep.subr.mxu0 0.0
    %2830 = vmatpush1.msra.mxu0 %v2722
    %2831 = vmatprep.subr.mxu0 0.0
    %2832 = vmatpush1.msra.mxu0 %v2723
    %2833 = vmatprep.subr.mxu0 0.0
    %2834 = vmatpush1.msra.mxu0 %v2724
    %2835 = vmatprep.subr.mxu0 0.0
    %2836 = vmatpush1.msra.mxu0 %v2725
    %2837 = vmatprep.subr.mxu0 0.0
    %2838 = vmatpush1.msra.mxu0 %v2726
    %2839 = vmatprep.subr.mxu0 0.0
    %2840 = vmatpush1.msra.mxu0 %v2727
    %2841 = vmatprep.subr.mxu0 0.0
    %2842 = vmatpush1.msra.mxu0 %v2728
    %2843 = vmatprep.subr.mxu0 0.0
    %2844 = vmatpush1.msra.mxu0 %v2729
    %2845 = vmatprep.subr.mxu0 0.0
    %2846 = vmatpush1.msra.mxu0 %v2730
    %2847 = vmatprep.subr.mxu0 0.0
    %2848 = vmatpush1.msra.mxu0 %v2731
    %2849 = vmatprep.subr.mxu0 0.0
    %2850 = vmatpush1.msra.mxu0 %v2732
    %2851 = vmatprep.subr.mxu0 0.0
    %2852 = vmatpush1.msra.mxu0 %v2733
    %2853 = vmatprep.subr.mxu0 0.0
    %2854 = vmatpush1.msra.mxu0 %v2734
    %2855 = vmatprep.subr.mxu0 0.0
    %2856 = vmatpush1.msra.mxu0 %v2735
    %2857 = vmatprep.subr.mxu0 0.0
    %2858 = vmatpush1.msra.mxu0 %v2736
    %2859 = vmatprep.subr.mxu0 0.0
    %2860 = vmatpush1.msra.mxu0 %v2737
    %2861 = vmatprep.subr.mxu0 0.0
    %2862 = vmatpush1.msra.mxu0 %v2738
    %2863 = vmatprep.subr.mxu0 0.0
    %2864 = vmatpush1.msra.mxu0 %v2739
    %2865 = vmatprep.subr.mxu0 0.0
    %2866 = vmatpush1.msra.mxu0 %v2740
    %2867 = vmatprep.subr.mxu0 0.0
    %2868 = vmatpush1.msra.mxu0 %v2741
    %2869 = vmatprep.subr.mxu0 0.0
    %2870 = vmatpush1.msra.mxu0 %v2742
    %2871 = vmatprep.subr.mxu0 0.0
    %2872 = vmatpush1.msra.mxu0 %v2743
    %2873 = vmatprep.subr.mxu0 0.0
    %2874 = vmatpush1.msra.mxu0 %v2744
    %2875 = vmatprep.subr.mxu0 0.0
    %2876 = vmatpush1.msra.mxu0 %v2745
    %2877 = vmatprep.subr.mxu0 0.0
    %2878 = vmatpush1.msra.mxu0 %v2746
    %2879 = vmatprep.subr.mxu0 0.0
    %2880 = vmatpush1.msra.mxu0 %v2747
    %2881 = vmatprep.subr.mxu0 0.0
    %2882 = vmatpush1.msra.mxu0 %v2748
    %2883 = vmatprep.mubr.f32.mxu0 %v2684
    %2884 = vmatmul.mubr.f32.gmra.mrb[0].mxu0 %v2683
    %v2885 = vpop.f32.mrb[0].mxu0
    %v2886 = vadd.f32 %v2816, %v2885
    %v2887 = vpop.f32.mrb[0].mxu0
    %2888 = vdwg.mxu0
    %2889 = vst [vmem:[#allocation2 + $0x28] sm:$0xff] %v2886
    %v2890 = vld [vmem:[%s0 + $0x30] sm:$0xff]
    %2891 = vset.pattern.permute.xlu0 0
    %2892 = vperm.xlu0 %2891, %v2890
    %v2893 = vpop.permute.xlu0 %2892
    %vm2894 = vcmp.eq.s32.totalorder %v2893, %v47
    %vm2895 = vcmp.eq.s32.totalorder %v2893, %v48
    %vm2896 = vcmp.eq.s32.totalorder %v2893, %v49
    %vm2897 = vcmp.eq.s32.totalorder %v2893, %v50
    %v2898 = vsel %vm2894, 1, 0
    %v2899 = vsel %vm2895, 1, 0
    %v2900 = vsel %vm2896, 1, 0
    %v2901 = vsel %vm2897, 1, 0
    %v2902 = vcvt.s32.f32 %v2898
    %v2903 = vcvt.s32.f32 %v2899
    %v2904 = vcvt.s32.f32 %v2900
    %v2905 = vcvt.s32.f32 %v2901
    %v2906 = vadd.f32 %v2902, 0.0
    %v2907 = vadd.f32 %v2903, 0.0
    %v2908 = vadd.f32 %v2904, 0.0
    %v2909 = vadd.f32 %v2905, 0.0
    %2910 = vset.pattern.permute.xlu0 1
    %2911 = vperm.xlu0 %2910, %v2890
    %v2912 = vpop.permute.xlu0 %2911
    %vm2913 = vcmp.eq.s32.totalorder %v2912, %v47
    %vm2914 = vcmp.eq.s32.totalorder %v2912, %v48
    %vm2915 = vcmp.eq.s32.totalorder %v2912, %v49
    %vm2916 = vcmp.eq.s32.totalorder %v2912, %v50
    %v2917 = vsel %vm2913, 1, 0
    %v2918 = vsel %vm2914, 1, 0
    %v2919 = vsel %vm2915, 1, 0
    %v2920 = vsel %vm2916, 1, 0
    %v2921 = vcvt.s32.f32 %v2917
    %v2922 = vcvt.s32.f32 %v2918
    %v2923 = vcvt.s32.f32 %v2919
    %v2924 = vcvt.s32.f32 %v2920
    %v2925 = vadd.f32 %v2906, %v2921
    %v2926 = vadd.f32 %v2907, %v2922
    %v2927 = vadd.f32 %v2908, %v2923
    %v2928 = vadd.f32 %v2909, %v2924
    %2929 = vset.pattern.permute.xlu0 2
    %2930 = vperm.xlu0 %2929, %v2890
    %v2931 = vpop.permute.xlu0 %2930
    %vm2932 = vcmp.eq.s32.totalorder %v2931, %v47
    %vm2933 = vcmp.eq.s32.totalorder %v2931, %v48
    %vm2934 = vcmp.eq.s32.totalorder %v2931, %v49
    %vm2935 = vcmp.eq.s32.totalorder %v2931, %v50
    %v2936 = vsel %vm2932, 1, 0
    %v2937 = vsel %vm2933, 1, 0
    %v2938 = vsel %vm2934, 1, 0
    %v2939 = vsel %vm2935, 1, 0
    %v2940 = vcvt.s32.f32 %v2936
    %v2941 = vcvt.s32.f32 %v2937
    %v2942 = vcvt.s32.f32 %v2938
    %v2943 = vcvt.s32.f32 %v2939
    %v2944 = vadd.f32 %v2925, %v2940
    %v2945 = vadd.f32 %v2926, %v2941
    %v2946 = vadd.f32 %v2927, %v2942
    %v2947 = vadd.f32 %v2928, %v2943
    %2948 = vset.pattern.permute.xlu0 3
    %2949 = vperm.xlu0 %2948, %v2890
    %v2950 = vpop.permute.xlu0 %2949
    %vm2951 = vcmp.eq.s32.totalorder %v2950, %v47
    %vm2952 = vcmp.eq.s32.totalorder %v2950, %v48
    %vm2953 = vcmp.eq.s32.totalorder %v2950, %v49
    %vm2954 = vcmp.eq.s32.totalorder %v2950, %v50
    %v2955 = vsel %vm2951, 1, 0
    %v2956 = vsel %vm2952, 1, 0
    %v2957 = vsel %vm2953, 1, 0
    %v2958 = vsel %vm2954, 1, 0
    %v2959 = vcvt.s32.f32 %v2955
    %v2960 = vcvt.s32.f32 %v2956
    %v2961 = vcvt.s32.f32 %v2957
    %v2962 = vcvt.s32.f32 %v2958
    %v2963 = vadd.f32 %v2944, %v2959
    %v2964 = vadd.f32 %v2945, %v2960
    %v2965 = vadd.f32 %v2946, %v2961
    %v2966 = vadd.f32 %v2947, %v2962
    %2967 = vset.pattern.permute.xlu0 4
    %2968 = vperm.xlu0 %2967, %v2890
    %v2969 = vpop.permute.xlu0 %2968
    %vm2970 = vcmp.eq.s32.totalorder %v2969, %v47
    %vm2971 = vcmp.eq.s32.totalorder %v2969, %v48
    %vm2972 = vcmp.eq.s32.totalorder %v2969, %v49
    %vm2973 = vcmp.eq.s32.totalorder %v2969, %v50
    %v2974 = vsel %vm2970, 1, 0
    %v2975 = vsel %vm2971, 1, 0
    %v2976 = vsel %vm2972, 1, 0
    %v2977 = vsel %vm2973, 1, 0
    %v2978 = vcvt.s32.f32 %v2974
    %v2979 = vcvt.s32.f32 %v2975
    %v2980 = vcvt.s32.f32 %v2976
    %v2981 = vcvt.s32.f32 %v2977
    %v2982 = vadd.f32 %v2963, %v2978
    %v2983 = vadd.f32 %v2964, %v2979
    %v2984 = vadd.f32 %v2965, %v2980
    %v2985 = vadd.f32 %v2966, %v2981
    %2986 = vset.pattern.permute.xlu0 5
    %2987 = vperm.xlu0 %2986, %v2890
    %v2988 = vpop.permute.xlu0 %2987
    %vm2989 = vcmp.eq.s32.totalorder %v2988, %v47
    %vm2990 = vcmp.eq.s32.totalorder %v2988, %v48
    %vm2991 = vcmp.eq.s32.totalorder %v2988, %v49
    %vm2992 = vcmp.eq.s32.totalorder %v2988, %v50
    %v2993 = vsel %vm2989, 1, 0
    %v2994 = vsel %vm2990, 1, 0
    %v2995 = vsel %vm2991, 1, 0
    %v2996 = vsel %vm2992, 1, 0
    %v2997 = vcvt.s32.f32 %v2993
    %v2998 = vcvt.s32.f32 %v2994
    %v2999 = vcvt.s32.f32 %v2995
    %v3000 = vcvt.s32.f32 %v2996
    %v3001 = vadd.f32 %v2982, %v2997
    %v3002 = vadd.f32 %v2983, %v2998
    %v3003 = vadd.f32 %v2984, %v2999
    %v3004 = vadd.f32 %v2985, %v3000
    %3005 = vset.pattern.permute.xlu0 6
    %3006 = vperm.xlu0 %3005, %v2890
    %v3007 = vpop.permute.xlu0 %3006
    %vm3008 = vcmp.eq.s32.totalorder %v3007, %v47
    %vm3009 = vcmp.eq.s32.totalorder %v3007, %v48
    %vm3010 = vcmp.eq.s32.totalorder %v3007, %v49
    %vm3011 = vcmp.eq.s32.totalorder %v3007, %v50
    %v3012 = vsel %vm3008, 1, 0
    %v3013 = vsel %vm3009, 1, 0
    %v3014 = vsel %vm3010, 1, 0
    %v3015 = vsel %vm3011, 1, 0
    %v3016 = vcvt.s32.f32 %v3012
    %v3017 = vcvt.s32.f32 %v3013
    %v3018 = vcvt.s32.f32 %v3014
    %v3019 = vcvt.s32.f32 %v3015
    %v3020 = vadd.f32 %v3001, %v3016
    %v3021 = vadd.f32 %v3002, %v3017
    %v3022 = vadd.f32 %v3003, %v3018
    %v3023 = vadd.f32 %v3004, %v3019
    %3024 = vset.pattern.permute.xlu0 7
    %3025 = vperm.xlu0 %3024, %v2890
    %v3026 = vpop.permute.xlu0 %3025
    %vm3027 = vcmp.eq.s32.totalorder %v3026, %v47
    %vm3028 = vcmp.eq.s32.totalorder %v3026, %v48
    %vm3029 = vcmp.eq.s32.totalorder %v3026, %v49
    %vm3030 = vcmp.eq.s32.totalorder %v3026, %v50
    %v3031 = vsel %vm3027, 1, 0
    %v3032 = vsel %vm3028, 1, 0
    %v3033 = vsel %vm3029, 1, 0
    %v3034 = vsel %vm3030, 1, 0
    %v3035 = vcvt.s32.f32 %v3031
    %v3036 = vcvt.s32.f32 %v3032
    %v3037 = vcvt.s32.f32 %v3033
    %v3038 = vcvt.s32.f32 %v3034
    %v3039 = vadd.f32 %v3020, %v3035
    %v3040 = vadd.f32 %v3021, %v3036
    %v3041 = vadd.f32 %v3022, %v3037
    %v3042 = vadd.f32 %v3023, %v3038
    %3043 = vset.pattern.permute.xlu0 8
    %3044 = vperm.xlu0 %3043, %v2890
    %v3045 = vpop.permute.xlu0 %3044
    %vm3046 = vcmp.eq.s32.totalorder %v3045, %v47
    %vm3047 = vcmp.eq.s32.totalorder %v3045, %v48
    %vm3048 = vcmp.eq.s32.totalorder %v3045, %v49
    %vm3049 = vcmp.eq.s32.totalorder %v3045, %v50
    %v3050 = vsel %vm3046, 1, 0
    %v3051 = vsel %vm3047, 1, 0
    %v3052 = vsel %vm3048, 1, 0
    %v3053 = vsel %vm3049, 1, 0
    %v3054 = vcvt.s32.f32 %v3050
    %v3055 = vcvt.s32.f32 %v3051
    %v3056 = vcvt.s32.f32 %v3052
    %v3057 = vcvt.s32.f32 %v3053
    %v3058 = vadd.f32 %v3039, %v3054
    %v3059 = vadd.f32 %v3040, %v3055
    %v3060 = vadd.f32 %v3041, %v3056
    %v3061 = vadd.f32 %v3042, %v3057
    %3062 = vset.pattern.permute.xlu0 9
    %3063 = vperm.xlu0 %3062, %v2890
    %v3064 = vpop.permute.xlu0 %3063
    %vm3065 = vcmp.eq.s32.totalorder %v3064, %v47
    %vm3066 = vcmp.eq.s32.totalorder %v3064, %v48
    %vm3067 = vcmp.eq.s32.totalorder %v3064, %v49
    %vm3068 = vcmp.eq.s32.totalorder %v3064, %v50
    %v3069 = vsel %vm3065, 1, 0
    %v3070 = vsel %vm3066, 1, 0
    %v3071 = vsel %vm3067, 1, 0
    %v3072 = vsel %vm3068, 1, 0
    %v3073 = vcvt.s32.f32 %v3069
    %v3074 = vcvt.s32.f32 %v3070
    %v3075 = vcvt.s32.f32 %v3071
    %v3076 = vcvt.s32.f32 %v3072
    %v3077 = vadd.f32 %v3058, %v3073
    %v3078 = vadd.f32 %v3059, %v3074
    %v3079 = vadd.f32 %v3060, %v3075
    %v3080 = vadd.f32 %v3061, %v3076
    %3081 = vset.pattern.permute.xlu0 10
    %3082 = vperm.xlu0 %3081, %v2890
    %v3083 = vpop.permute.xlu0 %3082
    %vm3084 = vcmp.eq.s32.totalorder %v3083, %v47
    %vm3085 = vcmp.eq.s32.totalorder %v3083, %v48
    %vm3086 = vcmp.eq.s32.totalorder %v3083, %v49
    %vm3087 = vcmp.eq.s32.totalorder %v3083, %v50
    %v3088 = vsel %vm3084, 1, 0
    %v3089 = vsel %vm3085, 1, 0
    %v3090 = vsel %vm3086, 1, 0
    %v3091 = vsel %vm3087, 1, 0
    %v3092 = vcvt.s32.f32 %v3088
    %v3093 = vcvt.s32.f32 %v3089
    %v3094 = vcvt.s32.f32 %v3090
    %v3095 = vcvt.s32.f32 %v3091
    %v3096 = vadd.f32 %v3077, %v3092
    %v3097 = vadd.f32 %v3078, %v3093
    %v3098 = vadd.f32 %v3079, %v3094
    %v3099 = vadd.f32 %v3080, %v3095
    %3100 = vset.pattern.permute.xlu0 11
    %3101 = vperm.xlu0 %3100, %v2890
    %v3102 = vpop.permute.xlu0 %3101
    %vm3103 = vcmp.eq.s32.totalorder %v3102, %v47
    %vm3104 = vcmp.eq.s32.totalorder %v3102, %v48
    %vm3105 = vcmp.eq.s32.totalorder %v3102, %v49
    %vm3106 = vcmp.eq.s32.totalorder %v3102, %v50
    %v3107 = vsel %vm3103, 1, 0
    %v3108 = vsel %vm3104, 1, 0
    %v3109 = vsel %vm3105, 1, 0
    %v3110 = vsel %vm3106, 1, 0
    %v3111 = vcvt.s32.f32 %v3107
    %v3112 = vcvt.s32.f32 %v3108
    %v3113 = vcvt.s32.f32 %v3109
    %v3114 = vcvt.s32.f32 %v3110
    %v3115 = vadd.f32 %v3096, %v3111
    %v3116 = vadd.f32 %v3097, %v3112
    %v3117 = vadd.f32 %v3098, %v3113
    %v3118 = vadd.f32 %v3099, %v3114
    %3119 = vset.pattern.permute.xlu0 12
    %3120 = vperm.xlu0 %3119, %v2890
    %v3121 = vpop.permute.xlu0 %3120
    %vm3122 = vcmp.eq.s32.totalorder %v3121, %v47
    %vm3123 = vcmp.eq.s32.totalorder %v3121, %v48
    %vm3124 = vcmp.eq.s32.totalorder %v3121, %v49
    %vm3125 = vcmp.eq.s32.totalorder %v3121, %v50
    %v3126 = vsel %vm3122, 1, 0
    %v3127 = vsel %vm3123, 1, 0
    %v3128 = vsel %vm3124, 1, 0
    %v3129 = vsel %vm3125, 1, 0
    %v3130 = vcvt.s32.f32 %v3126
    %v3131 = vcvt.s32.f32 %v3127
    %v3132 = vcvt.s32.f32 %v3128
    %v3133 = vcvt.s32.f32 %v3129
    %v3134 = vadd.f32 %v3115, %v3130
    %v3135 = vadd.f32 %v3116, %v3131
    %v3136 = vadd.f32 %v3117, %v3132
    %v3137 = vadd.f32 %v3118, %v3133
    %3138 = vset.pattern.permute.xlu0 13
    %3139 = vperm.xlu0 %3138, %v2890
    %v3140 = vpop.permute.xlu0 %3139
    %vm3141 = vcmp.eq.s32.totalorder %v3140, %v47
    %vm3142 = vcmp.eq.s32.totalorder %v3140, %v48
    %vm3143 = vcmp.eq.s32.totalorder %v3140, %v49
    %vm3144 = vcmp.eq.s32.totalorder %v3140, %v50
    %v3145 = vsel %vm3141, 1, 0
    %v3146 = vsel %vm3142, 1, 0
    %v3147 = vsel %vm3143, 1, 0
    %v3148 = vsel %vm3144, 1, 0
    %v3149 = vcvt.s32.f32 %v3145
    %v3150 = vcvt.s32.f32 %v3146
    %v3151 = vcvt.s32.f32 %v3147
    %v3152 = vcvt.s32.f32 %v3148
    %v3153 = vadd.f32 %v3134, %v3149
    %v3154 = vadd.f32 %v3135, %v3150
    %v3155 = vadd.f32 %v3136, %v3151
    %v3156 = vadd.f32 %v3137, %v3152
    %v3157 = vld [vmem:[#allocation3] sm:$0xff]
    %v3158 = vld [vmem:[#allocation3 + $0x8] sm:$0xff]
    %v3159 = vld [vmem:[#allocation3 + $0x10] sm:$0xff]
    %v3160 = vld [vmem:[#allocation3 + $0x18] sm:$0xff]
    %v3161 = vld [vmem:[#allocation3 + $0x20] sm:$0xff]
    %v3162 = vld [vmem:[#allocation3 + $0x28] sm:$0xff]
    %v3163 = vld [vmem:[#allocation3 + $0x30] sm:$0xff]
    %v3164 = vld [vmem:[#allocation3 + $0x38] sm:$0xff]
    %v3165 = vld [vmem:[#allocation3 + $0x40] sm:$0xff]
    %v3166 = vld [vmem:[#allocation3 + $0x48] sm:$0xff]
    %v3167 = vld [vmem:[#allocation3 + $0x50] sm:$0xff]
    %v3168 = vld [vmem:[#allocation3 + $0x58] sm:$0xff]
    %v3169 = vld [vmem:[#allocation3 + $0x60] sm:$0xff]
    %v3170 = vld [vmem:[#allocation3 + $0x68] sm:$0xff]
    %v3171 = vld [vmem:[#allocation3 + $0x70] sm:$0xff]
    %v3172 = vld [vmem:[#allocation3 + $0x78] sm:$0xff]
    %v3173 = vld [vmem:[#allocation3 + $0x80] sm:$0xff]
    %v3174 = vld [vmem:[#allocation3 + $0x88] sm:$0xff]
    %v3175 = vld [vmem:[#allocation3 + $0x90] sm:$0xff]
    %v3176 = vld [vmem:[#allocation3 + $0x98] sm:$0xff]
    %v3177 = vld [vmem:[#allocation3 + $0xa0] sm:$0xff]
    %v3178 = vld [vmem:[#allocation3 + $0xa8] sm:$0xff]
    %v3179 = vld [vmem:[#allocation3 + $0xb0] sm:$0xff]
    %v3180 = vld [vmem:[#allocation3 + $0xb8] sm:$0xff]
    %v3181 = vld [vmem:[#allocation3 + $0xc0] sm:$0xff]
    %v3182 = vld [vmem:[#allocation3 + $0xc8] sm:$0xff]
    %v3183 = vld [vmem:[#allocation3 + $0xd0] sm:$0xff]
    %v3184 = vld [vmem:[#allocation3 + $0xd8] sm:$0xff]
    %v3185 = vld [vmem:[#allocation3 + $0xe0] sm:$0xff]
    %v3186 = vld [vmem:[#allocation3 + $0xe8] sm:$0xff]
    %v3187 = vld [vmem:[#allocation3 + $0xf0] sm:$0xff]
    %v3188 = vld [vmem:[#allocation3 + $0xf8] sm:$0xff]
    %v3189 = vld [vmem:[#allocation3 + $0x100] sm:$0xff]
    %v3190 = vld [vmem:[#allocation3 + $0x108] sm:$0xff]
    %v3191 = vld [vmem:[#allocation3 + $0x110] sm:$0xff]
    %v3192 = vld [vmem:[#allocation3 + $0x118] sm:$0xff]
    %v3193 = vld [vmem:[#allocation3 + $0x120] sm:$0xff]
    %v3194 = vld [vmem:[#allocation3 + $0x128] sm:$0xff]
    %v3195 = vld [vmem:[#allocation3 + $0x130] sm:$0xff]
    %v3196 = vld [vmem:[#allocation3 + $0x138] sm:$0xff]
    %v3197 = vld [vmem:[#allocation3 + $0x140] sm:$0xff]
    %v3198 = vld [vmem:[#allocation3 + $0x148] sm:$0xff]
    %v3199 = vld [vmem:[#allocation3 + $0x150] sm:$0xff]
    %v3200 = vld [vmem:[#allocation3 + $0x158] sm:$0xff]
    %v3201 = vld [vmem:[#allocation3 + $0x160] sm:$0xff]
    %v3202 = vld [vmem:[#allocation3 + $0x168] sm:$0xff]
    %v3203 = vld [vmem:[#allocation3 + $0x170] sm:$0xff]
    %v3204 = vld [vmem:[#allocation3 + $0x178] sm:$0xff]
    %v3205 = vld [vmem:[#allocation3 + $0x180] sm:$0xff]
    %v3206 = vld [vmem:[#allocation3 + $0x188] sm:$0xff]
    %v3207 = vld [vmem:[#allocation3 + $0x190] sm:$0xff]
    %v3208 = vld [vmem:[#allocation3 + $0x198] sm:$0xff]
    %v3209 = vld [vmem:[#allocation3 + $0x1a0] sm:$0xff]
    %v3210 = vld [vmem:[#allocation3 + $0x1a8] sm:$0xff]
    %v3211 = vld [vmem:[#allocation3 + $0x1b0] sm:$0xff]
    %v3212 = vld [vmem:[#allocation3 + $0x1b8] sm:$0xff]
    %v3213 = vld [vmem:[#allocation3 + $0x1c0] sm:$0xff]
    %v3214 = vld [vmem:[#allocation3 + $0x1c8] sm:$0xff]
    %v3215 = vld [vmem:[#allocation3 + $0x1d0] sm:$0xff]
    %v3216 = vld [vmem:[#allocation3 + $0x1d8] sm:$0xff]
    %v3217 = vld [vmem:[#allocation3 + $0x1e0] sm:$0xff]
    %v3218 = vld [vmem:[#allocation3 + $0x1e8] sm:$0xff]
    %v3219 = vld [vmem:[#allocation3 + $0x1f0] sm:$0xff]
    %v3220 = vld [vmem:[#allocation3 + $0x1f8] sm:$0xff]
    %3221 = vmatprep.subr.mxu0 0.0
    %3222 = vmatpush1.msra.mxu0 %v3157
    %3223 = vmatprep.subr.mxu0 0.0
    %3224 = vmatpush1.msra.mxu0 %v3158
    %3225 = vmatprep.subr.mxu0 0.0
    %3226 = vmatpush1.msra.mxu0 %v3159
    %3227 = vmatprep.subr.mxu0 0.0
    %3228 = vmatpush1.msra.mxu0 %v3160
    %3229 = vmatprep.subr.mxu0 0.0
    %3230 = vmatpush1.msra.mxu0 %v3161
    %3231 = vmatprep.subr.mxu0 0.0
    %3232 = vmatpush1.msra.mxu0 %v3162
    %3233 = vmatprep.subr.mxu0 0.0
    %3234 = vmatpush1.msra.mxu0 %v3163
    %3235 = vmatprep.subr.mxu0 0.0
    %3236 = vmatpush1.msra.mxu0 %v3164
    %3237 = vmatprep.subr.mxu0 0.0
    %3238 = vmatpush1.msra.mxu0 %v3165
    %3239 = vmatprep.subr.mxu0 0.0
    %3240 = vmatpush1.msra.mxu0 %v3166
    %3241 = vmatprep.subr.mxu0 0.0
    %3242 = vmatpush1.msra.mxu0 %v3167
    %3243 = vmatprep.subr.mxu0 0.0
    %3244 = vmatpush1.msra.mxu0 %v3168
    %3245 = vmatprep.subr.mxu0 0.0
    %3246 = vmatpush1.msra.mxu0 %v3169
    %3247 = vmatprep.subr.mxu0 0.0
    %3248 = vmatpush1.msra.mxu0 %v3170
    %3249 = vmatprep.subr.mxu0 0.0
    %3250 = vmatpush1.msra.mxu0 %v3171
    %3251 = vmatprep.subr.mxu0 0.0
    %3252 = vmatpush1.msra.mxu0 %v3172
    %3253 = vmatprep.subr.mxu0 0.0
    %3254 = vmatpush1.msra.mxu0 %v3173
    %3255 = vmatprep.subr.mxu0 0.0
    %3256 = vmatpush1.msra.mxu0 %v3174
    %3257 = vmatprep.subr.mxu0 0.0
    %3258 = vmatpush1.msra.mxu0 %v3175
    %3259 = vmatprep.subr.mxu0 0.0
    %3260 = vmatpush1.msra.mxu0 %v3176
    %3261 = vmatprep.subr.mxu0 0.0
    %3262 = vmatpush1.msra.mxu0 %v3177
    %3263 = vmatprep.subr.mxu0 0.0
    %3264 = vmatpush1.msra.mxu0 %v3178
    %3265 = vmatprep.subr.mxu0 0.0
    %3266 = vmatpush1.msra.mxu0 %v3179
    %3267 = vmatprep.subr.mxu0 0.0
    %3268 = vmatpush1.msra.mxu0 %v3180
    %3269 = vmatprep.subr.mxu0 0.0
    %3270 = vmatpush1.msra.mxu0 %v3181
    %3271 = vmatprep.subr.mxu0 0.0
    %3272 = vmatpush1.msra.mxu0 %v3182
    %3273 = vmatprep.subr.mxu0 0.0
    %3274 = vmatpush1.msra.mxu0 %v3183
    %3275 = vmatprep.subr.mxu0 0.0
    %3276 = vmatpush1.msra.mxu0 %v3184
    %3277 = vmatprep.subr.mxu0 0.0
    %3278 = vmatpush1.msra.mxu0 %v3185
    %3279 = vmatprep.subr.mxu0 0.0
    %3280 = vmatpush1.msra.mxu0 %v3186
    %3281 = vmatprep.subr.mxu0 0.0
    %3282 = vmatpush1.msra.mxu0 %v3187
    %3283 = vmatprep.subr.mxu0 0.0
    %3284 = vmatpush1.msra.mxu0 %v3188
    %3285 = vmatprep.mubr.f32.mxu0 %v3154
    %3286 = vmatmul.mubr.f32.gmra.mrb[0].mxu0 %v3153
    %v3287 = vpop.f32.mrb[0].mxu0
    %v3288 = vadd.f32 %v387, %v3287
    %v3289 = vpop.f32.mrb[0].mxu0
    %3290 = vdwg.mxu0
    %3291 = vmatprep.subr.mxu0 0.0
    %3292 = vmatpush1.msra.mxu0 %v3189
    %3293 = vmatprep.subr.mxu0 0.0
    %3294 = vmatpush1.msra.mxu0 %v3190
    %3295 = vmatprep.subr.mxu0 0.0
    %3296 = vmatpush1.msra.mxu0 %v3191
    %3297 = vmatprep.subr.mxu0 0.0
    %3298 = vmatpush1.msra.mxu0 %v3192
    %3299 = vmatprep.subr.mxu0 0.0
    %3300 = vmatpush1.msra.mxu0 %v3193
    %3301 = vmatprep.subr.mxu0 0.0
    %3302 = vmatpush1.msra.mxu0 %v3194
    %3303 = vmatprep.subr.mxu0 0.0
    %3304 = vmatpush1.msra.mxu0 %v3195
    %3305 = vmatprep.subr.mxu0 0.0
    %3306 = vmatpush1.msra.mxu0 %v3196
    %3307 = vmatprep.subr.mxu0 0.0
    %3308 = vmatpush1.msra.mxu0 %v3197
    %3309 = vmatprep.subr.mxu0 0.0
    %3310 = vmatpush1.msra.mxu0 %v3198
    %3311 = vmatprep.subr.mxu0 0.0
    %3312 = vmatpush1.msra.mxu0 %v3199
    %3313 = vmatprep.subr.mxu0 0.0
    %3314 = vmatpush1.msra.mxu0 %v3200
    %3315 = vmatprep.subr.mxu0 0.0
    %3316 = vmatpush1.msra.mxu0 %v3201
    %3317 = vmatprep.subr.mxu0 0.0
    %3318 = vmatpush1.msra.mxu0 %v3202
    %3319 = vmatprep.subr.mxu0 0.0
    %3320 = vmatpush1.msra.mxu0 %v3203
    %3321 = vmatprep.subr.mxu0 0.0
    %3322 = vmatpush1.msra.mxu0 %v3204
    %3323 = vmatprep.subr.mxu0 0.0
    %3324 = vmatpush1.msra.mxu0 %v3205
    %3325 = vmatprep.subr.mxu0 0.0
    %3326 = vmatpush1.msra.mxu0 %v3206
    %3327 = vmatprep.subr.mxu0 0.0
    %3328 = vmatpush1.msra.mxu0 %v3207
    %3329 = vmatprep.subr.mxu0 0.0
    %3330 = vmatpush1.msra.mxu0 %v3208
    %3331 = vmatprep.subr.mxu0 0.0
    %3332 = vmatpush1.msra.mxu0 %v3209
    %3333 = vmatprep.subr.mxu0 0.0
    %3334 = vmatpush1.msra.mxu0 %v3210
    %3335 = vmatprep.subr.mxu0 0.0
    %3336 = vmatpush1.msra.mxu0 %v3211
    %3337 = vmatprep.subr.mxu0 0.0
    %3338 = vmatpush1.msra.mxu0 %v3212
    %3339 = vmatprep.subr.mxu0 0.0
    %3340 = vmatpush1.msra.mxu0 %v3213
    %3341 = vmatprep.subr.mxu0 0.0
    %3342 = vmatpush1.msra.mxu0 %v3214
    %3343 = vmatprep.subr.mxu0 0.0
    %3344 = vmatpush1.msra.mxu0 %v3215
    %3345 = vmatprep.subr.mxu0 0.0
    %3346 = vmatpush1.msra.mxu0 %v3216
    %3347 = vmatprep.subr.mxu0 0.0
    %3348 = vmatpush1.msra.mxu0 %v3217
    %3349 = vmatprep.subr.mxu0 0.0
    %3350 = vmatpush1.msra.mxu0 %v3218
    %3351 = vmatprep.subr.mxu0 0.0
    %3352 = vmatpush1.msra.mxu0 %v3219
    %3353 = vmatprep.subr.mxu0 0.0
    %3354 = vmatpush1.msra.mxu0 %v3220
    %3355 = vmatprep.mubr.f32.mxu0 %v3156
    %3356 = vmatmul.mubr.f32.gmra.mrb[0].mxu0 %v3155
    %v3357 = vpop.f32.mrb[0].mxu0
    %v3358 = vadd.f32 %v3288, %v3357
    %v3359 = vpop.f32.mrb[0].mxu0
    %3360 = vdwg.mxu0
    %3361 = vst [vmem:[#allocation2 + $0x30] sm:$0xff] %v3358
    %v3362 = vld [vmem:[%s0 + $0x38] sm:$0xff]
    %3363 = vset.pattern.permute.xlu0 0
    %3364 = vperm.xlu0 %3363, %v3362
    %v3365 = vpop.permute.xlu0 %3364
    %vm3366 = vcmp.eq.s32.totalorder %v3365, %v47
    %vm3367 = vcmp.eq.s32.totalorder %v3365, %v48
    %vm3368 = vcmp.eq.s32.totalorder %v3365, %v49
    %vm3369 = vcmp.eq.s32.totalorder %v3365, %v50
    %v3370 = vsel %vm3366, 1, 0
    %v3371 = vsel %vm3367, 1, 0
    %v3372 = vsel %vm3368, 1, 0
    %v3373 = vsel %vm3369, 1, 0
    %v3374 = vcvt.s32.f32 %v3370
    %v3375 = vcvt.s32.f32 %v3371
    %v3376 = vcvt.s32.f32 %v3372
    %v3377 = vcvt.s32.f32 %v3373
    %v3378 = vadd.f32 %v3374, 0.0
    %v3379 = vadd.f32 %v3375, 0.0
    %v3380 = vadd.f32 %v3376, 0.0
    %v3381 = vadd.f32 %v3377, 0.0
    %3382 = vset.pattern.permute.xlu0 1
    %3383 = vperm.xlu0 %3382, %v3362
    %v3384 = vpop.permute.xlu0 %3383
    %vm3385 = vcmp.eq.s32.totalorder %v3384, %v47
    %vm3386 = vcmp.eq.s32.totalorder %v3384, %v48
    %vm3387 = vcmp.eq.s32.totalorder %v3384, %v49
    %vm3388 = vcmp.eq.s32.totalorder %v3384, %v50
    %v3389 = vsel %vm3385, 1, 0
    %v3390 = vsel %vm3386, 1, 0
    %v3391 = vsel %vm3387, 1, 0
    %v3392 = vsel %vm3388, 1, 0
    %v3393 = vcvt.s32.f32 %v3389
    %v3394 = vcvt.s32.f32 %v3390
    %v3395 = vcvt.s32.f32 %v3391
    %v3396 = vcvt.s32.f32 %v3392
    %v3397 = vadd.f32 %v3378, %v3393
    %v3398 = vadd.f32 %v3379, %v3394
    %v3399 = vadd.f32 %v3380, %v3395
    %v3400 = vadd.f32 %v3381, %v3396
    %3401 = vset.pattern.permute.xlu0 2
    %3402 = vperm.xlu0 %3401, %v3362
    %v3403 = vpop.permute.xlu0 %3402
    %vm3404 = vcmp.eq.s32.totalorder %v3403, %v47
    %vm3405 = vcmp.eq.s32.totalorder %v3403, %v48
    %vm3406 = vcmp.eq.s32.totalorder %v3403, %v49
    %vm3407 = vcmp.eq.s32.totalorder %v3403, %v50
    %v3408 = vsel %vm3404, 1, 0
    %v3409 = vsel %vm3405, 1, 0
    %v3410 = vsel %vm3406, 1, 0
    %v3411 = vsel %vm3407, 1, 0
    %v3412 = vcvt.s32.f32 %v3408
    %v3413 = vcvt.s32.f32 %v3409
    %v3414 = vcvt.s32.f32 %v3410
    %v3415 = vcvt.s32.f32 %v3411
    %v3416 = vadd.f32 %v3397, %v3412
    %v3417 = vadd.f32 %v3398, %v3413
    %v3418 = vadd.f32 %v3399, %v3414
    %v3419 = vadd.f32 %v3400, %v3415
    %3420 = vset.pattern.permute.xlu0 3
    %3421 = vperm.xlu0 %3420, %v3362
    %v3422 = vpop.permute.xlu0 %3421
    %vm3423 = vcmp.eq.s32.totalorder %v3422, %v47
    %vm3424 = vcmp.eq.s32.totalorder %v3422, %v48
    %vm3425 = vcmp.eq.s32.totalorder %v3422, %v49
    %vm3426 = vcmp.eq.s32.totalorder %v3422, %v50
    %v3427 = vsel %vm3423, 1, 0
    %v3428 = vsel %vm3424, 1, 0
    %v3429 = vsel %vm3425, 1, 0
    %v3430 = vsel %vm3426, 1, 0
    %v3431 = vcvt.s32.f32 %v3427
    %v3432 = vcvt.s32.f32 %v3428
    %v3433 = vcvt.s32.f32 %v3429
    %v3434 = vcvt.s32.f32 %v3430
    %v3435 = vadd.f32 %v3416, %v3431
    %v3436 = vadd.f32 %v3417, %v3432
    %v3437 = vadd.f32 %v3418, %v3433
    %v3438 = vadd.f32 %v3419, %v3434
    %3439 = vset.pattern.permute.xlu0 4
    %3440 = vperm.xlu0 %3439, %v3362
    %v3441 = vpop.permute.xlu0 %3440
    %vm3442 = vcmp.eq.s32.totalorder %v3441, %v47
    %vm3443 = vcmp.eq.s32.totalorder %v3441, %v48
    %vm3444 = vcmp.eq.s32.totalorder %v3441, %v49
    %vm3445 = vcmp.eq.s32.totalorder %v3441, %v50
    %v3446 = vsel %vm3442, 1, 0
    %v3447 = vsel %vm3443, 1, 0
    %v3448 = vsel %vm3444, 1, 0
    %v3449 = vsel %vm3445, 1, 0
    %v3450 = vcvt.s32.f32 %v3446
    %v3451 = vcvt.s32.f32 %v3447
    %v3452 = vcvt.s32.f32 %v3448
    %v3453 = vcvt.s32.f32 %v3449
    %v3454 = vadd.f32 %v3435, %v3450
    %v3455 = vadd.f32 %v3436, %v3451
    %v3456 = vadd.f32 %v3437, %v3452
    %v3457 = vadd.f32 %v3438, %v3453
    %3458 = vset.pattern.permute.xlu0 5
    %3459 = vperm.xlu0 %3458, %v3362
    %v3460 = vpop.permute.xlu0 %3459
    %vm3461 = vcmp.eq.s32.totalorder %v3460, %v47
    %vm3462 = vcmp.eq.s32.totalorder %v3460, %v48
    %vm3463 = vcmp.eq.s32.totalorder %v3460, %v49
    %vm3464 = vcmp.eq.s32.totalorder %v3460, %v50
    %v3465 = vsel %vm3461, 1, 0
    %v3466 = vsel %vm3462, 1, 0
    %v3467 = vsel %vm3463, 1, 0
    %v3468 = vsel %vm3464, 1, 0
    %v3469 = vcvt.s32.f32 %v3465
    %v3470 = vcvt.s32.f32 %v3466
    %v3471 = vcvt.s32.f32 %v3467
    %v3472 = vcvt.s32.f32 %v3468
    %v3473 = vadd.f32 %v3454, %v3469
    %v3474 = vadd.f32 %v3455, %v3470
    %v3475 = vadd.f32 %v3456, %v3471
    %v3476 = vadd.f32 %v3457, %v3472
    %3477 = vset.pattern.permute.xlu0 6
    %3478 = vperm.xlu0 %3477, %v3362
    %v3479 = vpop.permute.xlu0 %3478
    %vm3480 = vcmp.eq.s32.totalorder %v3479, %v47
    %vm3481 = vcmp.eq.s32.totalorder %v3479, %v48
    %vm3482 = vcmp.eq.s32.totalorder %v3479, %v49
    %vm3483 = vcmp.eq.s32.totalorder %v3479, %v50
    %v3484 = vsel %vm3480, 1, 0
    %v3485 = vsel %vm3481, 1, 0
    %v3486 = vsel %vm3482, 1, 0
    %v3487 = vsel %vm3483, 1, 0
    %v3488 = vcvt.s32.f32 %v3484
    %v3489 = vcvt.s32.f32 %v3485
    %v3490 = vcvt.s32.f32 %v3486
    %v3491 = vcvt.s32.f32 %v3487
    %v3492 = vadd.f32 %v3473, %v3488
    %v3493 = vadd.f32 %v3474, %v3489
    %v3494 = vadd.f32 %v3475, %v3490
    %v3495 = vadd.f32 %v3476, %v3491
    %3496 = vset.pattern.permute.xlu0 7
    %3497 = vperm.xlu0 %3496, %v3362
    %v3498 = vpop.permute.xlu0 %3497
    %vm3499 = vcmp.eq.s32.totalorder %v3498, %v47
    %vm3500 = vcmp.eq.s32.totalorder %v3498, %v48
    %vm3501 = vcmp.eq.s32.totalorder %v3498, %v49
    %vm3502 = vcmp.eq.s32.totalorder %v3498, %v50
    %v3503 = vsel %vm3499, 1, 0
    %v3504 = vsel %vm3500, 1, 0
    %v3505 = vsel %vm3501, 1, 0
    %v3506 = vsel %vm3502, 1, 0
    %v3507 = vcvt.s32.f32 %v3503
    %v3508 = vcvt.s32.f32 %v3504
    %v3509 = vcvt.s32.f32 %v3505
    %v3510 = vcvt.s32.f32 %v3506
    %v3511 = vadd.f32 %v3492, %v3507
    %v3512 = vadd.f32 %v3493, %v3508
    %v3513 = vadd.f32 %v3494, %v3509
    %v3514 = vadd.f32 %v3495, %v3510
    %3515 = vset.pattern.permute.xlu0 8
    %3516 = vperm.xlu0 %3515, %v3362
    %v3517 = vpop.permute.xlu0 %3516
    %vm3518 = vcmp.eq.s32.totalorder %v3517, %v47
    %vm3519 = vcmp.eq.s32.totalorder %v3517, %v48
    %vm3520 = vcmp.eq.s32.totalorder %v3517, %v49
    %vm3521 = vcmp.eq.s32.totalorder %v3517, %v50
    %v3522 = vsel %vm3518, 1, 0
    %v3523 = vsel %vm3519, 1, 0
    %v3524 = vsel %vm3520, 1, 0
    %v3525 = vsel %vm3521, 1, 0
    %v3526 = vcvt.s32.f32 %v3522
    %v3527 = vcvt.s32.f32 %v3523
    %v3528 = vcvt.s32.f32 %v3524
    %v3529 = vcvt.s32.f32 %v3525
    %v3530 = vadd.f32 %v3511, %v3526
    %v3531 = vadd.f32 %v3512, %v3527
    %v3532 = vadd.f32 %v3513, %v3528
    %v3533 = vadd.f32 %v3514, %v3529
    %3534 = vset.pattern.permute.xlu0 9
    %3535 = vperm.xlu0 %3534, %v3362
    %v3536 = vpop.permute.xlu0 %3535
    %vm3537 = vcmp.eq.s32.totalorder %v3536, %v47
    %vm3538 = vcmp.eq.s32.totalorder %v3536, %v48
    %vm3539 = vcmp.eq.s32.totalorder %v3536, %v49
    %vm3540 = vcmp.eq.s32.totalorder %v3536, %v50
    %v3541 = vsel %vm3537, 1, 0
    %v3542 = vsel %vm3538, 1, 0
    %v3543 = vsel %vm3539, 1, 0
    %v3544 = vsel %vm3540, 1, 0
    %v3545 = vcvt.s32.f32 %v3541
    %v3546 = vcvt.s32.f32 %v3542
    %v3547 = vcvt.s32.f32 %v3543
    %v3548 = vcvt.s32.f32 %v3544
    %v3549 = vadd.f32 %v3530, %v3545
    %v3550 = vadd.f32 %v3531, %v3546
    %v3551 = vadd.f32 %v3532, %v3547
    %v3552 = vadd.f32 %v3533, %v3548
    %3553 = vset.pattern.permute.xlu0 10
    %3554 = vperm.xlu0 %3553, %v3362
    %v3555 = vpop.permute.xlu0 %3554
    %vm3556 = vcmp.eq.s32.totalorder %v3555, %v47
    %vm3557 = vcmp.eq.s32.totalorder %v3555, %v48
    %vm3558 = vcmp.eq.s32.totalorder %v3555, %v49
    %vm3559 = vcmp.eq.s32.totalorder %v3555, %v50
    %v3560 = vsel %vm3556, 1, 0
    %v3561 = vsel %vm3557, 1, 0
    %v3562 = vsel %vm3558, 1, 0
    %v3563 = vsel %vm3559, 1, 0
    %v3564 = vcvt.s32.f32 %v3560
    %v3565 = vcvt.s32.f32 %v3561
    %v3566 = vcvt.s32.f32 %v3562
    %v3567 = vcvt.s32.f32 %v3563
    %v3568 = vadd.f32 %v3549, %v3564
    %v3569 = vadd.f32 %v3550, %v3565
    %v3570 = vadd.f32 %v3551, %v3566
    %v3571 = vadd.f32 %v3552, %v3567
    %3572 = vset.pattern.permute.xlu0 11
    %3573 = vperm.xlu0 %3572, %v3362
    %v3574 = vpop.permute.xlu0 %3573
    %vm3575 = vcmp.eq.s32.totalorder %v3574, %v47
    %vm3576 = vcmp.eq.s32.totalorder %v3574, %v48
    %vm3577 = vcmp.eq.s32.totalorder %v3574, %v49
    %vm3578 = vcmp.eq.s32.totalorder %v3574, %v50
    %v3579 = vsel %vm3575, 1, 0
    %v3580 = vsel %vm3576, 1, 0
    %v3581 = vsel %vm3577, 1, 0
    %v3582 = vsel %vm3578, 1, 0
    %v3583 = vcvt.s32.f32 %v3579
    %v3584 = vcvt.s32.f32 %v3580
    %v3585 = vcvt.s32.f32 %v3581
    %v3586 = vcvt.s32.f32 %v3582
    %v3587 = vadd.f32 %v3568, %v3583
    %v3588 = vadd.f32 %v3569, %v3584
    %v3589 = vadd.f32 %v3570, %v3585
    %v3590 = vadd.f32 %v3571, %v3586
    %3591 = vset.pattern.permute.xlu0 12
    %3592 = vperm.xlu0 %3591, %v3362
    %v3593 = vpop.permute.xlu0 %3592
    %vm3594 = vcmp.eq.s32.totalorder %v3593, %v47
    %vm3595 = vcmp.eq.s32.totalorder %v3593, %v48
    %vm3596 = vcmp.eq.s32.totalorder %v3593, %v49
    %vm3597 = vcmp.eq.s32.totalorder %v3593, %v50
    %v3598 = vsel %vm3594, 1, 0
    %v3599 = vsel %vm3595, 1, 0
    %v3600 = vsel %vm3596, 1, 0
    %v3601 = vsel %vm3597, 1, 0
    %v3602 = vcvt.s32.f32 %v3598
    %v3603 = vcvt.s32.f32 %v3599
    %v3604 = vcvt.s32.f32 %v3600
    %v3605 = vcvt.s32.f32 %v3601
    %v3606 = vadd.f32 %v3587, %v3602
    %v3607 = vadd.f32 %v3588, %v3603
    %v3608 = vadd.f32 %v3589, %v3604
    %v3609 = vadd.f32 %v3590, %v3605
    %3610 = vset.pattern.permute.xlu0 13
    %3611 = vperm.xlu0 %3610, %v3362
    %v3612 = vpop.permute.xlu0 %3611
    %vm3613 = vcmp.eq.s32.totalorder %v3612, %v47
    %vm3614 = vcmp.eq.s32.totalorder %v3612, %v48
    %vm3615 = vcmp.eq.s32.totalorder %v3612, %v49
    %vm3616 = vcmp.eq.s32.totalorder %v3612, %v50
    %v3617 = vsel %vm3613, 1, 0
    %v3618 = vsel %vm3614, 1, 0
    %v3619 = vsel %vm3615, 1, 0
    %v3620 = vsel %vm3616, 1, 0
    %v3621 = vcvt.s32.f32 %v3617
    %v3622 = vcvt.s32.f32 %v3618
    %v3623 = vcvt.s32.f32 %v3619
    %v3624 = vcvt.s32.f32 %v3620
    %v3625 = vadd.f32 %v3606, %v3621
    %v3626 = vadd.f32 %v3607, %v3622
    %v3627 = vadd.f32 %v3608, %v3623
    %v3628 = vadd.f32 %v3609, %v3624
    %v3629 = vld [vmem:[#allocation3] sm:$0xff]
    %v3630 = vld [vmem:[#allocation3 + $0x8] sm:$0xff]
    %v3631 = vld [vmem:[#allocation3 + $0x10] sm:$0xff]
    %v3632 = vld [vmem:[#allocation3 + $0x18] sm:$0xff]
    %v3633 = vld [vmem:[#allocation3 + $0x20] sm:$0xff]
    %v3634 = vld [vmem:[#allocation3 + $0x28] sm:$0xff]
    %v3635 = vld [vmem:[#allocation3 + $0x30] sm:$0xff]
    %v3636 = vld [vmem:[#allocation3 + $0x38] sm:$0xff]
    %v3637 = vld [vmem:[#allocation3 + $0x40] sm:$0xff]
    %v3638 = vld [vmem:[#allocation3 + $0x48] sm:$0xff]
    %v3639 = vld [vmem:[#allocation3 + $0x50] sm:$0xff]
    %v3640 = vld [vmem:[#allocation3 + $0x58] sm:$0xff]
    %v3641 = vld [vmem:[#allocation3 + $0x60] sm:$0xff]
    %v3642 = vld [vmem:[#allocation3 + $0x68] sm:$0xff]
    %v3643 = vld [vmem:[#allocation3 + $0x70] sm:$0xff]
    %v3644 = vld [vmem:[#allocation3 + $0x78] sm:$0xff]
    %v3645 = vld [vmem:[#allocation3 + $0x80] sm:$0xff]
    %v3646 = vld [vmem:[#allocation3 + $0x88] sm:$0xff]
    %v3647 = vld [vmem:[#allocation3 + $0x90] sm:$0xff]
    %v3648 = vld [vmem:[#allocation3 + $0x98] sm:$0xff]
    %v3649 = vld [vmem:[#allocation3 + $0xa0] sm:$0xff]
    %v3650 = vld [vmem:[#allocation3 + $0xa8] sm:$0xff]
    %v3651 = vld [vmem:[#allocation3 + $0xb0] sm:$0xff]
    %v3652 = vld [vmem:[#allocation3 + $0xb8] sm:$0xff]
    %v3653 = vld [vmem:[#allocation3 + $0xc0] sm:$0xff]
    %v3654 = vld [vmem:[#allocation3 + $0xc8] sm:$0xff]
    %v3655 = vld [vmem:[#allocation3 + $0xd0] sm:$0xff]
    %v3656 = vld [vmem:[#allocation3 + $0xd8] sm:$0xff]
    %v3657 = vld [vmem:[#allocation3 + $0xe0] sm:$0xff]
    %v3658 = vld [vmem:[#allocation3 + $0xe8] sm:$0xff]
    %v3659 = vld [vmem:[#allocation3 + $0xf0] sm:$0xff]
    %v3660 = vld [vmem:[#allocation3 + $0xf8] sm:$0xff]
    %v3661 = vld [vmem:[#allocation3 + $0x100] sm:$0xff]
    %v3662 = vld [vmem:[#allocation3 + $0x108] sm:$0xff]
    %v3663 = vld [vmem:[#allocation3 + $0x110] sm:$0xff]
    %v3664 = vld [vmem:[#allocation3 + $0x118] sm:$0xff]
    %v3665 = vld [vmem:[#allocation3 + $0x120] sm:$0xff]
    %v3666 = vld [vmem:[#allocation3 + $0x128] sm:$0xff]
    %v3667 = vld [vmem:[#allocation3 + $0x130] sm:$0xff]
    %v3668 = vld [vmem:[#allocation3 + $0x138] sm:$0xff]
    %v3669 = vld [vmem:[#allocation3 + $0x140] sm:$0xff]
    %v3670 = vld [vmem:[#allocation3 + $0x148] sm:$0xff]
    %v3671 = vld [vmem:[#allocation3 + $0x150] sm:$0xff]
    %v3672 = vld [vmem:[#allocation3 + $0x158] sm:$0xff]
    %v3673 = vld [vmem:[#allocation3 + $0x160] sm:$0xff]
    %v3674 = vld [vmem:[#allocation3 + $0x168] sm:$0xff]
    %v3675 = vld [vmem:[#allocation3 + $0x170] sm:$0xff]
    %v3676 = vld [vmem:[#allocation3 + $0x178] sm:$0xff]
    %v3677 = vld [vmem:[#allocation3 + $0x180] sm:$0xff]
    %v3678 = vld [vmem:[#allocation3 + $0x188] sm:$0xff]
    %v3679 = vld [vmem:[#allocation3 + $0x190] sm:$0xff]
    %v3680 = vld [vmem:[#allocation3 + $0x198] sm:$0xff]
    %v3681 = vld [vmem:[#allocation3 + $0x1a0] sm:$0xff]
    %v3682 = vld [vmem:[#allocation3 + $0x1a8] sm:$0xff]
    %v3683 = vld [vmem:[#allocation3 + $0x1b0] sm:$0xff]
    %v3684 = vld [vmem:[#allocation3 + $0x1b8] sm:$0xff]
    %v3685 = vld [vmem:[#allocation3 + $0x1c0] sm:$0xff]
    %v3686 = vld [vmem:[#allocation3 + $0x1c8] sm:$0xff]
    %v3687 = vld [vmem:[#allocation3 + $0x1d0] sm:$0xff]
    %v3688 = vld [vmem:[#allocation3 + $0x1d8] sm:$0xff]
    %v3689 = vld [vmem:[#allocation3 + $0x1e0] sm:$0xff]
    %v3690 = vld [vmem:[#allocation3 + $0x1e8] sm:$0xff]
    %v3691 = vld [vmem:[#allocation3 + $0x1f0] sm:$0xff]
    %v3692 = vld [vmem:[#allocation3 + $0x1f8] sm:$0xff]
    %3693 = vmatprep.subr.mxu0 0.0
    %3694 = vmatpush1.msra.mxu0 %v3629
    %3695 = vmatprep.subr.mxu0 0.0
    %3696 = vmatpush1.msra.mxu0 %v3630
    %3697 = vmatprep.subr.mxu0 0.0
    %3698 = vmatpush1.msra.mxu0 %v3631
    %3699 = vmatprep.subr.mxu0 0.0
    %3700 = vmatpush1.msra.mxu0 %v3632
    %3701 = vmatprep.subr.mxu0 0.0
    %3702 = vmatpush1.msra.mxu0 %v3633
    %3703 = vmatprep.subr.mxu0 0.0
    %3704 = vmatpush1.msra.mxu0 %v3634
    %3705 = vmatprep.subr.mxu0 0.0
    %3706 = vmatpush1.msra.mxu0 %v3635
    %3707 = vmatprep.subr.mxu0 0.0
    %3708 = vmatpush1.msra.mxu0 %v3636
    %3709 = vmatprep.subr.mxu0 0.0
    %3710 = vmatpush1.msra.mxu0 %v3637
    %3711 = vmatprep.subr.mxu0 0.0
    %3712 = vmatpush1.msra.mxu0 %v3638
    %3713 = vmatprep.subr.mxu0 0.0
    %3714 = vmatpush1.msra.mxu0 %v3639
    %3715 = vmatprep.subr.mxu0 0.0
    %3716 = vmatpush1.msra.mxu0 %v3640
    %3717 = vmatprep.subr.mxu0 0.0
    %3718 = vmatpush1.msra.mxu0 %v3641
    %3719 = vmatprep.subr.mxu0 0.0
    %3720 = vmatpush1.msra.mxu0 %v3642
    %3721 = vmatprep.subr.mxu0 0.0
    %3722 = vmatpush1.msra.mxu0 %v3643
    %3723 = vmatprep.subr.mxu0 0.0
    %3724 = vmatpush1.msra.mxu0 %v3644
    %3725 = vmatprep.subr.mxu0 0.0
    %3726 = vmatpush1.msra.mxu0 %v3645
    %3727 = vmatprep.subr.mxu0 0.0
    %3728 = vmatpush1.msra.mxu0 %v3646
    %3729 = vmatprep.subr.mxu0 0.0
    %3730 = vmatpush1.msra.mxu0 %v3647
    %3731 = vmatprep.subr.mxu0 0.0
    %3732 = vmatpush1.msra.mxu0 %v3648
    %3733 = vmatprep.subr.mxu0 0.0
    %3734 = vmatpush1.msra.mxu0 %v3649
    %3735 = vmatprep.subr.mxu0 0.0
    %3736 = vmatpush1.msra.mxu0 %v3650
    %3737 = vmatprep.subr.mxu0 0.0
    %3738 = vmatpush1.msra.mxu0 %v3651
    %3739 = vmatprep.subr.mxu0 0.0
    %3740 = vmatpush1.msra.mxu0 %v3652
    %3741 = vmatprep.subr.mxu0 0.0
    %3742 = vmatpush1.msra.mxu0 %v3653
    %3743 = vmatprep.subr.mxu0 0.0
    %3744 = vmatpush1.msra.mxu0 %v3654
    %3745 = vmatprep.subr.mxu0 0.0
    %3746 = vmatpush1.msra.mxu0 %v3655
    %3747 = vmatprep.subr.mxu0 0.0
    %3748 = vmatpush1.msra.mxu0 %v3656
    %3749 = vmatprep.subr.mxu0 0.0
    %3750 = vmatpush1.msra.mxu0 %v3657
    %3751 = vmatprep.subr.mxu0 0.0
    %3752 = vmatpush1.msra.mxu0 %v3658
    %3753 = vmatprep.subr.mxu0 0.0
    %3754 = vmatpush1.msra.mxu0 %v3659
    %3755 = vmatprep.subr.mxu0 0.0
    %3756 = vmatpush1.msra.mxu0 %v3660
    %3757 = vmatprep.mubr.f32.mxu0 %v3626
    %3758 = vmatmul.mubr.f32.gmra.mrb[0].mxu0 %v3625
    %v3759 = vpop.f32.mrb[0].mxu0
    %v3760 = vadd.f32 %v387, %v3759
    %v3761 = vpop.f32.mrb[0].mxu0
    %3762 = vdwg.mxu0
    %3763 = vmatprep.subr.mxu0 0.0
    %3764 = vmatpush1.msra.mxu0 %v3661
    %3765 = vmatprep.subr.mxu0 0.0
    %3766 = vmatpush1.msra.mxu0 %v3662
    %3767 = vmatprep.subr.mxu0 0.0
    %3768 = vmatpush1.msra.mxu0 %v3663
    %3769 = vmatprep.subr.mxu0 0.0
    %3770 = vmatpush1.msra.mxu0 %v3664
    %3771 = vmatprep.subr.mxu0 0.0
    %3772 = vmatpush1.msra.mxu0 %v3665
    %3773 = vmatprep.subr.mxu0 0.0
    %3774 = vmatpush1.msra.mxu0 %v3666
    %3775 = vmatprep.subr.mxu0 0.0
    %3776 = vmatpush1.msra.mxu0 %v3667
    %3777 = vmatprep.subr.mxu0 0.0
    %3778 = vmatpush1.msra.mxu0 %v3668
    %3779 = vmatprep.subr.mxu0 0.0
    %3780 = vmatpush1.msra.mxu0 %v3669
    %3781 = vmatprep.subr.mxu0 0.0
    %3782 = vmatpush1.msra.mxu0 %v3670
    %3783 = vmatprep.subr.mxu0 0.0
    %3784 = vmatpush1.msra.mxu0 %v3671
    %3785 = vmatprep.subr.mxu0 0.0
    %3786 = vmatpush1.msra.mxu0 %v3672
    %3787 = vmatprep.subr.mxu0 0.0
    %3788 = vmatpush1.msra.mxu0 %v3673
    %3789 = vmatprep.subr.mxu0 0.0
    %3790 = vmatpush1.msra.mxu0 %v3674
    %3791 = vmatprep.subr.mxu0 0.0
    %3792 = vmatpush1.msra.mxu0 %v3675
    %3793 = vmatprep.subr.mxu0 0.0
    %3794 = vmatpush1.msra.mxu0 %v3676
    %3795 = vmatprep.subr.mxu0 0.0
    %3796 = vmatpush1.msra.mxu0 %v3677
    %3797 = vmatprep.subr.mxu0 0.0
    %3798 = vmatpush1.msra.mxu0 %v3678
    %3799 = vmatprep.subr.mxu0 0.0
    %3800 = vmatpush1.msra.mxu0 %v3679
    %3801 = vmatprep.subr.mxu0 0.0
    %3802 = vmatpush1.msra.mxu0 %v3680
    %3803 = vmatprep.subr.mxu0 0.0
    %3804 = vmatpush1.msra.mxu0 %v3681
    %3805 = vmatprep.subr.mxu0 0.0
    %3806 = vmatpush1.msra.mxu0 %v3682
    %3807 = vmatprep.subr.mxu0 0.0
    %3808 = vmatpush1.msra.mxu0 %v3683
    %3809 = vmatprep.subr.mxu0 0.0
    %3810 = vmatpush1.msra.mxu0 %v3684
    %3811 = vmatprep.subr.mxu0 0.0
    %3812 = vmatpush1.msra.mxu0 %v3685
    %3813 = vmatprep.subr.mxu0 0.0
    %3814 = vmatpush1.msra.mxu0 %v3686
    %3815 = vmatprep.subr.mxu0 0.0
    %3816 = vmatpush1.msra.mxu0 %v3687
    %3817 = vmatprep.subr.mxu0 0.0
    %3818 = vmatpush1.msra.mxu0 %v3688
    %3819 = vmatprep.subr.mxu0 0.0
    %3820 = vmatpush1.msra.mxu0 %v3689
    %3821 = vmatprep.subr.mxu0 0.0
    %3822 = vmatpush1.msra.mxu0 %v3690
    %3823 = vmatprep.subr.mxu0 0.0
    %3824 = vmatpush1.msra.mxu0 %v3691
    %3825 = vmatprep.subr.mxu0 0.0
    %3826 = vmatpush1.msra.mxu0 %v3692
    %3827 = vmatprep.mubr.f32.mxu0 %v3628
    %3828 = vmatmul.mubr.f32.gmra.mrb[0].mxu0 %v3627
    %v3829 = vpop.f32.mrb[0].mxu0
    %v3830 = vadd.f32 %v3760, %v3829
    %v3831 = vpop.f32.mrb[0].mxu0
    %3832 = vdwg.mxu0
    %3833 = vst [vmem:[#allocation2 + $0x38] sm:$0xff] %v3830
    %vm3834 = vcmp.ge.s32.totalorder %v47, 64
    %vm3835 = vcmp.lt.s32.totalorder %v47, 96
    %vm3836 = vmand %vm3834, %vm3835
    %v3837 = vsel %vm3836, 1.0, 0.5
    %v3838 = vsel %vm3836, 0.0, 0.5
    %v3839 = vld [vmem:[%s3] sm:$0xff]
    %v3840 = vld [vmem:[%s3 + $0x8] sm:$0xff]
    %v3841 = vld [vmem:[%s3 + $0x10] sm:$0xff]
    %v3842 = vld [vmem:[%s3 + $0x18] sm:$0xff]
    %v3843 = vld [vmem:[%s4] sm:$0xff]
    %v3844 = vld [vmem:[%s4 + $0x8] sm:$0xff]
    %v3845 = vld [vmem:[%s4 + $0x10] sm:$0xff]
    %v3846 = vld [vmem:[%s4 + $0x18] sm:$0xff]
    %v3847 = vld [vmem:[%s5] sm:$0xff]
    %v3848 = vld [vmem:[%s5 + $0x8] sm:$0xff]
    %v3849 = vld [vmem:[%s5 + $0x10] sm:$0xff]
    %v3850 = vld [vmem:[%s5 + $0x18] sm:$0xff]
    %v3851 = vld [vmem:[%s6] sm:$0x1]
    %v3852 = vld [vmem:[#allocation2] sm:$0xff]
    %vm3853 = vcmask 261120
    %v3855 = vsel %vm3853, 0.0, 0
    %3857 = vmatprep.subr.mxu0 0.0
    %3858 = vmatpush1.msra.mxu0 %v3839
    %3859 = vmatprep.subr.mxu0 0.0
    %3860 = vmatpush1.msra.mxu0 %v3840
    %3861 = vmatprep.subr.mxu0 0.0
    %3862 = vmatpush1.msra.mxu0 %v3841
    %3863 = vmatprep.subr.mxu0 0.0
    %3864 = vmatpush1.msra.mxu0 %v3842
    %3865 = vmatprep.subr.mxu0 0.0
    %3866 = vmatpush1.msra.mxu0 0.0
    %3867 = vmatprep.subr.mxu0 0.0
    %3868 = vmatpush1.msra.mxu0 0.0
    %3869 = vmatprep.subr.mxu0 0.0
    %3870 = vmatpush1.msra.mxu0 0.0
    %3871 = vmatprep.subr.mxu0 0.0
    %3872 = vmatpush1.msra.mxu0 0.0
    %3873 = vmatprep.subr.mxu0 0.0
    %3874 = vmatpush1.msra.mxu0 0.0
    %3875 = vmatprep.subr.mxu0 0.0
    %3876 = vmatpush1.msra.mxu0 0.0
    %3877 = vmatprep.subr.mxu0 0.0
    %3878 = vmatpush1.msra.mxu0 0.0
    %3879 = vmatprep.subr.mxu0 0.0
    %3880 = vmatpush1.msra.mxu0 0.0
    %3881 = vmatprep.subr.mxu0 0.0
    %3882 = vmatpush1.msra.mxu0 0.0
    %3883 = vmatprep.subr.mxu0 0.0
    %3884 = vmatpush1.msra.mxu0 0.0
    %3885 = vmatprep.subr.mxu0 0.0
    %3886 = vmatpush1.msra.mxu0 0.0
    %3887 = vmatprep.subr.mxu0 0.0
    %3888 = vmatpush1.msra.mxu0 0.0
    %3889 = vmatprep.subr.mxu0 0.0
    %3890 = vmatpush1.msra.mxu0 0.0
    %3891 = vmatprep.subr.mxu0 0.0
    %3892 = vmatpush1.msra.mxu0 0.0
    %3893 = vmatprep.subr.mxu0 0.0
    %3894 = vmatpush1.msra.mxu0 0.0
    %3895 = vmatprep.subr.mxu0 0.0
    %3896 = vmatpush1.msra.mxu0 0.0
    %3897 = vmatprep.subr.mxu0 0.0
    %3898 = vmatpush1.msra.mxu0 0.0
    %3899 = vmatprep.subr.mxu0 0.0
    %3900 = vmatpush1.msra.mxu0 0.0
    %3901 = vmatprep.subr.mxu0 0.0
    %3902 = vmatpush1.msra.mxu0 0.0
    %3903 = vmatprep.subr.mxu0 0.0
    %3904 = vmatpush1.msra.mxu0 0.0
    %3905 = vmatprep.subr.mxu0 0.0
    %3906 = vmatpush1.msra.mxu0 0.0
    %3907 = vmatprep.subr.mxu0 0.0
    %3908 = vmatpush1.msra.mxu0 0.0
    %3909 = vmatprep.subr.mxu0 0.0
    %3910 = vmatpush1.msra.mxu0 0.0
    %3911 = vmatprep.subr.mxu0 0.0
    %3912 = vmatpush1.msra.mxu0 0.0
    %3913 = vmatprep.subr.mxu0 0.0
    %3914 = vmatpush1.msra.mxu0 0.0
    %3915 = vmatprep.subr.mxu0 0.0
    %3916 = vmatpush1.msra.mxu0 0.0
    %3917 = vmatprep.subr.mxu0 0.0
    %3918 = vmatpush1.msra.mxu0 0.0
    %3919 = vmatprep.subr.mxu0 0.0
    %3920 = vmatpush1.msra.mxu0 0.0
    %3921 = vmatprep.mubr.f32.mxu0 0.0
    %3922 = vmatmul.mubr.f32.gmra.mrb[0].mxu0 %v3855
    %v3923 = vpop.f32.mrb[0].mxu0
    %v3924 = vadd.f32 0.0, %v3923
    %v3925 = vpop.f32.mrb[0].mxu0
    %3926 = vdwg.mxu0
    %v3927 = vadd.f32 %v3852, %v3924
    %v3928 = vmul.f32 %v3927, %v3837
    %v3929 = vtanh.pop %v3928
    %v3930 = vmul.f32 %v3929, %v3837
    %v3931 = vadd.f32 %v3930, %v3838
    %v3932 = vmul.f32 %v3931, 0.0
    %3934 = vrot.lane.b32.xlu0 %v3931, 64
    %v3935 = vpop.permute.xlu0 %3934
    %v3937 = vmul.f32 %v3931, %v3935
    %3939 = vrot.lane.b32.xlu0 %v3937, 32
    %v3940 = vpop.permute.xlu0 %3939
    %v3942 = vadd.f32 %v3932, %v3940
    %v3943 = vtanh.pop %v3942
    %3945 = vrot.lane.b32.xlu0 %v3943, 64
    %v3946 = vpop.permute.xlu0 %3945
    %v3948 = vmul.f32 %v3931, %v3946
    %s3949 = scalar_lea.vmem [#allocation2], 8
    %v3950 = vld [vmem:[%s3949] sm:$0xff]
    %3952 = vrot.lane.b32.xlu0 %v3948, 32
    %v3953 = vpop.permute.xlu0 %3952
    %v3954 = vsel %vm3853, %v3953, 0
    %3956 = vmatprep.subr.mxu0 0.0
    %3957 = vmatpush1.msra.mxu0 %v3839
    %3958 = vmatprep.subr.mxu0 0.0
    %3959 = vmatpush1.msra.mxu0 %v3840
    %3960 = vmatprep.subr.mxu0 0.0
    %3961 = vmatpush1.msra.mxu0 %v3841
    %3962 = vmatprep.subr.mxu0 0.0
    %3963 = vmatpush1.msra.mxu0 %v3842
    %3964 = vmatprep.subr.mxu0 0.0
    %3965 = vmatpush1.msra.mxu0 0.0
    %3966 = vmatprep.subr.mxu0 0.0
    %3967 = vmatpush1.msra.mxu0 0.0
    %3968 = vmatprep.subr.mxu0 0.0
    %3969 = vmatpush1.msra.mxu0 0.0
    %3970 = vmatprep.subr.mxu0 0.0
    %3971 = vmatpush1.msra.mxu0 0.0
    %3972 = vmatprep.subr.mxu0 0.0
    %3973 = vmatpush1.msra.mxu0 0.0
    %3974 = vmatprep.subr.mxu0 0.0
    %3975 = vmatpush1.msra.mxu0 0.0
    %3976 = vmatprep.subr.mxu0 0.0
    %3977 = vmatpush1.msra.mxu0 0.0
    %3978 = vmatprep.subr.mxu0 0.0
    %3979 = vmatpush1.msra.mxu0 0.0
    %3980 = vmatprep.subr.mxu0 0.0
    %3981 = vmatpush1.msra.mxu0 0.0
    %3982 = vmatprep.subr.mxu0 0.0
    %3983 = vmatpush1.msra.mxu0 0.0
    %3984 = vmatprep.subr.mxu0 0.0
    %3985 = vmatpush1.msra.mxu0 0.0
    %3986 = vmatprep.subr.mxu0 0.0
    %3987 = vmatpush1.msra.mxu0 0.0
    %3988 = vmatprep.subr.mxu0 0.0
    %3989 = vmatpush1.msra.mxu0 0.0
    %3990 = vmatprep.subr.mxu0 0.0
    %3991 = vmatpush1.msra.mxu0 0.0
    %3992 = vmatprep.subr.mxu0 0.0
    %3993 = vmatpush1.msra.mxu0 0.0
    %3994 = vmatprep.subr.mxu0 0.0
    %3995 = vmatpush1.msra.mxu0 0.0
    %3996 = vmatprep.subr.mxu0 0.0
    %3997 = vmatpush1.msra.mxu0 0.0
    %3998 = vmatprep.subr.mxu0 0.0
    %3999 = vmatpush1.msra.mxu0 0.0
    %4000 = vmatprep.subr.mxu0 0.0
    %4001 = vmatpush1.msra.mxu0 0.0
    %4002 = vmatprep.subr.mxu0 0.0
    %4003 = vmatpush1.msra.mxu0 0.0
    %4004 = vmatprep.subr.mxu0 0.0
    %4005 = vmatpush1.msra.mxu0 0.0
    %4006 = vmatprep.subr.mxu0 0.0
    %4007 = vmatpush1.msra.mxu0 0.0
    %4008 = vmatprep.subr.mxu0 0.0
    %4009 = vmatpush1.msra.mxu0 0.0
    %4010 = vmatprep.subr.mxu0 0.0
    %4011 = vmatpush1.msra.mxu0 0.0
    %4012 = vmatprep.subr.mxu0 0.0
    %4013 = vmatpush1.msra.mxu0 0.0
    %4014 = vmatprep.subr.mxu0 0.0
    %4015 = vmatpush1.msra.mxu0 0.0
    %4016 = vmatprep.subr.mxu0 0.0
    %4017 = vmatpush1.msra.mxu0 0.0
    %4018 = vmatprep.subr.mxu0 0.0
    %4019 = vmatpush1.msra.mxu0 0.0
    %4020 = vmatprep.mubr.f32.mxu0 0.0
    %4021 = vmatmul.mubr.f32.gmra.mrb[0].mxu0 %v3954
    %v4022 = vpop.f32.mrb[0].mxu0
    %v4023 = vadd.f32 0.0, %v4022
    %v4024 = vpop.f32.mrb[0].mxu0
    %4025 = vdwg.mxu0
    %v4026 = vadd.f32 %v3950, %v4023
    %v4027 = vmul.f32 %v4026, %v3837
    %v4028 = vtanh.pop %v4027
    %v4029 = vmul.f32 %v4028, %v3837
    %v4030 = vadd.f32 %v4029, %v3838
    %v4031 = vmul.f32 %v4030, %v3942
    %4033 = vrot.lane.b32.xlu0 %v4030, 64
    %v4034 = vpop.permute.xlu0 %4033
    %v4036 = vmul.f32 %v4030, %v4034
    %4038 = vrot.lane.b32.xlu0 %v4036, 32
    %v4039 = vpop.permute.xlu0 %4038
    %v4041 = vadd.f32 %v4031, %v4039
    %v4042 = vtanh.pop %v4041
    %4044 = vrot.lane.b32.xlu0 %v4042, 64
    %v4045 = vpop.permute.xlu0 %4044
    %v4047 = vmul.f32 %v4030, %v4045
    %4048 = vmatprep.subr.mxu0 0.0
    %4049 = vmatpush1.msra.mxu0 %v3847
    %4050 = vmatprep.subr.mxu0 0.0
    %4051 = vmatpush1.msra.mxu0 %v3848
    %4052 = vmatprep.subr.mxu0 0.0
    %4053 = vmatpush1.msra.mxu0 %v3849
    %4054 = vmatprep.subr.mxu0 0.0
    %4055 = vmatpush1.msra.mxu0 %v3850
    %4056 = vmatprep.subr.mxu0 0.0
    %4057 = vmatpush1.msra.mxu0 0.0
    %4058 = vmatprep.subr.mxu0 0.0
    %4059 = vmatpush1.msra.mxu0 0.0
    %4060 = vmatprep.subr.mxu0 0.0
    %4061 = vmatpush1.msra.mxu0 0.0
    %4062 = vmatprep.subr.mxu0 0.0
    %4063 = vmatpush1.msra.mxu0 0.0
    %4064 = vmatprep.subr.mxu0 0.0
    %4065 = vmatpush1.msra.mxu0 0.0
    %4066 = vmatprep.subr.mxu0 0.0
    %4067 = vmatpush1.msra.mxu0 0.0
    %4068 = vmatprep.subr.mxu0 0.0
    %4069 = vmatpush1.msra.mxu0 0.0
    %4070 = vmatprep.subr.mxu0 0.0
    %4071 = vmatpush1.msra.mxu0 0.0
    %4072 = vmatprep.subr.mxu0 0.0
    %4073 = vmatpush1.msra.mxu0 0.0
    %4074 = vmatprep.subr.mxu0 0.0
    %4075 = vmatpush1.msra.mxu0 0.0
    %4076 = vmatprep.subr.mxu0 0.0
    %4077 = vmatpush1.msra.mxu0 0.0
    %4078 = vmatprep.subr.mxu0 0.0
    %4079 = vmatpush1.msra.mxu0 0.0
    %4080 = vmatprep.subr.mxu0 0.0
    %4081 = vmatpush1.msra.mxu0 0.0
    %4082 = vmatprep.subr.mxu0 0.0
    %4083 = vmatpush1.msra.mxu0 0.0
    %4084 = vmatprep.subr.mxu0 0.0
    %4085 = vmatpush1.msra.mxu0 0.0
    %4086 = vmatprep.subr.mxu0 0.0
    %4087 = vmatpush1.msra.mxu0 0.0
    %4088 = vmatprep.subr.mxu0 0.0
    %4089 = vmatpush1.msra.mxu0 0.0
    %4090 = vmatprep.subr.mxu0 0.0
    %4091 = vmatpush1.msra.mxu0 0.0
    %4092 = vmatprep.subr.mxu0 0.0
    %4093 = vmatpush1.msra.mxu0 0.0
    %4094 = vmatprep.subr.mxu0 0.0
    %4095 = vmatpush1.msra.mxu0 0.0
    %4096 = vmatprep.subr.mxu0 0.0
    %4097 = vmatpush1.msra.mxu0 0.0
    %4098 = vmatprep.subr.mxu0 0.0
    %4099 = vmatpush1.msra.mxu0 0.0
    %4100 = vmatprep.subr.mxu0 0.0
    %4101 = vmatpush1.msra.mxu0 0.0
    %4102 = vmatprep.subr.mxu0 0.0
    %4103 = vmatpush1.msra.mxu0 0.0
    %4104 = vmatprep.subr.mxu0 0.0
    %4105 = vmatpush1.msra.mxu0 0.0
    %4106 = vmatprep.subr.mxu0 0.0
    %4107 = vmatpush1.msra.mxu0 0.0
    %4108 = vmatprep.subr.mxu0 0.0
    %4109 = vmatpush1.msra.mxu0 0.0
    %4110 = vmatprep.subr.mxu0 0.0
    %4111 = vmatpush1.msra.mxu0 0.0
    %4112 = vmatprep.mubr.f32.mxu0 0.0
    %4113 = vmatmul.mubr.f32.gmra.mrb[0].mxu0 %v3855
    %v4114 = vpop.f32.mrb[0].mxu0
    %v4115 = vadd.f32 0.0, %v4114
    %v4116 = vpop.f32.mrb[0].mxu0
    %4117 = vdwg.mxu0
    %4118 = vmatprep.subr.mxu0 0.0
    %4119 = vmatpush1.msra.mxu0 %v3843
    %4120 = vmatprep.subr.mxu0 0.0
    %4121 = vmatpush1.msra.mxu0 %v3844
    %4122 = vmatprep.subr.mxu0 0.0
    %4123 = vmatpush1.msra.mxu0 %v3845
    %4124 = vmatprep.subr.mxu0 0.0
    %4125 = vmatpush1.msra.mxu0 %v3846
    %4126 = vmatprep.subr.mxu0 0.0
    %4127 = vmatpush1.msra.mxu0 0.0
    %4128 = vmatprep.subr.mxu0 0.0
    %4129 = vmatpush1.msra.mxu0 0.0
    %4130 = vmatprep.subr.mxu0 0.0
    %4131 = vmatpush1.msra.mxu0 0.0
    %4132 = vmatprep.subr.mxu0 0.0
    %4133 = vmatpush1.msra.mxu0 0.0
    %4134 = vmatprep.subr.mxu0 0.0
    %4135 = vmatpush1.msra.mxu0 0.0
    %4136 = vmatprep.subr.mxu0 0.0
    %4137 = vmatpush1.msra.mxu0 0.0
    %4138 = vmatprep.subr.mxu0 0.0
    %4139 = vmatpush1.msra.mxu0 0.0
    %4140 = vmatprep.subr.mxu0 0.0
    %4141 = vmatpush1.msra.mxu0 0.0
    %4142 = vmatprep.subr.mxu0 0.0
    %4143 = vmatpush1.msra.mxu0 0.0
    %4144 = vmatprep.subr.mxu0 0.0
    %4145 = vmatpush1.msra.mxu0 0.0
    %4146 = vmatprep.subr.mxu0 0.0
    %4147 = vmatpush1.msra.mxu0 0.0
    %4148 = vmatprep.subr.mxu0 0.0
    %4149 = vmatpush1.msra.mxu0 0.0
    %4150 = vmatprep.subr.mxu0 0.0
    %4151 = vmatpush1.msra.mxu0 0.0
    %4152 = vmatprep.subr.mxu0 0.0
    %4153 = vmatpush1.msra.mxu0 0.0
    %4154 = vmatprep.subr.mxu0 0.0
    %4155 = vmatpush1.msra.mxu0 0.0
    %4156 = vmatprep.subr.mxu0 0.0
    %4157 = vmatpush1.msra.mxu0 0.0
    %4158 = vmatprep.subr.mxu0 0.0
    %4159 = vmatpush1.msra.mxu0 0.0
    %4160 = vmatprep.subr.mxu0 0.0
    %4161 = vmatpush1.msra.mxu0 0.0
    %4162 = vmatprep.subr.mxu0 0.0
    %4163 = vmatpush1.msra.mxu0 0.0
    %4164 = vmatprep.subr.mxu0 0.0
    %4165 = vmatpush1.msra.mxu0 0.0
    %4166 = vmatprep.subr.mxu0 0.0
    %4167 = vmatpush1.msra.mxu0 0.0
    %4168 = vmatprep.subr.mxu0 0.0
    %4169 = vmatpush1.msra.mxu0 0.0
    %4170 = vmatprep.subr.mxu0 0.0
    %4171 = vmatpush1.msra.mxu0 0.0
    %4172 = vmatprep.subr.mxu0 0.0
    %4173 = vmatpush1.msra.mxu0 0.0
    %4174 = vmatprep.subr.mxu0 0.0
    %4175 = vmatpush1.msra.mxu0 0.0
    %4176 = vmatprep.subr.mxu0 0.0
    %4177 = vmatpush1.msra.mxu0 0.0
    %4178 = vmatprep.subr.mxu0 0.0
    %4179 = vmatpush1.msra.mxu0 0.0
    %4180 = vmatprep.subr.mxu0 0.0
    %4181 = vmatpush1.msra.mxu0 0.0
    %4182 = vmatprep.mubr.f32.mxu0 0.0
    %4183 = vmatmul.mubr.f32.gmra.mrb[0].mxu0 %v3954
    %v4184 = vpop.f32.mrb[0].mxu0
    %v4185 = vadd.f32 %v4115, %v4184
    %v4186 = vpop.f32.mrb[0].mxu0
    %4187 = vdwg.mxu0
    %v4189 = vlaneseq
    %v4190 = vshrl.u32 %v4189, 7
    %v4191 = vsub.s32 0, %v4190
    %v4192 = vrot.slane %v3851, %v4191
    %v4194 = vadd.f32 %v4185, %v4192
    %v4195 = vmul.f32 %v4194, %v3837
    %v4196 = vtanh.pop %v4195
    %v4197 = vmul.f32 %v4196, %v3837
    %v4198 = vadd.f32 %v4197, %v3838
    %v4199 = vmul.f32 %v4198, 0.0
    %4201 = vrot.lane.b32.xlu0 %v4198, 64
    %v4202 = vpop.permute.xlu0 %4201
    %v4204 = vmul.f32 %v4198, %v4202
    %4206 = vrot.lane.b32.xlu0 %v4204, 32
    %v4207 = vpop.permute.xlu0 %4206
    %v4209 = vadd.f32 %v4199, %v4207
    %v4210 = vtanh.pop %v4209
    %4212 = vrot.lane.b32.xlu0 %v4210, 64
    %v4213 = vpop.permute.xlu0 %4212
    %v4215 = vmul.f32 %v4198, %v4213
    %s4216 = scalar_lea.vmem [#allocation2], 16
    %v4217 = vld [vmem:[%s4216] sm:$0xff]
    %4219 = vrot.lane.b32.xlu0 %v4047, 32
    %v4220 = vpop.permute.xlu0 %4219
    %v4221 = vsel %vm3853, %v4220, 0
    %4223 = vmatprep.subr.mxu0 0.0
    %4224 = vmatpush1.msra.mxu0 %v3839
    %4225 = vmatprep.subr.mxu0 0.0
    %4226 = vmatpush1.msra.mxu0 %v3840
    %4227 = vmatprep.subr.mxu0 0.0
    %4228 = vmatpush1.msra.mxu0 %v3841
    %4229 = vmatprep.subr.mxu0 0.0
    %4230 = vmatpush1.msra.mxu0 %v3842
    %4231 = vmatprep.subr.mxu0 0.0
    %4232 = vmatpush1.msra.mxu0 0.0
    %4233 = vmatprep.subr.mxu0 0.0
    %4234 = vmatpush1.msra.mxu0 0.0
    %4235 = vmatprep.subr.mxu0 0.0
    %4236 = vmatpush1.msra.mxu0 0.0
    %4237 = vmatprep.subr.mxu0 0.0
    %4238 = vmatpush1.msra.mxu0 0.0
    %4239 = vmatprep.subr.mxu0 0.0
    %4240 = vmatpush1.msra.mxu0 0.0
    %4241 = vmatprep.subr.mxu0 0.0
    %4242 = vmatpush1.msra.mxu0 0.0
    %4243 = vmatprep.subr.mxu0 0.0
    %4244 = vmatpush1.msra.mxu0 0.0
    %4245 = vmatprep.subr.mxu0 0.0
    %4246 = vmatpush1.msra.mxu0 0.0
    %4247 = vmatprep.subr.mxu0 0.0
    %4248 = vmatpush1.msra.mxu0 0.0
    %4249 = vmatprep.subr.mxu0 0.0
    %4250 = vmatpush1.msra.mxu0 0.0
    %4251 = vmatprep.subr.mxu0 0.0
    %4252 = vmatpush1.msra.mxu0 0.0
    %4253 = vmatprep.subr.mxu0 0.0
    %4254 = vmatpush1.msra.mxu0 0.0
    %4255 = vmatprep.subr.mxu0 0.0
    %4256 = vmatpush1.msra.mxu0 0.0
    %4257 = vmatprep.subr.mxu0 0.0
    %4258 = vmatpush1.msra.mxu0 0.0
    %4259 = vmatprep.subr.mxu0 0.0
    %4260 = vmatpush1.msra.mxu0 0.0
    %4261 = vmatprep.subr.mxu0 0.0
    %4262 = vmatpush1.msra.mxu0 0.0
    %4263 = vmatprep.subr.mxu0 0.0
    %4264 = vmatpush1.msra.mxu0 0.0
    %4265 = vmatprep.subr.mxu0 0.0
    %4266 = vmatpush1.msra.mxu0 0.0
    %4267 = vmatprep.subr.mxu0 0.0
    %4268 = vmatpush1.msra.mxu0 0.0
    %4269 = vmatprep.subr.mxu0 0.0
    %4270 = vmatpush1.msra.mxu0 0.0
    %4271 = vmatprep.subr.mxu0 0.0
    %4272 = vmatpush1.msra.mxu0 0.0
    %4273 = vmatprep.subr.mxu0 0.0
    %4274 = vmatpush1.msra.mxu0 0.0
    %4275 = vmatprep.subr.mxu0 0.0
    %4276 = vmatpush1.msra.mxu0 0.0
    %4277 = vmatprep.subr.mxu0 0.0
    %4278 = vmatpush1.msra.mxu0 0.0
    %4279 = vmatprep.subr.mxu0 0.0
    %4280 = vmatpush1.msra.mxu0 0.0
    %4281 = vmatprep.subr.mxu0 0.0
    %4282 = vmatpush1.msra.mxu0 0.0
    %4283 = vmatprep.subr.mxu0 0.0
    %4284 = vmatpush1.msra.mxu0 0.0
    %4285 = vmatprep.subr.mxu0 0.0
    %4286 = vmatpush1.msra.mxu0 0.0
    %4287 = vmatprep.mubr.f32.mxu0 0.0
    %4288 = vmatmul.mubr.f32.gmra.mrb[0].mxu0 %v4221
    %v4289 = vpop.f32.mrb[0].mxu0
    %v4290 = vadd.f32 0.0, %v4289
    %v4291 = vpop.f32.mrb[0].mxu0
    %4292 = vdwg.mxu0
    %v4293 = vadd.f32 %v4217, %v4290
    %v4294 = vmul.f32 %v4293, %v3837
    %v4295 = vtanh.pop %v4294
    %v4296 = vmul.f32 %v4295, %v3837
    %v4297 = vadd.f32 %v4296, %v3838
    %v4298 = vmul.f32 %v4297, %v4041
    %4300 = vrot.lane.b32.xlu0 %v4297, 64
    %v4301 = vpop.permute.xlu0 %4300
    %v4303 = vmul.f32 %v4297, %v4301
    %4305 = vrot.lane.b32.xlu0 %v4303, 32
    %v4306 = vpop.permute.xlu0 %4305
    %v4308 = vadd.f32 %v4298, %v4306
    %v4309 = vtanh.pop %v4308
    %4311 = vrot.lane.b32.xlu0 %v4309, 64
    %v4312 = vpop.permute.xlu0 %4311
    %v4314 = vmul.f32 %v4297, %v4312
    %4316 = vrot.lane.b32.xlu0 %v4215, 32
    %v4317 = vpop.permute.xlu0 %4316
    %v4318 = vsel %vm3853, %v4317, 0
    %4320 = vmatprep.subr.mxu0 0.0
    %4321 = vmatpush1.msra.mxu0 %v3847
    %4322 = vmatprep.subr.mxu0 0.0
    %4323 = vmatpush1.msra.mxu0 %v3848
    %4324 = vmatprep.subr.mxu0 0.0
    %4325 = vmatpush1.msra.mxu0 %v3849
    %4326 = vmatprep.subr.mxu0 0.0
    %4327 = vmatpush1.msra.mxu0 %v3850
    %4328 = vmatprep.subr.mxu0 0.0
    %4329 = vmatpush1.msra.mxu0 0.0
    %4330 = vmatprep.subr.mxu0 0.0
    %4331 = vmatpush1.msra.mxu0 0.0
    %4332 = vmatprep.subr.mxu0 0.0
    %4333 = vmatpush1.msra.mxu0 0.0
    %4334 = vmatprep.subr.mxu0 0.0
    %4335 = vmatpush1.msra.mxu0 0.0
    %4336 = vmatprep.subr.mxu0 0.0
    %4337 = vmatpush1.msra.mxu0 0.0
    %4338 = vmatprep.subr.mxu0 0.0
    %4339 = vmatpush1.msra.mxu0 0.0
    %4340 = vmatprep.subr.mxu0 0.0
    %4341 = vmatpush1.msra.mxu0 0.0
    %4342 = vmatprep.subr.mxu0 0.0
    %4343 = vmatpush1.msra.mxu0 0.0
    %4344 = vmatprep.subr.mxu0 0.0
    %4345 = vmatpush1.msra.mxu0 0.0
    %4346 = vmatprep.subr.mxu0 0.0
    %4347 = vmatpush1.msra.mxu0 0.0
    %4348 = vmatprep.subr.mxu0 0.0
    %4349 = vmatpush1.msra.mxu0 0.0
    %4350 = vmatprep.subr.mxu0 0.0
    %4351 = vmatpush1.msra.mxu0 0.0
    %4352 = vmatprep.subr.mxu0 0.0
    %4353 = vmatpush1.msra.mxu0 0.0
    %4354 = vmatprep.subr.mxu0 0.0
    %4355 = vmatpush1.msra.mxu0 0.0
    %4356 = vmatprep.subr.mxu0 0.0
    %4357 = vmatpush1.msra.mxu0 0.0
    %4358 = vmatprep.subr.mxu0 0.0
    %4359 = vmatpush1.msra.mxu0 0.0
    %4360 = vmatprep.subr.mxu0 0.0
    %4361 = vmatpush1.msra.mxu0 0.0
    %4362 = vmatprep.subr.mxu0 0.0
    %4363 = vmatpush1.msra.mxu0 0.0
    %4364 = vmatprep.subr.mxu0 0.0
    %4365 = vmatpush1.msra.mxu0 0.0
    %4366 = vmatprep.subr.mxu0 0.0
    %4367 = vmatpush1.msra.mxu0 0.0
    %4368 = vmatprep.subr.mxu0 0.0
    %4369 = vmatpush1.msra.mxu0 0.0
    %4370 = vmatprep.subr.mxu0 0.0
    %4371 = vmatpush1.msra.mxu0 0.0
    %4372 = vmatprep.subr.mxu0 0.0
    %4373 = vmatpush1.msra.mxu0 0.0
    %4374 = vmatprep.subr.mxu0 0.0
    %4375 = vmatpush1.msra.mxu0 0.0
    %4376 = vmatprep.subr.mxu0 0.0
    %4377 = vmatpush1.msra.mxu0 0.0
    %4378 = vmatprep.subr.mxu0 0.0
    %4379 = vmatpush1.msra.mxu0 0.0
    %4380 = vmatprep.subr.mxu0 0.0
    %4381 = vmatpush1.msra.mxu0 0.0
    %4382 = vmatprep.subr.mxu0 0.0
    %4383 = vmatpush1.msra.mxu0 0.0
    %4384 = vmatprep.mubr.f32.mxu0 0.0
    %4385 = vmatmul.mubr.f32.gmra.mrb[0].mxu0 %v4318
    %v4386 = vpop.f32.mrb[0].mxu0
    %v4387 = vadd.f32 0.0, %v4386
    %v4388 = vpop.f32.mrb[0].mxu0
    %4389 = vdwg.mxu0
    %4390 = vmatprep.subr.mxu0 0.0
    %4391 = vmatpush1.msra.mxu0 %v3843
    %4392 = vmatprep.subr.mxu0 0.0
    %4393 = vmatpush1.msra.mxu0 %v3844
    %4394 = vmatprep.subr.mxu0 0.0
    %4395 = vmatpush1.msra.mxu0 %v3845
    %4396 = vmatprep.subr.mxu0 0.0
    %4397 = vmatpush1.msra.mxu0 %v3846
    %4398 = vmatprep.subr.mxu0 0.0
    %4399 = vmatpush1.msra.mxu0 0.0
    %4400 = vmatprep.subr.mxu0 0.0
    %4401 = vmatpush1.msra.mxu0 0.0
    %4402 = vmatprep.subr.mxu0 0.0
    %4403 = vmatpush1.msra.mxu0 0.0
    %4404 = vmatprep.subr.mxu0 0.0
    %4405 = vmatpush1.msra.mxu0 0.0
    %4406 = vmatprep.subr.mxu0 0.0
    %4407 = vmatpush1.msra.mxu0 0.0
    %4408 = vmatprep.subr.mxu0 0.0
    %4409 = vmatpush1.msra.mxu0 0.0
    %4410 = vmatprep.subr.mxu0 0.0
    %4411 = vmatpush1.msra.mxu0 0.0
    %4412 = vmatprep.subr.mxu0 0.0
    %4413 = vmatpush1.msra.mxu0 0.0
    %4414 = vmatprep.subr.mxu0 0.0
    %4415 = vmatpush1.msra.mxu0 0.0
    %4416 = vmatprep.subr.mxu0 0.0
    %4417 = vmatpush1.msra.mxu0 0.0
    %4418 = vmatprep.subr.mxu0 0.0
    %4419 = vmatpush1.msra.mxu0 0.0
    %4420 = vmatprep.subr.mxu0 0.0
    %4421 = vmatpush1.msra.mxu0 0.0
    %4422 = vmatprep.subr.mxu0 0.0
    %4423 = vmatpush1.msra.mxu0 0.0
    %4424 = vmatprep.subr.mxu0 0.0
    %4425 = vmatpush1.msra.mxu0 0.0
    %4426 = vmatprep.subr.mxu0 0.0
    %4427 = vmatpush1.msra.mxu0 0.0
    %4428 = vmatprep.subr.mxu0 0.0
    %4429 = vmatpush1.msra.mxu0 0.0
    %4430 = vmatprep.subr.mxu0 0.0
    %4431 = vmatpush1.msra.mxu0 0.0
    %4432 = vmatprep.subr.mxu0 0.0
    %4433 = vmatpush1.msra.mxu0 0.0
    %4434 = vmatprep.subr.mxu0 0.0
    %4435 = vmatpush1.msra.mxu0 0.0
    %4436 = vmatprep.subr.mxu0 0.0
    %4437 = vmatpush1.msra.mxu0 0.0
    %4438 = vmatprep.subr.mxu0 0.0
    %4439 = vmatpush1.msra.mxu0 0.0
    %4440 = vmatprep.subr.mxu0 0.0
    %4441 = vmatpush1.msra.mxu0 0.0
    %4442 = vmatprep.subr.mxu0 0.0
    %4443 = vmatpush1.msra.mxu0 0.0
    %4444 = vmatprep.subr.mxu0 0.0
    %4445 = vmatpush1.msra.mxu0 0.0
    %4446 = vmatprep.subr.mxu0 0.0
    %4447 = vmatpush1.msra.mxu0 0.0
    %4448 = vmatprep.subr.mxu0 0.0
    %4449 = vmatpush1.msra.mxu0 0.0
    %4450 = vmatprep.subr.mxu0 0.0
    %4451 = vmatpush1.msra.mxu0 0.0
    %4452 = vmatprep.subr.mxu0 0.0
    %4453 = vmatpush1.msra.mxu0 0.0
    %4454 = vmatprep.mubr.f32.mxu0 0.0
    %4455 = vmatmul.mubr.f32.gmra.mrb[0].mxu0 %v4221
    %v4456 = vpop.f32.mrb[0].mxu0
    %v4457 = vadd.f32 %v4387, %v4456
    %v4458 = vpop.f32.mrb[0].mxu0
    %4459 = vdwg.mxu0
    %v4460 = vadd.f32 %v4457, %v4192
    %v4461 = vmul.f32 %v4460, %v3837
    %v4462 = vtanh.pop %v4461
    %v4463 = vmul.f32 %v4462, %v3837
    %v4464 = vadd.f32 %v4463, %v3838
    %v4465 = vmul.f32 %v4464, %v4209
    %4467 = vrot.lane.b32.xlu0 %v4464, 64
    %v4468 = vpop.permute.xlu0 %4467
    %v4470 = vmul.f32 %v4464, %v4468
    %4472 = vrot.lane.b32.xlu0 %v4470, 32
    %v4473 = vpop.permute.xlu0 %4472
    %v4475 = vadd.f32 %v4465, %v4473
    %v4476 = vtanh.pop %v4475
    %4478 = vrot.lane.b32.xlu0 %v4476, 64
    %v4479 = vpop.permute.xlu0 %4478
    %v4481 = vmul.f32 %v4464, %v4479
    %s4482 = scalar_lea.vmem [#allocation2], 24
    %v4483 = vld [vmem:[%s4482] sm:$0xff]
    %4485 = vrot.lane.b32.xlu0 %v4314, 32
    %v4486 = vpop.permute.xlu0 %4485
    %v4487 = vsel %vm3853, %v4486, 0
    %4489 = vmatprep.subr.mxu0 0.0
    %4490 = vmatpush1.msra.mxu0 %v3839
    %4491 = vmatprep.subr.mxu0 0.0
    %4492 = vmatpush1.msra.mxu0 %v3840
    %4493 = vmatprep.subr.mxu0 0.0
    %4494 = vmatpush1.msra.mxu0 %v3841
    %4495 = vmatprep.subr.mxu0 0.0
    %4496 = vmatpush1.msra.mxu0 %v3842
    %4497 = vmatprep.subr.mxu0 0.0
    %4498 = vmatpush1.msra.mxu0 0.0
    %4499 = vmatprep.subr.mxu0 0.0
    %4500 = vmatpush1.msra.mxu0 0.0
    %4501 = vmatprep.subr.mxu0 0.0
    %4502 = vmatpush1.msra.mxu0 0.0
    %4503 = vmatprep.subr.mxu0 0.0
    %4504 = vmatpush1.msra.mxu0 0.0
    %4505 = vmatprep.subr.mxu0 0.0
    %4506 = vmatpush1.msra.mxu0 0.0
    %4507 = vmatprep.subr.mxu0 0.0
    %4508 = vmatpush1.msra.mxu0 0.0
    %4509 = vmatprep.subr.mxu0 0.0
    %4510 = vmatpush1.msra.mxu0 0.0
    %4511 = vmatprep.subr.mxu0 0.0
    %4512 = vmatpush1.msra.mxu0 0.0
    %4513 = vmatprep.subr.mxu0 0.0
    %4514 = vmatpush1.msra.mxu0 0.0
    %4515 = vmatprep.subr.mxu0 0.0
    %4516 = vmatpush1.msra.mxu0 0.0
    %4517 = vmatprep.subr.mxu0 0.0
    %4518 = vmatpush1.msra.mxu0 0.0
    %4519 = vmatprep.subr.mxu0 0.0
    %4520 = vmatpush1.msra.mxu0 0.0
    %4521 = vmatprep.subr.mxu0 0.0
    %4522 = vmatpush1.msra.mxu0 0.0
    %4523 = vmatprep.subr.mxu0 0.0
    %4524 = vmatpush1.msra.mxu0 0.0
    %4525 = vmatprep.subr.mxu0 0.0
    %4526 = vmatpush1.msra.mxu0 0.0
    %4527 = vmatprep.subr.mxu0 0.0
    %4528 = vmatpush1.msra.mxu0 0.0
    %4529 = vmatprep.subr.mxu0 0.0
    %4530 = vmatpush1.msra.mxu0 0.0
    %4531 = vmatprep.subr.mxu0 0.0
    %4532 = vmatpush1.msra.mxu0 0.0
    %4533 = vmatprep.subr.mxu0 0.0
    %4534 = vmatpush1.msra.mxu0 0.0
    %4535 = vmatprep.subr.mxu0 0.0
    %4536 = vmatpush1.msra.mxu0 0.0
    %4537 = vmatprep.subr.mxu0 0.0
    %4538 = vmatpush1.msra.mxu0 0.0
    %4539 = vmatprep.subr.mxu0 0.0
    %4540 = vmatpush1.msra.mxu0 0.0
    %4541 = vmatprep.subr.mxu0 0.0
    %4542 = vmatpush1.msra.mxu0 0.0
    %4543 = vmatprep.subr.mxu0 0.0
    %4544 = vmatpush1.msra.mxu0 0.0
    %4545 = vmatprep.subr.mxu0 0.0
    %4546 = vmatpush1.msra.mxu0 0.0
    %4547 = vmatprep.subr.mxu0 0.0
    %4548 = vmatpush1.msra.mxu0 0.0
    %4549 = vmatprep.subr.mxu0 0.0
    %4550 = vmatpush1.msra.mxu0 0.0
    %4551 = vmatprep.subr.mxu0 0.0
    %4552 = vmatpush1.msra.mxu0 0.0
    %4553 = vmatprep.mubr.f32.mxu0 0.0
    %4554 = vmatmul.mubr.f32.gmra.mrb[0].mxu0 %v4487
    %v4555 = vpop.f32.mrb[0].mxu0
    %v4556 = vadd.f32 0.0, %v4555
    %v4557 = vpop.f32.mrb[0].mxu0
    %4558 = vdwg.mxu0
    %v4559 = vadd.f32 %v4483, %v4556
    %v4560 = vmul.f32 %v4559, %v3837
    %v4561 = vtanh.pop %v4560
    %v4562 = vmul.f32 %v4561, %v3837
    %v4563 = vadd.f32 %v4562, %v3838
    %v4564 = vmul.f32 %v4563, %v4308
    %4566 = vrot.lane.b32.xlu0 %v4563, 64
    %v4567 = vpop.permute.xlu0 %4566
    %v4569 = vmul.f32 %v4563, %v4567
    %4571 = vrot.lane.b32.xlu0 %v4569, 32
    %v4572 = vpop.permute.xlu0 %4571
    %v4574 = vadd.f32 %v4564, %v4572
    %v4575 = vtanh.pop %v4574
    %4577 = vrot.lane.b32.xlu0 %v4575, 64
    %v4578 = vpop.permute.xlu0 %4577
    %v4580 = vmul.f32 %v4563, %v4578
    %4582 = vrot.lane.b32.xlu0 %v4481, 32
    %v4583 = vpop.permute.xlu0 %4582
    %v4584 = vsel %vm3853, %v4583, 0
    %4586 = vmatprep.subr.mxu0 0.0
    %4587 = vmatpush1.msra.mxu0 %v3847
    %4588 = vmatprep.subr.mxu0 0.0
    %4589 = vmatpush1.msra.mxu0 %v3848
    %4590 = vmatprep.subr.mxu0 0.0
    %4591 = vmatpush1.msra.mxu0 %v3849
    %4592 = vmatprep.subr.mxu0 0.0
    %4593 = vmatpush1.msra.mxu0 %v3850
    %4594 = vmatprep.subr.mxu0 0.0
    %4595 = vmatpush1.msra.mxu0 0.0
    %4596 = vmatprep.subr.mxu0 0.0
    %4597 = vmatpush1.msra.mxu0 0.0
    %4598 = vmatprep.subr.mxu0 0.0
    %4599 = vmatpush1.msra.mxu0 0.0
    %4600 = vmatprep.subr.mxu0 0.0
    %4601 = vmatpush1.msra.mxu0 0.0
    %4602 = vmatprep.subr.mxu0 0.0
    %4603 = vmatpush1.msra.mxu0 0.0
    %4604 = vmatprep.subr.mxu0 0.0
    %4605 = vmatpush1.msra.mxu0 0.0
    %4606 = vmatprep.subr.mxu0 0.0
    %4607 = vmatpush1.msra.mxu0 0.0
    %4608 = vmatprep.subr.mxu0 0.0
    %4609 = vmatpush1.msra.mxu0 0.0
    %4610 = vmatprep.subr.mxu0 0.0
    %4611 = vmatpush1.msra.mxu0 0.0
    %4612 = vmatprep.subr.mxu0 0.0
    %4613 = vmatpush1.msra.mxu0 0.0
    %4614 = vmatprep.subr.mxu0 0.0
    %4615 = vmatpush1.msra.mxu0 0.0
    %4616 = vmatprep.subr.mxu0 0.0
    %4617 = vmatpush1.msra.mxu0 0.0
    %4618 = vmatprep.subr.mxu0 0.0
    %4619 = vmatpush1.msra.mxu0 0.0
    %4620 = vmatprep.subr.mxu0 0.0
    %4621 = vmatpush1.msra.mxu0 0.0
    %4622 = vmatprep.subr.mxu0 0.0
    %4623 = vmatpush1.msra.mxu0 0.0
    %4624 = vmatprep.subr.mxu0 0.0
    %4625 = vmatpush1.msra.mxu0 0.0
    %4626 = vmatprep.subr.mxu0 0.0
    %4627 = vmatpush1.msra.mxu0 0.0
    %4628 = vmatprep.subr.mxu0 0.0
    %4629 = vmatpush1.msra.mxu0 0.0
    %4630 = vmatprep.subr.mxu0 0.0
    %4631 = vmatpush1.msra.mxu0 0.0
    %4632 = vmatprep.subr.mxu0 0.0
    %4633 = vmatpush1.msra.mxu0 0.0
    %4634 = vmatprep.subr.mxu0 0.0
    %4635 = vmatpush1.msra.mxu0 0.0
    %4636 = vmatprep.subr.mxu0 0.0
    %4637 = vmatpush1.msra.mxu0 0.0
    %4638 = vmatprep.subr.mxu0 0.0
    %4639 = vmatpush1.msra.mxu0 0.0
    %4640 = vmatprep.subr.mxu0 0.0
    %4641 = vmatpush1.msra.mxu0 0.0
    %4642 = vmatprep.subr.mxu0 0.0
    %4643 = vmatpush1.msra.mxu0 0.0
    %4644 = vmatprep.subr.mxu0 0.0
    %4645 = vmatpush1.msra.mxu0 0.0
    %4646 = vmatprep.subr.mxu0 0.0
    %4647 = vmatpush1.msra.mxu0 0.0
    %4648 = vmatprep.subr.mxu0 0.0
    %4649 = vmatpush1.msra.mxu0 0.0
    %4650 = vmatprep.mubr.f32.mxu0 0.0
    %4651 = vmatmul.mubr.f32.gmra.mrb[0].mxu0 %v4584
    %v4652 = vpop.f32.mrb[0].mxu0
    %v4653 = vadd.f32 0.0, %v4652
    %v4654 = vpop.f32.mrb[0].mxu0
    %4655 = vdwg.mxu0
    %4656 = vmatprep.subr.mxu0 0.0
    %4657 = vmatpush1.msra.mxu0 %v3843
    %4658 = vmatprep.subr.mxu0 0.0
    %4659 = vmatpush1.msra.mxu0 %v3844
    %4660 = vmatprep.subr.mxu0 0.0
    %4661 = vmatpush1.msra.mxu0 %v3845
    %4662 = vmatprep.subr.mxu0 0.0
    %4663 = vmatpush1.msra.mxu0 %v3846
    %4664 = vmatprep.subr.mxu0 0.0
    %4665 = vmatpush1.msra.mxu0 0.0
    %4666 = vmatprep.subr.mxu0 0.0
    %4667 = vmatpush1.msra.mxu0 0.0
    %4668 = vmatprep.subr.mxu0 0.0
    %4669 = vmatpush1.msra.mxu0 0.0
    %4670 = vmatprep.subr.mxu0 0.0
    %4671 = vmatpush1.msra.mxu0 0.0
    %4672 = vmatprep.subr.mxu0 0.0
    %4673 = vmatpush1.msra.mxu0 0.0
    %4674 = vmatprep.subr.mxu0 0.0
    %4675 = vmatpush1.msra.mxu0 0.0
    %4676 = vmatprep.subr.mxu0 0.0
    %4677 = vmatpush1.msra.mxu0 0.0
    %4678 = vmatprep.subr.mxu0 0.0
    %4679 = vmatpush1.msra.mxu0 0.0
    %4680 = vmatprep.subr.mxu0 0.0
    %4681 = vmatpush1.msra.mxu0 0.0
    %4682 = vmatprep.subr.mxu0 0.0
    %4683 = vmatpush1.msra.mxu0 0.0
    %4684 = vmatprep.subr.mxu0 0.0
    %4685 = vmatpush1.msra.mxu0 0.0
    %4686 = vmatprep.subr.mxu0 0.0
    %4687 = vmatpush1.msra.mxu0 0.0
    %4688 = vmatprep.subr.mxu0 0.0
    %4689 = vmatpush1.msra.mxu0 0.0
    %4690 = vmatprep.subr.mxu0 0.0
    %4691 = vmatpush1.msra.mxu0 0.0
    %4692 = vmatprep.subr.mxu0 0.0
    %4693 = vmatpush1.msra.mxu0 0.0
    %4694 = vmatprep.subr.mxu0 0.0
    %4695 = vmatpush1.msra.mxu0 0.0
    %4696 = vmatprep.subr.mxu0 0.0
    %4697 = vmatpush1.msra.mxu0 0.0
    %4698 = vmatprep.subr.mxu0 0.0
    %4699 = vmatpush1.msra.mxu0 0.0
    %4700 = vmatprep.subr.mxu0 0.0
    %4701 = vmatpush1.msra.mxu0 0.0
    %4702 = vmatprep.subr.mxu0 0.0
    %4703 = vmatpush1.msra.mxu0 0.0
    %4704 = vmatprep.subr.mxu0 0.0
    %4705 = vmatpush1.msra.mxu0 0.0
    %4706 = vmatprep.subr.mxu0 0.0
    %4707 = vmatpush1.msra.mxu0 0.0
    %4708 = vmatprep.subr.mxu0 0.0
    %4709 = vmatpush1.msra.mxu0 0.0
    %4710 = vmatprep.subr.mxu0 0.0
    %4711 = vmatpush1.msra.mxu0 0.0
    %4712 = vmatprep.subr.mxu0 0.0
    %4713 = vmatpush1.msra.mxu0 0.0
    %4714 = vmatprep.subr.mxu0 0.0
    %4715 = vmatpush1.msra.mxu0 0.0
    %4716 = vmatprep.subr.mxu0 0.0
    %4717 = vmatpush1.msra.mxu0 0.0
    %4718 = vmatprep.subr.mxu0 0.0
    %4719 = vmatpush1.msra.mxu0 0.0
    %4720 = vmatprep.mubr.f32.mxu0 0.0
    %4721 = vmatmul.mubr.f32.gmra.mrb[0].mxu0 %v4487
    %v4722 = vpop.f32.mrb[0].mxu0
    %v4723 = vadd.f32 %v4653, %v4722
    %v4724 = vpop.f32.mrb[0].mxu0
    %4725 = vdwg.mxu0
    %v4726 = vadd.f32 %v4723, %v4192
    %v4727 = vmul.f32 %v4726, %v3837
    %v4728 = vtanh.pop %v4727
    %v4729 = vmul.f32 %v4728, %v3837
    %v4730 = vadd.f32 %v4729, %v3838
    %v4731 = vmul.f32 %v4730, %v4475
    %4733 = vrot.lane.b32.xlu0 %v4730, 64
    %v4734 = vpop.permute.xlu0 %4733
    %v4736 = vmul.f32 %v4730, %v4734
    %4738 = vrot.lane.b32.xlu0 %v4736, 32
    %v4739 = vpop.permute.xlu0 %4738
    %v4741 = vadd.f32 %v4731, %v4739
    %v4742 = vtanh.pop %v4741
    %4744 = vrot.lane.b32.xlu0 %v4742, 64
    %v4745 = vpop.permute.xlu0 %4744
    %v4747 = vmul.f32 %v4730, %v4745
    %s4748 = scalar_lea.vmem [#allocation2], 32
    %v4749 = vld [vmem:[%s4748] sm:$0xff]
    %4751 = vrot.lane.b32.xlu0 %v4580, 32
    %v4752 = vpop.permute.xlu0 %4751
    %v4753 = vsel %vm3853, %v4752, 0
    %4755 = vmatprep.subr.mxu0 0.0
    %4756 = vmatpush1.msra.mxu0 %v3839
    %4757 = vmatprep.subr.mxu0 0.0
    %4758 = vmatpush1.msra.mxu0 %v3840
    %4759 = vmatprep.subr.mxu0 0.0
    %4760 = vmatpush1.msra.mxu0 %v3841
    %4761 = vmatprep.subr.mxu0 0.0
    %4762 = vmatpush1.msra.mxu0 %v3842
    %4763 = vmatprep.subr.mxu0 0.0
    %4764 = vmatpush1.msra.mxu0 0.0
    %4765 = vmatprep.subr.mxu0 0.0
    %4766 = vmatpush1.msra.mxu0 0.0
    %4767 = vmatprep.subr.mxu0 0.0
    %4768 = vmatpush1.msra.mxu0 0.0
    %4769 = vmatprep.subr.mxu0 0.0
    %4770 = vmatpush1.msra.mxu0 0.0
    %4771 = vmatprep.subr.mxu0 0.0
    %4772 = vmatpush1.msra.mxu0 0.0
    %4773 = vmatprep.subr.mxu0 0.0
    %4774 = vmatpush1.msra.mxu0 0.0
    %4775 = vmatprep.subr.mxu0 0.0
    %4776 = vmatpush1.msra.mxu0 0.0
    %4777 = vmatprep.subr.mxu0 0.0
    %4778 = vmatpush1.msra.mxu0 0.0
    %4779 = vmatprep.subr.mxu0 0.0
    %4780 = vmatpush1.msra.mxu0 0.0
    %4781 = vmatprep.subr.mxu0 0.0
    %4782 = vmatpush1.msra.mxu0 0.0
    %4783 = vmatprep.subr.mxu0 0.0
    %4784 = vmatpush1.msra.mxu0 0.0
    %4785 = vmatprep.subr.mxu0 0.0
    %4786 = vmatpush1.msra.mxu0 0.0
    %4787 = vmatprep.subr.mxu0 0.0
    %4788 = vmatpush1.msra.mxu0 0.0
    %4789 = vmatprep.subr.mxu0 0.0
    %4790 = vmatpush1.msra.mxu0 0.0
    %4791 = vmatprep.subr.mxu0 0.0
    %4792 = vmatpush1.msra.mxu0 0.0
    %4793 = vmatprep.subr.mxu0 0.0
    %4794 = vmatpush1.msra.mxu0 0.0
    %4795 = vmatprep.subr.mxu0 0.0
    %4796 = vmatpush1.msra.mxu0 0.0
    %4797 = vmatprep.subr.mxu0 0.0
    %4798 = vmatpush1.msra.mxu0 0.0
    %4799 = vmatprep.subr.mxu0 0.0
    %4800 = vmatpush1.msra.mxu0 0.0
    %4801 = vmatprep.subr.mxu0 0.0
    %4802 = vmatpush1.msra.mxu0 0.0
    %4803 = vmatprep.subr.mxu0 0.0
    %4804 = vmatpush1.msra.mxu0 0.0
    %4805 = vmatprep.subr.mxu0 0.0
    %4806 = vmatpush1.msra.mxu0 0.0
    %4807 = vmatprep.subr.mxu0 0.0
    %4808 = vmatpush1.msra.mxu0 0.0
    %4809 = vmatprep.subr.mxu0 0.0
    %4810 = vmatpush1.msra.mxu0 0.0
    %4811 = vmatprep.subr.mxu0 0.0
    %4812 = vmatpush1.msra.mxu0 0.0
    %4813 = vmatprep.subr.mxu0 0.0
    %4814 = vmatpush1.msra.mxu0 0.0
    %4815 = vmatprep.subr.mxu0 0.0
    %4816 = vmatpush1.msra.mxu0 0.0
    %4817 = vmatprep.subr.mxu0 0.0
    %4818 = vmatpush1.msra.mxu0 0.0
    %4819 = vmatprep.mubr.f32.mxu0 0.0
    %4820 = vmatmul.mubr.f32.gmra.mrb[0].mxu0 %v4753
    %v4821 = vpop.f32.mrb[0].mxu0
    %v4822 = vadd.f32 0.0, %v4821
    %v4823 = vpop.f32.mrb[0].mxu0
    %4824 = vdwg.mxu0
    %v4825 = vadd.f32 %v4749, %v4822
    %v4826 = vmul.f32 %v4825, %v3837
    %v4827 = vtanh.pop %v4826
    %v4828 = vmul.f32 %v4827, %v3837
    %v4829 = vadd.f32 %v4828, %v3838
    %v4830 = vmul.f32 %v4829, %v4574
    %4832 = vrot.lane.b32.xlu0 %v4829, 64
    %v4833 = vpop.permute.xlu0 %4832
    %v4835 = vmul.f32 %v4829, %v4833
    %4837 = vrot.lane.b32.xlu0 %v4835, 32
    %v4838 = vpop.permute.xlu0 %4837
    %v4840 = vadd.f32 %v4830, %v4838
    %v4841 = vtanh.pop %v4840
    %4843 = vrot.lane.b32.xlu0 %v4841, 64
    %v4844 = vpop.permute.xlu0 %4843
    %v4846 = vmul.f32 %v4829, %v4844
    %4848 = vrot.lane.b32.xlu0 %v4747, 32
    %v4849 = vpop.permute.xlu0 %4848
    %v4850 = vsel %vm3853, %v4849, 0
    %4852 = vmatprep.subr.mxu0 0.0
    %4853 = vmatpush1.msra.mxu0 %v3847
    %4854 = vmatprep.subr.mxu0 0.0
    %4855 = vmatpush1.msra.mxu0 %v3848
    %4856 = vmatprep.subr.mxu0 0.0
    %4857 = vmatpush1.msra.mxu0 %v3849
    %4858 = vmatprep.subr.mxu0 0.0
    %4859 = vmatpush1.msra.mxu0 %v3850
    %4860 = vmatprep.subr.mxu0 0.0
    %4861 = vmatpush1.msra.mxu0 0.0
    %4862 = vmatprep.subr.mxu0 0.0
    %4863 = vmatpush1.msra.mxu0 0.0
    %4864 = vmatprep.subr.mxu0 0.0
    %4865 = vmatpush1.msra.mxu0 0.0
    %4866 = vmatprep.subr.mxu0 0.0
    %4867 = vmatpush1.msra.mxu0 0.0
    %4868 = vmatprep.subr.mxu0 0.0
    %4869 = vmatpush1.msra.mxu0 0.0
    %4870 = vmatprep.subr.mxu0 0.0
    %4871 = vmatpush1.msra.mxu0 0.0
    %4872 = vmatprep.subr.mxu0 0.0
    %4873 = vmatpush1.msra.mxu0 0.0
    %4874 = vmatprep.subr.mxu0 0.0
    %4875 = vmatpush1.msra.mxu0 0.0
    %4876 = vmatprep.subr.mxu0 0.0
    %4877 = vmatpush1.msra.mxu0 0.0
    %4878 = vmatprep.subr.mxu0 0.0
    %4879 = vmatpush1.msra.mxu0 0.0
    %4880 = vmatprep.subr.mxu0 0.0
    %4881 = vmatpush1.msra.mxu0 0.0
    %4882 = vmatprep.subr.mxu0 0.0
    %4883 = vmatpush1.msra.mxu0 0.0
    %4884 = vmatprep.subr.mxu0 0.0
    %4885 = vmatpush1.msra.mxu0 0.0
    %4886 = vmatprep.subr.mxu0 0.0
    %4887 = vmatpush1.msra.mxu0 0.0
    %4888 = vmatprep.subr.mxu0 0.0
    %4889 = vmatpush1.msra.mxu0 0.0
    %4890 = vmatprep.subr.mxu0 0.0
    %4891 = vmatpush1.msra.mxu0 0.0
    %4892 = vmatprep.subr.mxu0 0.0
    %4893 = vmatpush1.msra.mxu0 0.0
    %4894 = vmatprep.subr.mxu0 0.0
    %4895 = vmatpush1.msra.mxu0 0.0
    %4896 = vmatprep.subr.mxu0 0.0
    %4897 = vmatpush1.msra.mxu0 0.0
    %4898 = vmatprep.subr.mxu0 0.0
    %4899 = vmatpush1.msra.mxu0 0.0
    %4900 = vmatprep.subr.mxu0 0.0
    %4901 = vmatpush1.msra.mxu0 0.0
    %4902 = vmatprep.subr.mxu0 0.0
    %4903 = vmatpush1.msra.mxu0 0.0
    %4904 = vmatprep.subr.mxu0 0.0
    %4905 = vmatpush1.msra.mxu0 0.0
    %4906 = vmatprep.subr.mxu0 0.0
    %4907 = vmatpush1.msra.mxu0 0.0
    %4908 = vmatprep.subr.mxu0 0.0
    %4909 = vmatpush1.msra.mxu0 0.0
    %4910 = vmatprep.subr.mxu0 0.0
    %4911 = vmatpush1.msra.mxu0 0.0
    %4912 = vmatprep.subr.mxu0 0.0
    %4913 = vmatpush1.msra.mxu0 0.0
    %4914 = vmatprep.subr.mxu0 0.0
    %4915 = vmatpush1.msra.mxu0 0.0
    %4916 = vmatprep.mubr.f32.mxu0 0.0
    %4917 = vmatmul.mubr.f32.gmra.mrb[0].mxu0 %v4850
    %v4918 = vpop.f32.mrb[0].mxu0
    %v4919 = vadd.f32 0.0, %v4918
    %v4920 = vpop.f32.mrb[0].mxu0
    %4921 = vdwg.mxu0
    %4922 = vmatprep.subr.mxu0 0.0
    %4923 = vmatpush1.msra.mxu0 %v3843
    %4924 = vmatprep.subr.mxu0 0.0
    %4925 = vmatpush1.msra.mxu0 %v3844
    %4926 = vmatprep.subr.mxu0 0.0
    %4927 = vmatpush1.msra.mxu0 %v3845
    %4928 = vmatprep.subr.mxu0 0.0
    %4929 = vmatpush1.msra.mxu0 %v3846
    %4930 = vmatprep.subr.mxu0 0.0
    %4931 = vmatpush1.msra.mxu0 0.0
    %4932 = vmatprep.subr.mxu0 0.0
    %4933 = vmatpush1.msra.mxu0 0.0
    %4934 = vmatprep.subr.mxu0 0.0
    %4935 = vmatpush1.msra.mxu0 0.0
    %4936 = vmatprep.subr.mxu0 0.0
    %4937 = vmatpush1.msra.mxu0 0.0
    %4938 = vmatprep.subr.mxu0 0.0
    %4939 = vmatpush1.msra.mxu0 0.0
    %4940 = vmatprep.subr.mxu0 0.0
    %4941 = vmatpush1.msra.mxu0 0.0
    %4942 = vmatprep.subr.mxu0 0.0
    %4943 = vmatpush1.msra.mxu0 0.0
    %4944 = vmatprep.subr.mxu0 0.0
    %4945 = vmatpush1.msra.mxu0 0.0
    %4946 = vmatprep.subr.mxu0 0.0
    %4947 = vmatpush1.msra.mxu0 0.0
    %4948 = vmatprep.subr.mxu0 0.0
    %4949 = vmatpush1.msra.mxu0 0.0
    %4950 = vmatprep.subr.mxu0 0.0
    %4951 = vmatpush1.msra.mxu0 0.0
    %4952 = vmatprep.subr.mxu0 0.0
    %4953 = vmatpush1.msra.mxu0 0.0
    %4954 = vmatprep.subr.mxu0 0.0
    %4955 = vmatpush1.msra.mxu0 0.0
    %4956 = vmatprep.subr.mxu0 0.0
    %4957 = vmatpush1.msra.mxu0 0.0
    %4958 = vmatprep.subr.mxu0 0.0
    %4959 = vmatpush1.msra.mxu0 0.0
    %4960 = vmatprep.subr.mxu0 0.0
    %4961 = vmatpush1.msra.mxu0 0.0
    %4962 = vmatprep.subr.mxu0 0.0
    %4963 = vmatpush1.msra.mxu0 0.0
    %4964 = vmatprep.subr.mxu0 0.0
    %4965 = vmatpush1.msra.mxu0 0.0
    %4966 = vmatprep.subr.mxu0 0.0
    %4967 = vmatpush1.msra.mxu0 0.0
    %4968 = vmatprep.subr.mxu0 0.0
    %4969 = vmatpush1.msra.mxu0 0.0
    %4970 = vmatprep.subr.mxu0 0.0
    %4971 = vmatpush1.msra.mxu0 0.0
    %4972 = vmatprep.subr.mxu0 0.0
    %4973 = vmatpush1.msra.mxu0 0.0
    %4974 = vmatprep.subr.mxu0 0.0
    %4975 = vmatpush1.msra.mxu0 0.0
    %4976 = vmatprep.subr.mxu0 0.0
    %4977 = vmatpush1.msra.mxu0 0.0
    %4978 = vmatprep.subr.mxu0 0.0
    %4979 = vmatpush1.msra.mxu0 0.0
    %4980 = vmatprep.subr.mxu0 0.0
    %4981 = vmatpush1.msra.mxu0 0.0
    %4982 = vmatprep.subr.mxu0 0.0
    %4983 = vmatpush1.msra.mxu0 0.0
    %4984 = vmatprep.subr.mxu0 0.0
    %4985 = vmatpush1.msra.mxu0 0.0
    %4986 = vmatprep.mubr.f32.mxu0 0.0
    %4987 = vmatmul.mubr.f32.gmra.mrb[0].mxu0 %v4753
    %v4988 = vpop.f32.mrb[0].mxu0
    %v4989 = vadd.f32 %v4919, %v4988
    %v4990 = vpop.f32.mrb[0].mxu0
    %4991 = vdwg.mxu0
    %v4992 = vadd.f32 %v4989, %v4192
    %v4993 = vmul.f32 %v4992, %v3837
    %v4994 = vtanh.pop %v4993
    %v4995 = vmul.f32 %v4994, %v3837
    %v4996 = vadd.f32 %v4995, %v3838
    %v4997 = vmul.f32 %v4996, %v4741
    %4999 = vrot.lane.b32.xlu0 %v4996, 64
    %v5000 = vpop.permute.xlu0 %4999
    %v5002 = vmul.f32 %v4996, %v5000
    %5004 = vrot.lane.b32.xlu0 %v5002, 32
    %v5005 = vpop.permute.xlu0 %5004
    %v5007 = vadd.f32 %v4997, %v5005
    %v5008 = vtanh.pop %v5007
    %5010 = vrot.lane.b32.xlu0 %v5008, 64
    %v5011 = vpop.permute.xlu0 %5010
    %v5013 = vmul.f32 %v4996, %v5011
    %s5014 = scalar_lea.vmem [#allocation2], 40
    %v5015 = vld [vmem:[%s5014] sm:$0xff]
    %5017 = vrot.lane.b32.xlu0 %v4846, 32
    %v5018 = vpop.permute.xlu0 %5017
    %v5019 = vsel %vm3853, %v5018, 0
    %5021 = vmatprep.subr.mxu0 0.0
    %5022 = vmatpush1.msra.mxu0 %v3839
    %5023 = vmatprep.subr.mxu0 0.0
    %5024 = vmatpush1.msra.mxu0 %v3840
    %5025 = vmatprep.subr.mxu0 0.0
    %5026 = vmatpush1.msra.mxu0 %v3841
    %5027 = vmatprep.subr.mxu0 0.0
    %5028 = vmatpush1.msra.mxu0 %v3842
    %5029 = vmatprep.subr.mxu0 0.0
    %5030 = vmatpush1.msra.mxu0 0.0
    %5031 = vmatprep.subr.mxu0 0.0
    %5032 = vmatpush1.msra.mxu0 0.0
    %5033 = vmatprep.subr.mxu0 0.0
    %5034 = vmatpush1.msra.mxu0 0.0
    %5035 = vmatprep.subr.mxu0 0.0
    %5036 = vmatpush1.msra.mxu0 0.0
    %5037 = vmatprep.subr.mxu0 0.0
    %5038 = vmatpush1.msra.mxu0 0.0
    %5039 = vmatprep.subr.mxu0 0.0
    %5040 = vmatpush1.msra.mxu0 0.0
    %5041 = vmatprep.subr.mxu0 0.0
    %5042 = vmatpush1.msra.mxu0 0.0
    %5043 = vmatprep.subr.mxu0 0.0
    %5044 = vmatpush1.msra.mxu0 0.0
    %5045 = vmatprep.subr.mxu0 0.0
    %5046 = vmatpush1.msra.mxu0 0.0
    %5047 = vmatprep.subr.mxu0 0.0
    %5048 = vmatpush1.msra.mxu0 0.0
    %5049 = vmatprep.subr.mxu0 0.0
    %5050 = vmatpush1.msra.mxu0 0.0
    %5051 = vmatprep.subr.mxu0 0.0
    %5052 = vmatpush1.msra.mxu0 0.0
    %5053 = vmatprep.subr.mxu0 0.0
    %5054 = vmatpush1.msra.mxu0 0.0
    %5055 = vmatprep.subr.mxu0 0.0
    %5056 = vmatpush1.msra.mxu0 0.0
    %5057 = vmatprep.subr.mxu0 0.0
    %5058 = vmatpush1.msra.mxu0 0.0
    %5059 = vmatprep.subr.mxu0 0.0
    %5060 = vmatpush1.msra.mxu0 0.0
    %5061 = vmatprep.subr.mxu0 0.0
    %5062 = vmatpush1.msra.mxu0 0.0
    %5063 = vmatprep.subr.mxu0 0.0
    %5064 = vmatpush1.msra.mxu0 0.0
    %5065 = vmatprep.subr.mxu0 0.0
    %5066 = vmatpush1.msra.mxu0 0.0
    %5067 = vmatprep.subr.mxu0 0.0
    %5068 = vmatpush1.msra.mxu0 0.0
    %5069 = vmatprep.subr.mxu0 0.0
    %5070 = vmatpush1.msra.mxu0 0.0
    %5071 = vmatprep.subr.mxu0 0.0
    %5072 = vmatpush1.msra.mxu0 0.0
    %5073 = vmatprep.subr.mxu0 0.0
    %5074 = vmatpush1.msra.mxu0 0.0
    %5075 = vmatprep.subr.mxu0 0.0
    %5076 = vmatpush1.msra.mxu0 0.0
    %5077 = vmatprep.subr.mxu0 0.0
    %5078 = vmatpush1.msra.mxu0 0.0
    %5079 = vmatprep.subr.mxu0 0.0
    %5080 = vmatpush1.msra.mxu0 0.0
    %5081 = vmatprep.subr.mxu0 0.0
    %5082 = vmatpush1.msra.mxu0 0.0
    %5083 = vmatprep.subr.mxu0 0.0
    %5084 = vmatpush1.msra.mxu0 0.0
    %5085 = vmatprep.mubr.f32.mxu0 0.0
    %5086 = vmatmul.mubr.f32.gmra.mrb[0].mxu0 %v5019
    %v5087 = vpop.f32.mrb[0].mxu0
    %v5088 = vadd.f32 0.0, %v5087
    %v5089 = vpop.f32.mrb[0].mxu0
    %5090 = vdwg.mxu0
    %v5091 = vadd.f32 %v5015, %v5088
    %v5092 = vmul.f32 %v5091, %v3837
    %v5093 = vtanh.pop %v5092
    %v5094 = vmul.f32 %v5093, %v3837
    %v5095 = vadd.f32 %v5094, %v3838
    %v5096 = vmul.f32 %v5095, %v4840
    %5098 = vrot.lane.b32.xlu0 %v5095, 64
    %v5099 = vpop.permute.xlu0 %5098
    %v5101 = vmul.f32 %v5095, %v5099
    %5103 = vrot.lane.b32.xlu0 %v5101, 32
    %v5104 = vpop.permute.xlu0 %5103
    %v5106 = vadd.f32 %v5096, %v5104
    %v5107 = vtanh.pop %v5106
    %5109 = vrot.lane.b32.xlu0 %v5107, 64
    %v5110 = vpop.permute.xlu0 %5109
    %v5112 = vmul.f32 %v5095, %v5110
    %5114 = vrot.lane.b32.xlu0 %v5013, 32
    %v5115 = vpop.permute.xlu0 %5114
    %v5116 = vsel %vm3853, %v5115, 0
    %5118 = vmatprep.subr.mxu0 0.0
    %5119 = vmatpush1.msra.mxu0 %v3847
    %5120 = vmatprep.subr.mxu0 0.0
    %5121 = vmatpush1.msra.mxu0 %v3848
    %5122 = vmatprep.subr.mxu0 0.0
    %5123 = vmatpush1.msra.mxu0 %v3849
    %5124 = vmatprep.subr.mxu0 0.0
    %5125 = vmatpush1.msra.mxu0 %v3850
    %5126 = vmatprep.subr.mxu0 0.0
    %5127 = vmatpush1.msra.mxu0 0.0
    %5128 = vmatprep.subr.mxu0 0.0
    %5129 = vmatpush1.msra.mxu0 0.0
    %5130 = vmatprep.subr.mxu0 0.0
    %5131 = vmatpush1.msra.mxu0 0.0
    %5132 = vmatprep.subr.mxu0 0.0
    %5133 = vmatpush1.msra.mxu0 0.0
    %5134 = vmatprep.subr.mxu0 0.0
    %5135 = vmatpush1.msra.mxu0 0.0
    %5136 = vmatprep.subr.mxu0 0.0
    %5137 = vmatpush1.msra.mxu0 0.0
    %5138 = vmatprep.subr.mxu0 0.0
    %5139 = vmatpush1.msra.mxu0 0.0
    %5140 = vmatprep.subr.mxu0 0.0
    %5141 = vmatpush1.msra.mxu0 0.0
    %5142 = vmatprep.subr.mxu0 0.0
    %5143 = vmatpush1.msra.mxu0 0.0
    %5144 = vmatprep.subr.mxu0 0.0
    %5145 = vmatpush1.msra.mxu0 0.0
    %5146 = vmatprep.subr.mxu0 0.0
    %5147 = vmatpush1.msra.mxu0 0.0
    %5148 = vmatprep.subr.mxu0 0.0
    %5149 = vmatpush1.msra.mxu0 0.0
    %5150 = vmatprep.subr.mxu0 0.0
    %5151 = vmatpush1.msra.mxu0 0.0
    %5152 = vmatprep.subr.mxu0 0.0
    %5153 = vmatpush1.msra.mxu0 0.0
    %5154 = vmatprep.subr.mxu0 0.0
    %5155 = vmatpush1.msra.mxu0 0.0
    %5156 = vmatprep.subr.mxu0 0.0
    %5157 = vmatpush1.msra.mxu0 0.0
    %5158 = vmatprep.subr.mxu0 0.0
    %5159 = vmatpush1.msra.mxu0 0.0
    %5160 = vmatprep.subr.mxu0 0.0
    %5161 = vmatpush1.msra.mxu0 0.0
    %5162 = vmatprep.subr.mxu0 0.0
    %5163 = vmatpush1.msra.mxu0 0.0
    %5164 = vmatprep.subr.mxu0 0.0
    %5165 = vmatpush1.msra.mxu0 0.0
    %5166 = vmatprep.subr.mxu0 0.0
    %5167 = vmatpush1.msra.mxu0 0.0
    %5168 = vmatprep.subr.mxu0 0.0
    %5169 = vmatpush1.msra.mxu0 0.0
    %5170 = vmatprep.subr.mxu0 0.0
    %5171 = vmatpush1.msra.mxu0 0.0
    %5172 = vmatprep.subr.mxu0 0.0
    %5173 = vmatpush1.msra.mxu0 0.0
    %5174 = vmatprep.subr.mxu0 0.0
    %5175 = vmatpush1.msra.mxu0 0.0
    %5176 = vmatprep.subr.mxu0 0.0
    %5177 = vmatpush1.msra.mxu0 0.0
    %5178 = vmatprep.subr.mxu0 0.0
    %5179 = vmatpush1.msra.mxu0 0.0
    %5180 = vmatprep.subr.mxu0 0.0
    %5181 = vmatpush1.msra.mxu0 0.0
    %5182 = vmatprep.mubr.f32.mxu0 0.0
    %5183 = vmatmul.mubr.f32.gmra.mrb[0].mxu0 %v5116
    %v5184 = vpop.f32.mrb[0].mxu0
    %v5185 = vadd.f32 0.0, %v5184
    %v5186 = vpop.f32.mrb[0].mxu0
    %5187 = vdwg.mxu0
    %5188 = vmatprep.subr.mxu0 0.0
    %5189 = vmatpush1.msra.mxu0 %v3843
    %5190 = vmatprep.subr.mxu0 0.0
    %5191 = vmatpush1.msra.mxu0 %v3844
    %5192 = vmatprep.subr.mxu0 0.0
    %5193 = vmatpush1.msra.mxu0 %v3845
    %5194 = vmatprep.subr.mxu0 0.0
    %5195 = vmatpush1.msra.mxu0 %v3846
    %5196 = vmatprep.subr.mxu0 0.0
    %5197 = vmatpush1.msra.mxu0 0.0
    %5198 = vmatprep.subr.mxu0 0.0
    %5199 = vmatpush1.msra.mxu0 0.0
    %5200 = vmatprep.subr.mxu0 0.0
    %5201 = vmatpush1.msra.mxu0 0.0
    %5202 = vmatprep.subr.mxu0 0.0
    %5203 = vmatpush1.msra.mxu0 0.0
    %5204 = vmatprep.subr.mxu0 0.0
    %5205 = vmatpush1.msra.mxu0 0.0
    %5206 = vmatprep.subr.mxu0 0.0
    %5207 = vmatpush1.msra.mxu0 0.0
    %5208 = vmatprep.subr.mxu0 0.0
    %5209 = vmatpush1.msra.mxu0 0.0
    %5210 = vmatprep.subr.mxu0 0.0
    %5211 = vmatpush1.msra.mxu0 0.0
    %5212 = vmatprep.subr.mxu0 0.0
    %5213 = vmatpush1.msra.mxu0 0.0
    %5214 = vmatprep.subr.mxu0 0.0
    %5215 = vmatpush1.msra.mxu0 0.0
    %5216 = vmatprep.subr.mxu0 0.0
    %5217 = vmatpush1.msra.mxu0 0.0
    %5218 = vmatprep.subr.mxu0 0.0
    %5219 = vmatpush1.msra.mxu0 0.0
    %5220 = vmatprep.subr.mxu0 0.0
    %5221 = vmatpush1.msra.mxu0 0.0
    %5222 = vmatprep.subr.mxu0 0.0
    %5223 = vmatpush1.msra.mxu0 0.0
    %5224 = vmatprep.subr.mxu0 0.0
    %5225 = vmatpush1.msra.mxu0 0.0
    %5226 = vmatprep.subr.mxu0 0.0
    %5227 = vmatpush1.msra.mxu0 0.0
    %5228 = vmatprep.subr.mxu0 0.0
    %5229 = vmatpush1.msra.mxu0 0.0
    %5230 = vmatprep.subr.mxu0 0.0
    %5231 = vmatpush1.msra.mxu0 0.0
    %5232 = vmatprep.subr.mxu0 0.0
    %5233 = vmatpush1.msra.mxu0 0.0
    %5234 = vmatprep.subr.mxu0 0.0
    %5235 = vmatpush1.msra.mxu0 0.0
    %5236 = vmatprep.subr.mxu0 0.0
    %5237 = vmatpush1.msra.mxu0 0.0
    %5238 = vmatprep.subr.mxu0 0.0
    %5239 = vmatpush1.msra.mxu0 0.0
    %5240 = vmatprep.subr.mxu0 0.0
    %5241 = vmatpush1.msra.mxu0 0.0
    %5242 = vmatprep.subr.mxu0 0.0
    %5243 = vmatpush1.msra.mxu0 0.0
    %5244 = vmatprep.subr.mxu0 0.0
    %5245 = vmatpush1.msra.mxu0 0.0
    %5246 = vmatprep.subr.mxu0 0.0
    %5247 = vmatpush1.msra.mxu0 0.0
    %5248 = vmatprep.subr.mxu0 0.0
    %5249 = vmatpush1.msra.mxu0 0.0
    %5250 = vmatprep.subr.mxu0 0.0
    %5251 = vmatpush1.msra.mxu0 0.0
    %5252 = vmatprep.mubr.f32.mxu0 0.0
    %5253 = vmatmul.mubr.f32.gmra.mrb[0].mxu0 %v5019
    %v5254 = vpop.f32.mrb[0].mxu0
    %v5255 = vadd.f32 %v5185, %v5254
    %v5256 = vpop.f32.mrb[0].mxu0
    %5257 = vdwg.mxu0
    %v5258 = vadd.f32 %v5255, %v4192
    %v5259 = vmul.f32 %v5258, %v3837
    %v5260 = vtanh.pop %v5259
    %v5261 = vmul.f32 %v5260, %v3837
    %v5262 = vadd.f32 %v5261, %v3838
    %v5263 = vmul.f32 %v5262, %v5007
    %5265 = vrot.lane.b32.xlu0 %v5262, 64
    %v5266 = vpop.permute.xlu0 %5265
    %v5268 = vmul.f32 %v5262, %v5266
    %5270 = vrot.lane.b32.xlu0 %v5268, 32
    %v5271 = vpop.permute.xlu0 %5270
    %v5273 = vadd.f32 %v5263, %v5271
    %v5274 = vtanh.pop %v5273
    %5276 = vrot.lane.b32.xlu0 %v5274, 64
    %v5277 = vpop.permute.xlu0 %5276
    %v5279 = vmul.f32 %v5262, %v5277
    %s5280 = scalar_lea.vmem [#allocation2], 48
    %v5281 = vld [vmem:[%s5280] sm:$0xff]
    %5283 = vrot.lane.b32.xlu0 %v5112, 32
    %v5284 = vpop.permute.xlu0 %5283
    %v5285 = vsel %vm3853, %v5284, 0
    %5287 = vmatprep.subr.mxu0 0.0
    %5288 = vmatpush1.msra.mxu0 %v3839
    %5289 = vmatprep.subr.mxu0 0.0
    %5290 = vmatpush1.msra.mxu0 %v3840
    %5291 = vmatprep.subr.mxu0 0.0
    %5292 = vmatpush1.msra.mxu0 %v3841
    %5293 = vmatprep.subr.mxu0 0.0
    %5294 = vmatpush1.msra.mxu0 %v3842
    %5295 = vmatprep.subr.mxu0 0.0
    %5296 = vmatpush1.msra.mxu0 0.0
    %5297 = vmatprep.subr.mxu0 0.0
    %5298 = vmatpush1.msra.mxu0 0.0
    %5299 = vmatprep.subr.mxu0 0.0
    %5300 = vmatpush1.msra.mxu0 0.0
    %5301 = vmatprep.subr.mxu0 0.0
    %5302 = vmatpush1.msra.mxu0 0.0
    %5303 = vmatprep.subr.mxu0 0.0
    %5304 = vmatpush1.msra.mxu0 0.0
    %5305 = vmatprep.subr.mxu0 0.0
    %5306 = vmatpush1.msra.mxu0 0.0
    %5307 = vmatprep.subr.mxu0 0.0
    %5308 = vmatpush1.msra.mxu0 0.0
    %5309 = vmatprep.subr.mxu0 0.0
    %5310 = vmatpush1.msra.mxu0 0.0
    %5311 = vmatprep.subr.mxu0 0.0
    %5312 = vmatpush1.msra.mxu0 0.0
    %5313 = vmatprep.subr.mxu0 0.0
    %5314 = vmatpush1.msra.mxu0 0.0
    %5315 = vmatprep.subr.mxu0 0.0
    %5316 = vmatpush1.msra.mxu0 0.0
    %5317 = vmatprep.subr.mxu0 0.0
    %5318 = vmatpush1.msra.mxu0 0.0
    %5319 = vmatprep.subr.mxu0 0.0
    %5320 = vmatpush1.msra.mxu0 0.0
    %5321 = vmatprep.subr.mxu0 0.0
    %5322 = vmatpush1.msra.mxu0 0.0
    %5323 = vmatprep.subr.mxu0 0.0
    %5324 = vmatpush1.msra.mxu0 0.0
    %5325 = vmatprep.subr.mxu0 0.0
    %5326 = vmatpush1.msra.mxu0 0.0
    %5327 = vmatprep.subr.mxu0 0.0
    %5328 = vmatpush1.msra.mxu0 0.0
    %5329 = vmatprep.subr.mxu0 0.0
    %5330 = vmatpush1.msra.mxu0 0.0
    %5331 = vmatprep.subr.mxu0 0.0
    %5332 = vmatpush1.msra.mxu0 0.0
    %5333 = vmatprep.subr.mxu0 0.0
    %5334 = vmatpush1.msra.mxu0 0.0
    %5335 = vmatprep.subr.mxu0 0.0
    %5336 = vmatpush1.msra.mxu0 0.0
    %5337 = vmatprep.subr.mxu0 0.0
    %5338 = vmatpush1.msra.mxu0 0.0
    %5339 = vmatprep.subr.mxu0 0.0
    %5340 = vmatpush1.msra.mxu0 0.0
    %5341 = vmatprep.subr.mxu0 0.0
    %5342 = vmatpush1.msra.mxu0 0.0
    %5343 = vmatprep.subr.mxu0 0.0
    %5344 = vmatpush1.msra.mxu0 0.0
    %5345 = vmatprep.subr.mxu0 0.0
    %5346 = vmatpush1.msra.mxu0 0.0
    %5347 = vmatprep.subr.mxu0 0.0
    %5348 = vmatpush1.msra.mxu0 0.0
    %5349 = vmatprep.subr.mxu0 0.0
    %5350 = vmatpush1.msra.mxu0 0.0
    %5351 = vmatprep.mubr.f32.mxu0 0.0
    %5352 = vmatmul.mubr.f32.gmra.mrb[0].mxu0 %v5285
    %v5353 = vpop.f32.mrb[0].mxu0
    %v5354 = vadd.f32 0.0, %v5353
    %v5355 = vpop.f32.mrb[0].mxu0
    %5356 = vdwg.mxu0
    %v5357 = vadd.f32 %v5281, %v5354
    %v5358 = vmul.f32 %v5357, %v3837
    %v5359 = vtanh.pop %v5358
    %v5360 = vmul.f32 %v5359, %v3837
    %v5361 = vadd.f32 %v5360, %v3838
    %v5362 = vmul.f32 %v5361, %v5106
    %5364 = vrot.lane.b32.xlu0 %v5361, 64
    %v5365 = vpop.permute.xlu0 %5364
    %v5367 = vmul.f32 %v5361, %v5365
    %5369 = vrot.lane.b32.xlu0 %v5367, 32
    %v5370 = vpop.permute.xlu0 %5369
    %v5372 = vadd.f32 %v5362, %v5370
    %v5373 = vtanh.pop %v5372
    %5375 = vrot.lane.b32.xlu0 %v5373, 64
    %v5376 = vpop.permute.xlu0 %5375
    %v5378 = vmul.f32 %v5361, %v5376
    %5380 = vrot.lane.b32.xlu0 %v5279, 32
    %v5381 = vpop.permute.xlu0 %5380
    %v5382 = vsel %vm3853, %v5381, 0
    %5384 = vmatprep.subr.mxu0 0.0
    %5385 = vmatpush1.msra.mxu0 %v3847
    %5386 = vmatprep.subr.mxu0 0.0
    %5387 = vmatpush1.msra.mxu0 %v3848
    %5388 = vmatprep.subr.mxu0 0.0
    %5389 = vmatpush1.msra.mxu0 %v3849
    %5390 = vmatprep.subr.mxu0 0.0
    %5391 = vmatpush1.msra.mxu0 %v3850
    %5392 = vmatprep.subr.mxu0 0.0
    %5393 = vmatpush1.msra.mxu0 0.0
    %5394 = vmatprep.subr.mxu0 0.0
    %5395 = vmatpush1.msra.mxu0 0.0
    %5396 = vmatprep.subr.mxu0 0.0
    %5397 = vmatpush1.msra.mxu0 0.0
    %5398 = vmatprep.subr.mxu0 0.0
    %5399 = vmatpush1.msra.mxu0 0.0
    %5400 = vmatprep.subr.mxu0 0.0
    %5401 = vmatpush1.msra.mxu0 0.0
    %5402 = vmatprep.subr.mxu0 0.0
    %5403 = vmatpush1.msra.mxu0 0.0
    %5404 = vmatprep.subr.mxu0 0.0
    %5405 = vmatpush1.msra.mxu0 0.0
    %5406 = vmatprep.subr.mxu0 0.0
    %5407 = vmatpush1.msra.mxu0 0.0
    %5408 = vmatprep.subr.mxu0 0.0
    %5409 = vmatpush1.msra.mxu0 0.0
    %5410 = vmatprep.subr.mxu0 0.0
    %5411 = vmatpush1.msra.mxu0 0.0
    %5412 = vmatprep.subr.mxu0 0.0
    %5413 = vmatpush1.msra.mxu0 0.0
    %5414 = vmatprep.subr.mxu0 0.0
    %5415 = vmatpush1.msra.mxu0 0.0
    %5416 = vmatprep.subr.mxu0 0.0
    %5417 = vmatpush1.msra.mxu0 0.0
    %5418 = vmatprep.subr.mxu0 0.0
    %5419 = vmatpush1.msra.mxu0 0.0
    %5420 = vmatprep.subr.mxu0 0.0
    %5421 = vmatpush1.msra.mxu0 0.0
    %5422 = vmatprep.subr.mxu0 0.0
    %5423 = vmatpush1.msra.mxu0 0.0
    %5424 = vmatprep.subr.mxu0 0.0
    %5425 = vmatpush1.msra.mxu0 0.0
    %5426 = vmatprep.subr.mxu0 0.0
    %5427 = vmatpush1.msra.mxu0 0.0
    %5428 = vmatprep.subr.mxu0 0.0
    %5429 = vmatpush1.msra.mxu0 0.0
    %5430 = vmatprep.subr.mxu0 0.0
    %5431 = vmatpush1.msra.mxu0 0.0
    %5432 = vmatprep.subr.mxu0 0.0
    %5433 = vmatpush1.msra.mxu0 0.0
    %5434 = vmatprep.subr.mxu0 0.0
    %5435 = vmatpush1.msra.mxu0 0.0
    %5436 = vmatprep.subr.mxu0 0.0
    %5437 = vmatpush1.msra.mxu0 0.0
    %5438 = vmatprep.subr.mxu0 0.0
    %5439 = vmatpush1.msra.mxu0 0.0
    %5440 = vmatprep.subr.mxu0 0.0
    %5441 = vmatpush1.msra.mxu0 0.0
    %5442 = vmatprep.subr.mxu0 0.0
    %5443 = vmatpush1.msra.mxu0 0.0
    %5444 = vmatprep.subr.mxu0 0.0
    %5445 = vmatpush1.msra.mxu0 0.0
    %5446 = vmatprep.subr.mxu0 0.0
    %5447 = vmatpush1.msra.mxu0 0.0
    %5448 = vmatprep.mubr.f32.mxu0 0.0
    %5449 = vmatmul.mubr.f32.gmra.mrb[0].mxu0 %v5382
    %v5450 = vpop.f32.mrb[0].mxu0
    %v5451 = vadd.f32 0.0, %v5450
    %v5452 = vpop.f32.mrb[0].mxu0
    %5453 = vdwg.mxu0
    %5454 = vmatprep.subr.mxu0 0.0
    %5455 = vmatpush1.msra.mxu0 %v3843
    %5456 = vmatprep.subr.mxu0 0.0
    %5457 = vmatpush1.msra.mxu0 %v3844
    %5458 = vmatprep.subr.mxu0 0.0
    %5459 = vmatpush1.msra.mxu0 %v3845
    %5460 = vmatprep.subr.mxu0 0.0
    %5461 = vmatpush1.msra.mxu0 %v3846
    %5462 = vmatprep.subr.mxu0 0.0
    %5463 = vmatpush1.msra.mxu0 0.0
    %5464 = vmatprep.subr.mxu0 0.0
    %5465 = vmatpush1.msra.mxu0 0.0
    %5466 = vmatprep.subr.mxu0 0.0
    %5467 = vmatpush1.msra.mxu0 0.0
    %5468 = vmatprep.subr.mxu0 0.0
    %5469 = vmatpush1.msra.mxu0 0.0
    %5470 = vmatprep.subr.mxu0 0.0
    %5471 = vmatpush1.msra.mxu0 0.0
    %5472 = vmatprep.subr.mxu0 0.0
    %5473 = vmatpush1.msra.mxu0 0.0
    %5474 = vmatprep.subr.mxu0 0.0
    %5475 = vmatpush1.msra.mxu0 0.0
    %5476 = vmatprep.subr.mxu0 0.0
    %5477 = vmatpush1.msra.mxu0 0.0
    %5478 = vmatprep.subr.mxu0 0.0
    %5479 = vmatpush1.msra.mxu0 0.0
    %5480 = vmatprep.subr.mxu0 0.0
    %5481 = vmatpush1.msra.mxu0 0.0
    %5482 = vmatprep.subr.mxu0 0.0
    %5483 = vmatpush1.msra.mxu0 0.0
    %5484 = vmatprep.subr.mxu0 0.0
    %5485 = vmatpush1.msra.mxu0 0.0
    %5486 = vmatprep.subr.mxu0 0.0
    %5487 = vmatpush1.msra.mxu0 0.0
    %5488 = vmatprep.subr.mxu0 0.0
    %5489 = vmatpush1.msra.mxu0 0.0
    %5490 = vmatprep.subr.mxu0 0.0
    %5491 = vmatpush1.msra.mxu0 0.0
    %5492 = vmatprep.subr.mxu0 0.0
    %5493 = vmatpush1.msra.mxu0 0.0
    %5494 = vmatprep.subr.mxu0 0.0
    %5495 = vmatpush1.msra.mxu0 0.0
    %5496 = vmatprep.subr.mxu0 0.0
    %5497 = vmatpush1.msra.mxu0 0.0
    %5498 = vmatprep.subr.mxu0 0.0
    %5499 = vmatpush1.msra.mxu0 0.0
    %5500 = vmatprep.subr.mxu0 0.0
    %5501 = vmatpush1.msra.mxu0 0.0
    %5502 = vmatprep.subr.mxu0 0.0
    %5503 = vmatpush1.msra.mxu0 0.0
    %5504 = vmatprep.subr.mxu0 0.0
    %5505 = vmatpush1.msra.mxu0 0.0
    %5506 = vmatprep.subr.mxu0 0.0
    %5507 = vmatpush1.msra.mxu0 0.0
    %5508 = vmatprep.subr.mxu0 0.0
    %5509 = vmatpush1.msra.mxu0 0.0
    %5510 = vmatprep.subr.mxu0 0.0
    %5511 = vmatpush1.msra.mxu0 0.0
    %5512 = vmatprep.subr.mxu0 0.0
    %5513 = vmatpush1.msra.mxu0 0.0
    %5514 = vmatprep.subr.mxu0 0.0
    %5515 = vmatpush1.msra.mxu0 0.0
    %5516 = vmatprep.subr.mxu0 0.0
    %5517 = vmatpush1.msra.mxu0 0.0
    %5518 = vmatprep.mubr.f32.mxu0 0.0
    %5519 = vmatmul.mubr.f32.gmra.mrb[0].mxu0 %v5285
    %v5520 = vpop.f32.mrb[0].mxu0
    %v5521 = vadd.f32 %v5451, %v5520
    %v5522 = vpop.f32.mrb[0].mxu0
    %5523 = vdwg.mxu0
    %v5524 = vadd.f32 %v5521, %v4192
    %v5525 = vmul.f32 %v5524, %v3837
    %v5526 = vtanh.pop %v5525
    %v5527 = vmul.f32 %v5526, %v3837
    %v5528 = vadd.f32 %v5527, %v3838
    %v5529 = vmul.f32 %v5528, %v5273
    %5531 = vrot.lane.b32.xlu0 %v5528, 64
    %v5532 = vpop.permute.xlu0 %5531
    %v5534 = vmul.f32 %v5528, %v5532
    %5536 = vrot.lane.b32.xlu0 %v5534, 32
    %v5537 = vpop.permute.xlu0 %5536
    %v5539 = vadd.f32 %v5529, %v5537
    %v5540 = vtanh.pop %v5539
    %5542 = vrot.lane.b32.xlu0 %v5540, 64
    %v5543 = vpop.permute.xlu0 %5542
    %v5545 = vmul.f32 %v5528, %v5543
    %s5546 = scalar_lea.vmem [#allocation2], 56
    %v5547 = vld [vmem:[%s5546] sm:$0xff]
    %5549 = vrot.lane.b32.xlu0 %v5378, 32
    %v5550 = vpop.permute.xlu0 %5549
    %v5551 = vsel %vm3853, %v5550, 0
    %5553 = vmatprep.subr.mxu0 0.0
    %5554 = vmatpush1.msra.mxu0 %v3839
    %5555 = vmatprep.subr.mxu0 0.0
    %5556 = vmatpush1.msra.mxu0 %v3840
    %5557 = vmatprep.subr.mxu0 0.0
    %5558 = vmatpush1.msra.mxu0 %v3841
    %5559 = vmatprep.subr.mxu0 0.0
    %5560 = vmatpush1.msra.mxu0 %v3842
    %5561 = vmatprep.subr.mxu0 0.0
    %5562 = vmatpush1.msra.mxu0 0.0
    %5563 = vmatprep.subr.mxu0 0.0
    %5564 = vmatpush1.msra.mxu0 0.0
    %5565 = vmatprep.subr.mxu0 0.0
    %5566 = vmatpush1.msra.mxu0 0.0
    %5567 = vmatprep.subr.mxu0 0.0
    %5568 = vmatpush1.msra.mxu0 0.0
    %5569 = vmatprep.subr.mxu0 0.0
    %5570 = vmatpush1.msra.mxu0 0.0
    %5571 = vmatprep.subr.mxu0 0.0
    %5572 = vmatpush1.msra.mxu0 0.0
    %5573 = vmatprep.subr.mxu0 0.0
    %5574 = vmatpush1.msra.mxu0 0.0
    %5575 = vmatprep.subr.mxu0 0.0
    %5576 = vmatpush1.msra.mxu0 0.0
    %5577 = vmatprep.subr.mxu0 0.0
    %5578 = vmatpush1.msra.mxu0 0.0
    %5579 = vmatprep.subr.mxu0 0.0
    %5580 = vmatpush1.msra.mxu0 0.0
    %5581 = vmatprep.subr.mxu0 0.0
    %5582 = vmatpush1.msra.mxu0 0.0
    %5583 = vmatprep.subr.mxu0 0.0
    %5584 = vmatpush1.msra.mxu0 0.0
    %5585 = vmatprep.subr.mxu0 0.0
    %5586 = vmatpush1.msra.mxu0 0.0
    %5587 = vmatprep.subr.mxu0 0.0
    %5588 = vmatpush1.msra.mxu0 0.0
    %5589 = vmatprep.subr.mxu0 0.0
    %5590 = vmatpush1.msra.mxu0 0.0
    %5591 = vmatprep.subr.mxu0 0.0
    %5592 = vmatpush1.msra.mxu0 0.0
    %5593 = vmatprep.subr.mxu0 0.0
    %5594 = vmatpush1.msra.mxu0 0.0
    %5595 = vmatprep.subr.mxu0 0.0
    %5596 = vmatpush1.msra.mxu0 0.0
    %5597 = vmatprep.subr.mxu0 0.0
    %5598 = vmatpush1.msra.mxu0 0.0
    %5599 = vmatprep.subr.mxu0 0.0
    %5600 = vmatpush1.msra.mxu0 0.0
    %5601 = vmatprep.subr.mxu0 0.0
    %5602 = vmatpush1.msra.mxu0 0.0
    %5603 = vmatprep.subr.mxu0 0.0
    %5604 = vmatpush1.msra.mxu0 0.0
    %5605 = vmatprep.subr.mxu0 0.0
    %5606 = vmatpush1.msra.mxu0 0.0
    %5607 = vmatprep.subr.mxu0 0.0
    %5608 = vmatpush1.msra.mxu0 0.0
    %5609 = vmatprep.subr.mxu0 0.0
    %5610 = vmatpush1.msra.mxu0 0.0
    %5611 = vmatprep.subr.mxu0 0.0
    %5612 = vmatpush1.msra.mxu0 0.0
    %5613 = vmatprep.subr.mxu0 0.0
    %5614 = vmatpush1.msra.mxu0 0.0
    %5615 = vmatprep.subr.mxu0 0.0
    %5616 = vmatpush1.msra.mxu0 0.0
    %5617 = vmatprep.mubr.f32.mxu0 0.0
    %5618 = vmatmul.mubr.f32.gmra.mrb[0].mxu0 %v5551
    %v5619 = vpop.f32.mrb[0].mxu0
    %v5620 = vadd.f32 0.0, %v5619
    %v5621 = vpop.f32.mrb[0].mxu0
    %5622 = vdwg.mxu0
    %v5623 = vadd.f32 %v5547, %v5620
    %v5624 = vmul.f32 %v5623, %v3837
    %v5625 = vtanh.pop %v5624
    %v5626 = vmul.f32 %v5625, %v3837
    %v5627 = vadd.f32 %v5626, %v3838
    %v5628 = vmul.f32 %v5627, %v5372
    %5630 = vrot.lane.b32.xlu0 %v5627, 64
    %v5631 = vpop.permute.xlu0 %5630
    %v5633 = vmul.f32 %v5627, %v5631
    %5635 = vrot.lane.b32.xlu0 %v5633, 32
    %v5636 = vpop.permute.xlu0 %5635
    %v5638 = vadd.f32 %v5628, %v5636
    %v5639 = vtanh.pop %v5638
    %5641 = vrot.lane.b32.xlu0 %v5639, 64
    %v5642 = vpop.permute.xlu0 %5641
    %v5644 = vmul.f32 %v5627, %v5642
    %5646 = vrot.lane.b32.xlu0 %v5545, 32
    %v5647 = vpop.permute.xlu0 %5646
    %v5648 = vsel %vm3853, %v5647, 0
    %5650 = vmatprep.subr.mxu0 0.0
    %5651 = vmatpush1.msra.mxu0 %v3847
    %5652 = vmatprep.subr.mxu0 0.0
    %5653 = vmatpush1.msra.mxu0 %v3848
    %5654 = vmatprep.subr.mxu0 0.0
    %5655 = vmatpush1.msra.mxu0 %v3849
    %5656 = vmatprep.subr.mxu0 0.0
    %5657 = vmatpush1.msra.mxu0 %v3850
    %5658 = vmatprep.subr.mxu0 0.0
    %5659 = vmatpush1.msra.mxu0 0.0
    %5660 = vmatprep.subr.mxu0 0.0
    %5661 = vmatpush1.msra.mxu0 0.0
    %5662 = vmatprep.subr.mxu0 0.0
    %5663 = vmatpush1.msra.mxu0 0.0
    %5664 = vmatprep.subr.mxu0 0.0
    %5665 = vmatpush1.msra.mxu0 0.0
    %5666 = vmatprep.subr.mxu0 0.0
    %5667 = vmatpush1.msra.mxu0 0.0
    %5668 = vmatprep.subr.mxu0 0.0
    %5669 = vmatpush1.msra.mxu0 0.0
    %5670 = vmatprep.subr.mxu0 0.0
    %5671 = vmatpush1.msra.mxu0 0.0
    %5672 = vmatprep.subr.mxu0 0.0
    %5673 = vmatpush1.msra.mxu0 0.0
    %5674 = vmatprep.subr.mxu0 0.0
    %5675 = vmatpush1.msra.mxu0 0.0
    %5676 = vmatprep.subr.mxu0 0.0
    %5677 = vmatpush1.msra.mxu0 0.0
    %5678 = vmatprep.subr.mxu0 0.0
    %5679 = vmatpush1.msra.mxu0 0.0
    %5680 = vmatprep.subr.mxu0 0.0
    %5681 = vmatpush1.msra.mxu0 0.0
    %5682 = vmatprep.subr.mxu0 0.0
    %5683 = vmatpush1.msra.mxu0 0.0
    %5684 = vmatprep.subr.mxu0 0.0
    %5685 = vmatpush1.msra.mxu0 0.0
    %5686 = vmatprep.subr.mxu0 0.0
    %5687 = vmatpush1.msra.mxu0 0.0
    %5688 = vmatprep.subr.mxu0 0.0
    %5689 = vmatpush1.msra.mxu0 0.0
    %5690 = vmatprep.subr.mxu0 0.0
    %5691 = vmatpush1.msra.mxu0 0.0
    %5692 = vmatprep.subr.mxu0 0.0
    %5693 = vmatpush1.msra.mxu0 0.0
    %5694 = vmatprep.subr.mxu0 0.0
    %5695 = vmatpush1.msra.mxu0 0.0
    %5696 = vmatprep.subr.mxu0 0.0
    %5697 = vmatpush1.msra.mxu0 0.0
    %5698 = vmatprep.subr.mxu0 0.0
    %5699 = vmatpush1.msra.mxu0 0.0
    %5700 = vmatprep.subr.mxu0 0.0
    %5701 = vmatpush1.msra.mxu0 0.0
    %5702 = vmatprep.subr.mxu0 0.0
    %5703 = vmatpush1.msra.mxu0 0.0
    %5704 = vmatprep.subr.mxu0 0.0
    %5705 = vmatpush1.msra.mxu0 0.0
    %5706 = vmatprep.subr.mxu0 0.0
    %5707 = vmatpush1.msra.mxu0 0.0
    %5708 = vmatprep.subr.mxu0 0.0
    %5709 = vmatpush1.msra.mxu0 0.0
    %5710 = vmatprep.subr.mxu0 0.0
    %5711 = vmatpush1.msra.mxu0 0.0
    %5712 = vmatprep.subr.mxu0 0.0
    %5713 = vmatpush1.msra.mxu0 0.0
    %5714 = vmatprep.mubr.f32.mxu0 0.0
    %5715 = vmatmul.mubr.f32.gmra.mrb[0].mxu0 %v5648
    %v5716 = vpop.f32.mrb[0].mxu0
    %v5717 = vadd.f32 0.0, %v5716
    %v5718 = vpop.f32.mrb[0].mxu0
    %5719 = vdwg.mxu0
    %5720 = vmatprep.subr.mxu0 0.0
    %5721 = vmatpush1.msra.mxu0 %v3843
    %5722 = vmatprep.subr.mxu0 0.0
    %5723 = vmatpush1.msra.mxu0 %v3844
    %5724 = vmatprep.subr.mxu0 0.0
    %5725 = vmatpush1.msra.mxu0 %v3845
    %5726 = vmatprep.subr.mxu0 0.0
    %5727 = vmatpush1.msra.mxu0 %v3846
    %5728 = vmatprep.subr.mxu0 0.0
    %5729 = vmatpush1.msra.mxu0 0.0
    %5730 = vmatprep.subr.mxu0 0.0
    %5731 = vmatpush1.msra.mxu0 0.0
    %5732 = vmatprep.subr.mxu0 0.0
    %5733 = vmatpush1.msra.mxu0 0.0
    %5734 = vmatprep.subr.mxu0 0.0
    %5735 = vmatpush1.msra.mxu0 0.0
    %5736 = vmatprep.subr.mxu0 0.0
    %5737 = vmatpush1.msra.mxu0 0.0
    %5738 = vmatprep.subr.mxu0 0.0
    %5739 = vmatpush1.msra.mxu0 0.0
    %5740 = vmatprep.subr.mxu0 0.0
    %5741 = vmatpush1.msra.mxu0 0.0
    %5742 = vmatprep.subr.mxu0 0.0
    %5743 = vmatpush1.msra.mxu0 0.0
    %5744 = vmatprep.subr.mxu0 0.0
    %5745 = vmatpush1.msra.mxu0 0.0
    %5746 = vmatprep.subr.mxu0 0.0
    %5747 = vmatpush1.msra.mxu0 0.0
    %5748 = vmatprep.subr.mxu0 0.0
    %5749 = vmatpush1.msra.mxu0 0.0
    %5750 = vmatprep.subr.mxu0 0.0
    %5751 = vmatpush1.msra.mxu0 0.0
    %5752 = vmatprep.subr.mxu0 0.0
    %5753 = vmatpush1.msra.mxu0 0.0
    %5754 = vmatprep.subr.mxu0 0.0
    %5755 = vmatpush1.msra.mxu0 0.0
    %5756 = vmatprep.subr.mxu0 0.0
    %5757 = vmatpush1.msra.mxu0 0.0
    %5758 = vmatprep.subr.mxu0 0.0
    %5759 = vmatpush1.msra.mxu0 0.0
    %5760 = vmatprep.subr.mxu0 0.0
    %5761 = vmatpush1.msra.mxu0 0.0
    %5762 = vmatprep.subr.mxu0 0.0
    %5763 = vmatpush1.msra.mxu0 0.0
    %5764 = vmatprep.subr.mxu0 0.0
    %5765 = vmatpush1.msra.mxu0 0.0
    %5766 = vmatprep.subr.mxu0 0.0
    %5767 = vmatpush1.msra.mxu0 0.0
    %5768 = vmatprep.subr.mxu0 0.0
    %5769 = vmatpush1.msra.mxu0 0.0
    %5770 = vmatprep.subr.mxu0 0.0
    %5771 = vmatpush1.msra.mxu0 0.0
    %5772 = vmatprep.subr.mxu0 0.0
    %5773 = vmatpush1.msra.mxu0 0.0
    %5774 = vmatprep.subr.mxu0 0.0
    %5775 = vmatpush1.msra.mxu0 0.0
    %5776 = vmatprep.subr.mxu0 0.0
    %5777 = vmatpush1.msra.mxu0 0.0
    %5778 = vmatprep.subr.mxu0 0.0
    %5779 = vmatpush1.msra.mxu0 0.0
    %5780 = vmatprep.subr.mxu0 0.0
    %5781 = vmatpush1.msra.mxu0 0.0
    %5782 = vmatprep.subr.mxu0 0.0
    %5783 = vmatpush1.msra.mxu0 0.0
    %5784 = vmatprep.mubr.f32.mxu0 0.0
    %5785 = vmatmul.mubr.f32.gmra.mrb[0].mxu0 %v5551
    %v5786 = vpop.f32.mrb[0].mxu0
    %v5787 = vadd.f32 %v5717, %v5786
    %v5788 = vpop.f32.mrb[0].mxu0
    %5789 = vdwg.mxu0
    %v5790 = vadd.f32 %v5787, %v4192
    %v5791 = vmul.f32 %v5790, %v3837
    %v5792 = vtanh.pop %v5791
    %v5793 = vmul.f32 %v5792, %v3837
    %v5794 = vadd.f32 %v5793, %v3838
    %v5795 = vmul.f32 %v5794, %v5539
    %5797 = vrot.lane.b32.xlu0 %v5794, 64
    %v5798 = vpop.permute.xlu0 %5797
    %v5800 = vmul.f32 %v5794, %v5798
    %5802 = vrot.lane.b32.xlu0 %v5800, 32
    %v5803 = vpop.permute.xlu0 %5802
    %v5805 = vadd.f32 %v5795, %v5803
    %v5806 = vtanh.pop %v5805
    %5808 = vrot.lane.b32.xlu0 %v5806, 64
    %v5809 = vpop.permute.xlu0 %5808
    %v5811 = vmul.f32 %v5794, %v5809
    %5813 = vrot.lane.b32.xlu0 %v5811, 32
    %v5814 = vpop.permute.xlu0 %5813
    %v5815 = vsel %vm3853, %v5814, 0
    %5817 = vmatprep.subr.mxu0 0.0
    %5818 = vmatpush1.msra.mxu0 %v3847
    %5819 = vmatprep.subr.mxu0 0.0
    %5820 = vmatpush1.msra.mxu0 %v3848
    %5821 = vmatprep.subr.mxu0 0.0
    %5822 = vmatpush1.msra.mxu0 %v3849
    %5823 = vmatprep.subr.mxu0 0.0
    %5824 = vmatpush1.msra.mxu0 %v3850
    %5825 = vmatprep.subr.mxu0 0.0
    %5826 = vmatpush1.msra.mxu0 0.0
    %5827 = vmatprep.subr.mxu0 0.0
    %5828 = vmatpush1.msra.mxu0 0.0
    %5829 = vmatprep.subr.mxu0 0.0
    %5830 = vmatpush1.msra.mxu0 0.0
    %5831 = vmatprep.subr.mxu0 0.0
    %5832 = vmatpush1.msra.mxu0 0.0
    %5833 = vmatprep.subr.mxu0 0.0
    %5834 = vmatpush1.msra.mxu0 0.0
    %5835 = vmatprep.subr.mxu0 0.0
    %5836 = vmatpush1.msra.mxu0 0.0
    %5837 = vmatprep.subr.mxu0 0.0
    %5838 = vmatpush1.msra.mxu0 0.0
    %5839 = vmatprep.subr.mxu0 0.0
    %5840 = vmatpush1.msra.mxu0 0.0
    %5841 = vmatprep.subr.mxu0 0.0
    %5842 = vmatpush1.msra.mxu0 0.0
    %5843 = vmatprep.subr.mxu0 0.0
    %5844 = vmatpush1.msra.mxu0 0.0
    %5845 = vmatprep.subr.mxu0 0.0
    %5846 = vmatpush1.msra.mxu0 0.0
    %5847 = vmatprep.subr.mxu0 0.0
    %5848 = vmatpush1.msra.mxu0 0.0
    %5849 = vmatprep.subr.mxu0 0.0
    %5850 = vmatpush1.msra.mxu0 0.0
    %5851 = vmatprep.subr.mxu0 0.0
    %5852 = vmatpush1.msra.mxu0 0.0
    %5853 = vmatprep.subr.mxu0 0.0
    %5854 = vmatpush1.msra.mxu0 0.0
    %5855 = vmatprep.subr.mxu0 0.0
    %5856 = vmatpush1.msra.mxu0 0.0
    %5857 = vmatprep.subr.mxu0 0.0
    %5858 = vmatpush1.msra.mxu0 0.0
    %5859 = vmatprep.subr.mxu0 0.0
    %5860 = vmatpush1.msra.mxu0 0.0
    %5861 = vmatprep.subr.mxu0 0.0
    %5862 = vmatpush1.msra.mxu0 0.0
    %5863 = vmatprep.subr.mxu0 0.0
    %5864 = vmatpush1.msra.mxu0 0.0
    %5865 = vmatprep.subr.mxu0 0.0
    %5866 = vmatpush1.msra.mxu0 0.0
    %5867 = vmatprep.subr.mxu0 0.0
    %5868 = vmatpush1.msra.mxu0 0.0
    %5869 = vmatprep.subr.mxu0 0.0
    %5870 = vmatpush1.msra.mxu0 0.0
    %5871 = vmatprep.subr.mxu0 0.0
    %5872 = vmatpush1.msra.mxu0 0.0
    %5873 = vmatprep.subr.mxu0 0.0
    %5874 = vmatpush1.msra.mxu0 0.0
    %5875 = vmatprep.subr.mxu0 0.0
    %5876 = vmatpush1.msra.mxu0 0.0
    %5877 = vmatprep.subr.mxu0 0.0
    %5878 = vmatpush1.msra.mxu0 0.0
    %5879 = vmatprep.subr.mxu0 0.0
    %5880 = vmatpush1.msra.mxu0 0.0
    %5881 = vmatprep.mubr.f32.mxu0 0.0
    %5882 = vmatmul.mubr.f32.gmra.mrb[0].mxu0 %v5815
    %v5883 = vpop.f32.mrb[0].mxu0
    %v5884 = vadd.f32 0.0, %v5883
    %v5885 = vpop.f32.mrb[0].mxu0
    %5886 = vdwg.mxu0
    %5888 = vrot.lane.b32.xlu0 %v5644, 32
    %v5889 = vpop.permute.xlu0 %5888
    %v5890 = vsel %vm3853, %v5889, 0
    %5892 = vmatprep.subr.mxu0 0.0
    %5893 = vmatpush1.msra.mxu0 %v3843
    %5894 = vmatprep.subr.mxu0 0.0
    %5895 = vmatpush1.msra.mxu0 %v3844
    %5896 = vmatprep.subr.mxu0 0.0
    %5897 = vmatpush1.msra.mxu0 %v3845
    %5898 = vmatprep.subr.mxu0 0.0
    %5899 = vmatpush1.msra.mxu0 %v3846
    %5900 = vmatprep.subr.mxu0 0.0
    %5901 = vmatpush1.msra.mxu0 0.0
    %5902 = vmatprep.subr.mxu0 0.0
    %5903 = vmatpush1.msra.mxu0 0.0
    %5904 = vmatprep.subr.mxu0 0.0
    %5905 = vmatpush1.msra.mxu0 0.0
    %5906 = vmatprep.subr.mxu0 0.0
    %5907 = vmatpush1.msra.mxu0 0.0
    %5908 = vmatprep.subr.mxu0 0.0
    %5909 = vmatpush1.msra.mxu0 0.0
    %5910 = vmatprep.subr.mxu0 0.0
    %5911 = vmatpush1.msra.mxu0 0.0
    %5912 = vmatprep.subr.mxu0 0.0
    %5913 = vmatpush1.msra.mxu0 0.0
    %5914 = vmatprep.subr.mxu0 0.0
    %5915 = vmatpush1.msra.mxu0 0.0
    %5916 = vmatprep.subr.mxu0 0.0
    %5917 = vmatpush1.msra.mxu0 0.0
    %5918 = vmatprep.subr.mxu0 0.0
    %5919 = vmatpush1.msra.mxu0 0.0
    %5920 = vmatprep.subr.mxu0 0.0
    %5921 = vmatpush1.msra.mxu0 0.0
    %5922 = vmatprep.subr.mxu0 0.0
    %5923 = vmatpush1.msra.mxu0 0.0
    %5924 = vmatprep.subr.mxu0 0.0
    %5925 = vmatpush1.msra.mxu0 0.0
    %5926 = vmatprep.subr.mxu0 0.0
    %5927 = vmatpush1.msra.mxu0 0.0
    %5928 = vmatprep.subr.mxu0 0.0
    %5929 = vmatpush1.msra.mxu0 0.0
    %5930 = vmatprep.subr.mxu0 0.0
    %5931 = vmatpush1.msra.mxu0 0.0
    %5932 = vmatprep.subr.mxu0 0.0
    %5933 = vmatpush1.msra.mxu0 0.0
    %5934 = vmatprep.subr.mxu0 0.0
    %5935 = vmatpush1.msra.mxu0 0.0
    %5936 = vmatprep.subr.mxu0 0.0
    %5937 = vmatpush1.msra.mxu0 0.0
    %5938 = vmatprep.subr.mxu0 0.0
    %5939 = vmatpush1.msra.mxu0 0.0
    %5940 = vmatprep.subr.mxu0 0.0
    %5941 = vmatpush1.msra.mxu0 0.0
    %5942 = vmatprep.subr.mxu0 0.0
    %5943 = vmatpush1.msra.mxu0 0.0
    %5944 = vmatprep.subr.mxu0 0.0
    %5945 = vmatpush1.msra.mxu0 0.0
    %5946 = vmatprep.subr.mxu0 0.0
    %5947 = vmatpush1.msra.mxu0 0.0
    %5948 = vmatprep.subr.mxu0 0.0
    %5949 = vmatpush1.msra.mxu0 0.0
    %5950 = vmatprep.subr.mxu0 0.0
    %5951 = vmatpush1.msra.mxu0 0.0
    %5952 = vmatprep.subr.mxu0 0.0
    %5953 = vmatpush1.msra.mxu0 0.0
    %5954 = vmatprep.subr.mxu0 0.0
    %5955 = vmatpush1.msra.mxu0 0.0
    %5956 = vmatprep.mubr.f32.mxu0 0.0
    %5957 = vmatmul.mubr.f32.gmra.mrb[0].mxu0 %v5890
    %v5958 = vpop.f32.mrb[0].mxu0
    %v5959 = vadd.f32 %v5884, %v5958
    %v5960 = vpop.f32.mrb[0].mxu0
    %5961 = vdwg.mxu0
    %v5962 = vadd.f32 %v5959, %v4192
    %v5963 = vmul.f32 %v5962, %v3837
    %v5964 = vtanh.pop %v5963
    %v5965 = vmul.f32 %v5964, %v3837
    %v5966 = vadd.f32 %v5965, %v3838
    %v5967 = vmul.f32 %v5966, %v5805
    %5969 = vrot.lane.b32.xlu0 %v5966, 64
    %v5970 = vpop.permute.xlu0 %5969
    %v5972 = vmul.f32 %v5966, %v5970
    %5974 = vrot.lane.b32.xlu0 %v5972, 32
    %v5975 = vpop.permute.xlu0 %5974
    %v5977 = vadd.f32 %v5967, %v5975
    %v5978 = vtanh.pop %v5977
    %5980 = vrot.lane.b32.xlu0 %v5978, 64
    %v5981 = vpop.permute.xlu0 %5980
    %v5983 = vmul.f32 %v5966, %v5981
    %v5984 = vld [vmem:[%s7] sm:$0xff]
    %v5985 = vld [vmem:[%s7 + $0x8] sm:$0xff]
    %v5986 = vld [vmem:[%s7 + $0x10] sm:$0xff]
    %v5987 = vld [vmem:[%s7 + $0x18] sm:$0xff]
    %v5988 = vld [vmem:[%s8] sm:$0x1]
    %v5990 = vlaneseq
    %v5991 = vshrl.u32 %v5990, 7
    %v5992 = vsub.s32 0, %v5991
    %v5993 = vrot.slane %v5988, %v5992
    %5996 = vrot.lane.b32.xlu0 %v5983, 32
    %v5997 = vpop.permute.xlu0 %5996
    %v5998 = vsel %vm3853, %v5997, 0
    %6000 = vmatprep.subr.mxu0 0.0
    %6001 = vmatpush1.msra.mxu0 %v5984
    %6002 = vmatprep.subr.mxu0 0.0
    %6003 = vmatpush1.msra.mxu0 %v5985
    %6004 = vmatprep.subr.mxu0 0.0
    %6005 = vmatpush1.msra.mxu0 %v5986
    %6006 = vmatprep.subr.mxu0 0.0
    %6007 = vmatpush1.msra.mxu0 %v5987
    %6008 = vmatprep.subr.mxu0 0.0
    %6009 = vmatpush1.msra.mxu0 0.0
    %6010 = vmatprep.subr.mxu0 0.0
    %6011 = vmatpush1.msra.mxu0 0.0
    %6012 = vmatprep.subr.mxu0 0.0
    %6013 = vmatpush1.msra.mxu0 0.0
    %6014 = vmatprep.subr.mxu0 0.0
    %6015 = vmatpush1.msra.mxu0 0.0
    %6016 = vmatprep.subr.mxu0 0.0
    %6017 = vmatpush1.msra.mxu0 0.0
    %6018 = vmatprep.subr.mxu0 0.0
    %6019 = vmatpush1.msra.mxu0 0.0
    %6020 = vmatprep.subr.mxu0 0.0
    %6021 = vmatpush1.msra.mxu0 0.0
    %6022 = vmatprep.subr.mxu0 0.0
    %6023 = vmatpush1.msra.mxu0 0.0
    %6024 = vmatprep.subr.mxu0 0.0
    %6025 = vmatpush1.msra.mxu0 0.0
    %6026 = vmatprep.subr.mxu0 0.0
    %6027 = vmatpush1.msra.mxu0 0.0
    %6028 = vmatprep.subr.mxu0 0.0
    %6029 = vmatpush1.msra.mxu0 0.0
    %6030 = vmatprep.subr.mxu0 0.0
    %6031 = vmatpush1.msra.mxu0 0.0
    %6032 = vmatprep.subr.mxu0 0.0
    %6033 = vmatpush1.msra.mxu0 0.0
    %6034 = vmatprep.subr.mxu0 0.0
    %6035 = vmatpush1.msra.mxu0 0.0
    %6036 = vmatprep.subr.mxu0 0.0
    %6037 = vmatpush1.msra.mxu0 0.0
    %6038 = vmatprep.subr.mxu0 0.0
    %6039 = vmatpush1.msra.mxu0 0.0
    %6040 = vmatprep.subr.mxu0 0.0
    %6041 = vmatpush1.msra.mxu0 0.0
    %6042 = vmatprep.subr.mxu0 0.0
    %6043 = vmatpush1.msra.mxu0 0.0
    %6044 = vmatprep.subr.mxu0 0.0
    %6045 = vmatpush1.msra.mxu0 0.0
    %6046 = vmatprep.subr.mxu0 0.0
    %6047 = vmatpush1.msra.mxu0 0.0
    %6048 = vmatprep.subr.mxu0 0.0
    %6049 = vmatpush1.msra.mxu0 0.0
    %6050 = vmatprep.subr.mxu0 0.0
    %6051 = vmatpush1.msra.mxu0 0.0
    %6052 = vmatprep.subr.mxu0 0.0
    %6053 = vmatpush1.msra.mxu0 0.0
    %6054 = vmatprep.subr.mxu0 0.0
    %6055 = vmatpush1.msra.mxu0 0.0
    %6056 = vmatprep.subr.mxu0 0.0
    %6057 = vmatpush1.msra.mxu0 0.0
    %6058 = vmatprep.subr.mxu0 0.0
    %6059 = vmatpush1.msra.mxu0 0.0
    %6060 = vmatprep.subr.mxu0 0.0
    %6061 = vmatpush1.msra.mxu0 0.0
    %6062 = vmatprep.subr.mxu0 0.0
    %6063 = vmatpush1.msra.mxu0 0.0
    %6064 = vmatprep.mubr.f32.mxu0 0.0
    %6065 = vmatmul.mubr.f32.gmra.mrb[0].mxu0 %v5998
    %v6066 = vpop.f32.mrb[0].mxu0
    %v6067 = vadd.f32 %v5993, %v6066
    %v6068 = vpop.f32.mrb[0].mxu0
    %6069 = vdwg.mxu0
    %6070 = vst [vmem:[%s9] sm:$0xff] %v6067
    // Predicated region
    $region42: #{lstm_with_embeddings_forward.1} parent=1 // pred_check
      _
    $region43: #{lstm_with_embeddings_forward.1} parent=1 // pred_check_branch
      %6072 = sbr.rel (0) target = $region45
    $region44: #{lstm_with_embeddings_forward.1} parent=1 // pred_region
      _
    $region45: #{lstm_with_embeddings_forward.1} parent=1 // pred_fallthru
      _
    // Predicated region
    $region46: #{lstm_with_embeddings_forward.1} parent=1 // pred_check
      _
    $region47: #{lstm_with_embeddings_forward.1} parent=1 // pred_check_branch
      %6074 = sbr.rel (0) target = $region49
    $region48: #{lstm_with_embeddings_forward.1} parent=1 // pred_region
      _
    $region49: #{lstm_with_embeddings_forward.1} parent=1 // pred_fallthru
      _
    %6075 = vsyncpa [#allocation4], 1

</llo_original>
